<compile_context>
chip_gen: v7x
topology: tpu7x:2x2x1
jax: 0.10.0
libtpu: 0.0.40
codegen_flags: <defaults>
</compile_context>

<pallas_src>
import functools

import jax
import jax.numpy as jnp
from jax.experimental import pallas as pl
from jax.experimental.pallas import tpu as pltpu

NEG_SLOPE = 0.01   # nn.LeakyReLU default
BN_EPS = 1e-5      # nn.BatchNorm2d default
K = 5              # conv kernel size
STRIDE = 2         # conv stride
POOL = 3           # MaxPool2d(3): kernel = stride = 3


def _lrelu(v):
    return jnp.where(v > 0, v, NEG_SLOPE * v)


def conv_out(size, k=K, s=STRIDE):
    return (size - (k - 1) - 1) // s + 1


def _vmem_spec():
    # whole-array block resident in VMEM (all operands here are tiny)
    return pl.BlockSpec(memory_space=pltpu.MemorySpace.VMEM)


# ---------------------------------------------------------------------------
# The fused kernel: conv1+BN+lrelu, conv2+BN+lrelu, maxpool, fc1+lrelu, fc2
# ---------------------------------------------------------------------------
def _dqn_fused_kernel(p1_ref, w1_ref, g1_ref, b1_ref,
                      w2_ref, g2_ref, b2_ref,
                      wf1_ref, bf1_ref, wf2_ref, bf2_ref,
                      o_ref,
                      y1_ref, acc2_ref,
                      *, n, oh1, ow1, oc1, oh2, ow2,
                      ph_n, pw_n, rows1, pad1, chunk):
    # ---- conv1 (one deep K=k*k*C bf16 matmul) + BN1 (batch stats) + lrelu --
    # Conv bias omitted: training-mode BN subtracts the batch mean, which
    # cancels a per-channel bias exactly.
    y = jnp.dot(p1_ref[...], w1_ref[...], preferred_element_type=jnp.float32)
    inv1 = 1.0 / float(rows1)
    mean1 = jnp.sum(y, axis=0, keepdims=True) * inv1
    d1 = y - mean1
    var1 = jnp.sum(d1 * d1, axis=0, keepdims=True) * inv1   # centered two-pass
    scale1 = g1_ref[...] * jax.lax.rsqrt(var1 + BN_EPS)
    shift1 = b1_ref[...] - mean1 * scale1
    y1_ref[pl.ds(0, rows1), :] = _lrelu(y * scale1 + shift1)
    # Zero the padding rows (read by shifted conv2 loads; never selected).
    y1_ref[pl.ds(rows1, pad1), :] = jnp.zeros((pad1, oc1), jnp.float32)

    # ---- conv2: one fused K=k*k*oc1 matmul per row chunk -------------------
    # LHS[r, (di*K+dj)*oc1 + c] = y1[r + di*ow1 + dj, c]; the valid stride-2
    # output rows are compacted right below.  Accumulation over the 25 taps
    # happens inside the MXU (single K=400 contraction), not on the VPU.
    for start in range(0, rows1, chunk):
        size = min(chunk, rows1 - start)
        pieces = []
        for t in range(K * K):
            di, dj = divmod(t, K)
            shift = di * ow1 + dj
            pieces.append(y1_ref[pl.ds(start + shift, size), :])  # [size,oc1]
        lhs = jnp.concatenate(pieces, axis=1).astype(w2_ref.dtype)
        acc2_ref[pl.ds(start, size), :] = jnp.dot(
            lhs, w2_ref[...], preferred_element_type=jnp.float32)

    # ---- compact the valid stride-2 conv2 rows into one [n*oh2*ow2, oc2] ---
    blocks = []
    for b in range(n):
        for r2 in range(oh2):
            base = b * oh1 * ow1 + STRIDE * r2 * ow1
            blocks.append(acc2_ref[pl.ds(base, ow2, stride=STRIDE), :])
    z = jnp.concatenate(blocks, axis=0)          # rows ordered (b, r2, c2)

    # ---- BN2 (batch stats, centered two-pass) + LeakyReLU, whole slab ------
    inv2 = 1.0 / float(n * oh2 * ow2)
    mean2 = jnp.sum(z, axis=0, keepdims=True) * inv2
    d2 = z - mean2
    var2 = jnp.sum(d2 * d2, axis=0, keepdims=True) * inv2
    scale2 = g2_ref[...] * jax.lax.rsqrt(var2 + BN_EPS)
    shift2 = b2_ref[...] - mean2 * scale2
    z = _lrelu(z * scale2 + shift2)

    # ---- MaxPool(3) -> lane-dense [n, P*oc2] pooled slab -------------------
    pooled_rows = []
    for b in range(n):
        cols = []
        for pr in range(ph_n):
            for pc in range(pw_n):
                m = None
                for pi in range(POOL):
                    r = (b * oh2 + POOL * pr + pi) * ow2 + POOL * pc
                    w = jnp.max(z[r:r + POOL], axis=0, keepdims=True)
                    m = w if m is None else jnp.maximum(m, w)
                cols.append(m)                               # [1, oc2]
        pooled_rows.append(jnp.concatenate(cols, axis=1))    # [1, P*oc2]
    pooled = jnp.concatenate(pooled_rows, axis=0)            # [n, P*oc2]

    # ---- batched FC head: fc1 + lrelu + fc2, one full output store ---------
    h = _lrelu(jnp.dot(pooled, wf1_ref[...],
                       preferred_element_type=jnp.float32) + bf1_ref[...])
    o_ref[...] = (jnp.dot(h, wf2_ref[...],
                          preferred_element_type=jnp.float32) + bf2_ref[...])


# ---------------------------------------------------------------------------
# JAX glue: one-time weight prep + the (layout-only) conv1 im2col
# ---------------------------------------------------------------------------
def im2col(x_nhwc, k, s):
    n, h, w, c = x_nhwc.shape
    oh = (h - k) // s + 1
    ow = (w - k) // s + 1
    cols = []
    for di in range(k):
        for dj in range(k):
            cols.append(x_nhwc[:, di:di + oh * s:s, dj:dj + ow * s:s, :])
    patches = jnp.stack(cols, axis=3)                 # [N, OH, OW, k*k, C]
    return patches.reshape(n * oh * ow, k * k * c), oh, ow


def prepare_params(params, spatial):
    """One-time weight re-layout so the jitted hot path does no transposes."""
    oh2 = conv_out(conv_out(spatial))
    ph_n = (oh2 - POOL) // POOL + 1
    pw_n = ph_n
    oc1 = params["conv1_w"].shape[0]
    oc2 = params["conv2_w"].shape[0]
    hidden = params["fc1_w"].shape[0]
    # conv weights -> single matmul layouts (bf16 MXU operands); conv biases
    # dropped (cancelled by training-mode BN).
    w1_mat = jnp.transpose(params["conv1_w"],
                           (2, 3, 1, 0)).reshape(-1, oc1).astype(jnp.bfloat16)
    w2_mat = jnp.transpose(params["conv2_w"],
                           (2, 3, 1, 0)).reshape(K * K * oc1,
                                                 oc2).astype(jnp.bfloat16)
    # fc1: fold PyTorch's NCHW flatten order (c*P + p) into a [P*oc2, hidden]
    # matrix whose row index is p*oc2 + c, matching the pooled-slab lane order.
    wf1 = params["fc1_w"].reshape(hidden, oc2, ph_n, pw_n)
    wf1 = jnp.transpose(wf1, (2, 3, 1, 0)).reshape(ph_n * pw_n * oc2, hidden)
    return {
        "w1_mat": w1_mat,
        "bn1_g": params["bn1_g"].reshape(1, oc1),
        "bn1_b": params["bn1_b"].reshape(1, oc1),
        "w2_mat": w2_mat,
        "bn2_g": params["bn2_g"].reshape(1, oc2),
        "bn2_b": params["bn2_b"].reshape(1, oc2),
        "wf1": wf1,
        "bf1": params["fc1_b"].reshape(1, hidden),
        "wf2": params["fc2_w"].T,
        "bf2": params["fc2_b"].reshape(1, -1),
    }


def dqn_forward(prepped, obs_nchw):
    n = obs_nchw.shape[0]
    # Layout-only glue: NCHW -> NHWC + conv1 im2col (one XLA fusion), cast to
    # bf16 for the MXU (halves patches1 HBM->VMEM bytes).  Everything
    # downstream runs inside the single fused Pallas kernel.
    x = jnp.transpose(obs_nchw, (0, 2, 3, 1))
    patches1, oh1, ow1 = im2col(x, K, STRIDE)
    patches1 = patches1.astype(jnp.bfloat16)
    oh2, ow2 = conv_out(oh1), conv_out(ow1)
    ph_n = (oh2 - POOL) // POOL + 1
    pw_n = (ow2 - POOL) // POOL + 1
    oc1 = prepped["w1_mat"].shape[1]
    oc2 = prepped["w2_mat"].shape[1]
    nb_actions = prepped["wf2"].shape[1]
    rows1 = n * oh1 * ow1
    max_shift = (K - 1) * ow1 + (K - 1)
    pad1 = ((max_shift + 7) // 8) * 8
    chunk = min(rows1, 128)

    kernel = functools.partial(
        _dqn_fused_kernel,
        n=n, oh1=oh1, ow1=ow1, oc1=oc1, oh2=oh2, ow2=ow2,
        ph_n=ph_n, pw_n=pw_n, rows1=rows1, pad1=pad1, chunk=chunk)

    # NOTE: scratch VMEM scales with batch (rows1 = n*oh1*ow1); fine for small
    # replay batches here.  See TODO(synk) at top about batch-tiling.
    return pl.pallas_call(
        kernel,
        out_shape=jax.ShapeDtypeStruct((n, nb_actions), jnp.float32),
        in_specs=[_vmem_spec()] * 11,
        out_specs=_vmem_spec(),
        scratch_shapes=[
            pltpu.VMEM((rows1 + pad1, oc1), jnp.float32),  # y1 (+ pad rows)
            pltpu.VMEM((rows1, oc2), jnp.float32),         # dense conv2 grid
        ],
    )(patches1, prepped["w1_mat"], prepped["bn1_g"], prepped["bn1_b"],
      prepped["w2_mat"], prepped["bn2_g"], prepped["bn2_b"],
      prepped["wf1"], prepped["bf1"], prepped["wf2"], prepped["bf2"])


# ---------------------------------------------------------------------------
# Deterministic parameter init (PyTorch-shaped tensors)
# ---------------------------------------------------------------------------
def init_params(key, channels, hidden_size, nb_actions, linear_input_size):
    ks = jax.random.split(key, 8)

    def u(k, shape, fan_in):
        bound = 1.0 / jnp.sqrt(jnp.float32(fan_in))
        return jax.random.uniform(k, shape, jnp.float32, -bound, bound)

    return {
        "conv1_w": u(ks[0], (16, channels, 5, 5), channels * 25),
        "conv1_b": u(ks[1], (16,), channels * 25),
        "bn1_g": jnp.ones((16,), jnp.float32),
        "bn1_b": jnp.zeros((16,), jnp.float32),
        "conv2_w": u(ks[2], (32, 16, 5, 5), 16 * 25),
        "conv2_b": u(ks[3], (32,), 16 * 25),
        "bn2_g": jnp.ones((32,), jnp.float32),
        "bn2_b": jnp.zeros((32,), jnp.float32),
        "fc1_w": u(ks[4], (hidden_size, linear_input_size), linear_input_size),
        "fc1_b": u(ks[5], (hidden_size,), linear_input_size),
        "fc2_w": u(ks[6], (nb_actions, hidden_size), hidden_size),
        "fc2_b": u(ks[7], (nb_actions,), hidden_size),
    }


# Pure-JAX reference (NCHW, mirrors the nn.Sequential incl. conv biases).
def dqn_reference(params, obs):
    def conv(v, w, b):
        y = jax.lax.conv_general_dilated(
            v, w, (2, 2), "VALID", dimension_numbers=("NCHW", "OIHW", "NCHW"))
        return y + b[None, :, None, None]

    def bn(v, g, bt):
        mean = jnp.mean(v, axis=(0, 2, 3), keepdims=True)
        var = jnp.mean((v - mean) ** 2, axis=(0, 2, 3), keepdims=True)
        return (v - mean) / jnp.sqrt(var + BN_EPS) * g[None, :, None, None] \
            + bt[None, :, None, None]

    y = _lrelu(bn(conv(obs, params["conv1_w"], params["conv1_b"]),
                  params["bn1_g"], params["bn1_b"]))
    y = _lrelu(bn(conv(y, params["conv2_w"], params["conv2_b"]),
                  params["bn2_g"], params["bn2_b"]))
    y = jax.lax.reduce_window(y, -jnp.inf, jax.lax.max,
                              (1, 1, 3, 3), (1, 1, 3, 3), "VALID")
    flat = y.reshape(y.shape[0], -1)
    h = _lrelu(flat @ params["fc1_w"].T + params["fc1_b"])
    return h @ params["fc2_w"].T + params["fc2_b"]


if __name__ == "__main__":
    batch, channels, spatial = 2, 4, 36
    hidden_size, nb_actions = 32, 6

    convw = conv_out(conv_out(conv_out(spatial)), 3, 3)
    convh = convw
    linear_input_size = convw * convh * 32

    key = jax.random.PRNGKey(0)
    k_params, k_obs = jax.random.split(key)
    params = init_params(k_params, channels, hidden_size, nb_actions,
                         linear_input_size)
    obs = jax.random.normal(k_obs, (batch, channels, spatial, spatial),
                            jnp.float32)

    prepped = prepare_params(params, spatial)     # one-time weight relayout
    fwd = jax.jit(dqn_forward)
    out = fwd(prepped, obs)
    jax.block_until_ready(out)
    assert out.shape == (batch, nb_actions), out.shape

    ref = dqn_reference(params, obs)
    # bf16 MXU operands on the conv path; BN normalization keeps the error
    # well inside 1e-2 (accumulation and all pointwise math stay f32).
    assert jnp.allclose(out, ref, rtol=1e-2, atol=1e-2), \
        float(jnp.max(jnp.abs(out - ref)))

    print("KERNEL_OK")
</pallas_src>

<mosaic_0001>
module attributes {stable_mosaic.version = 11 : i64} {
  func.func @_dqn_fused_kernel(%arg0: memref<512x100xbf16, #tpu.memory_space<vmem>>, %arg1: memref<100x16xbf16, #tpu.memory_space<vmem>>, %arg2: memref<1x16xf32, #tpu.memory_space<vmem>>, %arg3: memref<1x16xf32, #tpu.memory_space<vmem>>, %arg4: memref<400x32xbf16, #tpu.memory_space<vmem>>, %arg5: memref<1x32xf32, #tpu.memory_space<vmem>>, %arg6: memref<1x32xf32, #tpu.memory_space<vmem>>, %arg7: memref<128x32xf32, #tpu.memory_space<vmem>>, %arg8: memref<1x32xf32, #tpu.memory_space<vmem>>, %arg9: memref<32x6xf32, #tpu.memory_space<vmem>>, %arg10: memref<1x6xf32, #tpu.memory_space<vmem>>, %arg11: memref<2x6xf32, #tpu.memory_space<vmem>>, %arg12: memref<584x16xf32, #tpu.memory_space<vmem>>, %arg13: memref<512x32xf32, #tpu.memory_space<vmem>>) attributes {dimension_semantics = [], scalar_prefetch = 0 : i64, scratch_operands = 2 : i64, tpu.core_type = #tpu.core_type<tc>} {
    %c0 = arith.constant 0 : index
    %c0_0 = arith.constant 0 : index
    %0 = vector.load %arg0[%c0, %c0_0] : memref<512x100xbf16, #tpu.memory_space<vmem>>, vector<512x100xbf16>
    %c0_1 = arith.constant 0 : index
    %c0_2 = arith.constant 0 : index
    %1 = vector.load %arg1[%c0_1, %c0_2] : memref<100x16xbf16, #tpu.memory_space<vmem>>, vector<100x16xbf16>
    %cst = arith.constant dense<0.000000e+00> : vector<512x16xf32>
    %2 = tpu.matmul %0, %1, %cst {dimension_numbers = #tpu.dot_dimension_numbers<[1], [0], [0], [1], [0, 0, 1, 1], [], []>} : vector<512x100xbf16>, vector<100x16xbf16>, vector<512x16xf32> -> vector<512x16xf32>
    %cst_3 = arith.constant dense<0.000000e+00> : vector<16xf32>
    %3 = vector.multi_reduction <add>, %2, %cst_3 [0] : vector<512x16xf32> to vector<16xf32>
    %4 = vector.shape_cast %3 : vector<16xf32> to vector<1x16xf32>
    %cst_4 = arith.constant 0.001953125 : f32
    %5 = vector.broadcast %cst_4 : f32 to vector<1x16xf32>
    %6 = arith.mulf %4, %5 : vector<1x16xf32>
    %7 = vector.broadcast %6 : vector<1x16xf32> to vector<512x16xf32>
    %8 = arith.subf %2, %7 : vector<512x16xf32>
    %9 = arith.mulf %8, %8 : vector<512x16xf32>
    %cst_5 = arith.constant dense<0.000000e+00> : vector<16xf32>
    %10 = vector.multi_reduction <add>, %9, %cst_5 [0] : vector<512x16xf32> to vector<16xf32>
    %11 = vector.shape_cast %10 : vector<16xf32> to vector<1x16xf32>
    %cst_6 = arith.constant 0.001953125 : f32
    %12 = vector.broadcast %cst_6 : f32 to vector<1x16xf32>
    %13 = arith.mulf %11, %12 : vector<1x16xf32>
    %c0_7 = arith.constant 0 : index
    %c0_8 = arith.constant 0 : index
    %14 = vector.load %arg2[%c0_7, %c0_8] : memref<1x16xf32, #tpu.memory_space<vmem>>, vector<1x16xf32>
    %cst_9 = arith.constant 9.99999974E-6 : f32
    %15 = vector.broadcast %cst_9 : f32 to vector<1x16xf32>
    %16 = arith.addf %13, %15 : vector<1x16xf32>
    %17 = math.rsqrt %16 : vector<1x16xf32>
    %18 = arith.mulf %14, %17 : vector<1x16xf32>
    %c0_10 = arith.constant 0 : index
    %c0_11 = arith.constant 0 : index
    %19 = vector.load %arg3[%c0_10, %c0_11] : memref<1x16xf32, #tpu.memory_space<vmem>>, vector<1x16xf32>
    %20 = arith.mulf %6, %18 : vector<1x16xf32>
    %21 = arith.subf %19, %20 : vector<1x16xf32>
    %22 = vector.broadcast %18 : vector<1x16xf32> to vector<512x16xf32>
    %23 = arith.mulf %2, %22 : vector<512x16xf32>
    %24 = vector.broadcast %21 : vector<1x16xf32> to vector<512x16xf32>
    %25 = arith.addf %23, %24 : vector<512x16xf32>
    %cst_12 = arith.constant 0.000000e+00 : f32
    %26 = vector.broadcast %cst_12 : f32 to vector<512x16xf32>
    %27 = arith.cmpf ogt, %25, %26 : vector<512x16xf32>
    %cst_13 = arith.constant 0.00999999977 : f32
    %28 = vector.broadcast %cst_13 : f32 to vector<512x16xf32>
    %29 = arith.mulf %28, %25 : vector<512x16xf32>
    %30 = arith.select %27, %25, %29 : vector<512x16xi1>, vector<512x16xf32>
    %c0_14 = arith.constant 0 : index
    %c0_15 = arith.constant 0 : index
    %31 = vector.load %arg12[%c0_14, %c0_15] : memref<584x16xf32, #tpu.memory_space<vmem>>, vector<512x16xf32>
    tpu.vector_store %arg12[%c0_14, %c0_15], %30 {strides = array<i32>} : memref<584x16xf32, #tpu.memory_space<vmem>>, vector<512x16xf32>,
    %cst_16 = arith.constant 0.000000e+00 : f32
    %32 = vector.broadcast %cst_16 : f32 to vector<72x16xf32>
    %c512 = arith.constant 512 : index
    %c0_17 = arith.constant 0 : index
    %33 = vector.load %arg12[%c512, %c0_17] : memref<584x16xf32, #tpu.memory_space<vmem>>, vector<72x16xf32>
    tpu.vector_store %arg12[%c512, %c0_17], %32 {strides = array<i32>} : memref<584x16xf32, #tpu.memory_space<vmem>>, vector<72x16xf32>,
    %c0_18 = arith.constant 0 : index
    %c0_19 = arith.constant 0 : index
    %34 = vector.load %arg12[%c0_18, %c0_19] : memref<584x16xf32, #tpu.memory_space<vmem>>, vector<128x16xf32>
    %c1 = arith.constant 1 : index
    %c0_20 = arith.constant 0 : index
    %35 = vector.load %arg12[%c1, %c0_20] : memref<584x16xf32, #tpu.memory_space<vmem>>, vector<128x16xf32>
    %c2 = arith.constant 2 : index
    %c0_21 = arith.constant 0 : index
    %36 = vector.load %arg12[%c2, %c0_21] : memref<584x16xf32, #tpu.memory_space<vmem>>, vector<128x16xf32>
    %c3 = arith.constant 3 : index
    %c0_22 = arith.constant 0 : index
    %37 = vector.load %arg12[%c3, %c0_22] : memref<584x16xf32, #tpu.memory_space<vmem>>, vector<128x16xf32>
    %c4 = arith.constant 4 : index
    %c0_23 = arith.constant 0 : index
    %38 = vector.load %arg12[%c4, %c0_23] : memref<584x16xf32, #tpu.memory_space<vmem>>, vector<128x16xf32>
    %c16 = arith.constant 16 : index
    %c0_24 = arith.constant 0 : index
    %39 = vector.load %arg12[%c16, %c0_24] : memref<584x16xf32, #tpu.memory_space<vmem>>, vector<128x16xf32>
    %c17 = arith.constant 17 : index
    %c0_25 = arith.constant 0 : index
    %40 = vector.load %arg12[%c17, %c0_25] : memref<584x16xf32, #tpu.memory_space<vmem>>, vector<128x16xf32>
    %c18 = arith.constant 18 : index
    %c0_26 = arith.constant 0 : index
    %41 = vector.load %arg12[%c18, %c0_26] : memref<584x16xf32, #tpu.memory_space<vmem>>, vector<128x16xf32>
    %c19 = arith.constant 19 : index
    %c0_27 = arith.constant 0 : index
    %42 = vector.load %arg12[%c19, %c0_27] : memref<584x16xf32, #tpu.memory_space<vmem>>, vector<128x16xf32>
    %c20 = arith.constant 20 : index
    %c0_28 = arith.constant 0 : index
    %43 = vector.load %arg12[%c20, %c0_28] : memref<584x16xf32, #tpu.memory_space<vmem>>, vector<128x16xf32>
    %c32 = arith.constant 32 : index
    %c0_29 = arith.constant 0 : index
    %44 = vector.load %arg12[%c32, %c0_29] : memref<584x16xf32, #tpu.memory_space<vmem>>, vector<128x16xf32>
    %c33 = arith.constant 33 : index
    %c0_30 = arith.constant 0 : index
    %45 = vector.load %arg12[%c33, %c0_30] : memref<584x16xf32, #tpu.memory_space<vmem>>, vector<128x16xf32>
    %c34 = arith.constant 34 : index
    %c0_31 = arith.constant 0 : index
    %46 = vector.load %arg12[%c34, %c0_31] : memref<584x16xf32, #tpu.memory_space<vmem>>, vector<128x16xf32>
    %c35 = arith.constant 35 : index
    %c0_32 = arith.constant 0 : index
    %47 = vector.load %arg12[%c35, %c0_32] : memref<584x16xf32, #tpu.memory_space<vmem>>, vector<128x16xf32>
    %c36 = arith.constant 36 : index
    %c0_33 = arith.constant 0 : index
    %48 = vector.load %arg12[%c36, %c0_33] : memref<584x16xf32, #tpu.memory_space<vmem>>, vector<128x16xf32>
    %c48 = arith.constant 48 : index
    %c0_34 = arith.constant 0 : index
    %49 = vector.load %arg12[%c48, %c0_34] : memref<584x16xf32, #tpu.memory_space<vmem>>, vector<128x16xf32>
    %c49 = arith.constant 49 : index
    %c0_35 = arith.constant 0 : index
    %50 = vector.load %arg12[%c49, %c0_35] : memref<584x16xf32, #tpu.memory_space<vmem>>, vector<128x16xf32>
    %c50 = arith.constant 50 : index
    %c0_36 = arith.constant 0 : index
    %51 = vector.load %arg12[%c50, %c0_36] : memref<584x16xf32, #tpu.memory_space<vmem>>, vector<128x16xf32>
    %c51 = arith.constant 51 : index
    %c0_37 = arith.constant 0 : index
    %52 = vector.load %arg12[%c51, %c0_37] : memref<584x16xf32, #tpu.memory_space<vmem>>, vector<128x16xf32>
    %c52 = arith.constant 52 : index
    %c0_38 = arith.constant 0 : index
    %53 = vector.load %arg12[%c52, %c0_38] : memref<584x16xf32, #tpu.memory_space<vmem>>, vector<128x16xf32>
    %c64 = arith.constant 64 : index
    %c0_39 = arith.constant 0 : index
    %54 = vector.load %arg12[%c64, %c0_39] : memref<584x16xf32, #tpu.memory_space<vmem>>, vector<128x16xf32>
    %c65 = arith.constant 65 : index
    %c0_40 = arith.constant 0 : index
    %55 = vector.load %arg12[%c65, %c0_40] : memref<584x16xf32, #tpu.memory_space<vmem>>, vector<128x16xf32>
    %c66 = arith.constant 66 : index
    %c0_41 = arith.constant 0 : index
    %56 = vector.load %arg12[%c66, %c0_41] : memref<584x16xf32, #tpu.memory_space<vmem>>, vector<128x16xf32>
    %c67 = arith.constant 67 : index
    %c0_42 = arith.constant 0 : index
    %57 = vector.load %arg12[%c67, %c0_42] : memref<584x16xf32, #tpu.memory_space<vmem>>, vector<128x16xf32>
    %c68 = arith.constant 68 : index
    %c0_43 = arith.constant 0 : index
    %58 = vector.load %arg12[%c68, %c0_43] : memref<584x16xf32, #tpu.memory_space<vmem>>, vector<128x16xf32>
    %59 = tpu.concatenate %34, %35, %36, %37, %38, %39, %40, %41, %42, %43, %44, %45, %46, %47, %48, %49 in 1 : vector<128x16xf32>, vector<128x16xf32>, vector<128x16xf32>, vector<128x16xf32>, vector<128x16xf32>, vector<128x16xf32>, vector<128x16xf32>, vector<128x16xf32>, vector<128x16xf32>, vector<128x16xf32>, vector<128x16xf32>, vector<128x16xf32>, vector<128x16xf32>, vector<128x16xf32>, vector<128x16xf32>, vector<128x16xf32> -> vector<128x256xf32>
    %60 = tpu.concatenate %50, %51, %52, %53, %54, %55, %56, %57, %58 in 1 : vector<128x16xf32>, vector<128x16xf32>, vector<128x16xf32>, vector<128x16xf32>, vector<128x16xf32>, vector<128x16xf32>, vector<128x16xf32>, vector<128x16xf32>, vector<128x16xf32> -> vector<128x144xf32>
    %61 = tpu.concatenate %59, %60 in 1 : vector<128x256xf32>, vector<128x144xf32> -> vector<128x400xf32>
    %62 = arith.truncf %61 : vector<128x400xf32> to vector<128x400xbf16>
    %c0_44 = arith.constant 0 : index
    %c0_45 = arith.constant 0 : index
    %63 = vector.load %arg4[%c0_44, %c0_45] : memref<400x32xbf16, #tpu.memory_space<vmem>>, vector<400x32xbf16>
    %cst_46 = arith.constant dense<0.000000e+00> : vector<128x32xf32>
    %64 = tpu.matmul %62, %63, %cst_46 {dimension_numbers = #tpu.dot_dimension_numbers<[1], [0], [0], [1], [0, 0, 1, 1], [], []>} : vector<128x400xbf16>, vector<400x32xbf16>, vector<128x32xf32> -> vector<128x32xf32>
    %c0_47 = arith.constant 0 : index
    %c0_48 = arith.constant 0 : index
    %65 = vector.load %arg13[%c0_47, %c0_48] : memref<512x32xf32, #tpu.memory_space<vmem>>, vector<128x32xf32>
    tpu.vector_store %arg13[%c0_47, %c0_48], %64 {strides = array<i32>} : memref<512x32xf32, #tpu.memory_space<vmem>>, vector<128x32xf32>,
    %c128 = arith.constant 128 : index
    %c0_49 = arith.constant 0 : index
    %66 = vector.load %arg12[%c128, %c0_49] : memref<584x16xf32, #tpu.memory_space<vmem>>, vector<128x16xf32>
    %c129 = arith.constant 129 : index
    %c0_50 = arith.constant 0 : index
    %67 = vector.load %arg12[%c129, %c0_50] : memref<584x16xf32, #tpu.memory_space<vmem>>, vector<128x16xf32>
    %c130 = arith.constant 130 : index
    %c0_51 = arith.constant 0 : index
    %68 = vector.load %arg12[%c130, %c0_51] : memref<584x16xf32, #tpu.memory_space<vmem>>, vector<128x16xf32>
    %c131 = arith.constant 131 : index
    %c0_52 = arith.constant 0 : index
    %69 = vector.load %arg12[%c131, %c0_52] : memref<584x16xf32, #tpu.memory_space<vmem>>, vector<128x16xf32>
    %c132 = arith.constant 132 : index
    %c0_53 = arith.constant 0 : index
    %70 = vector.load %arg12[%c132, %c0_53] : memref<584x16xf32, #tpu.memory_space<vmem>>, vector<128x16xf32>
    %c144 = arith.constant 144 : index
    %c0_54 = arith.constant 0 : index
    %71 = vector.load %arg12[%c144, %c0_54] : memref<584x16xf32, #tpu.memory_space<vmem>>, vector<128x16xf32>
    %c145 = arith.constant 145 : index
    %c0_55 = arith.constant 0 : index
    %72 = vector.load %arg12[%c145, %c0_55] : memref<584x16xf32, #tpu.memory_space<vmem>>, vector<128x16xf32>
    %c146 = arith.constant 146 : index
    %c0_56 = arith.constant 0 : index
    %73 = vector.load %arg12[%c146, %c0_56] : memref<584x16xf32, #tpu.memory_space<vmem>>, vector<128x16xf32>
    %c147 = arith.constant 147 : index
    %c0_57 = arith.constant 0 : index
    %74 = vector.load %arg12[%c147, %c0_57] : memref<584x16xf32, #tpu.memory_space<vmem>>, vector<128x16xf32>
    %c148 = arith.constant 148 : index
    %c0_58 = arith.constant 0 : index
    %75 = vector.load %arg12[%c148, %c0_58] : memref<584x16xf32, #tpu.memory_space<vmem>>, vector<128x16xf32>
    %c160 = arith.constant 160 : index
    %c0_59 = arith.constant 0 : index
    %76 = vector.load %arg12[%c160, %c0_59] : memref<584x16xf32, #tpu.memory_space<vmem>>, vector<128x16xf32>
    %c161 = arith.constant 161 : index
    %c0_60 = arith.constant 0 : index
    %77 = vector.load %arg12[%c161, %c0_60] : memref<584x16xf32, #tpu.memory_space<vmem>>, vector<128x16xf32>
    %c162 = arith.constant 162 : index
    %c0_61 = arith.constant 0 : index
    %78 = vector.load %arg12[%c162, %c0_61] : memref<584x16xf32, #tpu.memory_space<vmem>>, vector<128x16xf32>
    %c163 = arith.constant 163 : index
    %c0_62 = arith.constant 0 : index
    %79 = vector.load %arg12[%c163, %c0_62] : memref<584x16xf32, #tpu.memory_space<vmem>>, vector<128x16xf32>
    %c164 = arith.constant 164 : index
    %c0_63 = arith.constant 0 : index
    %80 = vector.load %arg12[%c164, %c0_63] : memref<584x16xf32, #tpu.memory_space<vmem>>, vector<128x16xf32>
    %c176 = arith.constant 176 : index
    %c0_64 = arith.constant 0 : index
    %81 = vector.load %arg12[%c176, %c0_64] : memref<584x16xf32, #tpu.memory_space<vmem>>, vector<128x16xf32>
    %c177 = arith.constant 177 : index
    %c0_65 = arith.constant 0 : index
    %82 = vector.load %arg12[%c177, %c0_65] : memref<584x16xf32, #tpu.memory_space<vmem>>, vector<128x16xf32>
    %c178 = arith.constant 178 : index
    %c0_66 = arith.constant 0 : index
    %83 = vector.load %arg12[%c178, %c0_66] : memref<584x16xf32, #tpu.memory_space<vmem>>, vector<128x16xf32>
    %c179 = arith.constant 179 : index
    %c0_67 = arith.constant 0 : index
    %84 = vector.load %arg12[%c179, %c0_67] : memref<584x16xf32, #tpu.memory_space<vmem>>, vector<128x16xf32>
    %c180 = arith.constant 180 : index
    %c0_68 = arith.constant 0 : index
    %85 = vector.load %arg12[%c180, %c0_68] : memref<584x16xf32, #tpu.memory_space<vmem>>, vector<128x16xf32>
    %c192 = arith.constant 192 : index
    %c0_69 = arith.constant 0 : index
    %86 = vector.load %arg12[%c192, %c0_69] : memref<584x16xf32, #tpu.memory_space<vmem>>, vector<128x16xf32>
    %c193 = arith.constant 193 : index
    %c0_70 = arith.constant 0 : index
    %87 = vector.load %arg12[%c193, %c0_70] : memref<584x16xf32, #tpu.memory_space<vmem>>, vector<128x16xf32>
    %c194 = arith.constant 194 : index
    %c0_71 = arith.constant 0 : index
    %88 = vector.load %arg12[%c194, %c0_71] : memref<584x16xf32, #tpu.memory_space<vmem>>, vector<128x16xf32>
    %c195 = arith.constant 195 : index
    %c0_72 = arith.constant 0 : index
    %89 = vector.load %arg12[%c195, %c0_72] : memref<584x16xf32, #tpu.memory_space<vmem>>, vector<128x16xf32>
    %c196 = arith.constant 196 : index
    %c0_73 = arith.constant 0 : index
    %90 = vector.load %arg12[%c196, %c0_73] : memref<584x16xf32, #tpu.memory_space<vmem>>, vector<128x16xf32>
    %91 = tpu.concatenate %66, %67, %68, %69, %70, %71, %72, %73, %74, %75, %76, %77, %78, %79, %80, %81 in 1 : vector<128x16xf32>, vector<128x16xf32>, vector<128x16xf32>, vector<128x16xf32>, vector<128x16xf32>, vector<128x16xf32>, vector<128x16xf32>, vector<128x16xf32>, vector<128x16xf32>, vector<128x16xf32>, vector<128x16xf32>, vector<128x16xf32>, vector<128x16xf32>, vector<128x16xf32>, vector<128x16xf32>, vector<128x16xf32> -> vector<128x256xf32>
    %92 = tpu.concatenate %82, %83, %84, %85, %86, %87, %88, %89, %90 in 1 : vector<128x16xf32>, vector<128x16xf32>, vector<128x16xf32>, vector<128x16xf32>, vector<128x16xf32>, vector<128x16xf32>, vector<128x16xf32>, vector<128x16xf32>, vector<128x16xf32> -> vector<128x144xf32>
    %93 = tpu.concatenate %91, %92 in 1 : vector<128x256xf32>, vector<128x144xf32> -> vector<128x400xf32>
    %94 = arith.truncf %93 : vector<128x400xf32> to vector<128x400xbf16>
    %c0_74 = arith.constant 0 : index
    %c0_75 = arith.constant 0 : index
    %95 = vector.load %arg4[%c0_74, %c0_75] : memref<400x32xbf16, #tpu.memory_space<vmem>>, vector<400x32xbf16>
    %cst_76 = arith.constant dense<0.000000e+00> : vector<128x32xf32>
    %96 = tpu.matmul %94, %95, %cst_76 {dimension_numbers = #tpu.dot_dimension_numbers<[1], [0], [0], [1], [0, 0, 1, 1], [], []>} : vector<128x400xbf16>, vector<400x32xbf16>, vector<128x32xf32> -> vector<128x32xf32>
    %c128_77 = arith.constant 128 : index
    %c0_78 = arith.constant 0 : index
    %97 = vector.load %arg13[%c128_77, %c0_78] : memref<512x32xf32, #tpu.memory_space<vmem>>, vector<128x32xf32>
    tpu.vector_store %arg13[%c128_77, %c0_78], %96 {strides = array<i32>} : memref<512x32xf32, #tpu.memory_space<vmem>>, vector<128x32xf32>,
    %c256 = arith.constant 256 : index
    %c0_79 = arith.constant 0 : index
    %98 = vector.load %arg12[%c256, %c0_79] : memref<584x16xf32, #tpu.memory_space<vmem>>, vector<128x16xf32>
    %c257 = arith.constant 257 : index
    %c0_80 = arith.constant 0 : index
    %99 = vector.load %arg12[%c257, %c0_80] : memref<584x16xf32, #tpu.memory_space<vmem>>, vector<128x16xf32>
    %c258 = arith.constant 258 : index
    %c0_81 = arith.constant 0 : index
    %100 = vector.load %arg12[%c258, %c0_81] : memref<584x16xf32, #tpu.memory_space<vmem>>, vector<128x16xf32>
    %c259 = arith.constant 259 : index
    %c0_82 = arith.constant 0 : index
    %101 = vector.load %arg12[%c259, %c0_82] : memref<584x16xf32, #tpu.memory_space<vmem>>, vector<128x16xf32>
    %c260 = arith.constant 260 : index
    %c0_83 = arith.constant 0 : index
    %102 = vector.load %arg12[%c260, %c0_83] : memref<584x16xf32, #tpu.memory_space<vmem>>, vector<128x16xf32>
    %c272 = arith.constant 272 : index
    %c0_84 = arith.constant 0 : index
    %103 = vector.load %arg12[%c272, %c0_84] : memref<584x16xf32, #tpu.memory_space<vmem>>, vector<128x16xf32>
    %c273 = arith.constant 273 : index
    %c0_85 = arith.constant 0 : index
    %104 = vector.load %arg12[%c273, %c0_85] : memref<584x16xf32, #tpu.memory_space<vmem>>, vector<128x16xf32>
    %c274 = arith.constant 274 : index
    %c0_86 = arith.constant 0 : index
    %105 = vector.load %arg12[%c274, %c0_86] : memref<584x16xf32, #tpu.memory_space<vmem>>, vector<128x16xf32>
    %c275 = arith.constant 275 : index
    %c0_87 = arith.constant 0 : index
    %106 = vector.load %arg12[%c275, %c0_87] : memref<584x16xf32, #tpu.memory_space<vmem>>, vector<128x16xf32>
    %c276 = arith.constant 276 : index
    %c0_88 = arith.constant 0 : index
    %107 = vector.load %arg12[%c276, %c0_88] : memref<584x16xf32, #tpu.memory_space<vmem>>, vector<128x16xf32>
    %c288 = arith.constant 288 : index
    %c0_89 = arith.constant 0 : index
    %108 = vector.load %arg12[%c288, %c0_89] : memref<584x16xf32, #tpu.memory_space<vmem>>, vector<128x16xf32>
    %c289 = arith.constant 289 : index
    %c0_90 = arith.constant 0 : index
    %109 = vector.load %arg12[%c289, %c0_90] : memref<584x16xf32, #tpu.memory_space<vmem>>, vector<128x16xf32>
    %c290 = arith.constant 290 : index
    %c0_91 = arith.constant 0 : index
    %110 = vector.load %arg12[%c290, %c0_91] : memref<584x16xf32, #tpu.memory_space<vmem>>, vector<128x16xf32>
    %c291 = arith.constant 291 : index
    %c0_92 = arith.constant 0 : index
    %111 = vector.load %arg12[%c291, %c0_92] : memref<584x16xf32, #tpu.memory_space<vmem>>, vector<128x16xf32>
    %c292 = arith.constant 292 : index
    %c0_93 = arith.constant 0 : index
    %112 = vector.load %arg12[%c292, %c0_93] : memref<584x16xf32, #tpu.memory_space<vmem>>, vector<128x16xf32>
    %c304 = arith.constant 304 : index
    %c0_94 = arith.constant 0 : index
    %113 = vector.load %arg12[%c304, %c0_94] : memref<584x16xf32, #tpu.memory_space<vmem>>, vector<128x16xf32>
    %c305 = arith.constant 305 : index
    %c0_95 = arith.constant 0 : index
    %114 = vector.load %arg12[%c305, %c0_95] : memref<584x16xf32, #tpu.memory_space<vmem>>, vector<128x16xf32>
    %c306 = arith.constant 306 : index
    %c0_96 = arith.constant 0 : index
    %115 = vector.load %arg12[%c306, %c0_96] : memref<584x16xf32, #tpu.memory_space<vmem>>, vector<128x16xf32>
    %c307 = arith.constant 307 : index
    %c0_97 = arith.constant 0 : index
    %116 = vector.load %arg12[%c307, %c0_97] : memref<584x16xf32, #tpu.memory_space<vmem>>, vector<128x16xf32>
    %c308 = arith.constant 308 : index
    %c0_98 = arith.constant 0 : index
    %117 = vector.load %arg12[%c308, %c0_98] : memref<584x16xf32, #tpu.memory_space<vmem>>, vector<128x16xf32>
    %c320 = arith.constant 320 : index
    %c0_99 = arith.constant 0 : index
    %118 = vector.load %arg12[%c320, %c0_99] : memref<584x16xf32, #tpu.memory_space<vmem>>, vector<128x16xf32>
    %c321 = arith.constant 321 : index
    %c0_100 = arith.constant 0 : index
    %119 = vector.load %arg12[%c321, %c0_100] : memref<584x16xf32, #tpu.memory_space<vmem>>, vector<128x16xf32>
    %c322 = arith.constant 322 : index
    %c0_101 = arith.constant 0 : index
    %120 = vector.load %arg12[%c322, %c0_101] : memref<584x16xf32, #tpu.memory_space<vmem>>, vector<128x16xf32>
    %c323 = arith.constant 323 : index
    %c0_102 = arith.constant 0 : index
    %121 = vector.load %arg12[%c323, %c0_102] : memref<584x16xf32, #tpu.memory_space<vmem>>, vector<128x16xf32>
    %c324 = arith.constant 324 : index
    %c0_103 = arith.constant 0 : index
    %122 = vector.load %arg12[%c324, %c0_103] : memref<584x16xf32, #tpu.memory_space<vmem>>, vector<128x16xf32>
    %123 = tpu.concatenate %98, %99, %100, %101, %102, %103, %104, %105, %106, %107, %108, %109, %110, %111, %112, %113 in 1 : vector<128x16xf32>, vector<128x16xf32>, vector<128x16xf32>, vector<128x16xf32>, vector<128x16xf32>, vector<128x16xf32>, vector<128x16xf32>, vector<128x16xf32>, vector<128x16xf32>, vector<128x16xf32>, vector<128x16xf32>, vector<128x16xf32>, vector<128x16xf32>, vector<128x16xf32>, vector<128x16xf32>, vector<128x16xf32> -> vector<128x256xf32>
    %124 = tpu.concatenate %114, %115, %116, %117, %118, %119, %120, %121, %122 in 1 : vector<128x16xf32>, vector<128x16xf32>, vector<128x16xf32>, vector<128x16xf32>, vector<128x16xf32>, vector<128x16xf32>, vector<128x16xf32>, vector<128x16xf32>, vector<128x16xf32> -> vector<128x144xf32>
    %125 = tpu.concatenate %123, %124 in 1 : vector<128x256xf32>, vector<128x144xf32> -> vector<128x400xf32>
    %126 = arith.truncf %125 : vector<128x400xf32> to vector<128x400xbf16>
    %c0_104 = arith.constant 0 : index
    %c0_105 = arith.constant 0 : index
    %127 = vector.load %arg4[%c0_104, %c0_105] : memref<400x32xbf16, #tpu.memory_space<vmem>>, vector<400x32xbf16>
    %cst_106 = arith.constant dense<0.000000e+00> : vector<128x32xf32>
    %128 = tpu.matmul %126, %127, %cst_106 {dimension_numbers = #tpu.dot_dimension_numbers<[1], [0], [0], [1], [0, 0, 1, 1], [], []>} : vector<128x400xbf16>, vector<400x32xbf16>, vector<128x32xf32> -> vector<128x32xf32>
    %c256_107 = arith.constant 256 : index
    %c0_108 = arith.constant 0 : index
    %129 = vector.load %arg13[%c256_107, %c0_108] : memref<512x32xf32, #tpu.memory_space<vmem>>, vector<128x32xf32>
    tpu.vector_store %arg13[%c256_107, %c0_108], %128 {strides = array<i32>} : memref<512x32xf32, #tpu.memory_space<vmem>>, vector<128x32xf32>,
    %c384 = arith.constant 384 : index
    %c0_109 = arith.constant 0 : index
    %130 = vector.load %arg12[%c384, %c0_109] : memref<584x16xf32, #tpu.memory_space<vmem>>, vector<128x16xf32>
    %c385 = arith.constant 385 : index
    %c0_110 = arith.constant 0 : index
    %131 = vector.load %arg12[%c385, %c0_110] : memref<584x16xf32, #tpu.memory_space<vmem>>, vector<128x16xf32>
    %c386 = arith.constant 386 : index
    %c0_111 = arith.constant 0 : index
    %132 = vector.load %arg12[%c386, %c0_111] : memref<584x16xf32, #tpu.memory_space<vmem>>, vector<128x16xf32>
    %c387 = arith.constant 387 : index
    %c0_112 = arith.constant 0 : index
    %133 = vector.load %arg12[%c387, %c0_112] : memref<584x16xf32, #tpu.memory_space<vmem>>, vector<128x16xf32>
    %c388 = arith.constant 388 : index
    %c0_113 = arith.constant 0 : index
    %134 = vector.load %arg12[%c388, %c0_113] : memref<584x16xf32, #tpu.memory_space<vmem>>, vector<128x16xf32>
    %c400 = arith.constant 400 : index
    %c0_114 = arith.constant 0 : index
    %135 = vector.load %arg12[%c400, %c0_114] : memref<584x16xf32, #tpu.memory_space<vmem>>, vector<128x16xf32>
    %c401 = arith.constant 401 : index
    %c0_115 = arith.constant 0 : index
    %136 = vector.load %arg12[%c401, %c0_115] : memref<584x16xf32, #tpu.memory_space<vmem>>, vector<128x16xf32>
    %c402 = arith.constant 402 : index
    %c0_116 = arith.constant 0 : index
    %137 = vector.load %arg12[%c402, %c0_116] : memref<584x16xf32, #tpu.memory_space<vmem>>, vector<128x16xf32>
    %c403 = arith.constant 403 : index
    %c0_117 = arith.constant 0 : index
    %138 = vector.load %arg12[%c403, %c0_117] : memref<584x16xf32, #tpu.memory_space<vmem>>, vector<128x16xf32>
    %c404 = arith.constant 404 : index
    %c0_118 = arith.constant 0 : index
    %139 = vector.load %arg12[%c404, %c0_118] : memref<584x16xf32, #tpu.memory_space<vmem>>, vector<128x16xf32>
    %c416 = arith.constant 416 : index
    %c0_119 = arith.constant 0 : index
    %140 = vector.load %arg12[%c416, %c0_119] : memref<584x16xf32, #tpu.memory_space<vmem>>, vector<128x16xf32>
    %c417 = arith.constant 417 : index
    %c0_120 = arith.constant 0 : index
    %141 = vector.load %arg12[%c417, %c0_120] : memref<584x16xf32, #tpu.memory_space<vmem>>, vector<128x16xf32>
    %c418 = arith.constant 418 : index
    %c0_121 = arith.constant 0 : index
    %142 = vector.load %arg12[%c418, %c0_121] : memref<584x16xf32, #tpu.memory_space<vmem>>, vector<128x16xf32>
    %c419 = arith.constant 419 : index
    %c0_122 = arith.constant 0 : index
    %143 = vector.load %arg12[%c419, %c0_122] : memref<584x16xf32, #tpu.memory_space<vmem>>, vector<128x16xf32>
    %c420 = arith.constant 420 : index
    %c0_123 = arith.constant 0 : index
    %144 = vector.load %arg12[%c420, %c0_123] : memref<584x16xf32, #tpu.memory_space<vmem>>, vector<128x16xf32>
    %c432 = arith.constant 432 : index
    %c0_124 = arith.constant 0 : index
    %145 = vector.load %arg12[%c432, %c0_124] : memref<584x16xf32, #tpu.memory_space<vmem>>, vector<128x16xf32>
    %c433 = arith.constant 433 : index
    %c0_125 = arith.constant 0 : index
    %146 = vector.load %arg12[%c433, %c0_125] : memref<584x16xf32, #tpu.memory_space<vmem>>, vector<128x16xf32>
    %c434 = arith.constant 434 : index
    %c0_126 = arith.constant 0 : index
    %147 = vector.load %arg12[%c434, %c0_126] : memref<584x16xf32, #tpu.memory_space<vmem>>, vector<128x16xf32>
    %c435 = arith.constant 435 : index
    %c0_127 = arith.constant 0 : index
    %148 = vector.load %arg12[%c435, %c0_127] : memref<584x16xf32, #tpu.memory_space<vmem>>, vector<128x16xf32>
    %c436 = arith.constant 436 : index
    %c0_128 = arith.constant 0 : index
    %149 = vector.load %arg12[%c436, %c0_128] : memref<584x16xf32, #tpu.memory_space<vmem>>, vector<128x16xf32>
    %c448 = arith.constant 448 : index
    %c0_129 = arith.constant 0 : index
    %150 = vector.load %arg12[%c448, %c0_129] : memref<584x16xf32, #tpu.memory_space<vmem>>, vector<128x16xf32>
    %c449 = arith.constant 449 : index
    %c0_130 = arith.constant 0 : index
    %151 = vector.load %arg12[%c449, %c0_130] : memref<584x16xf32, #tpu.memory_space<vmem>>, vector<128x16xf32>
    %c450 = arith.constant 450 : index
    %c0_131 = arith.constant 0 : index
    %152 = vector.load %arg12[%c450, %c0_131] : memref<584x16xf32, #tpu.memory_space<vmem>>, vector<128x16xf32>
    %c451 = arith.constant 451 : index
    %c0_132 = arith.constant 0 : index
    %153 = vector.load %arg12[%c451, %c0_132] : memref<584x16xf32, #tpu.memory_space<vmem>>, vector<128x16xf32>
    %c452 = arith.constant 452 : index
    %c0_133 = arith.constant 0 : index
    %154 = vector.load %arg12[%c452, %c0_133] : memref<584x16xf32, #tpu.memory_space<vmem>>, vector<128x16xf32>
    %155 = tpu.concatenate %130, %131, %132, %133, %134, %135, %136, %137, %138, %139, %140, %141, %142, %143, %144, %145 in 1 : vector<128x16xf32>, vector<128x16xf32>, vector<128x16xf32>, vector<128x16xf32>, vector<128x16xf32>, vector<128x16xf32>, vector<128x16xf32>, vector<128x16xf32>, vector<128x16xf32>, vector<128x16xf32>, vector<128x16xf32>, vector<128x16xf32>, vector<128x16xf32>, vector<128x16xf32>, vector<128x16xf32>, vector<128x16xf32> -> vector<128x256xf32>
    %156 = tpu.concatenate %146, %147, %148, %149, %150, %151, %152, %153, %154 in 1 : vector<128x16xf32>, vector<128x16xf32>, vector<128x16xf32>, vector<128x16xf32>, vector<128x16xf32>, vector<128x16xf32>, vector<128x16xf32>, vector<128x16xf32>, vector<128x16xf32> -> vector<128x144xf32>
    %157 = tpu.concatenate %155, %156 in 1 : vector<128x256xf32>, vector<128x144xf32> -> vector<128x400xf32>
    %158 = arith.truncf %157 : vector<128x400xf32> to vector<128x400xbf16>
    %c0_134 = arith.constant 0 : index
    %c0_135 = arith.constant 0 : index
    %159 = vector.load %arg4[%c0_134, %c0_135] : memref<400x32xbf16, #tpu.memory_space<vmem>>, vector<400x32xbf16>
    %cst_136 = arith.constant dense<0.000000e+00> : vector<128x32xf32>
    %160 = tpu.matmul %158, %159, %cst_136 {dimension_numbers = #tpu.dot_dimension_numbers<[1], [0], [0], [1], [0, 0, 1, 1], [], []>} : vector<128x400xbf16>, vector<400x32xbf16>, vector<128x32xf32> -> vector<128x32xf32>
    %c384_137 = arith.constant 384 : index
    %c0_138 = arith.constant 0 : index
    %161 = vector.load %arg13[%c384_137, %c0_138] : memref<512x32xf32, #tpu.memory_space<vmem>>, vector<128x32xf32>
    tpu.vector_store %arg13[%c384_137, %c0_138], %160 {strides = array<i32>} : memref<512x32xf32, #tpu.memory_space<vmem>>, vector<128x32xf32>,
    %c0_139 = arith.constant 0 : index
    %c0_140 = arith.constant 0 : index
    %162 = tpu.strided_load %arg13[%c0_139, %c0_140] {strides = array<i32: 2, 1>} : memref<512x32xf32, #tpu.memory_space<vmem>>, vector<6x32xf32>
    %c32_141 = arith.constant 32 : index
    %c0_142 = arith.constant 0 : index
    %163 = tpu.strided_load %arg13[%c32_141, %c0_142] {strides = array<i32: 2, 1>} : memref<512x32xf32, #tpu.memory_space<vmem>>, vector<6x32xf32>
    %c64_143 = arith.constant 64 : index
    %c0_144 = arith.constant 0 : index
    %164 = tpu.strided_load %arg13[%c64_143, %c0_144] {strides = array<i32: 2, 1>} : memref<512x32xf32, #tpu.memory_space<vmem>>, vector<6x32xf32>
    %c96 = arith.constant 96 : index
    %c0_145 = arith.constant 0 : index
    %165 = tpu.strided_load %arg13[%c96, %c0_145] {strides = array<i32: 2, 1>} : memref<512x32xf32, #tpu.memory_space<vmem>>, vector<6x32xf32>
    %c128_146 = arith.constant 128 : index
    %c0_147 = arith.constant 0 : index
    %166 = tpu.strided_load %arg13[%c128_146, %c0_147] {strides = array<i32: 2, 1>} : memref<512x32xf32, #tpu.memory_space<vmem>>, vector<6x32xf32>
    %c160_148 = arith.constant 160 : index
    %c0_149 = arith.constant 0 : index
    %167 = tpu.strided_load %arg13[%c160_148, %c0_149] {strides = array<i32: 2, 1>} : memref<512x32xf32, #tpu.memory_space<vmem>>, vector<6x32xf32>
    %c256_150 = arith.constant 256 : index
    %c0_151 = arith.constant 0 : index
    %168 = tpu.strided_load %arg13[%c256_150, %c0_151] {strides = array<i32: 2, 1>} : memref<512x32xf32, #tpu.memory_space<vmem>>, vector<6x32xf32>
    %c288_152 = arith.constant 288 : index
    %c0_153 = arith.constant 0 : index
    %169 = tpu.strided_load %arg13[%c288_152, %c0_153] {strides = array<i32: 2, 1>} : memref<512x32xf32, #tpu.memory_space<vmem>>, vector<6x32xf32>
    %c320_154 = arith.constant 320 : index
    %c0_155 = arith.constant 0 : index
    %170 = tpu.strided_load %arg13[%c320_154, %c0_155] {strides = array<i32: 2, 1>} : memref<512x32xf32, #tpu.memory_space<vmem>>, vector<6x32xf32>
    %c352 = arith.constant 352 : index
    %c0_156 = arith.constant 0 : index
    %171 = tpu.strided_load %arg13[%c352, %c0_156] {strides = array<i32: 2, 1>} : memref<512x32xf32, #tpu.memory_space<vmem>>, vector<6x32xf32>
    %c384_157 = arith.constant 384 : index
    %c0_158 = arith.constant 0 : index
    %172 = tpu.strided_load %arg13[%c384_157, %c0_158] {strides = array<i32: 2, 1>} : memref<512x32xf32, #tpu.memory_space<vmem>>, vector<6x32xf32>
    %c416_159 = arith.constant 416 : index
    %c0_160 = arith.constant 0 : index
    %173 = tpu.strided_load %arg13[%c416_159, %c0_160] {strides = array<i32: 2, 1>} : memref<512x32xf32, #tpu.memory_space<vmem>>, vector<6x32xf32>
    %174 = tpu.concatenate %162, %163, %164, %165, %166, %167, %168, %169, %170, %171, %172, %173 in 0 : vector<6x32xf32>, vector<6x32xf32>, vector<6x32xf32>, vector<6x32xf32>, vector<6x32xf32>, vector<6x32xf32>, vector<6x32xf32>, vector<6x32xf32>, vector<6x32xf32>, vector<6x32xf32>, vector<6x32xf32>, vector<6x32xf32> -> vector<72x32xf32>
    %cst_161 = arith.constant dense<0.000000e+00> : vector<32xf32>
    %175 = vector.multi_reduction <add>, %174, %cst_161 [0] : vector<72x32xf32> to vector<32xf32>
    %176 = vector.shape_cast %175 : vector<32xf32> to vector<1x32xf32>
    %cst_162 = arith.constant 0.013888889 : f32
    %177 = vector.broadcast %cst_162 : f32 to vector<1x32xf32>
    %178 = arith.mulf %176, %177 : vector<1x32xf32>
    %179 = vector.broadcast %178 : vector<1x32xf32> to vector<72x32xf32>
    %180 = arith.subf %174, %179 : vector<72x32xf32>
    %181 = arith.mulf %180, %180 : vector<72x32xf32>
    %cst_163 = arith.constant dense<0.000000e+00> : vector<32xf32>
    %182 = vector.multi_reduction <add>, %181, %cst_163 [0] : vector<72x32xf32> to vector<32xf32>
    %183 = vector.shape_cast %182 : vector<32xf32> to vector<1x32xf32>
    %cst_164 = arith.constant 0.013888889 : f32
    %184 = vector.broadcast %cst_164 : f32 to vector<1x32xf32>
    %185 = arith.mulf %183, %184 : vector<1x32xf32>
    %c0_165 = arith.constant 0 : index
    %c0_166 = arith.constant 0 : index
    %186 = vector.load %arg5[%c0_165, %c0_166] : memref<1x32xf32, #tpu.memory_space<vmem>>, vector<1x32xf32>
    %cst_167 = arith.constant 9.99999974E-6 : f32
    %187 = vector.broadcast %cst_167 : f32 to vector<1x32xf32>
    %188 = arith.addf %185, %187 : vector<1x32xf32>
    %189 = math.rsqrt %188 : vector<1x32xf32>
    %190 = arith.mulf %186, %189 : vector<1x32xf32>
    %c0_168 = arith.constant 0 : index
    %c0_169 = arith.constant 0 : index
    %191 = vector.load %arg6[%c0_168, %c0_169] : memref<1x32xf32, #tpu.memory_space<vmem>>, vector<1x32xf32>
    %192 = arith.mulf %178, %190 : vector<1x32xf32>
    %193 = arith.subf %191, %192 : vector<1x32xf32>
    %194 = vector.broadcast %190 : vector<1x32xf32> to vector<72x32xf32>
    %195 = arith.mulf %174, %194 : vector<72x32xf32>
    %196 = vector.broadcast %193 : vector<1x32xf32> to vector<72x32xf32>
    %197 = arith.addf %195, %196 : vector<72x32xf32>
    %cst_170 = arith.constant 0.000000e+00 : f32
    %198 = vector.broadcast %cst_170 : f32 to vector<72x32xf32>
    %199 = arith.cmpf ogt, %197, %198 : vector<72x32xf32>
    %cst_171 = arith.constant 0.00999999977 : f32
    %200 = vector.broadcast %cst_171 : f32 to vector<72x32xf32>
    %201 = arith.mulf %200, %197 : vector<72x32xf32>
    %202 = arith.select %199, %197, %201 : vector<72x32xi1>, vector<72x32xf32>
    %203 = vector.extract_strided_slice %202 {offsets = [0, 0], sizes = [3, 32], strides = [1, 1]} : vector<72x32xf32> to vector<3x32xf32>
    %cst_172 = arith.constant dense<0xFF800000> : vector<32xf32>
    %204 = vector.multi_reduction <maximumf>, %203, %cst_172 [0] : vector<3x32xf32> to vector<32xf32>
    %205 = vector.shape_cast %204 : vector<32xf32> to vector<1x32xf32>
    %206 = vector.extract_strided_slice %202 {offsets = [6, 0], sizes = [3, 32], strides = [1, 1]} : vector<72x32xf32> to vector<3x32xf32>
    %cst_173 = arith.constant dense<0xFF800000> : vector<32xf32>
    %207 = vector.multi_reduction <maximumf>, %206, %cst_173 [0] : vector<3x32xf32> to vector<32xf32>
    %208 = vector.shape_cast %207 : vector<32xf32> to vector<1x32xf32>
    %209 = arith.maximumf %205, %208 : vector<1x32xf32>
    %210 = vector.extract_strided_slice %202 {offsets = [12, 0], sizes = [3, 32], strides = [1, 1]} : vector<72x32xf32> to vector<3x32xf32>
    %cst_174 = arith.constant dense<0xFF800000> : vector<32xf32>
    %211 = vector.multi_reduction <maximumf>, %210, %cst_174 [0] : vector<3x32xf32> to vector<32xf32>
    %212 = vector.shape_cast %211 : vector<32xf32> to vector<1x32xf32>
    %213 = arith.maximumf %209, %212 : vector<1x32xf32>
    %214 = vector.extract_strided_slice %202 {offsets = [3, 0], sizes = [3, 32], strides = [1, 1]} : vector<72x32xf32> to vector<3x32xf32>
    %cst_175 = arith.constant dense<0xFF800000> : vector<32xf32>
    %215 = vector.multi_reduction <maximumf>, %214, %cst_175 [0] : vector<3x32xf32> to vector<32xf32>
    %216 = vector.shape_cast %215 : vector<32xf32> to vector<1x32xf32>
    %217 = vector.extract_strided_slice %202 {offsets = [9, 0], sizes = [3, 32], strides = [1, 1]} : vector<72x32xf32> to vector<3x32xf32>
    %cst_176 = arith.constant dense<0xFF800000> : vector<32xf32>
    %218 = vector.multi_reduction <maximumf>, %217, %cst_176 [0] : vector<3x32xf32> to vector<32xf32>
    %219 = vector.shape_cast %218 : vector<32xf32> to vector<1x32xf32>
    %220 = arith.maximumf %216, %219 : vector<1x32xf32>
    %221 = vector.extract_strided_slice %202 {offsets = [15, 0], sizes = [3, 32], strides = [1, 1]} : vector<72x32xf32> to vector<3x32xf32>
    %cst_177 = arith.constant dense<0xFF800000> : vector<32xf32>
    %222 = vector.multi_reduction <maximumf>, %221, %cst_177 [0] : vector<3x32xf32> to vector<32xf32>
    %223 = vector.shape_cast %222 : vector<32xf32> to vector<1x32xf32>
    %224 = arith.maximumf %220, %223 : vector<1x32xf32>
    %225 = vector.extract_strided_slice %202 {offsets = [18, 0], sizes = [3, 32], strides = [1, 1]} : vector<72x32xf32> to vector<3x32xf32>
    %cst_178 = arith.constant dense<0xFF800000> : vector<32xf32>
    %226 = vector.multi_reduction <maximumf>, %225, %cst_178 [0] : vector<3x32xf32> to vector<32xf32>
    %227 = vector.shape_cast %226 : vector<32xf32> to vector<1x32xf32>
    %228 = vector.extract_strided_slice %202 {offsets = [24, 0], sizes = [3, 32], strides = [1, 1]} : vector<72x32xf32> to vector<3x32xf32>
    %cst_179 = arith.constant dense<0xFF800000> : vector<32xf32>
    %229 = vector.multi_reduction <maximumf>, %228, %cst_179 [0] : vector<3x32xf32> to vector<32xf32>
    %230 = vector.shape_cast %229 : vector<32xf32> to vector<1x32xf32>
    %231 = arith.maximumf %227, %230 : vector<1x32xf32>
    %232 = vector.extract_strided_slice %202 {offsets = [30, 0], sizes = [3, 32], strides = [1, 1]} : vector<72x32xf32> to vector<3x32xf32>
    %cst_180 = arith.constant dense<0xFF800000> : vector<32xf32>
    %233 = vector.multi_reduction <maximumf>, %232, %cst_180 [0] : vector<3x32xf32> to vector<32xf32>
    %234 = vector.shape_cast %233 : vector<32xf32> to vector<1x32xf32>
    %235 = arith.maximumf %231, %234 : vector<1x32xf32>
    %236 = vector.extract_strided_slice %202 {offsets = [21, 0], sizes = [3, 32], strides = [1, 1]} : vector<72x32xf32> to vector<3x32xf32>
    %cst_181 = arith.constant dense<0xFF800000> : vector<32xf32>
    %237 = vector.multi_reduction <maximumf>, %236, %cst_181 [0] : vector<3x32xf32> to vector<32xf32>
    %238 = vector.shape_cast %237 : vector<32xf32> to vector<1x32xf32>
    %239 = vector.extract_strided_slice %202 {offsets = [27, 0], sizes = [3, 32], strides = [1, 1]} : vector<72x32xf32> to vector<3x32xf32>
    %cst_182 = arith.constant dense<0xFF800000> : vector<32xf32>
    %240 = vector.multi_reduction <maximumf>, %239, %cst_182 [0] : vector<3x32xf32> to vector<32xf32>
    %241 = vector.shape_cast %240 : vector<32xf32> to vector<1x32xf32>
    %242 = arith.maximumf %238, %241 : vector<1x32xf32>
    %243 = vector.extract_strided_slice %202 {offsets = [33, 0], sizes = [3, 32], strides = [1, 1]} : vector<72x32xf32> to vector<3x32xf32>
    %cst_183 = arith.constant dense<0xFF800000> : vector<32xf32>
    %244 = vector.multi_reduction <maximumf>, %243, %cst_183 [0] : vector<3x32xf32> to vector<32xf32>
    %245 = vector.shape_cast %244 : vector<32xf32> to vector<1x32xf32>
    %246 = arith.maximumf %242, %245 : vector<1x32xf32>
    %247 = tpu.concatenate %213, %224, %235, %246 in 1 : vector<1x32xf32>, vector<1x32xf32>, vector<1x32xf32>, vector<1x32xf32> -> vector<1x128xf32>
    %248 = vector.extract_strided_slice %202 {offsets = [36, 0], sizes = [3, 32], strides = [1, 1]} : vector<72x32xf32> to vector<3x32xf32>
    %cst_184 = arith.constant dense<0xFF800000> : vector<32xf32>
    %249 = vector.multi_reduction <maximumf>, %248, %cst_184 [0] : vector<3x32xf32> to vector<32xf32>
    %250 = vector.shape_cast %249 : vector<32xf32> to vector<1x32xf32>
    %251 = vector.extract_strided_slice %202 {offsets = [42, 0], sizes = [3, 32], strides = [1, 1]} : vector<72x32xf32> to vector<3x32xf32>
    %cst_185 = arith.constant dense<0xFF800000> : vector<32xf32>
    %252 = vector.multi_reduction <maximumf>, %251, %cst_185 [0] : vector<3x32xf32> to vector<32xf32>
    %253 = vector.shape_cast %252 : vector<32xf32> to vector<1x32xf32>
    %254 = arith.maximumf %250, %253 : vector<1x32xf32>
    %255 = vector.extract_strided_slice %202 {offsets = [48, 0], sizes = [3, 32], strides = [1, 1]} : vector<72x32xf32> to vector<3x32xf32>
    %cst_186 = arith.constant dense<0xFF800000> : vector<32xf32>
    %256 = vector.multi_reduction <maximumf>, %255, %cst_186 [0] : vector<3x32xf32> to vector<32xf32>
    %257 = vector.shape_cast %256 : vector<32xf32> to vector<1x32xf32>
    %258 = arith.maximumf %254, %257 : vector<1x32xf32>
    %259 = vector.extract_strided_slice %202 {offsets = [39, 0], sizes = [3, 32], strides = [1, 1]} : vector<72x32xf32> to vector<3x32xf32>
    %cst_187 = arith.constant dense<0xFF800000> : vector<32xf32>
    %260 = vector.multi_reduction <maximumf>, %259, %cst_187 [0] : vector<3x32xf32> to vector<32xf32>
    %261 = vector.shape_cast %260 : vector<32xf32> to vector<1x32xf32>
    %262 = vector.extract_strided_slice %202 {offsets = [45, 0], sizes = [3, 32], strides = [1, 1]} : vector<72x32xf32> to vector<3x32xf32>
    %cst_188 = arith.constant dense<0xFF800000> : vector<32xf32>
    %263 = vector.multi_reduction <maximumf>, %262, %cst_188 [0] : vector<3x32xf32> to vector<32xf32>
    %264 = vector.shape_cast %263 : vector<32xf32> to vector<1x32xf32>
    %265 = arith.maximumf %261, %264 : vector<1x32xf32>
    %266 = vector.extract_strided_slice %202 {offsets = [51, 0], sizes = [3, 32], strides = [1, 1]} : vector<72x32xf32> to vector<3x32xf32>
    %cst_189 = arith.constant dense<0xFF800000> : vector<32xf32>
    %267 = vector.multi_reduction <maximumf>, %266, %cst_189 [0] : vector<3x32xf32> to vector<32xf32>
    %268 = vector.shape_cast %267 : vector<32xf32> to vector<1x32xf32>
    %269 = arith.maximumf %265, %268 : vector<1x32xf32>
    %270 = vector.extract_strided_slice %202 {offsets = [54, 0], sizes = [3, 32], strides = [1, 1]} : vector<72x32xf32> to vector<3x32xf32>
    %cst_190 = arith.constant dense<0xFF800000> : vector<32xf32>
    %271 = vector.multi_reduction <maximumf>, %270, %cst_190 [0] : vector<3x32xf32> to vector<32xf32>
    %272 = vector.shape_cast %271 : vector<32xf32> to vector<1x32xf32>
    %273 = vector.extract_strided_slice %202 {offsets = [60, 0], sizes = [3, 32], strides = [1, 1]} : vector<72x32xf32> to vector<3x32xf32>
    %cst_191 = arith.constant dense<0xFF800000> : vector<32xf32>
    %274 = vector.multi_reduction <maximumf>, %273, %cst_191 [0] : vector<3x32xf32> to vector<32xf32>
    %275 = vector.shape_cast %274 : vector<32xf32> to vector<1x32xf32>
    %276 = arith.maximumf %272, %275 : vector<1x32xf32>
    %277 = vector.extract_strided_slice %202 {offsets = [66, 0], sizes = [3, 32], strides = [1, 1]} : vector<72x32xf32> to vector<3x32xf32>
    %cst_192 = arith.constant dense<0xFF800000> : vector<32xf32>
    %278 = vector.multi_reduction <maximumf>, %277, %cst_192 [0] : vector<3x32xf32> to vector<32xf32>
    %279 = vector.shape_cast %278 : vector<32xf32> to vector<1x32xf32>
    %280 = arith.maximumf %276, %279 : vector<1x32xf32>
    %281 = vector.extract_strided_slice %202 {offsets = [57, 0], sizes = [3, 32], strides = [1, 1]} : vector<72x32xf32> to vector<3x32xf32>
    %cst_193 = arith.constant dense<0xFF800000> : vector<32xf32>
    %282 = vector.multi_reduction <maximumf>, %281, %cst_193 [0] : vector<3x32xf32> to vector<32xf32>
    %283 = vector.shape_cast %282 : vector<32xf32> to vector<1x32xf32>
    %284 = vector.extract_strided_slice %202 {offsets = [63, 0], sizes = [3, 32], strides = [1, 1]} : vector<72x32xf32> to vector<3x32xf32>
    %cst_194 = arith.constant dense<0xFF800000> : vector<32xf32>
    %285 = vector.multi_reduction <maximumf>, %284, %cst_194 [0] : vector<3x32xf32> to vector<32xf32>
    %286 = vector.shape_cast %285 : vector<32xf32> to vector<1x32xf32>
    %287 = arith.maximumf %283, %286 : vector<1x32xf32>
    %288 = vector.extract_strided_slice %202 {offsets = [69, 0], sizes = [3, 32], strides = [1, 1]} : vector<72x32xf32> to vector<3x32xf32>
    %cst_195 = arith.constant dense<0xFF800000> : vector<32xf32>
    %289 = vector.multi_reduction <maximumf>, %288, %cst_195 [0] : vector<3x32xf32> to vector<32xf32>
    %290 = vector.shape_cast %289 : vector<32xf32> to vector<1x32xf32>
    %291 = arith.maximumf %287, %290 : vector<1x32xf32>
    %292 = tpu.concatenate %258, %269, %280, %291 in 1 : vector<1x32xf32>, vector<1x32xf32>, vector<1x32xf32>, vector<1x32xf32> -> vector<1x128xf32>
    %293 = tpu.concatenate %247, %292 in 0 : vector<1x128xf32>, vector<1x128xf32> -> vector<2x128xf32>
    %c0_196 = arith.constant 0 : index
    %c0_197 = arith.constant 0 : index
    %294 = vector.load %arg7[%c0_196, %c0_197] : memref<128x32xf32, #tpu.memory_space<vmem>>, vector<128x32xf32>
    %cst_198 = arith.constant dense<0.000000e+00> : vector<2x32xf32>
    %295 = tpu.matmul %293, %294, %cst_198 {dimension_numbers = #tpu.dot_dimension_numbers<[1], [0], [0], [1], [0, 0, 1, 1], [], []>} : vector<2x128xf32>, vector<128x32xf32>, vector<2x32xf32> -> vector<2x32xf32>
    %c0_199 = arith.constant 0 : index
    %c0_200 = arith.constant 0 : index
    %296 = vector.load %arg8[%c0_199, %c0_200] : memref<1x32xf32, #tpu.memory_space<vmem>>, vector<1x32xf32>
    %297 = vector.broadcast %296 : vector<1x32xf32> to vector<2x32xf32>
    %298 = arith.addf %295, %297 : vector<2x32xf32>
    %cst_201 = arith.constant 0.000000e+00 : f32
    %299 = vector.broadcast %cst_201 : f32 to vector<2x32xf32>
    %300 = arith.cmpf ogt, %298, %299 : vector<2x32xf32>
    %cst_202 = arith.constant 0.00999999977 : f32
    %301 = vector.broadcast %cst_202 : f32 to vector<2x32xf32>
    %302 = arith.mulf %301, %298 : vector<2x32xf32>
    %303 = arith.select %300, %298, %302 : vector<2x32xi1>, vector<2x32xf32>
    %c0_203 = arith.constant 0 : index
    %c0_204 = arith.constant 0 : index
    %304 = vector.load %arg9[%c0_203, %c0_204] : memref<32x6xf32, #tpu.memory_space<vmem>>, vector<32x6xf32>
    %cst_205 = arith.constant dense<0.000000e+00> : vector<2x6xf32>
    %305 = tpu.matmul %303, %304, %cst_205 {dimension_numbers = #tpu.dot_dimension_numbers<[1], [0], [0], [1], [0, 0, 1, 1], [], []>} : vector<2x32xf32>, vector<32x6xf32>, vector<2x6xf32> -> vector<2x6xf32>
    %c0_206 = arith.constant 0 : index
    %c0_207 = arith.constant 0 : index
    %306 = vector.load %arg10[%c0_206, %c0_207] : memref<1x6xf32, #tpu.memory_space<vmem>>, vector<1x6xf32>
    %307 = vector.broadcast %306 : vector<1x6xf32> to vector<2x6xf32>
    %308 = arith.addf %305, %307 : vector<2x6xf32>
    %c0_208 = arith.constant 0 : index
    %c0_209 = arith.constant 0 : index
    %309 = vector.load %arg11[%c0_208, %c0_209] : memref<2x6xf32, #tpu.memory_space<vmem>>, vector<2x6xf32>
    tpu.vector_store %arg11[%c0_208, %c0_209], %308 {strides = array<i32>} : memref<2x6xf32, #tpu.memory_space<vmem>>, vector<2x6xf32>,
    return
  }
}

</mosaic_0001>

<llo_original>
// kernel: dqn_forward.1
$region0: #{dqn_forward.1}
  #allocation0 [shape = 'u32[]', space=smem, size = 0x4, offset = 0x4, fixed_abs, tag = 'smem constant byte address 0x4 - core index']
  #allocation1 [shape = 'u32[144,128]{1,0:T(1,128)}', space=vmem, size = 0x12000, scoped, tag = 'internal scratch']
  #allocation2 [shape = 'f32[584,16]{1,0:T(8,128)}', space=vmem, size = 0x49000, scoped, tag = 'scratch operand']
  #allocation3 [shape = 'f32[512,32]{1,0:T(8,128)}', space=vmem, size = 0x40000, scoped, tag = 'scratch operand']
  %s0 = inlined_call_operand.vmem [shape: bf16[512,100], index: 0, kind: input, shape index: {}]
  %s1 = inlined_call_operand.vmem [shape: bf16[100,16], index: 1, kind: input, shape index: {}]
  %s2 = inlined_call_operand.vmem [shape: f32[1,16], index: 2, kind: input, shape index: {}]
  %s3 = inlined_call_operand.vmem [shape: f32[1,16], index: 3, kind: input, shape index: {}]
  %s4 = inlined_call_operand.vmem [shape: bf16[400,32], index: 4, kind: input, shape index: {}]
  %s5 = inlined_call_operand.vmem [shape: f32[1,32], index: 5, kind: input, shape index: {}]
  %s6 = inlined_call_operand.vmem [shape: f32[1,32], index: 6, kind: input, shape index: {}]
  %s7 = inlined_call_operand.vmem [shape: f32[128,32], index: 7, kind: input, shape index: {}]
  %s8 = inlined_call_operand.vmem [shape: f32[1,32], index: 8, kind: input, shape index: {}]
  %s9 = inlined_call_operand.vmem [shape: f32[32,6], index: 9, kind: input, shape index: {}]
  %s10 = inlined_call_operand.vmem [shape: f32[1,6], index: 10, kind: input, shape index: {}]
  %s11 = inlined_call_operand.hbm [shape: f32[2,6], index: 11, kind: output, shape index: {}]
  %s12 = sld [smem:[#allocation0]]
  $region54: #{dqn_forward.1} parent=0
    _
  %s14 = ssub.s32 1, %s12
  %s15 = scalar_select 0, %s14, %s12
  $region1: #{dqn_forward.1} parent=0
    #allocation4 [shape = 'u8[1024]{0}', space=vmem, size = 0x400, scoped, tag = 'output window, operand 0, single buffered']
    #allocation5 [shape = 's32[1]{0}', space=sflag, size = 0x4, scoped, tag = 'scoped memory for dqn_forward.1']
    %16 = vsyncpa [#allocation5], 0
    // Predicated region
    $region2: #{dqn_forward.1} parent=1 // pred_check
      _
    $region3: #{dqn_forward.1} parent=1 // pred_check_branch
      %18 = sbr.rel (0) target = $region5
    $region4: #{dqn_forward.1} parent=1 // pred_region
      _
    $region5: #{dqn_forward.1} parent=1 // pred_fallthru
      _
    // Predicated region
    $region6: #{dqn_forward.1} parent=1 // pred_check
      _
    $region7: #{dqn_forward.1} parent=1 // pred_check_branch
      %20 = sbr.rel (0) target = $region9
    $region8: #{dqn_forward.1} parent=1 // pred_region
      _
    $region9: #{dqn_forward.1} parent=1 // pred_fallthru
      _
    // Predicated region
    $region10: #{dqn_forward.1} parent=1 // pred_check
      _
    $region11: #{dqn_forward.1} parent=1 // pred_check_branch
      %22 = sbr.rel (0) target = $region13
    $region12: #{dqn_forward.1} parent=1 // pred_region
      _
    $region13: #{dqn_forward.1} parent=1 // pred_fallthru
      _
    // Predicated region
    $region14: #{dqn_forward.1} parent=1 // pred_check
      _
    $region15: #{dqn_forward.1} parent=1 // pred_check_branch
      %24 = sbr.rel (0) target = $region17
    $region16: #{dqn_forward.1} parent=1 // pred_region
      _
    $region17: #{dqn_forward.1} parent=1 // pred_fallthru
      _
    // Predicated region
    $region18: #{dqn_forward.1} parent=1 // pred_check
      _
    $region19: #{dqn_forward.1} parent=1 // pred_check_branch
      %26 = sbr.rel (0) target = $region21
    $region20: #{dqn_forward.1} parent=1 // pred_region
      _
    $region21: #{dqn_forward.1} parent=1 // pred_fallthru
      _
    // Predicated region
    $region22: #{dqn_forward.1} parent=1 // pred_check
      _
    $region23: #{dqn_forward.1} parent=1 // pred_check_branch
      %28 = sbr.rel (0) target = $region25
    $region24: #{dqn_forward.1} parent=1 // pred_region
      _
    $region25: #{dqn_forward.1} parent=1 // pred_fallthru
      _
    // Predicated region
    $region26: #{dqn_forward.1} parent=1 // pred_check
      _
    $region27: #{dqn_forward.1} parent=1 // pred_check_branch
      %30 = sbr.rel (0) target = $region29
    $region28: #{dqn_forward.1} parent=1 // pred_region
      _
    $region29: #{dqn_forward.1} parent=1 // pred_fallthru
      _
    // Predicated region
    $region30: #{dqn_forward.1} parent=1 // pred_check
      _
    $region31: #{dqn_forward.1} parent=1 // pred_check_branch
      %32 = sbr.rel (0) target = $region33
    $region32: #{dqn_forward.1} parent=1 // pred_region
      _
    $region33: #{dqn_forward.1} parent=1 // pred_fallthru
      _
    // Predicated region
    $region34: #{dqn_forward.1} parent=1 // pred_check
      _
    $region35: #{dqn_forward.1} parent=1 // pred_check_branch
      %34 = sbr.rel (0) target = $region37
    $region36: #{dqn_forward.1} parent=1 // pred_region
      _
    $region37: #{dqn_forward.1} parent=1 // pred_fallthru
      _
    // Predicated region
    $region38: #{dqn_forward.1} parent=1 // pred_check
      _
    $region39: #{dqn_forward.1} parent=1 // pred_check_branch
      %36 = sbr.rel (0) target = $region41
    $region40: #{dqn_forward.1} parent=1 // pred_region
      _
    $region41: #{dqn_forward.1} parent=1 // pred_fallthru
      _
    // Predicated region
    $region42: #{dqn_forward.1} parent=1 // pred_check
      _
    $region43: #{dqn_forward.1} parent=1 // pred_check_branch
      %38 = sbr.rel (0) target = $region45
    $region44: #{dqn_forward.1} parent=1 // pred_region
      _
    $region45: #{dqn_forward.1} parent=1 // pred_fallthru
      _
    %v40 = vld [vmem:[%s0] sm:$0xf]
    %v41 = vld [vmem:[%s0 + $0x4] sm:$0xf]
    %v42 = vld [vmem:[%s0 + $0x8] sm:$0xf]
    %v43 = vld [vmem:[%s0 + $0xc] sm:$0xf]
    %v44 = vld [vmem:[%s0 + $0x10] sm:$0xf]
    %v45 = vld [vmem:[%s0 + $0x14] sm:$0xf]
    %v46 = vld [vmem:[%s0 + $0x18] sm:$0xf]
    %v47 = vld [vmem:[%s0 + $0x1c] sm:$0xf]
    %v48 = vld [vmem:[%s0 + $0x20] sm:$0xf]
    %v49 = vld [vmem:[%s0 + $0x24] sm:$0xf]
    %v50 = vld [vmem:[%s0 + $0x28] sm:$0xf]
    %v51 = vld [vmem:[%s0 + $0x2c] sm:$0xf]
    %v52 = vld [vmem:[%s0 + $0x30] sm:$0xf]
    %v53 = vld [vmem:[%s0 + $0x34] sm:$0xf]
    %v54 = vld [vmem:[%s0 + $0x38] sm:$0xf]
    %v55 = vld [vmem:[%s0 + $0x3c] sm:$0xf]
    %v56 = vld [vmem:[%s0 + $0x40] sm:$0xf]
    %v57 = vld [vmem:[%s0 + $0x44] sm:$0xf]
    %v58 = vld [vmem:[%s0 + $0x48] sm:$0xf]
    %v59 = vld [vmem:[%s0 + $0x4c] sm:$0xf]
    %v60 = vld [vmem:[%s0 + $0x50] sm:$0xf]
    %v61 = vld [vmem:[%s0 + $0x54] sm:$0xf]
    %v62 = vld [vmem:[%s0 + $0x58] sm:$0xf]
    %v63 = vld [vmem:[%s0 + $0x5c] sm:$0xf]
    %v64 = vld [vmem:[%s0 + $0x60] sm:$0xf]
    %v65 = vld [vmem:[%s0 + $0x64] sm:$0xf]
    %v66 = vld [vmem:[%s0 + $0x68] sm:$0xf]
    %v67 = vld [vmem:[%s0 + $0x6c] sm:$0xf]
    %v68 = vld [vmem:[%s0 + $0x70] sm:$0xf]
    %v69 = vld [vmem:[%s0 + $0x74] sm:$0xf]
    %v70 = vld [vmem:[%s0 + $0x78] sm:$0xf]
    %v71 = vld [vmem:[%s0 + $0x7c] sm:$0xf]
    %v72 = vld [vmem:[%s0 + $0x80] sm:$0xf]
    %v73 = vld [vmem:[%s0 + $0x84] sm:$0xf]
    %v74 = vld [vmem:[%s0 + $0x88] sm:$0xf]
    %v75 = vld [vmem:[%s0 + $0x8c] sm:$0xf]
    %v76 = vld [vmem:[%s0 + $0x90] sm:$0xf]
    %v77 = vld [vmem:[%s0 + $0x94] sm:$0xf]
    %v78 = vld [vmem:[%s0 + $0x98] sm:$0xf]
    %v79 = vld [vmem:[%s0 + $0x9c] sm:$0xf]
    %v80 = vld [vmem:[%s0 + $0xa0] sm:$0xf]
    %v81 = vld [vmem:[%s0 + $0xa4] sm:$0xf]
    %v82 = vld [vmem:[%s0 + $0xa8] sm:$0xf]
    %v83 = vld [vmem:[%s0 + $0xac] sm:$0xf]
    %v84 = vld [vmem:[%s0 + $0xb0] sm:$0xf]
    %v85 = vld [vmem:[%s0 + $0xb4] sm:$0xf]
    %v86 = vld [vmem:[%s0 + $0xb8] sm:$0xf]
    %v87 = vld [vmem:[%s0 + $0xbc] sm:$0xf]
    %v88 = vld [vmem:[%s0 + $0xc0] sm:$0xf]
    %v89 = vld [vmem:[%s0 + $0xc4] sm:$0xf]
    %v90 = vld [vmem:[%s0 + $0xc8] sm:$0xf]
    %v91 = vld [vmem:[%s0 + $0xcc] sm:$0xf]
    %v92 = vld [vmem:[%s0 + $0xd0] sm:$0xf]
    %v93 = vld [vmem:[%s0 + $0xd4] sm:$0xf]
    %v94 = vld [vmem:[%s0 + $0xd8] sm:$0xf]
    %v95 = vld [vmem:[%s0 + $0xdc] sm:$0xf]
    %v96 = vld [vmem:[%s0 + $0xe0] sm:$0xf]
    %v97 = vld [vmem:[%s0 + $0xe4] sm:$0xf]
    %v98 = vld [vmem:[%s0 + $0xe8] sm:$0xf]
    %v99 = vld [vmem:[%s0 + $0xec] sm:$0xf]
    %v100 = vld [vmem:[%s0 + $0xf0] sm:$0xf]
    %v101 = vld [vmem:[%s0 + $0xf4] sm:$0xf]
    %v102 = vld [vmem:[%s0 + $0xf8] sm:$0xf]
    %v103 = vld [vmem:[%s0 + $0xfc] sm:$0xf]
    %v104 = vld [vmem:[%s1] sm:$0xf]
    %v105 = vld [vmem:[%s1 + $0x4] sm:$0xf]
    %v106 = vld [vmem:[%s1 + $0x8] sm:$0xf]
    %v107 = vld [vmem:[%s1 + $0xc] sm:$0xf]
    %v108 = vld [vmem:[%s1 + $0x10] sm:$0xf]
    %v109 = vld [vmem:[%s1 + $0x14] sm:$0xf]
    %v110 = vld [vmem:[%s1 + $0x18] sm:$0xf]
    %v111 = vld [vmem:[%s1 + $0x1c] sm:$0xf]
    %v112 = vld [vmem:[%s1 + $0x20] sm:$0xf]
    %v113 = vld [vmem:[%s1 + $0x24] sm:$0xf]
    %v114 = vld [vmem:[%s1 + $0x28] sm:$0xf]
    %v115 = vld [vmem:[%s1 + $0x2c] sm:$0xf]
    %v116 = vld [vmem:[%s1 + $0x30] sm:$0x3]
    %v181 = vunpack.c.l.b16 %v40
    %v182 = vunpack.c.l.b16 %v41
    %v183 = vunpack.c.l.b16 %v42
    %v184 = vunpack.c.l.b16 %v43
    %v185 = vunpack.c.l.b16 %v44
    %v186 = vunpack.c.l.b16 %v45
    %v187 = vunpack.c.l.b16 %v46
    %v188 = vunpack.c.l.b16 %v47
    %v189 = vunpack.c.l.b16 %v48
    %v190 = vunpack.c.l.b16 %v49
    %v191 = vunpack.c.l.b16 %v50
    %v192 = vunpack.c.l.b16 %v51
    %v193 = vunpack.c.l.b16 %v52
    %v194 = vunpack.c.l.b16 %v53
    %v195 = vunpack.c.l.b16 %v54
    %v196 = vunpack.c.l.b16 %v55
    %v197 = vunpack.c.l.b16 %v56
    %v198 = vunpack.c.l.b16 %v57
    %v199 = vunpack.c.l.b16 %v58
    %v200 = vunpack.c.l.b16 %v59
    %v201 = vunpack.c.l.b16 %v60
    %v202 = vunpack.c.l.b16 %v61
    %v203 = vunpack.c.l.b16 %v62
    %v204 = vunpack.c.l.b16 %v63
    %v205 = vunpack.c.l.b16 %v64
    %v206 = vunpack.c.l.b16 %v65
    %v207 = vunpack.c.l.b16 %v66
    %v208 = vunpack.c.l.b16 %v67
    %v209 = vunpack.c.l.b16 %v68
    %v210 = vunpack.c.l.b16 %v69
    %v211 = vunpack.c.l.b16 %v70
    %v212 = vunpack.c.l.b16 %v71
    %v213 = vunpack.c.l.b16 %v72
    %v214 = vunpack.c.l.b16 %v73
    %v215 = vunpack.c.l.b16 %v74
    %v216 = vunpack.c.l.b16 %v75
    %v217 = vunpack.c.l.b16 %v76
    %v218 = vunpack.c.l.b16 %v77
    %v219 = vunpack.c.l.b16 %v78
    %v220 = vunpack.c.l.b16 %v79
    %v221 = vunpack.c.l.b16 %v80
    %v222 = vunpack.c.l.b16 %v81
    %v223 = vunpack.c.l.b16 %v82
    %v224 = vunpack.c.l.b16 %v83
    %v225 = vunpack.c.l.b16 %v84
    %v226 = vunpack.c.l.b16 %v85
    %v227 = vunpack.c.l.b16 %v86
    %v228 = vunpack.c.l.b16 %v87
    %v229 = vunpack.c.l.b16 %v88
    %v230 = vunpack.c.l.b16 %v89
    %v231 = vunpack.c.l.b16 %v90
    %v232 = vunpack.c.l.b16 %v91
    %v233 = vunpack.c.l.b16 %v92
    %v234 = vunpack.c.l.b16 %v93
    %v235 = vunpack.c.l.b16 %v94
    %v236 = vunpack.c.l.b16 %v95
    %v237 = vunpack.c.l.b16 %v96
    %v238 = vunpack.c.l.b16 %v97
    %v239 = vunpack.c.l.b16 %v98
    %v240 = vunpack.c.l.b16 %v99
    %v241 = vunpack.c.l.b16 %v100
    %v242 = vunpack.c.l.b16 %v101
    %v243 = vunpack.c.l.b16 %v102
    %v244 = vunpack.c.l.b16 %v103
    %v245 = vpack.c.b16 %v182, %v181
    %v246 = vpack.c.b16 %v184, %v183
    %v247 = vpack.c.b16 %v186, %v185
    %v248 = vpack.c.b16 %v188, %v187
    %v249 = vpack.c.b16 %v190, %v189
    %v250 = vpack.c.b16 %v192, %v191
    %v251 = vpack.c.b16 %v194, %v193
    %v252 = vpack.c.b16 %v196, %v195
    %v253 = vpack.c.b16 %v198, %v197
    %v254 = vpack.c.b16 %v200, %v199
    %v255 = vpack.c.b16 %v202, %v201
    %v256 = vpack.c.b16 %v204, %v203
    %v257 = vpack.c.b16 %v206, %v205
    %v258 = vpack.c.b16 %v208, %v207
    %v259 = vpack.c.b16 %v210, %v209
    %v260 = vpack.c.b16 %v212, %v211
    %v261 = vpack.c.b16 %v214, %v213
    %v262 = vpack.c.b16 %v216, %v215
    %v263 = vpack.c.b16 %v218, %v217
    %v264 = vpack.c.b16 %v220, %v219
    %v265 = vpack.c.b16 %v222, %v221
    %v266 = vpack.c.b16 %v224, %v223
    %v267 = vpack.c.b16 %v226, %v225
    %v268 = vpack.c.b16 %v228, %v227
    %v269 = vpack.c.b16 %v230, %v229
    %v270 = vpack.c.b16 %v232, %v231
    %v271 = vpack.c.b16 %v234, %v233
    %v272 = vpack.c.b16 %v236, %v235
    %v273 = vpack.c.b16 %v238, %v237
    %v274 = vpack.c.b16 %v240, %v239
    %v275 = vpack.c.b16 %v242, %v241
    %v276 = vpack.c.b16 %v244, %v243
    %v290 = vunpack.c.l.b16 %v104
    %v291 = vunpack.c.l.b16 %v105
    %v292 = vunpack.c.l.b16 %v106
    %v293 = vunpack.c.l.b16 %v107
    %v294 = vunpack.c.l.b16 %v108
    %v295 = vunpack.c.l.b16 %v109
    %v296 = vunpack.c.l.b16 %v110
    %v297 = vunpack.c.l.b16 %v111
    %v298 = vunpack.c.l.b16 %v112
    %v299 = vunpack.c.l.b16 %v113
    %v300 = vunpack.c.l.b16 %v114
    %v301 = vunpack.c.l.b16 %v115
    %v302 = vunpack.c.l.b16 %v116
    %v303 = vpack.c.b16 %v291, %v290
    %v304 = vpack.c.b16 %v293, %v292
    %v305 = vpack.c.b16 %v295, %v294
    %v306 = vpack.c.b16 %v297, %v296
    %v307 = vpack.c.b16 %v299, %v298
    %v308 = vpack.c.b16 %v301, %v300
    %v309 = vpack.c.b16 %v302, %v302
    %vm316 = vcmask 818176
    %v318 = vsel %vm316, %v245, 0
    %v321 = vsel %vm316, %v246, 0
    %v324 = vsel %vm316, %v247, 0
    %v327 = vsel %vm316, %v248, 0
    %v330 = vsel %vm316, %v249, 0
    %v333 = vsel %vm316, %v250, 0
    %v336 = vsel %vm316, %v251, 0
    %v339 = vsel %vm316, %v252, 0
    %v342 = vsel %vm316, %v253, 0
    %v345 = vsel %vm316, %v254, 0
    %v348 = vsel %vm316, %v255, 0
    %v351 = vsel %vm316, %v256, 0
    %v354 = vsel %vm316, %v257, 0
    %v357 = vsel %vm316, %v258, 0
    %v360 = vsel %vm316, %v259, 0
    %v363 = vsel %vm316, %v260, 0
    %v366 = vsel %vm316, %v261, 0
    %v369 = vsel %vm316, %v262, 0
    %v372 = vsel %vm316, %v263, 0
    %v375 = vsel %vm316, %v264, 0
    %v378 = vsel %vm316, %v265, 0
    %v381 = vsel %vm316, %v266, 0
    %v384 = vsel %vm316, %v267, 0
    %v387 = vsel %vm316, %v268, 0
    %v390 = vsel %vm316, %v269, 0
    %v393 = vsel %vm316, %v270, 0
    %v396 = vsel %vm316, %v271, 0
    %v399 = vsel %vm316, %v272, 0
    %v402 = vsel %vm316, %v273, 0
    %v405 = vsel %vm316, %v274, 0
    %v408 = vsel %vm316, %v275, 0
    %v411 = vsel %vm316, %v276, 0
    %vm413 = vcmask 1041408
    %v415 = vsel %vm413, %v309, 0
    %417 = vmatprep.subr.bf16.mxu0 0
    %418 = vmatpush1.bf16.msra.mxu0 %v303
    %419 = vmatprep.subr.bf16.mxu0 0
    %420 = vmatpush1.bf16.msra.mxu0 %v304
    %421 = vmatprep.subr.bf16.mxu0 0
    %422 = vmatpush1.bf16.msra.mxu0 %v305
    %423 = vmatprep.subr.bf16.mxu0 0
    %424 = vmatpush1.bf16.msra.mxu0 %v306
    %425 = vmatprep.subr.bf16.mxu0 0
    %426 = vmatpush1.bf16.msra.mxu0 %v307
    %427 = vmatprep.subr.bf16.mxu0 0
    %428 = vmatpush1.bf16.msra.mxu0 %v308
    %429 = vmatprep.subr.bf16.mxu0 0
    %430 = vmatpush1.bf16.msra.mxu0 %v415
    %431 = vmatprep.subr.bf16.mxu0 0
    %432 = vmatpush1.bf16.msra.mxu0 0
    %433 = vmatprep.subr.bf16.mxu0 0
    %434 = vmatpush1.bf16.msra.mxu0 0
    %435 = vmatprep.subr.bf16.mxu0 0
    %436 = vmatpush1.bf16.msra.mxu0 0
    %437 = vmatprep.subr.bf16.mxu0 0
    %438 = vmatpush1.bf16.msra.mxu0 0
    %439 = vmatprep.subr.bf16.mxu0 0
    %440 = vmatpush1.bf16.msra.mxu0 0
    %441 = vmatprep.subr.bf16.mxu0 0
    %442 = vmatpush1.bf16.msra.mxu0 0
    %443 = vmatprep.subr.bf16.mxu0 0
    %444 = vmatpush1.bf16.msra.mxu0 0
    %445 = vmatprep.subr.bf16.mxu0 0
    %446 = vmatpush1.bf16.msra.mxu0 0
    %447 = vmatprep.subr.bf16.mxu0 0
    %448 = vmatpush1.bf16.msra.mxu0 0
    %449 = vmatprep.mubr.bf16.mxu0 0
    %450 = vmatmul.mubr.bf16.gmra.mrb[0].mxu0 %v318
    %v451 = vpop.f32.mrb[0].mxu0
    %v452 = vadd.f32 0.0, %v451
    %v453 = vpop.f32.mrb[0].mxu0
    %v454 = vpop.f32.mrb[0].mxu0
    %v455 = vadd.f32 0.0, %v454
    %v456 = vpop.f32.mrb[0].mxu0
    %457 = vmatprep.mubr.bf16.mxu0 0
    %458 = vmatmul.mubr.bf16.gmra.mrb[0].mxu0 %v321
    %v459 = vpop.f32.mrb[0].mxu0
    %v460 = vadd.f32 0.0, %v459
    %v461 = vpop.f32.mrb[0].mxu0
    %v462 = vpop.f32.mrb[0].mxu0
    %v463 = vadd.f32 0.0, %v462
    %v464 = vpop.f32.mrb[0].mxu0
    %465 = vmatprep.mubr.bf16.mxu0 0
    %466 = vmatmul.mubr.bf16.gmra.mrb[0].mxu0 %v324
    %v467 = vpop.f32.mrb[0].mxu0
    %v468 = vadd.f32 0.0, %v467
    %v469 = vpop.f32.mrb[0].mxu0
    %v470 = vpop.f32.mrb[0].mxu0
    %v471 = vadd.f32 0.0, %v470
    %v472 = vpop.f32.mrb[0].mxu0
    %473 = vmatprep.mubr.bf16.mxu0 0
    %474 = vmatmul.mubr.bf16.gmra.mrb[0].mxu0 %v327
    %v475 = vpop.f32.mrb[0].mxu0
    %v476 = vadd.f32 0.0, %v475
    %v477 = vpop.f32.mrb[0].mxu0
    %v478 = vpop.f32.mrb[0].mxu0
    %v479 = vadd.f32 0.0, %v478
    %v480 = vpop.f32.mrb[0].mxu0
    %481 = vmatprep.mubr.bf16.mxu0 0
    %482 = vmatmul.mubr.bf16.gmra.mrb[0].mxu0 %v330
    %v483 = vpop.f32.mrb[0].mxu0
    %v484 = vadd.f32 0.0, %v483
    %v485 = vpop.f32.mrb[0].mxu0
    %v486 = vpop.f32.mrb[0].mxu0
    %v487 = vadd.f32 0.0, %v486
    %v488 = vpop.f32.mrb[0].mxu0
    %489 = vmatprep.mubr.bf16.mxu0 0
    %490 = vmatmul.mubr.bf16.gmra.mrb[0].mxu0 %v333
    %v491 = vpop.f32.mrb[0].mxu0
    %v492 = vadd.f32 0.0, %v491
    %v493 = vpop.f32.mrb[0].mxu0
    %v494 = vpop.f32.mrb[0].mxu0
    %v495 = vadd.f32 0.0, %v494
    %v496 = vpop.f32.mrb[0].mxu0
    %497 = vmatprep.mubr.bf16.mxu0 0
    %498 = vmatmul.mubr.bf16.gmra.mrb[0].mxu0 %v336
    %v499 = vpop.f32.mrb[0].mxu0
    %v500 = vadd.f32 0.0, %v499
    %v501 = vpop.f32.mrb[0].mxu0
    %v502 = vpop.f32.mrb[0].mxu0
    %v503 = vadd.f32 0.0, %v502
    %v504 = vpop.f32.mrb[0].mxu0
    %505 = vmatprep.mubr.bf16.mxu0 0
    %506 = vmatmul.mubr.bf16.gmra.mrb[0].mxu0 %v339
    %v507 = vpop.f32.mrb[0].mxu0
    %v508 = vadd.f32 0.0, %v507
    %v509 = vpop.f32.mrb[0].mxu0
    %v510 = vpop.f32.mrb[0].mxu0
    %v511 = vadd.f32 0.0, %v510
    %v512 = vpop.f32.mrb[0].mxu0
    %513 = vmatprep.mubr.bf16.mxu0 0
    %514 = vmatmul.mubr.bf16.gmra.mrb[0].mxu0 %v342
    %v515 = vpop.f32.mrb[0].mxu0
    %v516 = vadd.f32 0.0, %v515
    %v517 = vpop.f32.mrb[0].mxu0
    %v518 = vpop.f32.mrb[0].mxu0
    %v519 = vadd.f32 0.0, %v518
    %v520 = vpop.f32.mrb[0].mxu0
    %521 = vmatprep.mubr.bf16.mxu0 0
    %522 = vmatmul.mubr.bf16.gmra.mrb[0].mxu0 %v345
    %v523 = vpop.f32.mrb[0].mxu0
    %v524 = vadd.f32 0.0, %v523
    %v525 = vpop.f32.mrb[0].mxu0
    %v526 = vpop.f32.mrb[0].mxu0
    %v527 = vadd.f32 0.0, %v526
    %v528 = vpop.f32.mrb[0].mxu0
    %529 = vmatprep.mubr.bf16.mxu0 0
    %530 = vmatmul.mubr.bf16.gmra.mrb[0].mxu0 %v348
    %v531 = vpop.f32.mrb[0].mxu0
    %v532 = vadd.f32 0.0, %v531
    %v533 = vpop.f32.mrb[0].mxu0
    %v534 = vpop.f32.mrb[0].mxu0
    %v535 = vadd.f32 0.0, %v534
    %v536 = vpop.f32.mrb[0].mxu0
    %537 = vmatprep.mubr.bf16.mxu0 0
    %538 = vmatmul.mubr.bf16.gmra.mrb[0].mxu0 %v351
    %v539 = vpop.f32.mrb[0].mxu0
    %v540 = vadd.f32 0.0, %v539
    %v541 = vpop.f32.mrb[0].mxu0
    %v542 = vpop.f32.mrb[0].mxu0
    %v543 = vadd.f32 0.0, %v542
    %v544 = vpop.f32.mrb[0].mxu0
    %545 = vmatprep.mubr.bf16.mxu0 0
    %546 = vmatmul.mubr.bf16.gmra.mrb[0].mxu0 %v354
    %v547 = vpop.f32.mrb[0].mxu0
    %v548 = vadd.f32 0.0, %v547
    %v549 = vpop.f32.mrb[0].mxu0
    %v550 = vpop.f32.mrb[0].mxu0
    %v551 = vadd.f32 0.0, %v550
    %v552 = vpop.f32.mrb[0].mxu0
    %553 = vmatprep.mubr.bf16.mxu0 0
    %554 = vmatmul.mubr.bf16.gmra.mrb[0].mxu0 %v357
    %v555 = vpop.f32.mrb[0].mxu0
    %v556 = vadd.f32 0.0, %v555
    %v557 = vpop.f32.mrb[0].mxu0
    %v558 = vpop.f32.mrb[0].mxu0
    %v559 = vadd.f32 0.0, %v558
    %v560 = vpop.f32.mrb[0].mxu0
    %561 = vmatprep.mubr.bf16.mxu0 0
    %562 = vmatmul.mubr.bf16.gmra.mrb[0].mxu0 %v360
    %v563 = vpop.f32.mrb[0].mxu0
    %v564 = vadd.f32 0.0, %v563
    %v565 = vpop.f32.mrb[0].mxu0
    %v566 = vpop.f32.mrb[0].mxu0
    %v567 = vadd.f32 0.0, %v566
    %v568 = vpop.f32.mrb[0].mxu0
    %569 = vmatprep.mubr.bf16.mxu0 0
    %570 = vmatmul.mubr.bf16.gmra.mrb[0].mxu0 %v363
    %v571 = vpop.f32.mrb[0].mxu0
    %v572 = vadd.f32 0.0, %v571
    %v573 = vpop.f32.mrb[0].mxu0
    %v574 = vpop.f32.mrb[0].mxu0
    %v575 = vadd.f32 0.0, %v574
    %v576 = vpop.f32.mrb[0].mxu0
    %577 = vmatprep.mubr.bf16.mxu0 0
    %578 = vmatmul.mubr.bf16.gmra.mrb[0].mxu0 %v366
    %v579 = vpop.f32.mrb[0].mxu0
    %v580 = vadd.f32 0.0, %v579
    %v581 = vpop.f32.mrb[0].mxu0
    %v582 = vpop.f32.mrb[0].mxu0
    %v583 = vadd.f32 0.0, %v582
    %v584 = vpop.f32.mrb[0].mxu0
    %585 = vmatprep.mubr.bf16.mxu0 0
    %586 = vmatmul.mubr.bf16.gmra.mrb[0].mxu0 %v369
    %v587 = vpop.f32.mrb[0].mxu0
    %v588 = vadd.f32 0.0, %v587
    %v589 = vpop.f32.mrb[0].mxu0
    %v590 = vpop.f32.mrb[0].mxu0
    %v591 = vadd.f32 0.0, %v590
    %v592 = vpop.f32.mrb[0].mxu0
    %593 = vmatprep.mubr.bf16.mxu0 0
    %594 = vmatmul.mubr.bf16.gmra.mrb[0].mxu0 %v372
    %v595 = vpop.f32.mrb[0].mxu0
    %v596 = vadd.f32 0.0, %v595
    %v597 = vpop.f32.mrb[0].mxu0
    %v598 = vpop.f32.mrb[0].mxu0
    %v599 = vadd.f32 0.0, %v598
    %v600 = vpop.f32.mrb[0].mxu0
    %601 = vmatprep.mubr.bf16.mxu0 0
    %602 = vmatmul.mubr.bf16.gmra.mrb[0].mxu0 %v375
    %v603 = vpop.f32.mrb[0].mxu0
    %v604 = vadd.f32 0.0, %v603
    %v605 = vpop.f32.mrb[0].mxu0
    %v606 = vpop.f32.mrb[0].mxu0
    %v607 = vadd.f32 0.0, %v606
    %v608 = vpop.f32.mrb[0].mxu0
    %609 = vmatprep.mubr.bf16.mxu0 0
    %610 = vmatmul.mubr.bf16.gmra.mrb[0].mxu0 %v378
    %v611 = vpop.f32.mrb[0].mxu0
    %v612 = vadd.f32 0.0, %v611
    %v613 = vpop.f32.mrb[0].mxu0
    %v614 = vpop.f32.mrb[0].mxu0
    %v615 = vadd.f32 0.0, %v614
    %v616 = vpop.f32.mrb[0].mxu0
    %617 = vmatprep.mubr.bf16.mxu0 0
    %618 = vmatmul.mubr.bf16.gmra.mrb[0].mxu0 %v381
    %v619 = vpop.f32.mrb[0].mxu0
    %v620 = vadd.f32 0.0, %v619
    %v621 = vpop.f32.mrb[0].mxu0
    %v622 = vpop.f32.mrb[0].mxu0
    %v623 = vadd.f32 0.0, %v622
    %v624 = vpop.f32.mrb[0].mxu0
    %625 = vmatprep.mubr.bf16.mxu0 0
    %626 = vmatmul.mubr.bf16.gmra.mrb[0].mxu0 %v384
    %v627 = vpop.f32.mrb[0].mxu0
    %v628 = vadd.f32 0.0, %v627
    %v629 = vpop.f32.mrb[0].mxu0
    %v630 = vpop.f32.mrb[0].mxu0
    %v631 = vadd.f32 0.0, %v630
    %v632 = vpop.f32.mrb[0].mxu0
    %633 = vmatprep.mubr.bf16.mxu0 0
    %634 = vmatmul.mubr.bf16.gmra.mrb[0].mxu0 %v387
    %v635 = vpop.f32.mrb[0].mxu0
    %v636 = vadd.f32 0.0, %v635
    %v637 = vpop.f32.mrb[0].mxu0
    %v638 = vpop.f32.mrb[0].mxu0
    %v639 = vadd.f32 0.0, %v638
    %v640 = vpop.f32.mrb[0].mxu0
    %641 = vmatprep.mubr.bf16.mxu0 0
    %642 = vmatmul.mubr.bf16.gmra.mrb[0].mxu0 %v390
    %v643 = vpop.f32.mrb[0].mxu0
    %v644 = vadd.f32 0.0, %v643
    %v645 = vpop.f32.mrb[0].mxu0
    %v646 = vpop.f32.mrb[0].mxu0
    %v647 = vadd.f32 0.0, %v646
    %v648 = vpop.f32.mrb[0].mxu0
    %649 = vmatprep.mubr.bf16.mxu0 0
    %650 = vmatmul.mubr.bf16.gmra.mrb[0].mxu0 %v393
    %v651 = vpop.f32.mrb[0].mxu0
    %v652 = vadd.f32 0.0, %v651
    %v653 = vpop.f32.mrb[0].mxu0
    %v654 = vpop.f32.mrb[0].mxu0
    %v655 = vadd.f32 0.0, %v654
    %v656 = vpop.f32.mrb[0].mxu0
    %657 = vmatprep.mubr.bf16.mxu0 0
    %658 = vmatmul.mubr.bf16.gmra.mrb[0].mxu0 %v396
    %v659 = vpop.f32.mrb[0].mxu0
    %v660 = vadd.f32 0.0, %v659
    %v661 = vpop.f32.mrb[0].mxu0
    %v662 = vpop.f32.mrb[0].mxu0
    %v663 = vadd.f32 0.0, %v662
    %v664 = vpop.f32.mrb[0].mxu0
    %665 = vmatprep.mubr.bf16.mxu0 0
    %666 = vmatmul.mubr.bf16.gmra.mrb[0].mxu0 %v399
    %v667 = vpop.f32.mrb[0].mxu0
    %v668 = vadd.f32 0.0, %v667
    %v669 = vpop.f32.mrb[0].mxu0
    %v670 = vpop.f32.mrb[0].mxu0
    %v671 = vadd.f32 0.0, %v670
    %v672 = vpop.f32.mrb[0].mxu0
    %673 = vmatprep.mubr.bf16.mxu0 0
    %674 = vmatmul.mubr.bf16.gmra.mrb[0].mxu0 %v402
    %v675 = vpop.f32.mrb[0].mxu0
    %v676 = vadd.f32 0.0, %v675
    %v677 = vpop.f32.mrb[0].mxu0
    %v678 = vpop.f32.mrb[0].mxu0
    %v679 = vadd.f32 0.0, %v678
    %v680 = vpop.f32.mrb[0].mxu0
    %681 = vmatprep.mubr.bf16.mxu0 0
    %682 = vmatmul.mubr.bf16.gmra.mrb[0].mxu0 %v405
    %v683 = vpop.f32.mrb[0].mxu0
    %v684 = vadd.f32 0.0, %v683
    %v685 = vpop.f32.mrb[0].mxu0
    %v686 = vpop.f32.mrb[0].mxu0
    %v687 = vadd.f32 0.0, %v686
    %v688 = vpop.f32.mrb[0].mxu0
    %689 = vmatprep.mubr.bf16.mxu0 0
    %690 = vmatmul.mubr.bf16.gmra.mrb[0].mxu0 %v408
    %v691 = vpop.f32.mrb[0].mxu0
    %v692 = vadd.f32 0.0, %v691
    %v693 = vpop.f32.mrb[0].mxu0
    %v694 = vpop.f32.mrb[0].mxu0
    %v695 = vadd.f32 0.0, %v694
    %v696 = vpop.f32.mrb[0].mxu0
    %697 = vmatprep.mubr.bf16.mxu0 0
    %698 = vmatmul.mubr.bf16.gmra.mrb[0].mxu0 %v411
    %v699 = vpop.f32.mrb[0].mxu0
    %v700 = vadd.f32 0.0, %v699
    %v701 = vpop.f32.mrb[0].mxu0
    %v702 = vpop.f32.mrb[0].mxu0
    %v703 = vadd.f32 0.0, %v702
    %v704 = vpop.f32.mrb[0].mxu0
    %705 = vdwg.mxu0
    %vm706 = vcmask 130048
    %v707 = vsel %vm706, %v452, 0.0
    %v708 = vsel %vm706, %v455, 0.0
    %v709 = vadd.f32 %v707, %v708
    %v710 = vsel %vm706, %v460, 0.0
    %v711 = vadd.f32 %v709, %v710
    %v712 = vsel %vm706, %v463, 0.0
    %v713 = vadd.f32 %v711, %v712
    %v714 = vsel %vm706, %v468, 0.0
    %v715 = vadd.f32 %v713, %v714
    %v716 = vsel %vm706, %v471, 0.0
    %v717 = vadd.f32 %v715, %v716
    %v718 = vsel %vm706, %v476, 0.0
    %v719 = vadd.f32 %v717, %v718
    %v720 = vsel %vm706, %v479, 0.0
    %v721 = vadd.f32 %v719, %v720
    %v722 = vsel %vm706, %v484, 0.0
    %v723 = vadd.f32 %v721, %v722
    %v724 = vsel %vm706, %v487, 0.0
    %v725 = vadd.f32 %v723, %v724
    %v726 = vsel %vm706, %v492, 0.0
    %v727 = vadd.f32 %v725, %v726
    %v728 = vsel %vm706, %v495, 0.0
    %v729 = vadd.f32 %v727, %v728
    %v730 = vsel %vm706, %v500, 0.0
    %v731 = vadd.f32 %v729, %v730
    %v732 = vsel %vm706, %v503, 0.0
    %v733 = vadd.f32 %v731, %v732
    %v734 = vsel %vm706, %v508, 0.0
    %v735 = vadd.f32 %v733, %v734
    %v736 = vsel %vm706, %v511, 0.0
    %v737 = vadd.f32 %v735, %v736
    %v738 = vsel %vm706, %v516, 0.0
    %v739 = vadd.f32 %v737, %v738
    %v740 = vsel %vm706, %v519, 0.0
    %v741 = vadd.f32 %v739, %v740
    %v742 = vsel %vm706, %v524, 0.0
    %v743 = vadd.f32 %v741, %v742
    %v744 = vsel %vm706, %v527, 0.0
    %v745 = vadd.f32 %v743, %v744
    %v746 = vsel %vm706, %v532, 0.0
    %v747 = vadd.f32 %v745, %v746
    %v748 = vsel %vm706, %v535, 0.0
    %v749 = vadd.f32 %v747, %v748
    %v750 = vsel %vm706, %v540, 0.0
    %v751 = vadd.f32 %v749, %v750
    %v752 = vsel %vm706, %v543, 0.0
    %v753 = vadd.f32 %v751, %v752
    %v754 = vsel %vm706, %v548, 0.0
    %v755 = vadd.f32 %v753, %v754
    %v756 = vsel %vm706, %v551, 0.0
    %v757 = vadd.f32 %v755, %v756
    %v758 = vsel %vm706, %v556, 0.0
    %v759 = vadd.f32 %v757, %v758
    %v760 = vsel %vm706, %v559, 0.0
    %v761 = vadd.f32 %v759, %v760
    %v762 = vsel %vm706, %v564, 0.0
    %v763 = vadd.f32 %v761, %v762
    %v764 = vsel %vm706, %v567, 0.0
    %v765 = vadd.f32 %v763, %v764
    %v766 = vsel %vm706, %v572, 0.0
    %v767 = vadd.f32 %v765, %v766
    %v768 = vsel %vm706, %v575, 0.0
    %v769 = vadd.f32 %v767, %v768
    %v770 = vsel %vm706, %v580, 0.0
    %v771 = vadd.f32 %v769, %v770
    %v772 = vsel %vm706, %v583, 0.0
    %v773 = vadd.f32 %v771, %v772
    %v774 = vsel %vm706, %v588, 0.0
    %v775 = vadd.f32 %v773, %v774
    %v776 = vsel %vm706, %v591, 0.0
    %v777 = vadd.f32 %v775, %v776
    %v778 = vsel %vm706, %v596, 0.0
    %v779 = vadd.f32 %v777, %v778
    %v780 = vsel %vm706, %v599, 0.0
    %v781 = vadd.f32 %v779, %v780
    %v782 = vsel %vm706, %v604, 0.0
    %v783 = vadd.f32 %v781, %v782
    %v784 = vsel %vm706, %v607, 0.0
    %v785 = vadd.f32 %v783, %v784
    %v786 = vsel %vm706, %v612, 0.0
    %v787 = vadd.f32 %v785, %v786
    %v788 = vsel %vm706, %v615, 0.0
    %v789 = vadd.f32 %v787, %v788
    %v790 = vsel %vm706, %v620, 0.0
    %v791 = vadd.f32 %v789, %v790
    %v792 = vsel %vm706, %v623, 0.0
    %v793 = vadd.f32 %v791, %v792
    %v794 = vsel %vm706, %v628, 0.0
    %v795 = vadd.f32 %v793, %v794
    %v796 = vsel %vm706, %v631, 0.0
    %v797 = vadd.f32 %v795, %v796
    %v798 = vsel %vm706, %v636, 0.0
    %v799 = vadd.f32 %v797, %v798
    %v800 = vsel %vm706, %v639, 0.0
    %v801 = vadd.f32 %v799, %v800
    %v802 = vsel %vm706, %v644, 0.0
    %v803 = vadd.f32 %v801, %v802
    %v804 = vsel %vm706, %v647, 0.0
    %v805 = vadd.f32 %v803, %v804
    %v806 = vsel %vm706, %v652, 0.0
    %v807 = vadd.f32 %v805, %v806
    %v808 = vsel %vm706, %v655, 0.0
    %v809 = vadd.f32 %v807, %v808
    %v810 = vsel %vm706, %v660, 0.0
    %v811 = vadd.f32 %v809, %v810
    %v812 = vsel %vm706, %v663, 0.0
    %v813 = vadd.f32 %v811, %v812
    %v814 = vsel %vm706, %v668, 0.0
    %v815 = vadd.f32 %v813, %v814
    %v816 = vsel %vm706, %v671, 0.0
    %v817 = vadd.f32 %v815, %v816
    %v818 = vsel %vm706, %v676, 0.0
    %v819 = vadd.f32 %v817, %v818
    %v820 = vsel %vm706, %v679, 0.0
    %v821 = vadd.f32 %v819, %v820
    %v822 = vsel %vm706, %v684, 0.0
    %v823 = vadd.f32 %v821, %v822
    %v824 = vsel %vm706, %v687, 0.0
    %v825 = vadd.f32 %v823, %v824
    %v826 = vsel %vm706, %v692, 0.0
    %v827 = vadd.f32 %v825, %v826
    %v828 = vsel %vm706, %v695, 0.0
    %v829 = vadd.f32 %v827, %v828
    %v830 = vsel %vm706, %v700, 0.0
    %v831 = vadd.f32 %v829, %v830
    %v832 = vsel %vm706, %v703, 0.0
    %v833 = vadd.f32 %v831, %v832
    %v834 = vrot.slane %v833, 4
    %v835 = vadd.f32 %v833, %v834
    %v836 = vrot.slane %v835, 2
    %v837 = vadd.f32 %v835, %v836
    %v838 = vrot.slane %v837, 1
    %v839 = vadd.f32 %v837, %v838
    %v840 = vmul.f32 %v839, 0.001953125
    %v841 = vsub.f32 %v452, %v840
    %v842 = vsub.f32 %v455, %v840
    %v843 = vsub.f32 %v460, %v840
    %v844 = vsub.f32 %v463, %v840
    %v845 = vsub.f32 %v468, %v840
    %v846 = vsub.f32 %v471, %v840
    %v847 = vsub.f32 %v476, %v840
    %v848 = vsub.f32 %v479, %v840
    %v849 = vsub.f32 %v484, %v840
    %v850 = vsub.f32 %v487, %v840
    %v851 = vsub.f32 %v492, %v840
    %v852 = vsub.f32 %v495, %v840
    %v853 = vsub.f32 %v500, %v840
    %v854 = vsub.f32 %v503, %v840
    %v855 = vsub.f32 %v508, %v840
    %v856 = vsub.f32 %v511, %v840
    %v857 = vsub.f32 %v516, %v840
    %v858 = vsub.f32 %v519, %v840
    %v859 = vsub.f32 %v524, %v840
    %v860 = vsub.f32 %v527, %v840
    %v861 = vsub.f32 %v532, %v840
    %v862 = vsub.f32 %v535, %v840
    %v863 = vsub.f32 %v540, %v840
    %v864 = vsub.f32 %v543, %v840
    %v865 = vsub.f32 %v548, %v840
    %v866 = vsub.f32 %v551, %v840
    %v867 = vsub.f32 %v556, %v840
    %v868 = vsub.f32 %v559, %v840
    %v869 = vsub.f32 %v564, %v840
    %v870 = vsub.f32 %v567, %v840
    %v871 = vsub.f32 %v572, %v840
    %v872 = vsub.f32 %v575, %v840
    %v873 = vsub.f32 %v580, %v840
    %v874 = vsub.f32 %v583, %v840
    %v875 = vsub.f32 %v588, %v840
    %v876 = vsub.f32 %v591, %v840
    %v877 = vsub.f32 %v596, %v840
    %v878 = vsub.f32 %v599, %v840
    %v879 = vsub.f32 %v604, %v840
    %v880 = vsub.f32 %v607, %v840
    %v881 = vsub.f32 %v612, %v840
    %v882 = vsub.f32 %v615, %v840
    %v883 = vsub.f32 %v620, %v840
    %v884 = vsub.f32 %v623, %v840
    %v885 = vsub.f32 %v628, %v840
    %v886 = vsub.f32 %v631, %v840
    %v887 = vsub.f32 %v636, %v840
    %v888 = vsub.f32 %v639, %v840
    %v889 = vsub.f32 %v644, %v840
    %v890 = vsub.f32 %v647, %v840
    %v891 = vsub.f32 %v652, %v840
    %v892 = vsub.f32 %v655, %v840
    %v893 = vsub.f32 %v660, %v840
    %v894 = vsub.f32 %v663, %v840
    %v895 = vsub.f32 %v668, %v840
    %v896 = vsub.f32 %v671, %v840
    %v897 = vsub.f32 %v676, %v840
    %v898 = vsub.f32 %v679, %v840
    %v899 = vsub.f32 %v684, %v840
    %v900 = vsub.f32 %v687, %v840
    %v901 = vsub.f32 %v692, %v840
    %v902 = vsub.f32 %v695, %v840
    %v903 = vsub.f32 %v700, %v840
    %v904 = vsub.f32 %v703, %v840
    %v905 = vmul.f32 %v841, %v841
    %v906 = vmul.f32 %v842, %v842
    %v907 = vmul.f32 %v843, %v843
    %v908 = vmul.f32 %v844, %v844
    %v909 = vmul.f32 %v845, %v845
    %v910 = vmul.f32 %v846, %v846
    %v911 = vmul.f32 %v847, %v847
    %v912 = vmul.f32 %v848, %v848
    %v913 = vmul.f32 %v849, %v849
    %v914 = vmul.f32 %v850, %v850
    %v915 = vmul.f32 %v851, %v851
    %v916 = vmul.f32 %v852, %v852
    %v917 = vmul.f32 %v853, %v853
    %v918 = vmul.f32 %v854, %v854
    %v919 = vmul.f32 %v855, %v855
    %v920 = vmul.f32 %v856, %v856
    %v921 = vmul.f32 %v857, %v857
    %v922 = vmul.f32 %v858, %v858
    %v923 = vmul.f32 %v859, %v859
    %v924 = vmul.f32 %v860, %v860
    %v925 = vmul.f32 %v861, %v861
    %v926 = vmul.f32 %v862, %v862
    %v927 = vmul.f32 %v863, %v863
    %v928 = vmul.f32 %v864, %v864
    %v929 = vmul.f32 %v865, %v865
    %v930 = vmul.f32 %v866, %v866
    %v931 = vmul.f32 %v867, %v867
    %v932 = vmul.f32 %v868, %v868
    %v933 = vmul.f32 %v869, %v869
    %v934 = vmul.f32 %v870, %v870
    %v935 = vmul.f32 %v871, %v871
    %v936 = vmul.f32 %v872, %v872
    %v937 = vmul.f32 %v873, %v873
    %v938 = vmul.f32 %v874, %v874
    %v939 = vmul.f32 %v875, %v875
    %v940 = vmul.f32 %v876, %v876
    %v941 = vmul.f32 %v877, %v877
    %v942 = vmul.f32 %v878, %v878
    %v943 = vmul.f32 %v879, %v879
    %v944 = vmul.f32 %v880, %v880
    %v945 = vmul.f32 %v881, %v881
    %v946 = vmul.f32 %v882, %v882
    %v947 = vmul.f32 %v883, %v883
    %v948 = vmul.f32 %v884, %v884
    %v949 = vmul.f32 %v885, %v885
    %v950 = vmul.f32 %v886, %v886
    %v951 = vmul.f32 %v887, %v887
    %v952 = vmul.f32 %v888, %v888
    %v953 = vmul.f32 %v889, %v889
    %v954 = vmul.f32 %v890, %v890
    %v955 = vmul.f32 %v891, %v891
    %v956 = vmul.f32 %v892, %v892
    %v957 = vmul.f32 %v893, %v893
    %v958 = vmul.f32 %v894, %v894
    %v959 = vmul.f32 %v895, %v895
    %v960 = vmul.f32 %v896, %v896
    %v961 = vmul.f32 %v897, %v897
    %v962 = vmul.f32 %v898, %v898
    %v963 = vmul.f32 %v899, %v899
    %v964 = vmul.f32 %v900, %v900
    %v965 = vmul.f32 %v901, %v901
    %v966 = vmul.f32 %v902, %v902
    %v967 = vmul.f32 %v903, %v903
    %v968 = vmul.f32 %v904, %v904
    %v969 = vsel %vm706, %v905, 0.0
    %v970 = vsel %vm706, %v906, 0.0
    %v971 = vadd.f32 %v969, %v970
    %v972 = vsel %vm706, %v907, 0.0
    %v973 = vadd.f32 %v971, %v972
    %v974 = vsel %vm706, %v908, 0.0
    %v975 = vadd.f32 %v973, %v974
    %v976 = vsel %vm706, %v909, 0.0
    %v977 = vadd.f32 %v975, %v976
    %v978 = vsel %vm706, %v910, 0.0
    %v979 = vadd.f32 %v977, %v978
    %v980 = vsel %vm706, %v911, 0.0
    %v981 = vadd.f32 %v979, %v980
    %v982 = vsel %vm706, %v912, 0.0
    %v983 = vadd.f32 %v981, %v982
    %v984 = vsel %vm706, %v913, 0.0
    %v985 = vadd.f32 %v983, %v984
    %v986 = vsel %vm706, %v914, 0.0
    %v987 = vadd.f32 %v985, %v986
    %v988 = vsel %vm706, %v915, 0.0
    %v989 = vadd.f32 %v987, %v988
    %v990 = vsel %vm706, %v916, 0.0
    %v991 = vadd.f32 %v989, %v990
    %v992 = vsel %vm706, %v917, 0.0
    %v993 = vadd.f32 %v991, %v992
    %v994 = vsel %vm706, %v918, 0.0
    %v995 = vadd.f32 %v993, %v994
    %v996 = vsel %vm706, %v919, 0.0
    %v997 = vadd.f32 %v995, %v996
    %v998 = vsel %vm706, %v920, 0.0
    %v999 = vadd.f32 %v997, %v998
    %v1000 = vsel %vm706, %v921, 0.0
    %v1001 = vadd.f32 %v999, %v1000
    %v1002 = vsel %vm706, %v922, 0.0
    %v1003 = vadd.f32 %v1001, %v1002
    %v1004 = vsel %vm706, %v923, 0.0
    %v1005 = vadd.f32 %v1003, %v1004
    %v1006 = vsel %vm706, %v924, 0.0
    %v1007 = vadd.f32 %v1005, %v1006
    %v1008 = vsel %vm706, %v925, 0.0
    %v1009 = vadd.f32 %v1007, %v1008
    %v1010 = vsel %vm706, %v926, 0.0
    %v1011 = vadd.f32 %v1009, %v1010
    %v1012 = vsel %vm706, %v927, 0.0
    %v1013 = vadd.f32 %v1011, %v1012
    %v1014 = vsel %vm706, %v928, 0.0
    %v1015 = vadd.f32 %v1013, %v1014
    %v1016 = vsel %vm706, %v929, 0.0
    %v1017 = vadd.f32 %v1015, %v1016
    %v1018 = vsel %vm706, %v930, 0.0
    %v1019 = vadd.f32 %v1017, %v1018
    %v1020 = vsel %vm706, %v931, 0.0
    %v1021 = vadd.f32 %v1019, %v1020
    %v1022 = vsel %vm706, %v932, 0.0
    %v1023 = vadd.f32 %v1021, %v1022
    %v1024 = vsel %vm706, %v933, 0.0
    %v1025 = vadd.f32 %v1023, %v1024
    %v1026 = vsel %vm706, %v934, 0.0
    %v1027 = vadd.f32 %v1025, %v1026
    %v1028 = vsel %vm706, %v935, 0.0
    %v1029 = vadd.f32 %v1027, %v1028
    %v1030 = vsel %vm706, %v936, 0.0
    %v1031 = vadd.f32 %v1029, %v1030
    %v1032 = vsel %vm706, %v937, 0.0
    %v1033 = vadd.f32 %v1031, %v1032
    %v1034 = vsel %vm706, %v938, 0.0
    %v1035 = vadd.f32 %v1033, %v1034
    %v1036 = vsel %vm706, %v939, 0.0
    %v1037 = vadd.f32 %v1035, %v1036
    %v1038 = vsel %vm706, %v940, 0.0
    %v1039 = vadd.f32 %v1037, %v1038
    %v1040 = vsel %vm706, %v941, 0.0
    %v1041 = vadd.f32 %v1039, %v1040
    %v1042 = vsel %vm706, %v942, 0.0
    %v1043 = vadd.f32 %v1041, %v1042
    %v1044 = vsel %vm706, %v943, 0.0
    %v1045 = vadd.f32 %v1043, %v1044
    %v1046 = vsel %vm706, %v944, 0.0
    %v1047 = vadd.f32 %v1045, %v1046
    %v1048 = vsel %vm706, %v945, 0.0
    %v1049 = vadd.f32 %v1047, %v1048
    %v1050 = vsel %vm706, %v946, 0.0
    %v1051 = vadd.f32 %v1049, %v1050
    %v1052 = vsel %vm706, %v947, 0.0
    %v1053 = vadd.f32 %v1051, %v1052
    %v1054 = vsel %vm706, %v948, 0.0
    %v1055 = vadd.f32 %v1053, %v1054
    %v1056 = vsel %vm706, %v949, 0.0
    %v1057 = vadd.f32 %v1055, %v1056
    %v1058 = vsel %vm706, %v950, 0.0
    %v1059 = vadd.f32 %v1057, %v1058
    %v1060 = vsel %vm706, %v951, 0.0
    %v1061 = vadd.f32 %v1059, %v1060
    %v1062 = vsel %vm706, %v952, 0.0
    %v1063 = vadd.f32 %v1061, %v1062
    %v1064 = vsel %vm706, %v953, 0.0
    %v1065 = vadd.f32 %v1063, %v1064
    %v1066 = vsel %vm706, %v954, 0.0
    %v1067 = vadd.f32 %v1065, %v1066
    %v1068 = vsel %vm706, %v955, 0.0
    %v1069 = vadd.f32 %v1067, %v1068
    %v1070 = vsel %vm706, %v956, 0.0
    %v1071 = vadd.f32 %v1069, %v1070
    %v1072 = vsel %vm706, %v957, 0.0
    %v1073 = vadd.f32 %v1071, %v1072
    %v1074 = vsel %vm706, %v958, 0.0
    %v1075 = vadd.f32 %v1073, %v1074
    %v1076 = vsel %vm706, %v959, 0.0
    %v1077 = vadd.f32 %v1075, %v1076
    %v1078 = vsel %vm706, %v960, 0.0
    %v1079 = vadd.f32 %v1077, %v1078
    %v1080 = vsel %vm706, %v961, 0.0
    %v1081 = vadd.f32 %v1079, %v1080
    %v1082 = vsel %vm706, %v962, 0.0
    %v1083 = vadd.f32 %v1081, %v1082
    %v1084 = vsel %vm706, %v963, 0.0
    %v1085 = vadd.f32 %v1083, %v1084
    %v1086 = vsel %vm706, %v964, 0.0
    %v1087 = vadd.f32 %v1085, %v1086
    %v1088 = vsel %vm706, %v965, 0.0
    %v1089 = vadd.f32 %v1087, %v1088
    %v1090 = vsel %vm706, %v966, 0.0
    %v1091 = vadd.f32 %v1089, %v1090
    %v1092 = vsel %vm706, %v967, 0.0
    %v1093 = vadd.f32 %v1091, %v1092
    %v1094 = vsel %vm706, %v968, 0.0
    %v1095 = vadd.f32 %v1093, %v1094
    %v1096 = vrot.slane %v1095, 4
    %v1097 = vadd.f32 %v1095, %v1096
    %v1098 = vrot.slane %v1097, 2
    %v1099 = vadd.f32 %v1097, %v1098
    %v1100 = vrot.slane %v1099, 1
    %v1101 = vadd.f32 %v1099, %v1100
    %v1102 = vmul.f32 %v1101, 0.001953125
    %v1103 = vld [vmem:[%s2] sm:$0x1]
    %v1104 = vadd.f32 %v1102, 1e-05
    %v1105 = vrsqrt.pop %v1104
    %v1106 = vmul.f32 %v1103, %v1105
    %v1107 = vld [vmem:[%s3] sm:$0x1]
    %v1108 = vmul.f32 %v840, %v1106
    %v1109 = vsub.f32 %v1107, %v1108
    %v1111 = vlaneseq
    %v1112 = vshrl.u32 %v1111, 7
    %v1113 = vsub.s32 0, %v1112
    %v1114 = vrot.slane %v1106, %v1113
    %v1116 = vmul.f32 %v452, %v1114
    %v1117 = vmul.f32 %v455, %v1114
    %v1118 = vmul.f32 %v460, %v1114
    %v1119 = vmul.f32 %v463, %v1114
    %v1120 = vmul.f32 %v468, %v1114
    %v1121 = vmul.f32 %v471, %v1114
    %v1122 = vmul.f32 %v476, %v1114
    %v1123 = vmul.f32 %v479, %v1114
    %v1124 = vmul.f32 %v484, %v1114
    %v1125 = vmul.f32 %v487, %v1114
    %v1126 = vmul.f32 %v492, %v1114
    %v1127 = vmul.f32 %v495, %v1114
    %v1128 = vmul.f32 %v500, %v1114
    %v1129 = vmul.f32 %v503, %v1114
    %v1130 = vmul.f32 %v508, %v1114
    %v1131 = vmul.f32 %v511, %v1114
    %v1132 = vmul.f32 %v516, %v1114
    %v1133 = vmul.f32 %v519, %v1114
    %v1134 = vmul.f32 %v524, %v1114
    %v1135 = vmul.f32 %v527, %v1114
    %v1136 = vmul.f32 %v532, %v1114
    %v1137 = vmul.f32 %v535, %v1114
    %v1138 = vmul.f32 %v540, %v1114
    %v1139 = vmul.f32 %v543, %v1114
    %v1140 = vmul.f32 %v548, %v1114
    %v1141 = vmul.f32 %v551, %v1114
    %v1142 = vmul.f32 %v556, %v1114
    %v1143 = vmul.f32 %v559, %v1114
    %v1144 = vmul.f32 %v564, %v1114
    %v1145 = vmul.f32 %v567, %v1114
    %v1146 = vmul.f32 %v572, %v1114
    %v1147 = vmul.f32 %v575, %v1114
    %v1148 = vmul.f32 %v580, %v1114
    %v1149 = vmul.f32 %v583, %v1114
    %v1150 = vmul.f32 %v588, %v1114
    %v1151 = vmul.f32 %v591, %v1114
    %v1152 = vmul.f32 %v596, %v1114
    %v1153 = vmul.f32 %v599, %v1114
    %v1154 = vmul.f32 %v604, %v1114
    %v1155 = vmul.f32 %v607, %v1114
    %v1156 = vmul.f32 %v612, %v1114
    %v1157 = vmul.f32 %v615, %v1114
    %v1158 = vmul.f32 %v620, %v1114
    %v1159 = vmul.f32 %v623, %v1114
    %v1160 = vmul.f32 %v628, %v1114
    %v1161 = vmul.f32 %v631, %v1114
    %v1162 = vmul.f32 %v636, %v1114
    %v1163 = vmul.f32 %v639, %v1114
    %v1164 = vmul.f32 %v644, %v1114
    %v1165 = vmul.f32 %v647, %v1114
    %v1166 = vmul.f32 %v652, %v1114
    %v1167 = vmul.f32 %v655, %v1114
    %v1168 = vmul.f32 %v660, %v1114
    %v1169 = vmul.f32 %v663, %v1114
    %v1170 = vmul.f32 %v668, %v1114
    %v1171 = vmul.f32 %v671, %v1114
    %v1172 = vmul.f32 %v676, %v1114
    %v1173 = vmul.f32 %v679, %v1114
    %v1174 = vmul.f32 %v684, %v1114
    %v1175 = vmul.f32 %v687, %v1114
    %v1176 = vmul.f32 %v692, %v1114
    %v1177 = vmul.f32 %v695, %v1114
    %v1178 = vmul.f32 %v700, %v1114
    %v1179 = vmul.f32 %v703, %v1114
    %v1181 = vlaneseq
    %v1182 = vshrl.u32 %v1181, 7
    %v1183 = vsub.s32 0, %v1182
    %v1184 = vrot.slane %v1109, %v1183
    %v1186 = vadd.f32 %v1116, %v1184
    %v1187 = vadd.f32 %v1117, %v1184
    %v1188 = vadd.f32 %v1118, %v1184
    %v1189 = vadd.f32 %v1119, %v1184
    %v1190 = vadd.f32 %v1120, %v1184
    %v1191 = vadd.f32 %v1121, %v1184
    %v1192 = vadd.f32 %v1122, %v1184
    %v1193 = vadd.f32 %v1123, %v1184
    %v1194 = vadd.f32 %v1124, %v1184
    %v1195 = vadd.f32 %v1125, %v1184
    %v1196 = vadd.f32 %v1126, %v1184
    %v1197 = vadd.f32 %v1127, %v1184
    %v1198 = vadd.f32 %v1128, %v1184
    %v1199 = vadd.f32 %v1129, %v1184
    %v1200 = vadd.f32 %v1130, %v1184
    %v1201 = vadd.f32 %v1131, %v1184
    %v1202 = vadd.f32 %v1132, %v1184
    %v1203 = vadd.f32 %v1133, %v1184
    %v1204 = vadd.f32 %v1134, %v1184
    %v1205 = vadd.f32 %v1135, %v1184
    %v1206 = vadd.f32 %v1136, %v1184
    %v1207 = vadd.f32 %v1137, %v1184
    %v1208 = vadd.f32 %v1138, %v1184
    %v1209 = vadd.f32 %v1139, %v1184
    %v1210 = vadd.f32 %v1140, %v1184
    %v1211 = vadd.f32 %v1141, %v1184
    %v1212 = vadd.f32 %v1142, %v1184
    %v1213 = vadd.f32 %v1143, %v1184
    %v1214 = vadd.f32 %v1144, %v1184
    %v1215 = vadd.f32 %v1145, %v1184
    %v1216 = vadd.f32 %v1146, %v1184
    %v1217 = vadd.f32 %v1147, %v1184
    %v1218 = vadd.f32 %v1148, %v1184
    %v1219 = vadd.f32 %v1149, %v1184
    %v1220 = vadd.f32 %v1150, %v1184
    %v1221 = vadd.f32 %v1151, %v1184
    %v1222 = vadd.f32 %v1152, %v1184
    %v1223 = vadd.f32 %v1153, %v1184
    %v1224 = vadd.f32 %v1154, %v1184
    %v1225 = vadd.f32 %v1155, %v1184
    %v1226 = vadd.f32 %v1156, %v1184
    %v1227 = vadd.f32 %v1157, %v1184
    %v1228 = vadd.f32 %v1158, %v1184
    %v1229 = vadd.f32 %v1159, %v1184
    %v1230 = vadd.f32 %v1160, %v1184
    %v1231 = vadd.f32 %v1161, %v1184
    %v1232 = vadd.f32 %v1162, %v1184
    %v1233 = vadd.f32 %v1163, %v1184
    %v1234 = vadd.f32 %v1164, %v1184
    %v1235 = vadd.f32 %v1165, %v1184
    %v1236 = vadd.f32 %v1166, %v1184
    %v1237 = vadd.f32 %v1167, %v1184
    %v1238 = vadd.f32 %v1168, %v1184
    %v1239 = vadd.f32 %v1169, %v1184
    %v1240 = vadd.f32 %v1170, %v1184
    %v1241 = vadd.f32 %v1171, %v1184
    %v1242 = vadd.f32 %v1172, %v1184
    %v1243 = vadd.f32 %v1173, %v1184
    %v1244 = vadd.f32 %v1174, %v1184
    %v1245 = vadd.f32 %v1175, %v1184
    %v1246 = vadd.f32 %v1176, %v1184
    %v1247 = vadd.f32 %v1177, %v1184
    %v1248 = vadd.f32 %v1178, %v1184
    %v1249 = vadd.f32 %v1179, %v1184
    %vm1250 = vcmp.gt.f32.partialorder %v1186, 0.0
    %vm1251 = vcmp.gt.f32.partialorder %v1187, 0.0
    %vm1252 = vcmp.gt.f32.partialorder %v1188, 0.0
    %vm1253 = vcmp.gt.f32.partialorder %v1189, 0.0
    %vm1254 = vcmp.gt.f32.partialorder %v1190, 0.0
    %vm1255 = vcmp.gt.f32.partialorder %v1191, 0.0
    %vm1256 = vcmp.gt.f32.partialorder %v1192, 0.0
    %vm1257 = vcmp.gt.f32.partialorder %v1193, 0.0
    %vm1258 = vcmp.gt.f32.partialorder %v1194, 0.0
    %vm1259 = vcmp.gt.f32.partialorder %v1195, 0.0
    %vm1260 = vcmp.gt.f32.partialorder %v1196, 0.0
    %vm1261 = vcmp.gt.f32.partialorder %v1197, 0.0
    %vm1262 = vcmp.gt.f32.partialorder %v1198, 0.0
    %vm1263 = vcmp.gt.f32.partialorder %v1199, 0.0
    %vm1264 = vcmp.gt.f32.partialorder %v1200, 0.0
    %vm1265 = vcmp.gt.f32.partialorder %v1201, 0.0
    %vm1266 = vcmp.gt.f32.partialorder %v1202, 0.0
    %vm1267 = vcmp.gt.f32.partialorder %v1203, 0.0
    %vm1268 = vcmp.gt.f32.partialorder %v1204, 0.0
    %vm1269 = vcmp.gt.f32.partialorder %v1205, 0.0
    %vm1270 = vcmp.gt.f32.partialorder %v1206, 0.0
    %vm1271 = vcmp.gt.f32.partialorder %v1207, 0.0
    %vm1272 = vcmp.gt.f32.partialorder %v1208, 0.0
    %vm1273 = vcmp.gt.f32.partialorder %v1209, 0.0
    %vm1274 = vcmp.gt.f32.partialorder %v1210, 0.0
    %vm1275 = vcmp.gt.f32.partialorder %v1211, 0.0
    %vm1276 = vcmp.gt.f32.partialorder %v1212, 0.0
    %vm1277 = vcmp.gt.f32.partialorder %v1213, 0.0
    %vm1278 = vcmp.gt.f32.partialorder %v1214, 0.0
    %vm1279 = vcmp.gt.f32.partialorder %v1215, 0.0
    %vm1280 = vcmp.gt.f32.partialorder %v1216, 0.0
    %vm1281 = vcmp.gt.f32.partialorder %v1217, 0.0
    %vm1282 = vcmp.gt.f32.partialorder %v1218, 0.0
    %vm1283 = vcmp.gt.f32.partialorder %v1219, 0.0
    %vm1284 = vcmp.gt.f32.partialorder %v1220, 0.0
    %vm1285 = vcmp.gt.f32.partialorder %v1221, 0.0
    %vm1286 = vcmp.gt.f32.partialorder %v1222, 0.0
    %vm1287 = vcmp.gt.f32.partialorder %v1223, 0.0
    %vm1288 = vcmp.gt.f32.partialorder %v1224, 0.0
    %vm1289 = vcmp.gt.f32.partialorder %v1225, 0.0
    %vm1290 = vcmp.gt.f32.partialorder %v1226, 0.0
    %vm1291 = vcmp.gt.f32.partialorder %v1227, 0.0
    %vm1292 = vcmp.gt.f32.partialorder %v1228, 0.0
    %vm1293 = vcmp.gt.f32.partialorder %v1229, 0.0
    %vm1294 = vcmp.gt.f32.partialorder %v1230, 0.0
    %vm1295 = vcmp.gt.f32.partialorder %v1231, 0.0
    %vm1296 = vcmp.gt.f32.partialorder %v1232, 0.0
    %vm1297 = vcmp.gt.f32.partialorder %v1233, 0.0
    %vm1298 = vcmp.gt.f32.partialorder %v1234, 0.0
    %vm1299 = vcmp.gt.f32.partialorder %v1235, 0.0
    %vm1300 = vcmp.gt.f32.partialorder %v1236, 0.0
    %vm1301 = vcmp.gt.f32.partialorder %v1237, 0.0
    %vm1302 = vcmp.gt.f32.partialorder %v1238, 0.0
    %vm1303 = vcmp.gt.f32.partialorder %v1239, 0.0
    %vm1304 = vcmp.gt.f32.partialorder %v1240, 0.0
    %vm1305 = vcmp.gt.f32.partialorder %v1241, 0.0
    %vm1306 = vcmp.gt.f32.partialorder %v1242, 0.0
    %vm1307 = vcmp.gt.f32.partialorder %v1243, 0.0
    %vm1308 = vcmp.gt.f32.partialorder %v1244, 0.0
    %vm1309 = vcmp.gt.f32.partialorder %v1245, 0.0
    %vm1310 = vcmp.gt.f32.partialorder %v1246, 0.0
    %vm1311 = vcmp.gt.f32.partialorder %v1247, 0.0
    %vm1312 = vcmp.gt.f32.partialorder %v1248, 0.0
    %vm1313 = vcmp.gt.f32.partialorder %v1249, 0.0
    %v1314 = vmul.f32 %v1186, 0.01
    %v1315 = vmul.f32 %v1187, 0.01
    %v1316 = vmul.f32 %v1188, 0.01
    %v1317 = vmul.f32 %v1189, 0.01
    %v1318 = vmul.f32 %v1190, 0.01
    %v1319 = vmul.f32 %v1191, 0.01
    %v1320 = vmul.f32 %v1192, 0.01
    %v1321 = vmul.f32 %v1193, 0.01
    %v1322 = vmul.f32 %v1194, 0.01
    %v1323 = vmul.f32 %v1195, 0.01
    %v1324 = vmul.f32 %v1196, 0.01
    %v1325 = vmul.f32 %v1197, 0.01
    %v1326 = vmul.f32 %v1198, 0.01
    %v1327 = vmul.f32 %v1199, 0.01
    %v1328 = vmul.f32 %v1200, 0.01
    %v1329 = vmul.f32 %v1201, 0.01
    %v1330 = vmul.f32 %v1202, 0.01
    %v1331 = vmul.f32 %v1203, 0.01
    %v1332 = vmul.f32 %v1204, 0.01
    %v1333 = vmul.f32 %v1205, 0.01
    %v1334 = vmul.f32 %v1206, 0.01
    %v1335 = vmul.f32 %v1207, 0.01
    %v1336 = vmul.f32 %v1208, 0.01
    %v1337 = vmul.f32 %v1209, 0.01
    %v1338 = vmul.f32 %v1210, 0.01
    %v1339 = vmul.f32 %v1211, 0.01
    %v1340 = vmul.f32 %v1212, 0.01
    %v1341 = vmul.f32 %v1213, 0.01
    %v1342 = vmul.f32 %v1214, 0.01
    %v1343 = vmul.f32 %v1215, 0.01
    %v1344 = vmul.f32 %v1216, 0.01
    %v1345 = vmul.f32 %v1217, 0.01
    %v1346 = vmul.f32 %v1218, 0.01
    %v1347 = vmul.f32 %v1219, 0.01
    %v1348 = vmul.f32 %v1220, 0.01
    %v1349 = vmul.f32 %v1221, 0.01
    %v1350 = vmul.f32 %v1222, 0.01
    %v1351 = vmul.f32 %v1223, 0.01
    %v1352 = vmul.f32 %v1224, 0.01
    %v1353 = vmul.f32 %v1225, 0.01
    %v1354 = vmul.f32 %v1226, 0.01
    %v1355 = vmul.f32 %v1227, 0.01
    %v1356 = vmul.f32 %v1228, 0.01
    %v1357 = vmul.f32 %v1229, 0.01
    %v1358 = vmul.f32 %v1230, 0.01
    %v1359 = vmul.f32 %v1231, 0.01
    %v1360 = vmul.f32 %v1232, 0.01
    %v1361 = vmul.f32 %v1233, 0.01
    %v1362 = vmul.f32 %v1234, 0.01
    %v1363 = vmul.f32 %v1235, 0.01
    %v1364 = vmul.f32 %v1236, 0.01
    %v1365 = vmul.f32 %v1237, 0.01
    %v1366 = vmul.f32 %v1238, 0.01
    %v1367 = vmul.f32 %v1239, 0.01
    %v1368 = vmul.f32 %v1240, 0.01
    %v1369 = vmul.f32 %v1241, 0.01
    %v1370 = vmul.f32 %v1242, 0.01
    %v1371 = vmul.f32 %v1243, 0.01
    %v1372 = vmul.f32 %v1244, 0.01
    %v1373 = vmul.f32 %v1245, 0.01
    %v1374 = vmul.f32 %v1246, 0.01
    %v1375 = vmul.f32 %v1247, 0.01
    %v1376 = vmul.f32 %v1248, 0.01
    %v1377 = vmul.f32 %v1249, 0.01
    %v1378 = vsel %vm1250, %v1186, %v1314
    %v1379 = vsel %vm1251, %v1187, %v1315
    %v1380 = vsel %vm1252, %v1188, %v1316
    %v1381 = vsel %vm1253, %v1189, %v1317
    %v1382 = vsel %vm1254, %v1190, %v1318
    %v1383 = vsel %vm1255, %v1191, %v1319
    %v1384 = vsel %vm1256, %v1192, %v1320
    %v1385 = vsel %vm1257, %v1193, %v1321
    %v1386 = vsel %vm1258, %v1194, %v1322
    %v1387 = vsel %vm1259, %v1195, %v1323
    %v1388 = vsel %vm1260, %v1196, %v1324
    %v1389 = vsel %vm1261, %v1197, %v1325
    %v1390 = vsel %vm1262, %v1198, %v1326
    %v1391 = vsel %vm1263, %v1199, %v1327
    %v1392 = vsel %vm1264, %v1200, %v1328
    %v1393 = vsel %vm1265, %v1201, %v1329
    %v1394 = vsel %vm1266, %v1202, %v1330
    %v1395 = vsel %vm1267, %v1203, %v1331
    %v1396 = vsel %vm1268, %v1204, %v1332
    %v1397 = vsel %vm1269, %v1205, %v1333
    %v1398 = vsel %vm1270, %v1206, %v1334
    %v1399 = vsel %vm1271, %v1207, %v1335
    %v1400 = vsel %vm1272, %v1208, %v1336
    %v1401 = vsel %vm1273, %v1209, %v1337
    %v1402 = vsel %vm1274, %v1210, %v1338
    %v1403 = vsel %vm1275, %v1211, %v1339
    %v1404 = vsel %vm1276, %v1212, %v1340
    %v1405 = vsel %vm1277, %v1213, %v1341
    %v1406 = vsel %vm1278, %v1214, %v1342
    %v1407 = vsel %vm1279, %v1215, %v1343
    %v1408 = vsel %vm1280, %v1216, %v1344
    %v1409 = vsel %vm1281, %v1217, %v1345
    %v1410 = vsel %vm1282, %v1218, %v1346
    %v1411 = vsel %vm1283, %v1219, %v1347
    %v1412 = vsel %vm1284, %v1220, %v1348
    %v1413 = vsel %vm1285, %v1221, %v1349
    %v1414 = vsel %vm1286, %v1222, %v1350
    %v1415 = vsel %vm1287, %v1223, %v1351
    %v1416 = vsel %vm1288, %v1224, %v1352
    %v1417 = vsel %vm1289, %v1225, %v1353
    %v1418 = vsel %vm1290, %v1226, %v1354
    %v1419 = vsel %vm1291, %v1227, %v1355
    %v1420 = vsel %vm1292, %v1228, %v1356
    %v1421 = vsel %vm1293, %v1229, %v1357
    %v1422 = vsel %vm1294, %v1230, %v1358
    %v1423 = vsel %vm1295, %v1231, %v1359
    %v1424 = vsel %vm1296, %v1232, %v1360
    %v1425 = vsel %vm1297, %v1233, %v1361
    %v1426 = vsel %vm1298, %v1234, %v1362
    %v1427 = vsel %vm1299, %v1235, %v1363
    %v1428 = vsel %vm1300, %v1236, %v1364
    %v1429 = vsel %vm1301, %v1237, %v1365
    %v1430 = vsel %vm1302, %v1238, %v1366
    %v1431 = vsel %vm1303, %v1239, %v1367
    %v1432 = vsel %vm1304, %v1240, %v1368
    %v1433 = vsel %vm1305, %v1241, %v1369
    %v1434 = vsel %vm1306, %v1242, %v1370
    %v1435 = vsel %vm1307, %v1243, %v1371
    %v1436 = vsel %vm1308, %v1244, %v1372
    %v1437 = vsel %vm1309, %v1245, %v1373
    %v1438 = vsel %vm1310, %v1246, %v1374
    %v1439 = vsel %vm1311, %v1247, %v1375
    %v1440 = vsel %vm1312, %v1248, %v1376
    %v1441 = vsel %vm1313, %v1249, %v1377
    %1442 = vst.msk [vmem:[#allocation2] sm:$0xff] %vm706, %v1378
    %1443 = vst.msk [vmem:[#allocation2 + $0x8] sm:$0xff] %vm706, %v1379
    %1444 = vst.msk [vmem:[#allocation2 + $0x10] sm:$0xff] %vm706, %v1380
    %1445 = vst.msk [vmem:[#allocation2 + $0x18] sm:$0xff] %vm706, %v1381
    %1446 = vst.msk [vmem:[#allocation2 + $0x20] sm:$0xff] %vm706, %v1382
    %1447 = vst.msk [vmem:[#allocation2 + $0x28] sm:$0xff] %vm706, %v1383
    %1448 = vst.msk [vmem:[#allocation2 + $0x30] sm:$0xff] %vm706, %v1384
    %1449 = vst.msk [vmem:[#allocation2 + $0x38] sm:$0xff] %vm706, %v1385
    %1450 = vst.msk [vmem:[#allocation2 + $0x40] sm:$0xff] %vm706, %v1386
    %1451 = vst.msk [vmem:[#allocation2 + $0x48] sm:$0xff] %vm706, %v1387
    %1452 = vst.msk [vmem:[#allocation2 + $0x50] sm:$0xff] %vm706, %v1388
    %1453 = vst.msk [vmem:[#allocation2 + $0x58] sm:$0xff] %vm706, %v1389
    %1454 = vst.msk [vmem:[#allocation2 + $0x60] sm:$0xff] %vm706, %v1390
    %1455 = vst.msk [vmem:[#allocation2 + $0x68] sm:$0xff] %vm706, %v1391
    %1456 = vst.msk [vmem:[#allocation2 + $0x70] sm:$0xff] %vm706, %v1392
    %1457 = vst.msk [vmem:[#allocation2 + $0x78] sm:$0xff] %vm706, %v1393
    %1458 = vst.msk [vmem:[#allocation2 + $0x80] sm:$0xff] %vm706, %v1394
    %1459 = vst.msk [vmem:[#allocation2 + $0x88] sm:$0xff] %vm706, %v1395
    %1460 = vst.msk [vmem:[#allocation2 + $0x90] sm:$0xff] %vm706, %v1396
    %1461 = vst.msk [vmem:[#allocation2 + $0x98] sm:$0xff] %vm706, %v1397
    %1462 = vst.msk [vmem:[#allocation2 + $0xa0] sm:$0xff] %vm706, %v1398
    %1463 = vst.msk [vmem:[#allocation2 + $0xa8] sm:$0xff] %vm706, %v1399
    %1464 = vst.msk [vmem:[#allocation2 + $0xb0] sm:$0xff] %vm706, %v1400
    %1465 = vst.msk [vmem:[#allocation2 + $0xb8] sm:$0xff] %vm706, %v1401
    %1466 = vst.msk [vmem:[#allocation2 + $0xc0] sm:$0xff] %vm706, %v1402
    %1467 = vst.msk [vmem:[#allocation2 + $0xc8] sm:$0xff] %vm706, %v1403
    %1468 = vst.msk [vmem:[#allocation2 + $0xd0] sm:$0xff] %vm706, %v1404
    %1469 = vst.msk [vmem:[#allocation2 + $0xd8] sm:$0xff] %vm706, %v1405
    %1470 = vst.msk [vmem:[#allocation2 + $0xe0] sm:$0xff] %vm706, %v1406
    %1471 = vst.msk [vmem:[#allocation2 + $0xe8] sm:$0xff] %vm706, %v1407
    %1472 = vst.msk [vmem:[#allocation2 + $0xf0] sm:$0xff] %vm706, %v1408
    %1473 = vst.msk [vmem:[#allocation2 + $0xf8] sm:$0xff] %vm706, %v1409
    %1474 = vst.msk [vmem:[#allocation2 + $0x100] sm:$0xff] %vm706, %v1410
    %1475 = vst.msk [vmem:[#allocation2 + $0x108] sm:$0xff] %vm706, %v1411
    %1476 = vst.msk [vmem:[#allocation2 + $0x110] sm:$0xff] %vm706, %v1412
    %1477 = vst.msk [vmem:[#allocation2 + $0x118] sm:$0xff] %vm706, %v1413
    %1478 = vst.msk [vmem:[#allocation2 + $0x120] sm:$0xff] %vm706, %v1414
    %1479 = vst.msk [vmem:[#allocation2 + $0x128] sm:$0xff] %vm706, %v1415
    %1480 = vst.msk [vmem:[#allocation2 + $0x130] sm:$0xff] %vm706, %v1416
    %1481 = vst.msk [vmem:[#allocation2 + $0x138] sm:$0xff] %vm706, %v1417
    %1482 = vst.msk [vmem:[#allocation2 + $0x140] sm:$0xff] %vm706, %v1418
    %1483 = vst.msk [vmem:[#allocation2 + $0x148] sm:$0xff] %vm706, %v1419
    %1484 = vst.msk [vmem:[#allocation2 + $0x150] sm:$0xff] %vm706, %v1420
    %1485 = vst.msk [vmem:[#allocation2 + $0x158] sm:$0xff] %vm706, %v1421
    %1486 = vst.msk [vmem:[#allocation2 + $0x160] sm:$0xff] %vm706, %v1422
    %1487 = vst.msk [vmem:[#allocation2 + $0x168] sm:$0xff] %vm706, %v1423
    %1488 = vst.msk [vmem:[#allocation2 + $0x170] sm:$0xff] %vm706, %v1424
    %1489 = vst.msk [vmem:[#allocation2 + $0x178] sm:$0xff] %vm706, %v1425
    %1490 = vst.msk [vmem:[#allocation2 + $0x180] sm:$0xff] %vm706, %v1426
    %1491 = vst.msk [vmem:[#allocation2 + $0x188] sm:$0xff] %vm706, %v1427
    %1492 = vst.msk [vmem:[#allocation2 + $0x190] sm:$0xff] %vm706, %v1428
    %1493 = vst.msk [vmem:[#allocation2 + $0x198] sm:$0xff] %vm706, %v1429
    %1494 = vst.msk [vmem:[#allocation2 + $0x1a0] sm:$0xff] %vm706, %v1430
    %1495 = vst.msk [vmem:[#allocation2 + $0x1a8] sm:$0xff] %vm706, %v1431
    %1496 = vst.msk [vmem:[#allocation2 + $0x1b0] sm:$0xff] %vm706, %v1432
    %1497 = vst.msk [vmem:[#allocation2 + $0x1b8] sm:$0xff] %vm706, %v1433
    %1498 = vst.msk [vmem:[#allocation2 + $0x1c0] sm:$0xff] %vm706, %v1434
    %1499 = vst.msk [vmem:[#allocation2 + $0x1c8] sm:$0xff] %vm706, %v1435
    %1500 = vst.msk [vmem:[#allocation2 + $0x1d0] sm:$0xff] %vm706, %v1436
    %1501 = vst.msk [vmem:[#allocation2 + $0x1d8] sm:$0xff] %vm706, %v1437
    %1502 = vst.msk [vmem:[#allocation2 + $0x1e0] sm:$0xff] %vm706, %v1438
    %1503 = vst.msk [vmem:[#allocation2 + $0x1e8] sm:$0xff] %vm706, %v1439
    %1504 = vst.msk [vmem:[#allocation2 + $0x1f0] sm:$0xff] %vm706, %v1440
    %1505 = vst.msk [vmem:[#allocation2 + $0x1f8] sm:$0xff] %vm706, %v1441
    %1506 = vst.msk [vmem:[#allocation2 + $0x200] sm:$0xff] %vm706, 0.0
    %1507 = vst.msk [vmem:[#allocation2 + $0x208] sm:$0xff] %vm706, 0.0
    %1508 = vst.msk [vmem:[#allocation2 + $0x210] sm:$0xff] %vm706, 0.0
    %1509 = vst.msk [vmem:[#allocation2 + $0x218] sm:$0xff] %vm706, 0.0
    %1510 = vst.msk [vmem:[#allocation2 + $0x220] sm:$0xff] %vm706, 0.0
    %1511 = vst.msk [vmem:[#allocation2 + $0x228] sm:$0xff] %vm706, 0.0
    %1512 = vst.msk [vmem:[#allocation2 + $0x230] sm:$0xff] %vm706, 0.0
    %1513 = vst.msk [vmem:[#allocation2 + $0x238] sm:$0xff] %vm706, 0.0
    %1514 = vst.msk [vmem:[#allocation2 + $0x240] sm:$0xff] %vm706, 0.0
    %v1515 = vld [vmem:[#allocation2] sm:$0xff]
    %v1516 = vld [vmem:[#allocation2 + $0x8] sm:$0xff]
    %v1517 = vld [vmem:[#allocation2 + $0x10] sm:$0xff]
    %v1518 = vld [vmem:[#allocation2 + $0x18] sm:$0xff]
    %v1519 = vld [vmem:[#allocation2 + $0x20] sm:$0xff]
    %v1520 = vld [vmem:[#allocation2 + $0x28] sm:$0xff]
    %v1521 = vld [vmem:[#allocation2 + $0x30] sm:$0xff]
    %v1522 = vld [vmem:[#allocation2 + $0x38] sm:$0xff]
    %v1523 = vld [vmem:[#allocation2 + $0x40] sm:$0xff]
    %v1524 = vld [vmem:[#allocation2 + $0x48] sm:$0xff]
    %v1525 = vld [vmem:[#allocation2 + $0x50] sm:$0xff]
    %v1526 = vld [vmem:[#allocation2 + $0x58] sm:$0xff]
    %v1527 = vld [vmem:[#allocation2 + $0x60] sm:$0xff]
    %v1528 = vld [vmem:[#allocation2 + $0x68] sm:$0xff]
    %v1529 = vld [vmem:[#allocation2 + $0x70] sm:$0xff]
    %v1530 = vld [vmem:[#allocation2 + $0x78] sm:$0xff]
    %v1531 = vld [vmem:[#allocation2 + $0x1] sm:$0xff]
    %v1532 = vld [vmem:[#allocation2 + $0x9] sm:$0xff]
    %v1533 = vld [vmem:[#allocation2 + $0x11] sm:$0xff]
    %v1534 = vld [vmem:[#allocation2 + $0x19] sm:$0xff]
    %v1535 = vld [vmem:[#allocation2 + $0x21] sm:$0xff]
    %v1536 = vld [vmem:[#allocation2 + $0x29] sm:$0xff]
    %v1537 = vld [vmem:[#allocation2 + $0x31] sm:$0xff]
    %v1538 = vld [vmem:[#allocation2 + $0x39] sm:$0xff]
    %v1539 = vld [vmem:[#allocation2 + $0x41] sm:$0xff]
    %v1540 = vld [vmem:[#allocation2 + $0x49] sm:$0xff]
    %v1541 = vld [vmem:[#allocation2 + $0x51] sm:$0xff]
    %v1542 = vld [vmem:[#allocation2 + $0x59] sm:$0xff]
    %v1543 = vld [vmem:[#allocation2 + $0x61] sm:$0xff]
    %v1544 = vld [vmem:[#allocation2 + $0x69] sm:$0xff]
    %v1545 = vld [vmem:[#allocation2 + $0x71] sm:$0xff]
    %v1546 = vld [vmem:[#allocation2 + $0x79] sm:$0xff]
    %v1547 = vld [vmem:[#allocation2 + $0x2] sm:$0xff]
    %v1548 = vld [vmem:[#allocation2 + $0xa] sm:$0xff]
    %v1549 = vld [vmem:[#allocation2 + $0x12] sm:$0xff]
    %v1550 = vld [vmem:[#allocation2 + $0x1a] sm:$0xff]
    %v1551 = vld [vmem:[#allocation2 + $0x22] sm:$0xff]
    %v1552 = vld [vmem:[#allocation2 + $0x2a] sm:$0xff]
    %v1553 = vld [vmem:[#allocation2 + $0x32] sm:$0xff]
    %v1554 = vld [vmem:[#allocation2 + $0x3a] sm:$0xff]
    %v1555 = vld [vmem:[#allocation2 + $0x42] sm:$0xff]
    %v1556 = vld [vmem:[#allocation2 + $0x4a] sm:$0xff]
    %v1557 = vld [vmem:[#allocation2 + $0x52] sm:$0xff]
    %v1558 = vld [vmem:[#allocation2 + $0x5a] sm:$0xff]
    %v1559 = vld [vmem:[#allocation2 + $0x62] sm:$0xff]
    %v1560 = vld [vmem:[#allocation2 + $0x6a] sm:$0xff]
    %v1561 = vld [vmem:[#allocation2 + $0x72] sm:$0xff]
    %v1562 = vld [vmem:[#allocation2 + $0x7a] sm:$0xff]
    %v1563 = vld [vmem:[#allocation2 + $0x3] sm:$0xff]
    %v1564 = vld [vmem:[#allocation2 + $0xb] sm:$0xff]
    %v1565 = vld [vmem:[#allocation2 + $0x13] sm:$0xff]
    %v1566 = vld [vmem:[#allocation2 + $0x1b] sm:$0xff]
    %v1567 = vld [vmem:[#allocation2 + $0x23] sm:$0xff]
    %v1568 = vld [vmem:[#allocation2 + $0x2b] sm:$0xff]
    %v1569 = vld [vmem:[#allocation2 + $0x33] sm:$0xff]
    %v1570 = vld [vmem:[#allocation2 + $0x3b] sm:$0xff]
    %v1571 = vld [vmem:[#allocation2 + $0x43] sm:$0xff]
    %v1572 = vld [vmem:[#allocation2 + $0x4b] sm:$0xff]
    %v1573 = vld [vmem:[#allocation2 + $0x53] sm:$0xff]
    %v1574 = vld [vmem:[#allocation2 + $0x5b] sm:$0xff]
    %v1575 = vld [vmem:[#allocation2 + $0x63] sm:$0xff]
    %v1576 = vld [vmem:[#allocation2 + $0x6b] sm:$0xff]
    %v1577 = vld [vmem:[#allocation2 + $0x73] sm:$0xff]
    %v1578 = vld [vmem:[#allocation2 + $0x7b] sm:$0xff]
    %v1579 = vld [vmem:[#allocation2 + $0x4] sm:$0xff]
    %v1580 = vld [vmem:[#allocation2 + $0xc] sm:$0xff]
    %v1581 = vld [vmem:[#allocation2 + $0x14] sm:$0xff]
    %v1582 = vld [vmem:[#allocation2 + $0x1c] sm:$0xff]
    %v1583 = vld [vmem:[#allocation2 + $0x24] sm:$0xff]
    %v1584 = vld [vmem:[#allocation2 + $0x2c] sm:$0xff]
    %v1585 = vld [vmem:[#allocation2 + $0x34] sm:$0xff]
    %v1586 = vld [vmem:[#allocation2 + $0x3c] sm:$0xff]
    %v1587 = vld [vmem:[#allocation2 + $0x44] sm:$0xff]
    %v1588 = vld [vmem:[#allocation2 + $0x4c] sm:$0xff]
    %v1589 = vld [vmem:[#allocation2 + $0x54] sm:$0xff]
    %v1590 = vld [vmem:[#allocation2 + $0x5c] sm:$0xff]
    %v1591 = vld [vmem:[#allocation2 + $0x64] sm:$0xff]
    %v1592 = vld [vmem:[#allocation2 + $0x6c] sm:$0xff]
    %v1593 = vld [vmem:[#allocation2 + $0x74] sm:$0xff]
    %v1594 = vld [vmem:[#allocation2 + $0x7c] sm:$0xff]
    %v1595 = vld [vmem:[#allocation2 + $0x80] sm:$0xff]
    %v1596 = vld [vmem:[#allocation2 + $0x88] sm:$0xff]
    %v1597 = vld [vmem:[#allocation2 + $0x81] sm:$0xff]
    %v1598 = vld [vmem:[#allocation2 + $0x89] sm:$0xff]
    %v1599 = vld [vmem:[#allocation2 + $0x82] sm:$0xff]
    %v1600 = vld [vmem:[#allocation2 + $0x8a] sm:$0xff]
    %v1601 = vld [vmem:[#allocation2 + $0x83] sm:$0xff]
    %v1602 = vld [vmem:[#allocation2 + $0x8b] sm:$0xff]
    %v1603 = vld [vmem:[#allocation2 + $0x84] sm:$0xff]
    %v1604 = vld [vmem:[#allocation2 + $0x8c] sm:$0xff]
    %v1605 = vld [vmem:[#allocation2 + $0x90] sm:$0xff]
    %v1606 = vld [vmem:[#allocation2 + $0x98] sm:$0xff]
    %v1607 = vld [vmem:[#allocation2 + $0x91] sm:$0xff]
    %v1608 = vld [vmem:[#allocation2 + $0x99] sm:$0xff]
    %v1609 = vld [vmem:[#allocation2 + $0x92] sm:$0xff]
    %v1610 = vld [vmem:[#allocation2 + $0x9a] sm:$0xff]
    %v1611 = vld [vmem:[#allocation2 + $0x93] sm:$0xff]
    %v1612 = vld [vmem:[#allocation2 + $0x9b] sm:$0xff]
    %v1613 = vld [vmem:[#allocation2 + $0x94] sm:$0xff]
    %v1614 = vld [vmem:[#allocation2 + $0x9c] sm:$0xff]
    %v1615 = vld [vmem:[#allocation2 + $0xa0] sm:$0xff]
    %v1616 = vld [vmem:[#allocation2 + $0xa8] sm:$0xff]
    %v1617 = vld [vmem:[#allocation2 + $0xa1] sm:$0xff]
    %v1618 = vld [vmem:[#allocation2 + $0xa9] sm:$0xff]
    %v1619 = vld [vmem:[#allocation2 + $0xa2] sm:$0xff]
    %v1620 = vld [vmem:[#allocation2 + $0xaa] sm:$0xff]
    %v1621 = vld [vmem:[#allocation2 + $0xa3] sm:$0xff]
    %v1622 = vld [vmem:[#allocation2 + $0xab] sm:$0xff]
    %v1623 = vld [vmem:[#allocation2 + $0xa4] sm:$0xff]
    %v1624 = vld [vmem:[#allocation2 + $0xac] sm:$0xff]
    %v1625 = vld [vmem:[#allocation2 + $0xb0] sm:$0xff]
    %v1626 = vld [vmem:[#allocation2 + $0xb8] sm:$0xff]
    %v1627 = vld [vmem:[#allocation2 + $0xb1] sm:$0xff]
    %v1628 = vld [vmem:[#allocation2 + $0xb9] sm:$0xff]
    %v1629 = vld [vmem:[#allocation2 + $0xb2] sm:$0xff]
    %v1630 = vld [vmem:[#allocation2 + $0xba] sm:$0xff]
    %v1631 = vld [vmem:[#allocation2 + $0xb3] sm:$0xff]
    %v1632 = vld [vmem:[#allocation2 + $0xbb] sm:$0xff]
    %v1633 = vld [vmem:[#allocation2 + $0xb4] sm:$0xff]
    %v1634 = vld [vmem:[#allocation2 + $0xbc] sm:$0xff]
    %1651 = vrot.lane.b32.xlu0 %v1531, 16
    %v1652 = vpop.permute.xlu0 %1651
    %1653 = vrot.lane.b32.xlu0 %v1532, 16
    %v1654 = vpop.permute.xlu0 %1653
    %1655 = vrot.lane.b32.xlu0 %v1533, 16
    %v1656 = vpop.permute.xlu0 %1655
    %1657 = vrot.lane.b32.xlu0 %v1534, 16
    %v1658 = vpop.permute.xlu0 %1657
    %1659 = vrot.lane.b32.xlu0 %v1535, 16
    %v1660 = vpop.permute.xlu0 %1659
    %1661 = vrot.lane.b32.xlu0 %v1536, 16
    %v1662 = vpop.permute.xlu0 %1661
    %1663 = vrot.lane.b32.xlu0 %v1537, 16
    %v1664 = vpop.permute.xlu0 %1663
    %1665 = vrot.lane.b32.xlu0 %v1538, 16
    %v1666 = vpop.permute.xlu0 %1665
    %1667 = vrot.lane.b32.xlu0 %v1539, 16
    %v1668 = vpop.permute.xlu0 %1667
    %1669 = vrot.lane.b32.xlu0 %v1540, 16
    %v1670 = vpop.permute.xlu0 %1669
    %1671 = vrot.lane.b32.xlu0 %v1541, 16
    %v1672 = vpop.permute.xlu0 %1671
    %1673 = vrot.lane.b32.xlu0 %v1542, 16
    %v1674 = vpop.permute.xlu0 %1673
    %1675 = vrot.lane.b32.xlu0 %v1543, 16
    %v1676 = vpop.permute.xlu0 %1675
    %1677 = vrot.lane.b32.xlu0 %v1544, 16
    %v1678 = vpop.permute.xlu0 %1677
    %1679 = vrot.lane.b32.xlu0 %v1545, 16
    %v1680 = vpop.permute.xlu0 %1679
    %1681 = vrot.lane.b32.xlu0 %v1546, 16
    %v1682 = vpop.permute.xlu0 %1681
    %1715 = vrot.lane.b32.xlu0 %v1547, 32
    %v1716 = vpop.permute.xlu0 %1715
    %1717 = vrot.lane.b32.xlu0 %v1548, 32
    %v1718 = vpop.permute.xlu0 %1717
    %1719 = vrot.lane.b32.xlu0 %v1549, 32
    %v1720 = vpop.permute.xlu0 %1719
    %1721 = vrot.lane.b32.xlu0 %v1550, 32
    %v1722 = vpop.permute.xlu0 %1721
    %1723 = vrot.lane.b32.xlu0 %v1551, 32
    %v1724 = vpop.permute.xlu0 %1723
    %1725 = vrot.lane.b32.xlu0 %v1552, 32
    %v1726 = vpop.permute.xlu0 %1725
    %1727 = vrot.lane.b32.xlu0 %v1553, 32
    %v1728 = vpop.permute.xlu0 %1727
    %1729 = vrot.lane.b32.xlu0 %v1554, 32
    %v1730 = vpop.permute.xlu0 %1729
    %1731 = vrot.lane.b32.xlu0 %v1555, 32
    %v1732 = vpop.permute.xlu0 %1731
    %1733 = vrot.lane.b32.xlu0 %v1556, 32
    %v1734 = vpop.permute.xlu0 %1733
    %1735 = vrot.lane.b32.xlu0 %v1557, 32
    %v1736 = vpop.permute.xlu0 %1735
    %1737 = vrot.lane.b32.xlu0 %v1558, 32
    %v1738 = vpop.permute.xlu0 %1737
    %1739 = vrot.lane.b32.xlu0 %v1559, 32
    %v1740 = vpop.permute.xlu0 %1739
    %1741 = vrot.lane.b32.xlu0 %v1560, 32
    %v1742 = vpop.permute.xlu0 %1741
    %1743 = vrot.lane.b32.xlu0 %v1561, 32
    %v1744 = vpop.permute.xlu0 %1743
    %1745 = vrot.lane.b32.xlu0 %v1562, 32
    %v1746 = vpop.permute.xlu0 %1745
    %1779 = vrot.lane.b32.xlu0 %v1563, 48
    %v1780 = vpop.permute.xlu0 %1779
    %1781 = vrot.lane.b32.xlu0 %v1564, 48
    %v1782 = vpop.permute.xlu0 %1781
    %1783 = vrot.lane.b32.xlu0 %v1565, 48
    %v1784 = vpop.permute.xlu0 %1783
    %1785 = vrot.lane.b32.xlu0 %v1566, 48
    %v1786 = vpop.permute.xlu0 %1785
    %1787 = vrot.lane.b32.xlu0 %v1567, 48
    %v1788 = vpop.permute.xlu0 %1787
    %1789 = vrot.lane.b32.xlu0 %v1568, 48
    %v1790 = vpop.permute.xlu0 %1789
    %1791 = vrot.lane.b32.xlu0 %v1569, 48
    %v1792 = vpop.permute.xlu0 %1791
    %1793 = vrot.lane.b32.xlu0 %v1570, 48
    %v1794 = vpop.permute.xlu0 %1793
    %1795 = vrot.lane.b32.xlu0 %v1571, 48
    %v1796 = vpop.permute.xlu0 %1795
    %1797 = vrot.lane.b32.xlu0 %v1572, 48
    %v1798 = vpop.permute.xlu0 %1797
    %1799 = vrot.lane.b32.xlu0 %v1573, 48
    %v1800 = vpop.permute.xlu0 %1799
    %1801 = vrot.lane.b32.xlu0 %v1574, 48
    %v1802 = vpop.permute.xlu0 %1801
    %1803 = vrot.lane.b32.xlu0 %v1575, 48
    %v1804 = vpop.permute.xlu0 %1803
    %1805 = vrot.lane.b32.xlu0 %v1576, 48
    %v1806 = vpop.permute.xlu0 %1805
    %1807 = vrot.lane.b32.xlu0 %v1577, 48
    %v1808 = vpop.permute.xlu0 %1807
    %1809 = vrot.lane.b32.xlu0 %v1578, 48
    %v1810 = vpop.permute.xlu0 %1809
    %1843 = vrot.lane.b32.xlu0 %v1579, 64
    %v1844 = vpop.permute.xlu0 %1843
    %1845 = vrot.lane.b32.xlu0 %v1580, 64
    %v1846 = vpop.permute.xlu0 %1845
    %1847 = vrot.lane.b32.xlu0 %v1581, 64
    %v1848 = vpop.permute.xlu0 %1847
    %1849 = vrot.lane.b32.xlu0 %v1582, 64
    %v1850 = vpop.permute.xlu0 %1849
    %1851 = vrot.lane.b32.xlu0 %v1583, 64
    %v1852 = vpop.permute.xlu0 %1851
    %1853 = vrot.lane.b32.xlu0 %v1584, 64
    %v1854 = vpop.permute.xlu0 %1853
    %1855 = vrot.lane.b32.xlu0 %v1585, 64
    %v1856 = vpop.permute.xlu0 %1855
    %1857 = vrot.lane.b32.xlu0 %v1586, 64
    %v1858 = vpop.permute.xlu0 %1857
    %1859 = vrot.lane.b32.xlu0 %v1587, 64
    %v1860 = vpop.permute.xlu0 %1859
    %1861 = vrot.lane.b32.xlu0 %v1588, 64
    %v1862 = vpop.permute.xlu0 %1861
    %1863 = vrot.lane.b32.xlu0 %v1589, 64
    %v1864 = vpop.permute.xlu0 %1863
    %1865 = vrot.lane.b32.xlu0 %v1590, 64
    %v1866 = vpop.permute.xlu0 %1865
    %1867 = vrot.lane.b32.xlu0 %v1591, 64
    %v1868 = vpop.permute.xlu0 %1867
    %1869 = vrot.lane.b32.xlu0 %v1592, 64
    %v1870 = vpop.permute.xlu0 %1869
    %1871 = vrot.lane.b32.xlu0 %v1593, 64
    %v1872 = vpop.permute.xlu0 %1871
    %1873 = vrot.lane.b32.xlu0 %v1594, 64
    %v1874 = vpop.permute.xlu0 %1873
    %1907 = vrot.lane.b32.xlu0 %v1517, 80
    %v1908 = vpop.permute.xlu0 %1907
    %1909 = vrot.lane.b32.xlu0 %v1518, 80
    %v1910 = vpop.permute.xlu0 %1909
    %1911 = vrot.lane.b32.xlu0 %v1519, 80
    %v1912 = vpop.permute.xlu0 %1911
    %1913 = vrot.lane.b32.xlu0 %v1520, 80
    %v1914 = vpop.permute.xlu0 %1913
    %1915 = vrot.lane.b32.xlu0 %v1521, 80
    %v1916 = vpop.permute.xlu0 %1915
    %1917 = vrot.lane.b32.xlu0 %v1522, 80
    %v1918 = vpop.permute.xlu0 %1917
    %1919 = vrot.lane.b32.xlu0 %v1523, 80
    %v1920 = vpop.permute.xlu0 %1919
    %1921 = vrot.lane.b32.xlu0 %v1524, 80
    %v1922 = vpop.permute.xlu0 %1921
    %1923 = vrot.lane.b32.xlu0 %v1525, 80
    %v1924 = vpop.permute.xlu0 %1923
    %1925 = vrot.lane.b32.xlu0 %v1526, 80
    %v1926 = vpop.permute.xlu0 %1925
    %1927 = vrot.lane.b32.xlu0 %v1527, 80
    %v1928 = vpop.permute.xlu0 %1927
    %1929 = vrot.lane.b32.xlu0 %v1528, 80
    %v1930 = vpop.permute.xlu0 %1929
    %1931 = vrot.lane.b32.xlu0 %v1529, 80
    %v1932 = vpop.permute.xlu0 %1931
    %1933 = vrot.lane.b32.xlu0 %v1530, 80
    %v1934 = vpop.permute.xlu0 %1933
    %1935 = vrot.lane.b32.xlu0 %v1595, 80
    %v1936 = vpop.permute.xlu0 %1935
    %1937 = vrot.lane.b32.xlu0 %v1596, 80
    %v1938 = vpop.permute.xlu0 %1937
    %1957 = vrot.lane.b32.xlu0 %v1533, 96
    %v1958 = vpop.permute.xlu0 %1957
    %1959 = vrot.lane.b32.xlu0 %v1534, 96
    %v1960 = vpop.permute.xlu0 %1959
    %1961 = vrot.lane.b32.xlu0 %v1535, 96
    %v1962 = vpop.permute.xlu0 %1961
    %1963 = vrot.lane.b32.xlu0 %v1536, 96
    %v1964 = vpop.permute.xlu0 %1963
    %1965 = vrot.lane.b32.xlu0 %v1537, 96
    %v1966 = vpop.permute.xlu0 %1965
    %1967 = vrot.lane.b32.xlu0 %v1538, 96
    %v1968 = vpop.permute.xlu0 %1967
    %1969 = vrot.lane.b32.xlu0 %v1539, 96
    %v1970 = vpop.permute.xlu0 %1969
    %1971 = vrot.lane.b32.xlu0 %v1540, 96
    %v1972 = vpop.permute.xlu0 %1971
    %1973 = vrot.lane.b32.xlu0 %v1541, 96
    %v1974 = vpop.permute.xlu0 %1973
    %1975 = vrot.lane.b32.xlu0 %v1542, 96
    %v1976 = vpop.permute.xlu0 %1975
    %1977 = vrot.lane.b32.xlu0 %v1543, 96
    %v1978 = vpop.permute.xlu0 %1977
    %1979 = vrot.lane.b32.xlu0 %v1544, 96
    %v1980 = vpop.permute.xlu0 %1979
    %1981 = vrot.lane.b32.xlu0 %v1545, 96
    %v1982 = vpop.permute.xlu0 %1981
    %1983 = vrot.lane.b32.xlu0 %v1546, 96
    %v1984 = vpop.permute.xlu0 %1983
    %1985 = vrot.lane.b32.xlu0 %v1597, 96
    %v1986 = vpop.permute.xlu0 %1985
    %1987 = vrot.lane.b32.xlu0 %v1598, 96
    %v1988 = vpop.permute.xlu0 %1987
    %2007 = vrot.lane.b32.xlu0 %v1549, 112
    %v2008 = vpop.permute.xlu0 %2007
    %2009 = vrot.lane.b32.xlu0 %v1550, 112
    %v2010 = vpop.permute.xlu0 %2009
    %2011 = vrot.lane.b32.xlu0 %v1551, 112
    %v2012 = vpop.permute.xlu0 %2011
    %2013 = vrot.lane.b32.xlu0 %v1552, 112
    %v2014 = vpop.permute.xlu0 %2013
    %2015 = vrot.lane.b32.xlu0 %v1553, 112
    %v2016 = vpop.permute.xlu0 %2015
    %2017 = vrot.lane.b32.xlu0 %v1554, 112
    %v2018 = vpop.permute.xlu0 %2017
    %2019 = vrot.lane.b32.xlu0 %v1555, 112
    %v2020 = vpop.permute.xlu0 %2019
    %2021 = vrot.lane.b32.xlu0 %v1556, 112
    %v2022 = vpop.permute.xlu0 %2021
    %2023 = vrot.lane.b32.xlu0 %v1557, 112
    %v2024 = vpop.permute.xlu0 %2023
    %2025 = vrot.lane.b32.xlu0 %v1558, 112
    %v2026 = vpop.permute.xlu0 %2025
    %2027 = vrot.lane.b32.xlu0 %v1559, 112
    %v2028 = vpop.permute.xlu0 %2027
    %2029 = vrot.lane.b32.xlu0 %v1560, 112
    %v2030 = vpop.permute.xlu0 %2029
    %2031 = vrot.lane.b32.xlu0 %v1561, 112
    %v2032 = vpop.permute.xlu0 %2031
    %2033 = vrot.lane.b32.xlu0 %v1562, 112
    %v2034 = vpop.permute.xlu0 %2033
    %2035 = vrot.lane.b32.xlu0 %v1599, 112
    %v2036 = vpop.permute.xlu0 %2035
    %2037 = vrot.lane.b32.xlu0 %v1600, 112
    %v2038 = vpop.permute.xlu0 %2037
    %2057 = vrot.lane.b32.xlu0 %v1581, 16
    %v2058 = vpop.permute.xlu0 %2057
    %2059 = vrot.lane.b32.xlu0 %v1582, 16
    %v2060 = vpop.permute.xlu0 %2059
    %2061 = vrot.lane.b32.xlu0 %v1583, 16
    %v2062 = vpop.permute.xlu0 %2061
    %2063 = vrot.lane.b32.xlu0 %v1584, 16
    %v2064 = vpop.permute.xlu0 %2063
    %2065 = vrot.lane.b32.xlu0 %v1585, 16
    %v2066 = vpop.permute.xlu0 %2065
    %2067 = vrot.lane.b32.xlu0 %v1586, 16
    %v2068 = vpop.permute.xlu0 %2067
    %2069 = vrot.lane.b32.xlu0 %v1587, 16
    %v2070 = vpop.permute.xlu0 %2069
    %2071 = vrot.lane.b32.xlu0 %v1588, 16
    %v2072 = vpop.permute.xlu0 %2071
    %2073 = vrot.lane.b32.xlu0 %v1589, 16
    %v2074 = vpop.permute.xlu0 %2073
    %2075 = vrot.lane.b32.xlu0 %v1590, 16
    %v2076 = vpop.permute.xlu0 %2075
    %2077 = vrot.lane.b32.xlu0 %v1591, 16
    %v2078 = vpop.permute.xlu0 %2077
    %2079 = vrot.lane.b32.xlu0 %v1592, 16
    %v2080 = vpop.permute.xlu0 %2079
    %2081 = vrot.lane.b32.xlu0 %v1593, 16
    %v2082 = vpop.permute.xlu0 %2081
    %2083 = vrot.lane.b32.xlu0 %v1594, 16
    %v2084 = vpop.permute.xlu0 %2083
    %2085 = vrot.lane.b32.xlu0 %v1603, 16
    %v2086 = vpop.permute.xlu0 %2085
    %2087 = vrot.lane.b32.xlu0 %v1604, 16
    %v2088 = vpop.permute.xlu0 %2087
    %2107 = vrot.lane.b32.xlu0 %v1519, 32
    %v2108 = vpop.permute.xlu0 %2107
    %2109 = vrot.lane.b32.xlu0 %v1520, 32
    %v2110 = vpop.permute.xlu0 %2109
    %2111 = vrot.lane.b32.xlu0 %v1521, 32
    %v2112 = vpop.permute.xlu0 %2111
    %2113 = vrot.lane.b32.xlu0 %v1522, 32
    %v2114 = vpop.permute.xlu0 %2113
    %2115 = vrot.lane.b32.xlu0 %v1523, 32
    %v2116 = vpop.permute.xlu0 %2115
    %2117 = vrot.lane.b32.xlu0 %v1524, 32
    %v2118 = vpop.permute.xlu0 %2117
    %2119 = vrot.lane.b32.xlu0 %v1525, 32
    %v2120 = vpop.permute.xlu0 %2119
    %2121 = vrot.lane.b32.xlu0 %v1526, 32
    %v2122 = vpop.permute.xlu0 %2121
    %2123 = vrot.lane.b32.xlu0 %v1527, 32
    %v2124 = vpop.permute.xlu0 %2123
    %2125 = vrot.lane.b32.xlu0 %v1528, 32
    %v2126 = vpop.permute.xlu0 %2125
    %2127 = vrot.lane.b32.xlu0 %v1529, 32
    %v2128 = vpop.permute.xlu0 %2127
    %2129 = vrot.lane.b32.xlu0 %v1530, 32
    %v2130 = vpop.permute.xlu0 %2129
    %2131 = vrot.lane.b32.xlu0 %v1595, 32
    %v2132 = vpop.permute.xlu0 %2131
    %2133 = vrot.lane.b32.xlu0 %v1596, 32
    %v2134 = vpop.permute.xlu0 %2133
    %2135 = vrot.lane.b32.xlu0 %v1605, 32
    %v2136 = vpop.permute.xlu0 %2135
    %2137 = vrot.lane.b32.xlu0 %v1606, 32
    %v2138 = vpop.permute.xlu0 %2137
    %2157 = vrot.lane.b32.xlu0 %v1535, 48
    %v2158 = vpop.permute.xlu0 %2157
    %2159 = vrot.lane.b32.xlu0 %v1536, 48
    %v2160 = vpop.permute.xlu0 %2159
    %2161 = vrot.lane.b32.xlu0 %v1537, 48
    %v2162 = vpop.permute.xlu0 %2161
    %2163 = vrot.lane.b32.xlu0 %v1538, 48
    %v2164 = vpop.permute.xlu0 %2163
    %2165 = vrot.lane.b32.xlu0 %v1539, 48
    %v2166 = vpop.permute.xlu0 %2165
    %2167 = vrot.lane.b32.xlu0 %v1540, 48
    %v2168 = vpop.permute.xlu0 %2167
    %2169 = vrot.lane.b32.xlu0 %v1541, 48
    %v2170 = vpop.permute.xlu0 %2169
    %2171 = vrot.lane.b32.xlu0 %v1542, 48
    %v2172 = vpop.permute.xlu0 %2171
    %2173 = vrot.lane.b32.xlu0 %v1543, 48
    %v2174 = vpop.permute.xlu0 %2173
    %2175 = vrot.lane.b32.xlu0 %v1544, 48
    %v2176 = vpop.permute.xlu0 %2175
    %2177 = vrot.lane.b32.xlu0 %v1545, 48
    %v2178 = vpop.permute.xlu0 %2177
    %2179 = vrot.lane.b32.xlu0 %v1546, 48
    %v2180 = vpop.permute.xlu0 %2179
    %2181 = vrot.lane.b32.xlu0 %v1597, 48
    %v2182 = vpop.permute.xlu0 %2181
    %2183 = vrot.lane.b32.xlu0 %v1598, 48
    %v2184 = vpop.permute.xlu0 %2183
    %2185 = vrot.lane.b32.xlu0 %v1607, 48
    %v2186 = vpop.permute.xlu0 %2185
    %2187 = vrot.lane.b32.xlu0 %v1608, 48
    %v2188 = vpop.permute.xlu0 %2187
    %2207 = vrot.lane.b32.xlu0 %v1551, 64
    %v2208 = vpop.permute.xlu0 %2207
    %2209 = vrot.lane.b32.xlu0 %v1552, 64
    %v2210 = vpop.permute.xlu0 %2209
    %2211 = vrot.lane.b32.xlu0 %v1553, 64
    %v2212 = vpop.permute.xlu0 %2211
    %2213 = vrot.lane.b32.xlu0 %v1554, 64
    %v2214 = vpop.permute.xlu0 %2213
    %2215 = vrot.lane.b32.xlu0 %v1555, 64
    %v2216 = vpop.permute.xlu0 %2215
    %2217 = vrot.lane.b32.xlu0 %v1556, 64
    %v2218 = vpop.permute.xlu0 %2217
    %2219 = vrot.lane.b32.xlu0 %v1557, 64
    %v2220 = vpop.permute.xlu0 %2219
    %2221 = vrot.lane.b32.xlu0 %v1558, 64
    %v2222 = vpop.permute.xlu0 %2221
    %2223 = vrot.lane.b32.xlu0 %v1559, 64
    %v2224 = vpop.permute.xlu0 %2223
    %2225 = vrot.lane.b32.xlu0 %v1560, 64
    %v2226 = vpop.permute.xlu0 %2225
    %2227 = vrot.lane.b32.xlu0 %v1561, 64
    %v2228 = vpop.permute.xlu0 %2227
    %2229 = vrot.lane.b32.xlu0 %v1562, 64
    %v2230 = vpop.permute.xlu0 %2229
    %2231 = vrot.lane.b32.xlu0 %v1599, 64
    %v2232 = vpop.permute.xlu0 %2231
    %2233 = vrot.lane.b32.xlu0 %v1600, 64
    %v2234 = vpop.permute.xlu0 %2233
    %2235 = vrot.lane.b32.xlu0 %v1609, 64
    %v2236 = vpop.permute.xlu0 %2235
    %2237 = vrot.lane.b32.xlu0 %v1610, 64
    %v2238 = vpop.permute.xlu0 %2237
    %2259 = vrot.lane.b32.xlu0 %v1567, 80
    %v2260 = vpop.permute.xlu0 %2259
    %2261 = vrot.lane.b32.xlu0 %v1568, 80
    %v2262 = vpop.permute.xlu0 %2261
    %2263 = vrot.lane.b32.xlu0 %v1569, 80
    %v2264 = vpop.permute.xlu0 %2263
    %2265 = vrot.lane.b32.xlu0 %v1570, 80
    %v2266 = vpop.permute.xlu0 %2265
    %2267 = vrot.lane.b32.xlu0 %v1571, 80
    %v2268 = vpop.permute.xlu0 %2267
    %2269 = vrot.lane.b32.xlu0 %v1572, 80
    %v2270 = vpop.permute.xlu0 %2269
    %2271 = vrot.lane.b32.xlu0 %v1573, 80
    %v2272 = vpop.permute.xlu0 %2271
    %2273 = vrot.lane.b32.xlu0 %v1574, 80
    %v2274 = vpop.permute.xlu0 %2273
    %2275 = vrot.lane.b32.xlu0 %v1575, 80
    %v2276 = vpop.permute.xlu0 %2275
    %2277 = vrot.lane.b32.xlu0 %v1576, 80
    %v2278 = vpop.permute.xlu0 %2277
    %2279 = vrot.lane.b32.xlu0 %v1577, 80
    %v2280 = vpop.permute.xlu0 %2279
    %2281 = vrot.lane.b32.xlu0 %v1578, 80
    %v2282 = vpop.permute.xlu0 %2281
    %2283 = vrot.lane.b32.xlu0 %v1601, 80
    %v2284 = vpop.permute.xlu0 %2283
    %2285 = vrot.lane.b32.xlu0 %v1602, 80
    %v2286 = vpop.permute.xlu0 %2285
    %2287 = vrot.lane.b32.xlu0 %v1611, 80
    %v2288 = vpop.permute.xlu0 %2287
    %2289 = vrot.lane.b32.xlu0 %v1612, 80
    %v2290 = vpop.permute.xlu0 %2289
    %2309 = vrot.lane.b32.xlu0 %v1583, 96
    %v2310 = vpop.permute.xlu0 %2309
    %2311 = vrot.lane.b32.xlu0 %v1584, 96
    %v2312 = vpop.permute.xlu0 %2311
    %2313 = vrot.lane.b32.xlu0 %v1585, 96
    %v2314 = vpop.permute.xlu0 %2313
    %2315 = vrot.lane.b32.xlu0 %v1586, 96
    %v2316 = vpop.permute.xlu0 %2315
    %2317 = vrot.lane.b32.xlu0 %v1587, 96
    %v2318 = vpop.permute.xlu0 %2317
    %2319 = vrot.lane.b32.xlu0 %v1588, 96
    %v2320 = vpop.permute.xlu0 %2319
    %2321 = vrot.lane.b32.xlu0 %v1589, 96
    %v2322 = vpop.permute.xlu0 %2321
    %2323 = vrot.lane.b32.xlu0 %v1590, 96
    %v2324 = vpop.permute.xlu0 %2323
    %2325 = vrot.lane.b32.xlu0 %v1591, 96
    %v2326 = vpop.permute.xlu0 %2325
    %2327 = vrot.lane.b32.xlu0 %v1592, 96
    %v2328 = vpop.permute.xlu0 %2327
    %2329 = vrot.lane.b32.xlu0 %v1593, 96
    %v2330 = vpop.permute.xlu0 %2329
    %2331 = vrot.lane.b32.xlu0 %v1594, 96
    %v2332 = vpop.permute.xlu0 %2331
    %2333 = vrot.lane.b32.xlu0 %v1603, 96
    %v2334 = vpop.permute.xlu0 %2333
    %2335 = vrot.lane.b32.xlu0 %v1604, 96
    %v2336 = vpop.permute.xlu0 %2335
    %2337 = vrot.lane.b32.xlu0 %v1613, 96
    %v2338 = vpop.permute.xlu0 %2337
    %2339 = vrot.lane.b32.xlu0 %v1614, 96
    %v2340 = vpop.permute.xlu0 %2339
    %2359 = vrot.lane.b32.xlu0 %v1521, 112
    %v2360 = vpop.permute.xlu0 %2359
    %2361 = vrot.lane.b32.xlu0 %v1522, 112
    %v2362 = vpop.permute.xlu0 %2361
    %2363 = vrot.lane.b32.xlu0 %v1523, 112
    %v2364 = vpop.permute.xlu0 %2363
    %2365 = vrot.lane.b32.xlu0 %v1524, 112
    %v2366 = vpop.permute.xlu0 %2365
    %2367 = vrot.lane.b32.xlu0 %v1525, 112
    %v2368 = vpop.permute.xlu0 %2367
    %2369 = vrot.lane.b32.xlu0 %v1526, 112
    %v2370 = vpop.permute.xlu0 %2369
    %2371 = vrot.lane.b32.xlu0 %v1527, 112
    %v2372 = vpop.permute.xlu0 %2371
    %2373 = vrot.lane.b32.xlu0 %v1528, 112
    %v2374 = vpop.permute.xlu0 %2373
    %2375 = vrot.lane.b32.xlu0 %v1529, 112
    %v2376 = vpop.permute.xlu0 %2375
    %2377 = vrot.lane.b32.xlu0 %v1530, 112
    %v2378 = vpop.permute.xlu0 %2377
    %2379 = vrot.lane.b32.xlu0 %v1595, 112
    %v2380 = vpop.permute.xlu0 %2379
    %2381 = vrot.lane.b32.xlu0 %v1596, 112
    %v2382 = vpop.permute.xlu0 %2381
    %2383 = vrot.lane.b32.xlu0 %v1605, 112
    %v2384 = vpop.permute.xlu0 %2383
    %2385 = vrot.lane.b32.xlu0 %v1606, 112
    %v2386 = vpop.permute.xlu0 %2385
    %2387 = vrot.lane.b32.xlu0 %v1615, 112
    %v2388 = vpop.permute.xlu0 %2387
    %2389 = vrot.lane.b32.xlu0 %v1616, 112
    %v2390 = vpop.permute.xlu0 %2389
    %v2407 = vsel %vm706, %v1515, %v1652
    %v2408 = vsel %vm706, %v1516, %v1654
    %v2409 = vsel %vm706, %v1517, %v1656
    %v2410 = vsel %vm706, %v1518, %v1658
    %v2411 = vsel %vm706, %v1519, %v1660
    %v2412 = vsel %vm706, %v1520, %v1662
    %v2413 = vsel %vm706, %v1521, %v1664
    %v2414 = vsel %vm706, %v1522, %v1666
    %v2415 = vsel %vm706, %v1523, %v1668
    %v2416 = vsel %vm706, %v1524, %v1670
    %v2417 = vsel %vm706, %v1525, %v1672
    %v2418 = vsel %vm706, %v1526, %v1674
    %v2419 = vsel %vm706, %v1527, %v1676
    %v2420 = vsel %vm706, %v1528, %v1678
    %v2421 = vsel %vm706, %v1529, %v1680
    %v2422 = vsel %vm706, %v1530, %v1682
    %vm2423 = vcmask 261120
    %v2424 = vsel %vm2423, %v2407, %v1716
    %v2425 = vsel %vm2423, %v2408, %v1718
    %v2426 = vsel %vm2423, %v2409, %v1720
    %v2427 = vsel %vm2423, %v2410, %v1722
    %v2428 = vsel %vm2423, %v2411, %v1724
    %v2429 = vsel %vm2423, %v2412, %v1726
    %v2430 = vsel %vm2423, %v2413, %v1728
    %v2431 = vsel %vm2423, %v2414, %v1730
    %v2432 = vsel %vm2423, %v2415, %v1732
    %v2433 = vsel %vm2423, %v2416, %v1734
    %v2434 = vsel %vm2423, %v2417, %v1736
    %v2435 = vsel %vm2423, %v2418, %v1738
    %v2436 = vsel %vm2423, %v2419, %v1740
    %v2437 = vsel %vm2423, %v2420, %v1742
    %v2438 = vsel %vm2423, %v2421, %v1744
    %v2439 = vsel %vm2423, %v2422, %v1746
    %vm2440 = vcmask 392192
    %v2441 = vsel %vm2440, %v2424, %v1780
    %v2442 = vsel %vm2440, %v2425, %v1782
    %v2443 = vsel %vm2440, %v2426, %v1784
    %v2444 = vsel %vm2440, %v2427, %v1786
    %v2445 = vsel %vm2440, %v2428, %v1788
    %v2446 = vsel %vm2440, %v2429, %v1790
    %v2447 = vsel %vm2440, %v2430, %v1792
    %v2448 = vsel %vm2440, %v2431, %v1794
    %v2449 = vsel %vm2440, %v2432, %v1796
    %v2450 = vsel %vm2440, %v2433, %v1798
    %v2451 = vsel %vm2440, %v2434, %v1800
    %v2452 = vsel %vm2440, %v2435, %v1802
    %v2453 = vsel %vm2440, %v2436, %v1804
    %v2454 = vsel %vm2440, %v2437, %v1806
    %v2455 = vsel %vm2440, %v2438, %v1808
    %v2456 = vsel %vm2440, %v2439, %v1810
    %vm2457 = vcmask 523264
    %v2458 = vsel %vm2457, %v2441, %v1844
    %v2459 = vsel %vm2457, %v2442, %v1846
    %v2460 = vsel %vm2457, %v2443, %v1848
    %v2461 = vsel %vm2457, %v2444, %v1850
    %v2462 = vsel %vm2457, %v2445, %v1852
    %v2463 = vsel %vm2457, %v2446, %v1854
    %v2464 = vsel %vm2457, %v2447, %v1856
    %v2465 = vsel %vm2457, %v2448, %v1858
    %v2466 = vsel %vm2457, %v2449, %v1860
    %v2467 = vsel %vm2457, %v2450, %v1862
    %v2468 = vsel %vm2457, %v2451, %v1864
    %v2469 = vsel %vm2457, %v2452, %v1866
    %v2470 = vsel %vm2457, %v2453, %v1868
    %v2471 = vsel %vm2457, %v2454, %v1870
    %v2472 = vsel %vm2457, %v2455, %v1872
    %v2473 = vsel %vm2457, %v2456, %v1874
    %vm2474 = vcmask 654336
    %v2475 = vsel %vm2474, %v2458, %v1908
    %v2476 = vsel %vm2474, %v2459, %v1910
    %v2477 = vsel %vm2474, %v2460, %v1912
    %v2478 = vsel %vm2474, %v2461, %v1914
    %v2479 = vsel %vm2474, %v2462, %v1916
    %v2480 = vsel %vm2474, %v2463, %v1918
    %v2481 = vsel %vm2474, %v2464, %v1920
    %v2482 = vsel %vm2474, %v2465, %v1922
    %v2483 = vsel %vm2474, %v2466, %v1924
    %v2484 = vsel %vm2474, %v2467, %v1926
    %v2485 = vsel %vm2474, %v2468, %v1928
    %v2486 = vsel %vm2474, %v2469, %v1930
    %v2487 = vsel %vm2474, %v2470, %v1932
    %v2488 = vsel %vm2474, %v2471, %v1934
    %v2489 = vsel %vm2474, %v2472, %v1936
    %v2490 = vsel %vm2474, %v2473, %v1938
    %vm2491 = vcmask 785408
    %v2492 = vsel %vm2491, %v2475, %v1958
    %v2493 = vsel %vm2491, %v2476, %v1960
    %v2494 = vsel %vm2491, %v2477, %v1962
    %v2495 = vsel %vm2491, %v2478, %v1964
    %v2496 = vsel %vm2491, %v2479, %v1966
    %v2497 = vsel %vm2491, %v2480, %v1968
    %v2498 = vsel %vm2491, %v2481, %v1970
    %v2499 = vsel %vm2491, %v2482, %v1972
    %v2500 = vsel %vm2491, %v2483, %v1974
    %v2501 = vsel %vm2491, %v2484, %v1976
    %v2502 = vsel %vm2491, %v2485, %v1978
    %v2503 = vsel %vm2491, %v2486, %v1980
    %v2504 = vsel %vm2491, %v2487, %v1982
    %v2505 = vsel %vm2491, %v2488, %v1984
    %v2506 = vsel %vm2491, %v2489, %v1986
    %v2507 = vsel %vm2491, %v2490, %v1988
    %vm2508 = vcmask 916480
    %v2509 = vsel %vm2508, %v2492, %v2008
    %v2510 = vsel %vm2508, %v2493, %v2010
    %v2511 = vsel %vm2508, %v2494, %v2012
    %v2512 = vsel %vm2508, %v2495, %v2014
    %v2513 = vsel %vm2508, %v2496, %v2016
    %v2514 = vsel %vm2508, %v2497, %v2018
    %v2515 = vsel %vm2508, %v2498, %v2020
    %v2516 = vsel %vm2508, %v2499, %v2022
    %v2517 = vsel %vm2508, %v2500, %v2024
    %v2518 = vsel %vm2508, %v2501, %v2026
    %v2519 = vsel %vm2508, %v2502, %v2028
    %v2520 = vsel %vm2508, %v2503, %v2030
    %v2521 = vsel %vm2508, %v2504, %v2032
    %v2522 = vsel %vm2508, %v2505, %v2034
    %v2523 = vsel %vm2508, %v2506, %v2036
    %v2524 = vsel %vm2508, %v2507, %v2038
    %v2525 = vsel %vm706, %v1565, %v2058
    %v2526 = vsel %vm706, %v1566, %v2060
    %v2527 = vsel %vm706, %v1567, %v2062
    %v2528 = vsel %vm706, %v1568, %v2064
    %v2529 = vsel %vm706, %v1569, %v2066
    %v2530 = vsel %vm706, %v1570, %v2068
    %v2531 = vsel %vm706, %v1571, %v2070
    %v2532 = vsel %vm706, %v1572, %v2072
    %v2533 = vsel %vm706, %v1573, %v2074
    %v2534 = vsel %vm706, %v1574, %v2076
    %v2535 = vsel %vm706, %v1575, %v2078
    %v2536 = vsel %vm706, %v1576, %v2080
    %v2537 = vsel %vm706, %v1577, %v2082
    %v2538 = vsel %vm706, %v1578, %v2084
    %v2539 = vsel %vm706, %v1601, %v2086
    %v2540 = vsel %vm706, %v1602, %v2088
    %v2541 = vsel %vm2423, %v2525, %v2108
    %v2542 = vsel %vm2423, %v2526, %v2110
    %v2543 = vsel %vm2423, %v2527, %v2112
    %v2544 = vsel %vm2423, %v2528, %v2114
    %v2545 = vsel %vm2423, %v2529, %v2116
    %v2546 = vsel %vm2423, %v2530, %v2118
    %v2547 = vsel %vm2423, %v2531, %v2120
    %v2548 = vsel %vm2423, %v2532, %v2122
    %v2549 = vsel %vm2423, %v2533, %v2124
    %v2550 = vsel %vm2423, %v2534, %v2126
    %v2551 = vsel %vm2423, %v2535, %v2128
    %v2552 = vsel %vm2423, %v2536, %v2130
    %v2553 = vsel %vm2423, %v2537, %v2132
    %v2554 = vsel %vm2423, %v2538, %v2134
    %v2555 = vsel %vm2423, %v2539, %v2136
    %v2556 = vsel %vm2423, %v2540, %v2138
    %v2557 = vsel %vm2440, %v2541, %v2158
    %v2558 = vsel %vm2440, %v2542, %v2160
    %v2559 = vsel %vm2440, %v2543, %v2162
    %v2560 = vsel %vm2440, %v2544, %v2164
    %v2561 = vsel %vm2440, %v2545, %v2166
    %v2562 = vsel %vm2440, %v2546, %v2168
    %v2563 = vsel %vm2440, %v2547, %v2170
    %v2564 = vsel %vm2440, %v2548, %v2172
    %v2565 = vsel %vm2440, %v2549, %v2174
    %v2566 = vsel %vm2440, %v2550, %v2176
    %v2567 = vsel %vm2440, %v2551, %v2178
    %v2568 = vsel %vm2440, %v2552, %v2180
    %v2569 = vsel %vm2440, %v2553, %v2182
    %v2570 = vsel %vm2440, %v2554, %v2184
    %v2571 = vsel %vm2440, %v2555, %v2186
    %v2572 = vsel %vm2440, %v2556, %v2188
    %v2573 = vsel %vm2457, %v2557, %v2208
    %v2574 = vsel %vm2457, %v2558, %v2210
    %v2575 = vsel %vm2457, %v2559, %v2212
    %v2576 = vsel %vm2457, %v2560, %v2214
    %v2577 = vsel %vm2457, %v2561, %v2216
    %v2578 = vsel %vm2457, %v2562, %v2218
    %v2579 = vsel %vm2457, %v2563, %v2220
    %v2580 = vsel %vm2457, %v2564, %v2222
    %v2581 = vsel %vm2457, %v2565, %v2224
    %v2582 = vsel %vm2457, %v2566, %v2226
    %v2583 = vsel %vm2457, %v2567, %v2228
    %v2584 = vsel %vm2457, %v2568, %v2230
    %v2585 = vsel %vm2457, %v2569, %v2232
    %v2586 = vsel %vm2457, %v2570, %v2234
    %v2587 = vsel %vm2457, %v2571, %v2236
    %v2588 = vsel %vm2457, %v2572, %v2238
    %v2589 = vsel %vm2474, %v2573, %v2260
    %v2590 = vsel %vm2474, %v2574, %v2262
    %v2591 = vsel %vm2474, %v2575, %v2264
    %v2592 = vsel %vm2474, %v2576, %v2266
    %v2593 = vsel %vm2474, %v2577, %v2268
    %v2594 = vsel %vm2474, %v2578, %v2270
    %v2595 = vsel %vm2474, %v2579, %v2272
    %v2596 = vsel %vm2474, %v2580, %v2274
    %v2597 = vsel %vm2474, %v2581, %v2276
    %v2598 = vsel %vm2474, %v2582, %v2278
    %v2599 = vsel %vm2474, %v2583, %v2280
    %v2600 = vsel %vm2474, %v2584, %v2282
    %v2601 = vsel %vm2474, %v2585, %v2284
    %v2602 = vsel %vm2474, %v2586, %v2286
    %v2603 = vsel %vm2474, %v2587, %v2288
    %v2604 = vsel %vm2474, %v2588, %v2290
    %v2605 = vsel %vm2491, %v2589, %v2310
    %v2606 = vsel %vm2491, %v2590, %v2312
    %v2607 = vsel %vm2491, %v2591, %v2314
    %v2608 = vsel %vm2491, %v2592, %v2316
    %v2609 = vsel %vm2491, %v2593, %v2318
    %v2610 = vsel %vm2491, %v2594, %v2320
    %v2611 = vsel %vm2491, %v2595, %v2322
    %v2612 = vsel %vm2491, %v2596, %v2324
    %v2613 = vsel %vm2491, %v2597, %v2326
    %v2614 = vsel %vm2491, %v2598, %v2328
    %v2615 = vsel %vm2491, %v2599, %v2330
    %v2616 = vsel %vm2491, %v2600, %v2332
    %v2617 = vsel %vm2491, %v2601, %v2334
    %v2618 = vsel %vm2491, %v2602, %v2336
    %v2619 = vsel %vm2491, %v2603, %v2338
    %v2620 = vsel %vm2491, %v2604, %v2340
    %v2621 = vsel %vm2508, %v2605, %v2360
    %v2622 = vsel %vm2508, %v2606, %v2362
    %v2623 = vsel %vm2508, %v2607, %v2364
    %v2624 = vsel %vm2508, %v2608, %v2366
    %v2625 = vsel %vm2508, %v2609, %v2368
    %v2626 = vsel %vm2508, %v2610, %v2370
    %v2627 = vsel %vm2508, %v2611, %v2372
    %v2628 = vsel %vm2508, %v2612, %v2374
    %v2629 = vsel %vm2508, %v2613, %v2376
    %v2630 = vsel %vm2508, %v2614, %v2378
    %v2631 = vsel %vm2508, %v2615, %v2380
    %v2632 = vsel %vm2508, %v2616, %v2382
    %v2633 = vsel %vm2508, %v2617, %v2384
    %v2634 = vsel %vm2508, %v2618, %v2386
    %v2635 = vsel %vm2508, %v2619, %v2388
    %v2636 = vsel %vm2508, %v2620, %v2390
    %2639 = vrot.lane.b32.xlu0 %v1553, 16
    %v2640 = vpop.permute.xlu0 %2639
    %2641 = vrot.lane.b32.xlu0 %v1554, 16
    %v2642 = vpop.permute.xlu0 %2641
    %2643 = vrot.lane.b32.xlu0 %v1555, 16
    %v2644 = vpop.permute.xlu0 %2643
    %2645 = vrot.lane.b32.xlu0 %v1556, 16
    %v2646 = vpop.permute.xlu0 %2645
    %2647 = vrot.lane.b32.xlu0 %v1557, 16
    %v2648 = vpop.permute.xlu0 %2647
    %2649 = vrot.lane.b32.xlu0 %v1558, 16
    %v2650 = vpop.permute.xlu0 %2649
    %2651 = vrot.lane.b32.xlu0 %v1559, 16
    %v2652 = vpop.permute.xlu0 %2651
    %2653 = vrot.lane.b32.xlu0 %v1560, 16
    %v2654 = vpop.permute.xlu0 %2653
    %2655 = vrot.lane.b32.xlu0 %v1561, 16
    %v2656 = vpop.permute.xlu0 %2655
    %2657 = vrot.lane.b32.xlu0 %v1562, 16
    %v2658 = vpop.permute.xlu0 %2657
    %2659 = vrot.lane.b32.xlu0 %v1599, 16
    %v2660 = vpop.permute.xlu0 %2659
    %2661 = vrot.lane.b32.xlu0 %v1600, 16
    %v2662 = vpop.permute.xlu0 %2661
    %2663 = vrot.lane.b32.xlu0 %v1609, 16
    %v2664 = vpop.permute.xlu0 %2663
    %2665 = vrot.lane.b32.xlu0 %v1610, 16
    %v2666 = vpop.permute.xlu0 %2665
    %2667 = vrot.lane.b32.xlu0 %v1619, 16
    %v2668 = vpop.permute.xlu0 %2667
    %2669 = vrot.lane.b32.xlu0 %v1620, 16
    %v2670 = vpop.permute.xlu0 %2669
    %2689 = vrot.lane.b32.xlu0 %v1569, 32
    %v2690 = vpop.permute.xlu0 %2689
    %2691 = vrot.lane.b32.xlu0 %v1570, 32
    %v2692 = vpop.permute.xlu0 %2691
    %2693 = vrot.lane.b32.xlu0 %v1571, 32
    %v2694 = vpop.permute.xlu0 %2693
    %2695 = vrot.lane.b32.xlu0 %v1572, 32
    %v2696 = vpop.permute.xlu0 %2695
    %2697 = vrot.lane.b32.xlu0 %v1573, 32
    %v2698 = vpop.permute.xlu0 %2697
    %2699 = vrot.lane.b32.xlu0 %v1574, 32
    %v2700 = vpop.permute.xlu0 %2699
    %2701 = vrot.lane.b32.xlu0 %v1575, 32
    %v2702 = vpop.permute.xlu0 %2701
    %2703 = vrot.lane.b32.xlu0 %v1576, 32
    %v2704 = vpop.permute.xlu0 %2703
    %2705 = vrot.lane.b32.xlu0 %v1577, 32
    %v2706 = vpop.permute.xlu0 %2705
    %2707 = vrot.lane.b32.xlu0 %v1578, 32
    %v2708 = vpop.permute.xlu0 %2707
    %2709 = vrot.lane.b32.xlu0 %v1601, 32
    %v2710 = vpop.permute.xlu0 %2709
    %2711 = vrot.lane.b32.xlu0 %v1602, 32
    %v2712 = vpop.permute.xlu0 %2711
    %2713 = vrot.lane.b32.xlu0 %v1611, 32
    %v2714 = vpop.permute.xlu0 %2713
    %2715 = vrot.lane.b32.xlu0 %v1612, 32
    %v2716 = vpop.permute.xlu0 %2715
    %2717 = vrot.lane.b32.xlu0 %v1621, 32
    %v2718 = vpop.permute.xlu0 %2717
    %2719 = vrot.lane.b32.xlu0 %v1622, 32
    %v2720 = vpop.permute.xlu0 %2719
    %2739 = vrot.lane.b32.xlu0 %v1585, 48
    %v2740 = vpop.permute.xlu0 %2739
    %2741 = vrot.lane.b32.xlu0 %v1586, 48
    %v2742 = vpop.permute.xlu0 %2741
    %2743 = vrot.lane.b32.xlu0 %v1587, 48
    %v2744 = vpop.permute.xlu0 %2743
    %2745 = vrot.lane.b32.xlu0 %v1588, 48
    %v2746 = vpop.permute.xlu0 %2745
    %2747 = vrot.lane.b32.xlu0 %v1589, 48
    %v2748 = vpop.permute.xlu0 %2747
    %2749 = vrot.lane.b32.xlu0 %v1590, 48
    %v2750 = vpop.permute.xlu0 %2749
    %2751 = vrot.lane.b32.xlu0 %v1591, 48
    %v2752 = vpop.permute.xlu0 %2751
    %2753 = vrot.lane.b32.xlu0 %v1592, 48
    %v2754 = vpop.permute.xlu0 %2753
    %2755 = vrot.lane.b32.xlu0 %v1593, 48
    %v2756 = vpop.permute.xlu0 %2755
    %2757 = vrot.lane.b32.xlu0 %v1594, 48
    %v2758 = vpop.permute.xlu0 %2757
    %2759 = vrot.lane.b32.xlu0 %v1603, 48
    %v2760 = vpop.permute.xlu0 %2759
    %2761 = vrot.lane.b32.xlu0 %v1604, 48
    %v2762 = vpop.permute.xlu0 %2761
    %2763 = vrot.lane.b32.xlu0 %v1613, 48
    %v2764 = vpop.permute.xlu0 %2763
    %2765 = vrot.lane.b32.xlu0 %v1614, 48
    %v2766 = vpop.permute.xlu0 %2765
    %2767 = vrot.lane.b32.xlu0 %v1623, 48
    %v2768 = vpop.permute.xlu0 %2767
    %2769 = vrot.lane.b32.xlu0 %v1624, 48
    %v2770 = vpop.permute.xlu0 %2769
    %2789 = vrot.lane.b32.xlu0 %v1523, 64
    %v2790 = vpop.permute.xlu0 %2789
    %2791 = vrot.lane.b32.xlu0 %v1524, 64
    %v2792 = vpop.permute.xlu0 %2791
    %2793 = vrot.lane.b32.xlu0 %v1525, 64
    %v2794 = vpop.permute.xlu0 %2793
    %2795 = vrot.lane.b32.xlu0 %v1526, 64
    %v2796 = vpop.permute.xlu0 %2795
    %2797 = vrot.lane.b32.xlu0 %v1527, 64
    %v2798 = vpop.permute.xlu0 %2797
    %2799 = vrot.lane.b32.xlu0 %v1528, 64
    %v2800 = vpop.permute.xlu0 %2799
    %2801 = vrot.lane.b32.xlu0 %v1529, 64
    %v2802 = vpop.permute.xlu0 %2801
    %2803 = vrot.lane.b32.xlu0 %v1530, 64
    %v2804 = vpop.permute.xlu0 %2803
    %2805 = vrot.lane.b32.xlu0 %v1595, 64
    %v2806 = vpop.permute.xlu0 %2805
    %2807 = vrot.lane.b32.xlu0 %v1596, 64
    %v2808 = vpop.permute.xlu0 %2807
    %2809 = vrot.lane.b32.xlu0 %v1605, 64
    %v2810 = vpop.permute.xlu0 %2809
    %2811 = vrot.lane.b32.xlu0 %v1606, 64
    %v2812 = vpop.permute.xlu0 %2811
    %2813 = vrot.lane.b32.xlu0 %v1615, 64
    %v2814 = vpop.permute.xlu0 %2813
    %2815 = vrot.lane.b32.xlu0 %v1616, 64
    %v2816 = vpop.permute.xlu0 %2815
    %2817 = vrot.lane.b32.xlu0 %v1625, 64
    %v2818 = vpop.permute.xlu0 %2817
    %2819 = vrot.lane.b32.xlu0 %v1626, 64
    %v2820 = vpop.permute.xlu0 %2819
    %2841 = vrot.lane.b32.xlu0 %v1539, 80
    %v2842 = vpop.permute.xlu0 %2841
    %2843 = vrot.lane.b32.xlu0 %v1540, 80
    %v2844 = vpop.permute.xlu0 %2843
    %2845 = vrot.lane.b32.xlu0 %v1541, 80
    %v2846 = vpop.permute.xlu0 %2845
    %2847 = vrot.lane.b32.xlu0 %v1542, 80
    %v2848 = vpop.permute.xlu0 %2847
    %2849 = vrot.lane.b32.xlu0 %v1543, 80
    %v2850 = vpop.permute.xlu0 %2849
    %2851 = vrot.lane.b32.xlu0 %v1544, 80
    %v2852 = vpop.permute.xlu0 %2851
    %2853 = vrot.lane.b32.xlu0 %v1545, 80
    %v2854 = vpop.permute.xlu0 %2853
    %2855 = vrot.lane.b32.xlu0 %v1546, 80
    %v2856 = vpop.permute.xlu0 %2855
    %2857 = vrot.lane.b32.xlu0 %v1597, 80
    %v2858 = vpop.permute.xlu0 %2857
    %2859 = vrot.lane.b32.xlu0 %v1598, 80
    %v2860 = vpop.permute.xlu0 %2859
    %2861 = vrot.lane.b32.xlu0 %v1607, 80
    %v2862 = vpop.permute.xlu0 %2861
    %2863 = vrot.lane.b32.xlu0 %v1608, 80
    %v2864 = vpop.permute.xlu0 %2863
    %2865 = vrot.lane.b32.xlu0 %v1617, 80
    %v2866 = vpop.permute.xlu0 %2865
    %2867 = vrot.lane.b32.xlu0 %v1618, 80
    %v2868 = vpop.permute.xlu0 %2867
    %2869 = vrot.lane.b32.xlu0 %v1627, 80
    %v2870 = vpop.permute.xlu0 %2869
    %2871 = vrot.lane.b32.xlu0 %v1628, 80
    %v2872 = vpop.permute.xlu0 %2871
    %2891 = vrot.lane.b32.xlu0 %v1555, 96
    %v2892 = vpop.permute.xlu0 %2891
    %2893 = vrot.lane.b32.xlu0 %v1556, 96
    %v2894 = vpop.permute.xlu0 %2893
    %2895 = vrot.lane.b32.xlu0 %v1557, 96
    %v2896 = vpop.permute.xlu0 %2895
    %2897 = vrot.lane.b32.xlu0 %v1558, 96
    %v2898 = vpop.permute.xlu0 %2897
    %2899 = vrot.lane.b32.xlu0 %v1559, 96
    %v2900 = vpop.permute.xlu0 %2899
    %2901 = vrot.lane.b32.xlu0 %v1560, 96
    %v2902 = vpop.permute.xlu0 %2901
    %2903 = vrot.lane.b32.xlu0 %v1561, 96
    %v2904 = vpop.permute.xlu0 %2903
    %2905 = vrot.lane.b32.xlu0 %v1562, 96
    %v2906 = vpop.permute.xlu0 %2905
    %2907 = vrot.lane.b32.xlu0 %v1599, 96
    %v2908 = vpop.permute.xlu0 %2907
    %2909 = vrot.lane.b32.xlu0 %v1600, 96
    %v2910 = vpop.permute.xlu0 %2909
    %2911 = vrot.lane.b32.xlu0 %v1609, 96
    %v2912 = vpop.permute.xlu0 %2911
    %2913 = vrot.lane.b32.xlu0 %v1610, 96
    %v2914 = vpop.permute.xlu0 %2913
    %2915 = vrot.lane.b32.xlu0 %v1619, 96
    %v2916 = vpop.permute.xlu0 %2915
    %2917 = vrot.lane.b32.xlu0 %v1620, 96
    %v2918 = vpop.permute.xlu0 %2917
    %2919 = vrot.lane.b32.xlu0 %v1629, 96
    %v2920 = vpop.permute.xlu0 %2919
    %2921 = vrot.lane.b32.xlu0 %v1630, 96
    %v2922 = vpop.permute.xlu0 %2921
    %2941 = vrot.lane.b32.xlu0 %v1571, 112
    %v2942 = vpop.permute.xlu0 %2941
    %2943 = vrot.lane.b32.xlu0 %v1572, 112
    %v2944 = vpop.permute.xlu0 %2943
    %2945 = vrot.lane.b32.xlu0 %v1573, 112
    %v2946 = vpop.permute.xlu0 %2945
    %2947 = vrot.lane.b32.xlu0 %v1574, 112
    %v2948 = vpop.permute.xlu0 %2947
    %2949 = vrot.lane.b32.xlu0 %v1575, 112
    %v2950 = vpop.permute.xlu0 %2949
    %2951 = vrot.lane.b32.xlu0 %v1576, 112
    %v2952 = vpop.permute.xlu0 %2951
    %2953 = vrot.lane.b32.xlu0 %v1577, 112
    %v2954 = vpop.permute.xlu0 %2953
    %2955 = vrot.lane.b32.xlu0 %v1578, 112
    %v2956 = vpop.permute.xlu0 %2955
    %2957 = vrot.lane.b32.xlu0 %v1601, 112
    %v2958 = vpop.permute.xlu0 %2957
    %2959 = vrot.lane.b32.xlu0 %v1602, 112
    %v2960 = vpop.permute.xlu0 %2959
    %2961 = vrot.lane.b32.xlu0 %v1611, 112
    %v2962 = vpop.permute.xlu0 %2961
    %2963 = vrot.lane.b32.xlu0 %v1612, 112
    %v2964 = vpop.permute.xlu0 %2963
    %2965 = vrot.lane.b32.xlu0 %v1621, 112
    %v2966 = vpop.permute.xlu0 %2965
    %2967 = vrot.lane.b32.xlu0 %v1622, 112
    %v2968 = vpop.permute.xlu0 %2967
    %2969 = vrot.lane.b32.xlu0 %v1631, 112
    %v2970 = vpop.permute.xlu0 %2969
    %2971 = vrot.lane.b32.xlu0 %v1632, 112
    %v2972 = vpop.permute.xlu0 %2971
    %v2989 = vsel %vm706, %v1537, %v2640
    %v2990 = vsel %vm706, %v1538, %v2642
    %v2991 = vsel %vm706, %v1539, %v2644
    %v2992 = vsel %vm706, %v1540, %v2646
    %v2993 = vsel %vm706, %v1541, %v2648
    %v2994 = vsel %vm706, %v1542, %v2650
    %v2995 = vsel %vm706, %v1543, %v2652
    %v2996 = vsel %vm706, %v1544, %v2654
    %v2997 = vsel %vm706, %v1545, %v2656
    %v2998 = vsel %vm706, %v1546, %v2658
    %v2999 = vsel %vm706, %v1597, %v2660
    %v3000 = vsel %vm706, %v1598, %v2662
    %v3001 = vsel %vm706, %v1607, %v2664
    %v3002 = vsel %vm706, %v1608, %v2666
    %v3003 = vsel %vm706, %v1617, %v2668
    %v3004 = vsel %vm706, %v1618, %v2670
    %v3005 = vsel %vm2423, %v2989, %v2690
    %v3006 = vsel %vm2423, %v2990, %v2692
    %v3007 = vsel %vm2423, %v2991, %v2694
    %v3008 = vsel %vm2423, %v2992, %v2696
    %v3009 = vsel %vm2423, %v2993, %v2698
    %v3010 = vsel %vm2423, %v2994, %v2700
    %v3011 = vsel %vm2423, %v2995, %v2702
    %v3012 = vsel %vm2423, %v2996, %v2704
    %v3013 = vsel %vm2423, %v2997, %v2706
    %v3014 = vsel %vm2423, %v2998, %v2708
    %v3015 = vsel %vm2423, %v2999, %v2710
    %v3016 = vsel %vm2423, %v3000, %v2712
    %v3017 = vsel %vm2423, %v3001, %v2714
    %v3018 = vsel %vm2423, %v3002, %v2716
    %v3019 = vsel %vm2423, %v3003, %v2718
    %v3020 = vsel %vm2423, %v3004, %v2720
    %v3021 = vsel %vm2440, %v3005, %v2740
    %v3022 = vsel %vm2440, %v3006, %v2742
    %v3023 = vsel %vm2440, %v3007, %v2744
    %v3024 = vsel %vm2440, %v3008, %v2746
    %v3025 = vsel %vm2440, %v3009, %v2748
    %v3026 = vsel %vm2440, %v3010, %v2750
    %v3027 = vsel %vm2440, %v3011, %v2752
    %v3028 = vsel %vm2440, %v3012, %v2754
    %v3029 = vsel %vm2440, %v3013, %v2756
    %v3030 = vsel %vm2440, %v3014, %v2758
    %v3031 = vsel %vm2440, %v3015, %v2760
    %v3032 = vsel %vm2440, %v3016, %v2762
    %v3033 = vsel %vm2440, %v3017, %v2764
    %v3034 = vsel %vm2440, %v3018, %v2766
    %v3035 = vsel %vm2440, %v3019, %v2768
    %v3036 = vsel %vm2440, %v3020, %v2770
    %v3037 = vsel %vm2457, %v3021, %v2790
    %v3038 = vsel %vm2457, %v3022, %v2792
    %v3039 = vsel %vm2457, %v3023, %v2794
    %v3040 = vsel %vm2457, %v3024, %v2796
    %v3041 = vsel %vm2457, %v3025, %v2798
    %v3042 = vsel %vm2457, %v3026, %v2800
    %v3043 = vsel %vm2457, %v3027, %v2802
    %v3044 = vsel %vm2457, %v3028, %v2804
    %v3045 = vsel %vm2457, %v3029, %v2806
    %v3046 = vsel %vm2457, %v3030, %v2808
    %v3047 = vsel %vm2457, %v3031, %v2810
    %v3048 = vsel %vm2457, %v3032, %v2812
    %v3049 = vsel %vm2457, %v3033, %v2814
    %v3050 = vsel %vm2457, %v3034, %v2816
    %v3051 = vsel %vm2457, %v3035, %v2818
    %v3052 = vsel %vm2457, %v3036, %v2820
    %v3053 = vsel %vm2474, %v3037, %v2842
    %v3054 = vsel %vm2474, %v3038, %v2844
    %v3055 = vsel %vm2474, %v3039, %v2846
    %v3056 = vsel %vm2474, %v3040, %v2848
    %v3057 = vsel %vm2474, %v3041, %v2850
    %v3058 = vsel %vm2474, %v3042, %v2852
    %v3059 = vsel %vm2474, %v3043, %v2854
    %v3060 = vsel %vm2474, %v3044, %v2856
    %v3061 = vsel %vm2474, %v3045, %v2858
    %v3062 = vsel %vm2474, %v3046, %v2860
    %v3063 = vsel %vm2474, %v3047, %v2862
    %v3064 = vsel %vm2474, %v3048, %v2864
    %v3065 = vsel %vm2474, %v3049, %v2866
    %v3066 = vsel %vm2474, %v3050, %v2868
    %v3067 = vsel %vm2474, %v3051, %v2870
    %v3068 = vsel %vm2474, %v3052, %v2872
    %v3069 = vsel %vm2491, %v3053, %v2892
    %v3070 = vsel %vm2491, %v3054, %v2894
    %v3071 = vsel %vm2491, %v3055, %v2896
    %v3072 = vsel %vm2491, %v3056, %v2898
    %v3073 = vsel %vm2491, %v3057, %v2900
    %v3074 = vsel %vm2491, %v3058, %v2902
    %v3075 = vsel %vm2491, %v3059, %v2904
    %v3076 = vsel %vm2491, %v3060, %v2906
    %v3077 = vsel %vm2491, %v3061, %v2908
    %v3078 = vsel %vm2491, %v3062, %v2910
    %v3079 = vsel %vm2491, %v3063, %v2912
    %v3080 = vsel %vm2491, %v3064, %v2914
    %v3081 = vsel %vm2491, %v3065, %v2916
    %v3082 = vsel %vm2491, %v3066, %v2918
    %v3083 = vsel %vm2491, %v3067, %v2920
    %v3084 = vsel %vm2491, %v3068, %v2922
    %v3085 = vsel %vm2508, %v3069, %v2942
    %v3086 = vsel %vm2508, %v3070, %v2944
    %v3087 = vsel %vm2508, %v3071, %v2946
    %v3088 = vsel %vm2508, %v3072, %v2948
    %v3089 = vsel %vm2508, %v3073, %v2950
    %v3090 = vsel %vm2508, %v3074, %v2952
    %v3091 = vsel %vm2508, %v3075, %v2954
    %v3092 = vsel %vm2508, %v3076, %v2956
    %v3093 = vsel %vm2508, %v3077, %v2958
    %v3094 = vsel %vm2508, %v3078, %v2960
    %v3095 = vsel %vm2508, %v3079, %v2962
    %v3096 = vsel %vm2508, %v3080, %v2964
    %v3097 = vsel %vm2508, %v3081, %v2966
    %v3098 = vsel %vm2508, %v3082, %v2968
    %v3099 = vsel %vm2508, %v3083, %v2970
    %v3100 = vsel %vm2508, %v3084, %v2972
    %v3101 = vpack.c.bf16 %v2510, %v2509
    %v3102 = vpack.c.bf16 %v2622, %v2621
    %v3103 = vpack.c.bf16 %v3086, %v3085
    %v3104 = vpack.c.bf16 %v1588, %v1587
    %v3105 = vpack.c.bf16 %v2512, %v2511
    %v3106 = vpack.c.bf16 %v2624, %v2623
    %v3107 = vpack.c.bf16 %v3088, %v3087
    %v3108 = vpack.c.bf16 %v1590, %v1589
    %v3109 = vpack.c.bf16 %v2514, %v2513
    %v3110 = vpack.c.bf16 %v2626, %v2625
    %v3111 = vpack.c.bf16 %v3090, %v3089
    %v3112 = vpack.c.bf16 %v1592, %v1591
    %v3113 = vpack.c.bf16 %v2516, %v2515
    %v3114 = vpack.c.bf16 %v2628, %v2627
    %v3115 = vpack.c.bf16 %v3092, %v3091
    %v3116 = vpack.c.bf16 %v1594, %v1593
    %v3117 = vpack.c.bf16 %v2518, %v2517
    %v3118 = vpack.c.bf16 %v2630, %v2629
    %v3119 = vpack.c.bf16 %v3094, %v3093
    %v3120 = vpack.c.bf16 %v1604, %v1603
    %v3121 = vpack.c.bf16 %v2520, %v2519
    %v3122 = vpack.c.bf16 %v2632, %v2631
    %v3123 = vpack.c.bf16 %v3096, %v3095
    %v3124 = vpack.c.bf16 %v1614, %v1613
    %v3125 = vpack.c.bf16 %v2522, %v2521
    %v3126 = vpack.c.bf16 %v2634, %v2633
    %v3127 = vpack.c.bf16 %v3098, %v3097
    %v3128 = vpack.c.bf16 %v1624, %v1623
    %v3129 = vpack.c.bf16 %v2524, %v2523
    %v3130 = vpack.c.bf16 %v2636, %v2635
    %v3131 = vpack.c.bf16 %v3100, %v3099
    %v3132 = vpack.c.bf16 %v1634, %v1633
    %v3133 = vld [vmem:[%s4] sm:$0xf]
    %v3134 = vld [vmem:[%s4 + $0x4] sm:$0xf]
    %v3135 = vld [vmem:[%s4 + $0x8] sm:$0xf]
    %v3136 = vld [vmem:[%s4 + $0xc] sm:$0xf]
    %v3137 = vld [vmem:[%s4 + $0x10] sm:$0xf]
    %v3138 = vld [vmem:[%s4 + $0x14] sm:$0xf]
    %v3139 = vld [vmem:[%s4 + $0x18] sm:$0xf]
    %v3140 = vld [vmem:[%s4 + $0x1c] sm:$0xf]
    %v3141 = vld [vmem:[%s4 + $0x20] sm:$0xf]
    %v3142 = vld [vmem:[%s4 + $0x24] sm:$0xf]
    %v3143 = vld [vmem:[%s4 + $0x28] sm:$0xf]
    %v3144 = vld [vmem:[%s4 + $0x2c] sm:$0xf]
    %v3145 = vld [vmem:[%s4 + $0x30] sm:$0xf]
    %v3146 = vld [vmem:[%s4 + $0x34] sm:$0xf]
    %v3147 = vld [vmem:[%s4 + $0x38] sm:$0xf]
    %v3148 = vld [vmem:[%s4 + $0x3c] sm:$0xf]
    %v3149 = vld [vmem:[%s4 + $0x40] sm:$0xf]
    %v3150 = vld [vmem:[%s4 + $0x44] sm:$0xf]
    %v3151 = vld [vmem:[%s4 + $0x48] sm:$0xf]
    %v3152 = vld [vmem:[%s4 + $0x4c] sm:$0xf]
    %v3153 = vld [vmem:[%s4 + $0x50] sm:$0xf]
    %v3154 = vld [vmem:[%s4 + $0x54] sm:$0xf]
    %v3155 = vld [vmem:[%s4 + $0x58] sm:$0xf]
    %v3156 = vld [vmem:[%s4 + $0x5c] sm:$0xf]
    %v3157 = vld [vmem:[%s4 + $0x60] sm:$0xf]
    %v3158 = vld [vmem:[%s4 + $0x64] sm:$0xf]
    %v3159 = vld [vmem:[%s4 + $0x68] sm:$0xf]
    %v3160 = vld [vmem:[%s4 + $0x6c] sm:$0xf]
    %v3161 = vld [vmem:[%s4 + $0x70] sm:$0xf]
    %v3162 = vld [vmem:[%s4 + $0x74] sm:$0xf]
    %v3163 = vld [vmem:[%s4 + $0x78] sm:$0xf]
    %v3164 = vld [vmem:[%s4 + $0x7c] sm:$0xf]
    %v3165 = vld [vmem:[%s4 + $0x80] sm:$0xf]
    %v3166 = vld [vmem:[%s4 + $0x84] sm:$0xf]
    %v3167 = vld [vmem:[%s4 + $0x88] sm:$0xf]
    %v3168 = vld [vmem:[%s4 + $0x8c] sm:$0xf]
    %v3169 = vld [vmem:[%s4 + $0x90] sm:$0xf]
    %v3170 = vld [vmem:[%s4 + $0x94] sm:$0xf]
    %v3171 = vld [vmem:[%s4 + $0x98] sm:$0xf]
    %v3172 = vld [vmem:[%s4 + $0x9c] sm:$0xf]
    %v3173 = vld [vmem:[%s4 + $0xa0] sm:$0xf]
    %v3174 = vld [vmem:[%s4 + $0xa4] sm:$0xf]
    %v3175 = vld [vmem:[%s4 + $0xa8] sm:$0xf]
    %v3176 = vld [vmem:[%s4 + $0xac] sm:$0xf]
    %v3177 = vld [vmem:[%s4 + $0xb0] sm:$0xf]
    %v3178 = vld [vmem:[%s4 + $0xb4] sm:$0xf]
    %v3179 = vld [vmem:[%s4 + $0xb8] sm:$0xf]
    %v3180 = vld [vmem:[%s4 + $0xbc] sm:$0xf]
    %v3181 = vld [vmem:[%s4 + $0xc0] sm:$0xf]
    %v3182 = vld [vmem:[%s4 + $0xc4] sm:$0xf]
    %v3233 = vunpack.c.l.b16 %v3133
    %v3234 = vunpack.c.l.b16 %v3134
    %v3235 = vunpack.c.l.b16 %v3135
    %v3236 = vunpack.c.l.b16 %v3136
    %v3237 = vunpack.c.l.b16 %v3137
    %v3238 = vunpack.c.l.b16 %v3138
    %v3239 = vunpack.c.l.b16 %v3139
    %v3240 = vunpack.c.l.b16 %v3140
    %v3241 = vunpack.c.l.b16 %v3141
    %v3242 = vunpack.c.l.b16 %v3142
    %v3243 = vunpack.c.l.b16 %v3143
    %v3244 = vunpack.c.l.b16 %v3144
    %v3245 = vunpack.c.l.b16 %v3145
    %v3246 = vunpack.c.l.b16 %v3146
    %v3247 = vunpack.c.l.b16 %v3147
    %v3248 = vunpack.c.l.b16 %v3148
    %v3249 = vunpack.c.l.b16 %v3149
    %v3250 = vunpack.c.l.b16 %v3150
    %v3251 = vunpack.c.l.b16 %v3151
    %v3252 = vunpack.c.l.b16 %v3152
    %v3253 = vunpack.c.l.b16 %v3153
    %v3254 = vunpack.c.l.b16 %v3154
    %v3255 = vunpack.c.l.b16 %v3155
    %v3256 = vunpack.c.l.b16 %v3156
    %v3257 = vunpack.c.l.b16 %v3157
    %v3258 = vunpack.c.l.b16 %v3158
    %v3259 = vunpack.c.l.b16 %v3159
    %v3260 = vunpack.c.l.b16 %v3160
    %v3261 = vunpack.c.l.b16 %v3161
    %v3262 = vunpack.c.l.b16 %v3162
    %v3263 = vunpack.c.l.b16 %v3163
    %v3264 = vunpack.c.l.b16 %v3164
    %v3265 = vunpack.c.l.b16 %v3165
    %v3266 = vunpack.c.l.b16 %v3166
    %v3267 = vunpack.c.l.b16 %v3167
    %v3268 = vunpack.c.l.b16 %v3168
    %v3269 = vunpack.c.l.b16 %v3169
    %v3270 = vunpack.c.l.b16 %v3170
    %v3271 = vunpack.c.l.b16 %v3171
    %v3272 = vunpack.c.l.b16 %v3172
    %v3273 = vunpack.c.l.b16 %v3173
    %v3274 = vunpack.c.l.b16 %v3174
    %v3275 = vunpack.c.l.b16 %v3175
    %v3276 = vunpack.c.l.b16 %v3176
    %v3277 = vunpack.c.l.b16 %v3177
    %v3278 = vunpack.c.l.b16 %v3178
    %v3279 = vunpack.c.l.b16 %v3179
    %v3280 = vunpack.c.l.b16 %v3180
    %v3281 = vunpack.c.l.b16 %v3181
    %v3282 = vunpack.c.l.b16 %v3182
    %v3283 = vpack.c.b16 %v3234, %v3233
    %v3284 = vpack.c.b16 %v3236, %v3235
    %v3285 = vpack.c.b16 %v3238, %v3237
    %v3286 = vpack.c.b16 %v3240, %v3239
    %v3287 = vpack.c.b16 %v3242, %v3241
    %v3288 = vpack.c.b16 %v3244, %v3243
    %v3289 = vpack.c.b16 %v3246, %v3245
    %v3290 = vpack.c.b16 %v3248, %v3247
    %v3291 = vpack.c.b16 %v3250, %v3249
    %v3292 = vpack.c.b16 %v3252, %v3251
    %v3293 = vpack.c.b16 %v3254, %v3253
    %v3294 = vpack.c.b16 %v3256, %v3255
    %v3295 = vpack.c.b16 %v3258, %v3257
    %v3296 = vpack.c.b16 %v3260, %v3259
    %v3297 = vpack.c.b16 %v3262, %v3261
    %v3298 = vpack.c.b16 %v3264, %v3263
    %v3299 = vpack.c.b16 %v3266, %v3265
    %v3300 = vpack.c.b16 %v3268, %v3267
    %v3301 = vpack.c.b16 %v3270, %v3269
    %v3302 = vpack.c.b16 %v3272, %v3271
    %v3303 = vpack.c.b16 %v3274, %v3273
    %v3304 = vpack.c.b16 %v3276, %v3275
    %v3305 = vpack.c.b16 %v3278, %v3277
    %v3306 = vpack.c.b16 %v3280, %v3279
    %v3307 = vpack.c.b16 %v3282, %v3281
    %v3334 = vsel %vm706, %v3104, 0
    %v3337 = vsel %vm706, %v3108, 0
    %v3340 = vsel %vm706, %v3112, 0
    %v3343 = vsel %vm706, %v3116, 0
    %v3346 = vsel %vm706, %v3120, 0
    %v3349 = vsel %vm706, %v3124, 0
    %v3352 = vsel %vm706, %v3128, 0
    %v3355 = vsel %vm706, %v3132, 0
    %3357 = vmatprep.subr.bf16.mxu0 0
    %3358 = vmatpush1.bf16.msra.mxu0 %v3283
    %3359 = vmatprep.subr.bf16.mxu0 0
    %3360 = vmatpush1.bf16.msra.mxu0 %v3284
    %3361 = vmatprep.subr.bf16.mxu0 0
    %3362 = vmatpush1.bf16.msra.mxu0 %v3285
    %3363 = vmatprep.subr.bf16.mxu0 0
    %3364 = vmatpush1.bf16.msra.mxu0 %v3286
    %3365 = vmatprep.subr.bf16.mxu0 0
    %3366 = vmatpush1.bf16.msra.mxu0 %v3287
    %3367 = vmatprep.subr.bf16.mxu0 0
    %3368 = vmatpush1.bf16.msra.mxu0 %v3288
    %3369 = vmatprep.subr.bf16.mxu0 0
    %3370 = vmatpush1.bf16.msra.mxu0 %v3289
    %3371 = vmatprep.subr.bf16.mxu0 0
    %3372 = vmatpush1.bf16.msra.mxu0 %v3290
    %3373 = vmatprep.subr.bf16.mxu0 0
    %3374 = vmatpush1.bf16.msra.mxu0 %v3291
    %3375 = vmatprep.subr.bf16.mxu0 0
    %3376 = vmatpush1.bf16.msra.mxu0 %v3292
    %3377 = vmatprep.subr.bf16.mxu0 0
    %3378 = vmatpush1.bf16.msra.mxu0 %v3293
    %3379 = vmatprep.subr.bf16.mxu0 0
    %3380 = vmatpush1.bf16.msra.mxu0 %v3294
    %3381 = vmatprep.subr.bf16.mxu0 0
    %3382 = vmatpush1.bf16.msra.mxu0 %v3295
    %3383 = vmatprep.subr.bf16.mxu0 0
    %3384 = vmatpush1.bf16.msra.mxu0 %v3296
    %3385 = vmatprep.subr.bf16.mxu0 0
    %3386 = vmatpush1.bf16.msra.mxu0 %v3297
    %3387 = vmatprep.subr.bf16.mxu0 0
    %3388 = vmatpush1.bf16.msra.mxu0 %v3298
    %3389 = vmatprep.mubr.bf16.mxu0 %v3102
    %3390 = vmatmul.mubr.bf16.gmra.mrb[0].mxu0 %v3101
    %v3391 = vpop.f32.mrb[0].mxu0
    %v3392 = vadd.f32 0.0, %v3391
    %v3393 = vpop.f32.mrb[0].mxu0
    %v3394 = vpop.f32.mrb[0].mxu0
    %v3395 = vadd.f32 0.0, %v3394
    %v3396 = vpop.f32.mrb[0].mxu0
    %3397 = vmatprep.mubr.bf16.mxu0 %v3106
    %3398 = vmatmul.mubr.bf16.gmra.mrb[0].mxu0 %v3105
    %v3399 = vpop.f32.mrb[0].mxu0
    %v3400 = vadd.f32 0.0, %v3399
    %v3401 = vpop.f32.mrb[0].mxu0
    %v3402 = vpop.f32.mrb[0].mxu0
    %v3403 = vadd.f32 0.0, %v3402
    %v3404 = vpop.f32.mrb[0].mxu0
    %3405 = vmatprep.mubr.bf16.mxu0 %v3110
    %3406 = vmatmul.mubr.bf16.gmra.mrb[0].mxu0 %v3109
    %v3407 = vpop.f32.mrb[0].mxu0
    %v3408 = vadd.f32 0.0, %v3407
    %v3409 = vpop.f32.mrb[0].mxu0
    %v3410 = vpop.f32.mrb[0].mxu0
    %v3411 = vadd.f32 0.0, %v3410
    %v3412 = vpop.f32.mrb[0].mxu0
    %3413 = vmatprep.mubr.bf16.mxu0 %v3114
    %3414 = vmatmul.mubr.bf16.gmra.mrb[0].mxu0 %v3113
    %v3415 = vpop.f32.mrb[0].mxu0
    %v3416 = vadd.f32 0.0, %v3415
    %v3417 = vpop.f32.mrb[0].mxu0
    %v3418 = vpop.f32.mrb[0].mxu0
    %v3419 = vadd.f32 0.0, %v3418
    %v3420 = vpop.f32.mrb[0].mxu0
    %3421 = vmatprep.mubr.bf16.mxu0 %v3118
    %3422 = vmatmul.mubr.bf16.gmra.mrb[0].mxu0 %v3117
    %v3423 = vpop.f32.mrb[0].mxu0
    %v3424 = vadd.f32 0.0, %v3423
    %v3425 = vpop.f32.mrb[0].mxu0
    %v3426 = vpop.f32.mrb[0].mxu0
    %v3427 = vadd.f32 0.0, %v3426
    %v3428 = vpop.f32.mrb[0].mxu0
    %3429 = vmatprep.mubr.bf16.mxu0 %v3122
    %3430 = vmatmul.mubr.bf16.gmra.mrb[0].mxu0 %v3121
    %v3431 = vpop.f32.mrb[0].mxu0
    %v3432 = vadd.f32 0.0, %v3431
    %v3433 = vpop.f32.mrb[0].mxu0
    %v3434 = vpop.f32.mrb[0].mxu0
    %v3435 = vadd.f32 0.0, %v3434
    %v3436 = vpop.f32.mrb[0].mxu0
    %3437 = vmatprep.mubr.bf16.mxu0 %v3126
    %3438 = vmatmul.mubr.bf16.gmra.mrb[0].mxu0 %v3125
    %v3439 = vpop.f32.mrb[0].mxu0
    %v3440 = vadd.f32 0.0, %v3439
    %v3441 = vpop.f32.mrb[0].mxu0
    %v3442 = vpop.f32.mrb[0].mxu0
    %v3443 = vadd.f32 0.0, %v3442
    %v3444 = vpop.f32.mrb[0].mxu0
    %3445 = vmatprep.mubr.bf16.mxu0 %v3130
    %3446 = vmatmul.mubr.bf16.gmra.mrb[0].mxu0 %v3129
    %v3447 = vpop.f32.mrb[0].mxu0
    %v3448 = vadd.f32 0.0, %v3447
    %v3449 = vpop.f32.mrb[0].mxu0
    %v3450 = vpop.f32.mrb[0].mxu0
    %v3451 = vadd.f32 0.0, %v3450
    %v3452 = vpop.f32.mrb[0].mxu0
    %3453 = vdwg.mxu0
    %3454 = vmatprep.subr.bf16.mxu0 0
    %3455 = vmatpush1.bf16.msra.mxu0 %v3299
    %3456 = vmatprep.subr.bf16.mxu0 0
    %3457 = vmatpush1.bf16.msra.mxu0 %v3300
    %3458 = vmatprep.subr.bf16.mxu0 0
    %3459 = vmatpush1.bf16.msra.mxu0 %v3301
    %3460 = vmatprep.subr.bf16.mxu0 0
    %3461 = vmatpush1.bf16.msra.mxu0 %v3302
    %3462 = vmatprep.subr.bf16.mxu0 0
    %3463 = vmatpush1.bf16.msra.mxu0 %v3303
    %3464 = vmatprep.subr.bf16.mxu0 0
    %3465 = vmatpush1.bf16.msra.mxu0 %v3304
    %3466 = vmatprep.subr.bf16.mxu0 0
    %3467 = vmatpush1.bf16.msra.mxu0 %v3305
    %3468 = vmatprep.subr.bf16.mxu0 0
    %3469 = vmatpush1.bf16.msra.mxu0 %v3306
    %3470 = vmatprep.subr.bf16.mxu0 0
    %3471 = vmatpush1.bf16.msra.mxu0 %v3307
    %3472 = vmatprep.subr.bf16.mxu0 0
    %3473 = vmatpush1.bf16.msra.mxu0 0
    %3474 = vmatprep.subr.bf16.mxu0 0
    %3475 = vmatpush1.bf16.msra.mxu0 0
    %3476 = vmatprep.subr.bf16.mxu0 0
    %3477 = vmatpush1.bf16.msra.mxu0 0
    %3478 = vmatprep.subr.bf16.mxu0 0
    %3479 = vmatpush1.bf16.msra.mxu0 0
    %3480 = vmatprep.subr.bf16.mxu0 0
    %3481 = vmatpush1.bf16.msra.mxu0 0
    %3482 = vmatprep.subr.bf16.mxu0 0
    %3483 = vmatpush1.bf16.msra.mxu0 0
    %3484 = vmatprep.subr.bf16.mxu0 0
    %3485 = vmatpush1.bf16.msra.mxu0 0
    %3486 = vmatprep.mubr.bf16.mxu0 %v3334
    %3487 = vmatmul.mubr.bf16.gmra.mrb[0].mxu0 %v3103
    %v3488 = vpop.f32.mrb[0].mxu0
    %v3489 = vadd.f32 %v3392, %v3488
    %v3490 = vpop.f32.mrb[0].mxu0
    %v3491 = vpop.f32.mrb[0].mxu0
    %v3492 = vadd.f32 %v3395, %v3491
    %v3493 = vpop.f32.mrb[0].mxu0
    %3494 = vmatprep.mubr.bf16.mxu0 %v3337
    %3495 = vmatmul.mubr.bf16.gmra.mrb[0].mxu0 %v3107
    %v3496 = vpop.f32.mrb[0].mxu0
    %v3497 = vadd.f32 %v3400, %v3496
    %v3498 = vpop.f32.mrb[0].mxu0
    %v3499 = vpop.f32.mrb[0].mxu0
    %v3500 = vadd.f32 %v3403, %v3499
    %v3501 = vpop.f32.mrb[0].mxu0
    %3502 = vmatprep.mubr.bf16.mxu0 %v3340
    %3503 = vmatmul.mubr.bf16.gmra.mrb[0].mxu0 %v3111
    %v3504 = vpop.f32.mrb[0].mxu0
    %v3505 = vadd.f32 %v3408, %v3504
    %v3506 = vpop.f32.mrb[0].mxu0
    %v3507 = vpop.f32.mrb[0].mxu0
    %v3508 = vadd.f32 %v3411, %v3507
    %v3509 = vpop.f32.mrb[0].mxu0
    %3510 = vmatprep.mubr.bf16.mxu0 %v3343
    %3511 = vmatmul.mubr.bf16.gmra.mrb[0].mxu0 %v3115
    %v3512 = vpop.f32.mrb[0].mxu0
    %v3513 = vadd.f32 %v3416, %v3512
    %v3514 = vpop.f32.mrb[0].mxu0
    %v3515 = vpop.f32.mrb[0].mxu0
    %v3516 = vadd.f32 %v3419, %v3515
    %v3517 = vpop.f32.mrb[0].mxu0
    %3518 = vmatprep.mubr.bf16.mxu0 %v3346
    %3519 = vmatmul.mubr.bf16.gmra.mrb[0].mxu0 %v3119
    %v3520 = vpop.f32.mrb[0].mxu0
    %v3521 = vadd.f32 %v3424, %v3520
    %v3522 = vpop.f32.mrb[0].mxu0
    %v3523 = vpop.f32.mrb[0].mxu0
    %v3524 = vadd.f32 %v3427, %v3523
    %v3525 = vpop.f32.mrb[0].mxu0
    %3526 = vmatprep.mubr.bf16.mxu0 %v3349
    %3527 = vmatmul.mubr.bf16.gmra.mrb[0].mxu0 %v3123
    %v3528 = vpop.f32.mrb[0].mxu0
    %v3529 = vadd.f32 %v3432, %v3528
    %v3530 = vpop.f32.mrb[0].mxu0
    %v3531 = vpop.f32.mrb[0].mxu0
    %v3532 = vadd.f32 %v3435, %v3531
    %v3533 = vpop.f32.mrb[0].mxu0
    %3534 = vmatprep.mubr.bf16.mxu0 %v3352
    %3535 = vmatmul.mubr.bf16.gmra.mrb[0].mxu0 %v3127
    %v3536 = vpop.f32.mrb[0].mxu0
    %v3537 = vadd.f32 %v3440, %v3536
    %v3538 = vpop.f32.mrb[0].mxu0
    %v3539 = vpop.f32.mrb[0].mxu0
    %v3540 = vadd.f32 %v3443, %v3539
    %v3541 = vpop.f32.mrb[0].mxu0
    %3542 = vmatprep.mubr.bf16.mxu0 %v3355
    %3543 = vmatmul.mubr.bf16.gmra.mrb[0].mxu0 %v3131
    %v3544 = vpop.f32.mrb[0].mxu0
    %v3545 = vadd.f32 %v3448, %v3544
    %v3546 = vpop.f32.mrb[0].mxu0
    %v3547 = vpop.f32.mrb[0].mxu0
    %v3548 = vadd.f32 %v3451, %v3547
    %v3549 = vpop.f32.mrb[0].mxu0
    %3550 = vdwg.mxu0
    %3551 = vst.msk [vmem:[#allocation3] sm:$0xff] %vm2423, %v3489
    %3552 = vst.msk [vmem:[#allocation3 + $0x8] sm:$0xff] %vm2423, %v3492
    %3553 = vst.msk [vmem:[#allocation3 + $0x10] sm:$0xff] %vm2423, %v3497
    %3554 = vst.msk [vmem:[#allocation3 + $0x18] sm:$0xff] %vm2423, %v3500
    %3555 = vst.msk [vmem:[#allocation3 + $0x20] sm:$0xff] %vm2423, %v3505
    %3556 = vst.msk [vmem:[#allocation3 + $0x28] sm:$0xff] %vm2423, %v3508
    %3557 = vst.msk [vmem:[#allocation3 + $0x30] sm:$0xff] %vm2423, %v3513
    %3558 = vst.msk [vmem:[#allocation3 + $0x38] sm:$0xff] %vm2423, %v3516
    %3559 = vst.msk [vmem:[#allocation3 + $0x40] sm:$0xff] %vm2423, %v3521
    %3560 = vst.msk [vmem:[#allocation3 + $0x48] sm:$0xff] %vm2423, %v3524
    %3561 = vst.msk [vmem:[#allocation3 + $0x50] sm:$0xff] %vm2423, %v3529
    %3562 = vst.msk [vmem:[#allocation3 + $0x58] sm:$0xff] %vm2423, %v3532
    %3563 = vst.msk [vmem:[#allocation3 + $0x60] sm:$0xff] %vm2423, %v3537
    %3564 = vst.msk [vmem:[#allocation3 + $0x68] sm:$0xff] %vm2423, %v3540
    %3565 = vst.msk [vmem:[#allocation3 + $0x70] sm:$0xff] %vm2423, %v3545
    %3566 = vst.msk [vmem:[#allocation3 + $0x78] sm:$0xff] %vm2423, %v3548
    %v3567 = vld [vmem:[#allocation2 + $0x80] sm:$0xff]
    %v3568 = vld [vmem:[#allocation2 + $0x88] sm:$0xff]
    %v3569 = vld [vmem:[#allocation2 + $0x90] sm:$0xff]
    %v3570 = vld [vmem:[#allocation2 + $0x98] sm:$0xff]
    %v3571 = vld [vmem:[#allocation2 + $0xa0] sm:$0xff]
    %v3572 = vld [vmem:[#allocation2 + $0xa8] sm:$0xff]
    %v3573 = vld [vmem:[#allocation2 + $0xb0] sm:$0xff]
    %v3574 = vld [vmem:[#allocation2 + $0xb8] sm:$0xff]
    %v3575 = vld [vmem:[#allocation2 + $0xc0] sm:$0xff]
    %v3576 = vld [vmem:[#allocation2 + $0xc8] sm:$0xff]
    %v3577 = vld [vmem:[#allocation2 + $0xd0] sm:$0xff]
    %v3578 = vld [vmem:[#allocation2 + $0xd8] sm:$0xff]
    %v3579 = vld [vmem:[#allocation2 + $0xe0] sm:$0xff]
    %v3580 = vld [vmem:[#allocation2 + $0xe8] sm:$0xff]
    %v3581 = vld [vmem:[#allocation2 + $0xf0] sm:$0xff]
    %v3582 = vld [vmem:[#allocation2 + $0xf8] sm:$0xff]
    %v3583 = vld [vmem:[#allocation2 + $0x81] sm:$0xff]
    %v3584 = vld [vmem:[#allocation2 + $0x89] sm:$0xff]
    %v3585 = vld [vmem:[#allocation2 + $0x91] sm:$0xff]
    %v3586 = vld [vmem:[#allocation2 + $0x99] sm:$0xff]
    %v3587 = vld [vmem:[#allocation2 + $0xa1] sm:$0xff]
    %v3588 = vld [vmem:[#allocation2 + $0xa9] sm:$0xff]
    %v3589 = vld [vmem:[#allocation2 + $0xb1] sm:$0xff]
    %v3590 = vld [vmem:[#allocation2 + $0xb9] sm:$0xff]
    %v3591 = vld [vmem:[#allocation2 + $0xc1] sm:$0xff]
    %v3592 = vld [vmem:[#allocation2 + $0xc9] sm:$0xff]
    %v3593 = vld [vmem:[#allocation2 + $0xd1] sm:$0xff]
    %v3594 = vld [vmem:[#allocation2 + $0xd9] sm:$0xff]
    %v3595 = vld [vmem:[#allocation2 + $0xe1] sm:$0xff]
    %v3596 = vld [vmem:[#allocation2 + $0xe9] sm:$0xff]
    %v3597 = vld [vmem:[#allocation2 + $0xf1] sm:$0xff]
    %v3598 = vld [vmem:[#allocation2 + $0xf9] sm:$0xff]
    %v3599 = vld [vmem:[#allocation2 + $0x82] sm:$0xff]
    %v3600 = vld [vmem:[#allocation2 + $0x8a] sm:$0xff]
    %v3601 = vld [vmem:[#allocation2 + $0x92] sm:$0xff]
    %v3602 = vld [vmem:[#allocation2 + $0x9a] sm:$0xff]
    %v3603 = vld [vmem:[#allocation2 + $0xa2] sm:$0xff]
    %v3604 = vld [vmem:[#allocation2 + $0xaa] sm:$0xff]
    %v3605 = vld [vmem:[#allocation2 + $0xb2] sm:$0xff]
    %v3606 = vld [vmem:[#allocation2 + $0xba] sm:$0xff]
    %v3607 = vld [vmem:[#allocation2 + $0xc2] sm:$0xff]
    %v3608 = vld [vmem:[#allocation2 + $0xca] sm:$0xff]
    %v3609 = vld [vmem:[#allocation2 + $0xd2] sm:$0xff]
    %v3610 = vld [vmem:[#allocation2 + $0xda] sm:$0xff]
    %v3611 = vld [vmem:[#allocation2 + $0xe2] sm:$0xff]
    %v3612 = vld [vmem:[#allocation2 + $0xea] sm:$0xff]
    %v3613 = vld [vmem:[#allocation2 + $0xf2] sm:$0xff]
    %v3614 = vld [vmem:[#allocation2 + $0xfa] sm:$0xff]
    %v3615 = vld [vmem:[#allocation2 + $0x83] sm:$0xff]
    %v3616 = vld [vmem:[#allocation2 + $0x8b] sm:$0xff]
    %v3617 = vld [vmem:[#allocation2 + $0x93] sm:$0xff]
    %v3618 = vld [vmem:[#allocation2 + $0x9b] sm:$0xff]
    %v3619 = vld [vmem:[#allocation2 + $0xa3] sm:$0xff]
    %v3620 = vld [vmem:[#allocation2 + $0xab] sm:$0xff]
    %v3621 = vld [vmem:[#allocation2 + $0xb3] sm:$0xff]
    %v3622 = vld [vmem:[#allocation2 + $0xbb] sm:$0xff]
    %v3623 = vld [vmem:[#allocation2 + $0xc3] sm:$0xff]
    %v3624 = vld [vmem:[#allocation2 + $0xcb] sm:$0xff]
    %v3625 = vld [vmem:[#allocation2 + $0xd3] sm:$0xff]
    %v3626 = vld [vmem:[#allocation2 + $0xdb] sm:$0xff]
    %v3627 = vld [vmem:[#allocation2 + $0xe3] sm:$0xff]
    %v3628 = vld [vmem:[#allocation2 + $0xeb] sm:$0xff]
    %v3629 = vld [vmem:[#allocation2 + $0xf3] sm:$0xff]
    %v3630 = vld [vmem:[#allocation2 + $0xfb] sm:$0xff]
    %v3631 = vld [vmem:[#allocation2 + $0x84] sm:$0xff]
    %v3632 = vld [vmem:[#allocation2 + $0x8c] sm:$0xff]
    %v3633 = vld [vmem:[#allocation2 + $0x94] sm:$0xff]
    %v3634 = vld [vmem:[#allocation2 + $0x9c] sm:$0xff]
    %v3635 = vld [vmem:[#allocation2 + $0xa4] sm:$0xff]
    %v3636 = vld [vmem:[#allocation2 + $0xac] sm:$0xff]
    %v3637 = vld [vmem:[#allocation2 + $0xb4] sm:$0xff]
    %v3638 = vld [vmem:[#allocation2 + $0xbc] sm:$0xff]
    %v3639 = vld [vmem:[#allocation2 + $0xc4] sm:$0xff]
    %v3640 = vld [vmem:[#allocation2 + $0xcc] sm:$0xff]
    %v3641 = vld [vmem:[#allocation2 + $0xd4] sm:$0xff]
    %v3642 = vld [vmem:[#allocation2 + $0xdc] sm:$0xff]
    %v3643 = vld [vmem:[#allocation2 + $0xe4] sm:$0xff]
    %v3644 = vld [vmem:[#allocation2 + $0xec] sm:$0xff]
    %v3645 = vld [vmem:[#allocation2 + $0xf4] sm:$0xff]
    %v3646 = vld [vmem:[#allocation2 + $0xfc] sm:$0xff]
    %v3647 = vld [vmem:[#allocation2 + $0x100] sm:$0xff]
    %v3648 = vld [vmem:[#allocation2 + $0x108] sm:$0xff]
    %v3649 = vld [vmem:[#allocation2 + $0x101] sm:$0xff]
    %v3650 = vld [vmem:[#allocation2 + $0x109] sm:$0xff]
    %v3651 = vld [vmem:[#allocation2 + $0x102] sm:$0xff]
    %v3652 = vld [vmem:[#allocation2 + $0x10a] sm:$0xff]
    %v3653 = vld [vmem:[#allocation2 + $0x103] sm:$0xff]
    %v3654 = vld [vmem:[#allocation2 + $0x10b] sm:$0xff]
    %v3655 = vld [vmem:[#allocation2 + $0x104] sm:$0xff]
    %v3656 = vld [vmem:[#allocation2 + $0x10c] sm:$0xff]
    %v3657 = vld [vmem:[#allocation2 + $0x110] sm:$0xff]
    %v3658 = vld [vmem:[#allocation2 + $0x118] sm:$0xff]
    %v3659 = vld [vmem:[#allocation2 + $0x111] sm:$0xff]
    %v3660 = vld [vmem:[#allocation2 + $0x119] sm:$0xff]
    %v3661 = vld [vmem:[#allocation2 + $0x112] sm:$0xff]
    %v3662 = vld [vmem:[#allocation2 + $0x11a] sm:$0xff]
    %v3663 = vld [vmem:[#allocation2 + $0x113] sm:$0xff]
    %v3664 = vld [vmem:[#allocation2 + $0x11b] sm:$0xff]
    %v3665 = vld [vmem:[#allocation2 + $0x114] sm:$0xff]
    %v3666 = vld [vmem:[#allocation2 + $0x11c] sm:$0xff]
    %v3667 = vld [vmem:[#allocation2 + $0x120] sm:$0xff]
    %v3668 = vld [vmem:[#allocation2 + $0x128] sm:$0xff]
    %v3669 = vld [vmem:[#allocation2 + $0x121] sm:$0xff]
    %v3670 = vld [vmem:[#allocation2 + $0x129] sm:$0xff]
    %v3671 = vld [vmem:[#allocation2 + $0x122] sm:$0xff]
    %v3672 = vld [vmem:[#allocation2 + $0x12a] sm:$0xff]
    %v3673 = vld [vmem:[#allocation2 + $0x123] sm:$0xff]
    %v3674 = vld [vmem:[#allocation2 + $0x12b] sm:$0xff]
    %v3675 = vld [vmem:[#allocation2 + $0x124] sm:$0xff]
    %v3676 = vld [vmem:[#allocation2 + $0x12c] sm:$0xff]
    %v3677 = vld [vmem:[#allocation2 + $0x130] sm:$0xff]
    %v3678 = vld [vmem:[#allocation2 + $0x138] sm:$0xff]
    %v3679 = vld [vmem:[#allocation2 + $0x131] sm:$0xff]
    %v3680 = vld [vmem:[#allocation2 + $0x139] sm:$0xff]
    %v3681 = vld [vmem:[#allocation2 + $0x132] sm:$0xff]
    %v3682 = vld [vmem:[#allocation2 + $0x13a] sm:$0xff]
    %v3683 = vld [vmem:[#allocation2 + $0x133] sm:$0xff]
    %v3684 = vld [vmem:[#allocation2 + $0x13b] sm:$0xff]
    %v3685 = vld [vmem:[#allocation2 + $0x134] sm:$0xff]
    %v3686 = vld [vmem:[#allocation2 + $0x13c] sm:$0xff]
    %3703 = vrot.lane.b32.xlu0 %v3583, 16
    %v3704 = vpop.permute.xlu0 %3703
    %3705 = vrot.lane.b32.xlu0 %v3584, 16
    %v3706 = vpop.permute.xlu0 %3705
    %3707 = vrot.lane.b32.xlu0 %v3585, 16
    %v3708 = vpop.permute.xlu0 %3707
    %3709 = vrot.lane.b32.xlu0 %v3586, 16
    %v3710 = vpop.permute.xlu0 %3709
    %3711 = vrot.lane.b32.xlu0 %v3587, 16
    %v3712 = vpop.permute.xlu0 %3711
    %3713 = vrot.lane.b32.xlu0 %v3588, 16
    %v3714 = vpop.permute.xlu0 %3713
    %3715 = vrot.lane.b32.xlu0 %v3589, 16
    %v3716 = vpop.permute.xlu0 %3715
    %3717 = vrot.lane.b32.xlu0 %v3590, 16
    %v3718 = vpop.permute.xlu0 %3717
    %3719 = vrot.lane.b32.xlu0 %v3591, 16
    %v3720 = vpop.permute.xlu0 %3719
    %3721 = vrot.lane.b32.xlu0 %v3592, 16
    %v3722 = vpop.permute.xlu0 %3721
    %3723 = vrot.lane.b32.xlu0 %v3593, 16
    %v3724 = vpop.permute.xlu0 %3723
    %3725 = vrot.lane.b32.xlu0 %v3594, 16
    %v3726 = vpop.permute.xlu0 %3725
    %3727 = vrot.lane.b32.xlu0 %v3595, 16
    %v3728 = vpop.permute.xlu0 %3727
    %3729 = vrot.lane.b32.xlu0 %v3596, 16
    %v3730 = vpop.permute.xlu0 %3729
    %3731 = vrot.lane.b32.xlu0 %v3597, 16
    %v3732 = vpop.permute.xlu0 %3731
    %3733 = vrot.lane.b32.xlu0 %v3598, 16
    %v3734 = vpop.permute.xlu0 %3733
    %3767 = vrot.lane.b32.xlu0 %v3599, 32
    %v3768 = vpop.permute.xlu0 %3767
    %3769 = vrot.lane.b32.xlu0 %v3600, 32
    %v3770 = vpop.permute.xlu0 %3769
    %3771 = vrot.lane.b32.xlu0 %v3601, 32
    %v3772 = vpop.permute.xlu0 %3771
    %3773 = vrot.lane.b32.xlu0 %v3602, 32
    %v3774 = vpop.permute.xlu0 %3773
    %3775 = vrot.lane.b32.xlu0 %v3603, 32
    %v3776 = vpop.permute.xlu0 %3775
    %3777 = vrot.lane.b32.xlu0 %v3604, 32
    %v3778 = vpop.permute.xlu0 %3777
    %3779 = vrot.lane.b32.xlu0 %v3605, 32
    %v3780 = vpop.permute.xlu0 %3779
    %3781 = vrot.lane.b32.xlu0 %v3606, 32
    %v3782 = vpop.permute.xlu0 %3781
    %3783 = vrot.lane.b32.xlu0 %v3607, 32
    %v3784 = vpop.permute.xlu0 %3783
    %3785 = vrot.lane.b32.xlu0 %v3608, 32
    %v3786 = vpop.permute.xlu0 %3785
    %3787 = vrot.lane.b32.xlu0 %v3609, 32
    %v3788 = vpop.permute.xlu0 %3787
    %3789 = vrot.lane.b32.xlu0 %v3610, 32
    %v3790 = vpop.permute.xlu0 %3789
    %3791 = vrot.lane.b32.xlu0 %v3611, 32
    %v3792 = vpop.permute.xlu0 %3791
    %3793 = vrot.lane.b32.xlu0 %v3612, 32
    %v3794 = vpop.permute.xlu0 %3793
    %3795 = vrot.lane.b32.xlu0 %v3613, 32
    %v3796 = vpop.permute.xlu0 %3795
    %3797 = vrot.lane.b32.xlu0 %v3614, 32
    %v3798 = vpop.permute.xlu0 %3797
    %3831 = vrot.lane.b32.xlu0 %v3615, 48
    %v3832 = vpop.permute.xlu0 %3831
    %3833 = vrot.lane.b32.xlu0 %v3616, 48
    %v3834 = vpop.permute.xlu0 %3833
    %3835 = vrot.lane.b32.xlu0 %v3617, 48
    %v3836 = vpop.permute.xlu0 %3835
    %3837 = vrot.lane.b32.xlu0 %v3618, 48
    %v3838 = vpop.permute.xlu0 %3837
    %3839 = vrot.lane.b32.xlu0 %v3619, 48
    %v3840 = vpop.permute.xlu0 %3839
    %3841 = vrot.lane.b32.xlu0 %v3620, 48
    %v3842 = vpop.permute.xlu0 %3841
    %3843 = vrot.lane.b32.xlu0 %v3621, 48
    %v3844 = vpop.permute.xlu0 %3843
    %3845 = vrot.lane.b32.xlu0 %v3622, 48
    %v3846 = vpop.permute.xlu0 %3845
    %3847 = vrot.lane.b32.xlu0 %v3623, 48
    %v3848 = vpop.permute.xlu0 %3847
    %3849 = vrot.lane.b32.xlu0 %v3624, 48
    %v3850 = vpop.permute.xlu0 %3849
    %3851 = vrot.lane.b32.xlu0 %v3625, 48
    %v3852 = vpop.permute.xlu0 %3851
    %3853 = vrot.lane.b32.xlu0 %v3626, 48
    %v3854 = vpop.permute.xlu0 %3853
    %3855 = vrot.lane.b32.xlu0 %v3627, 48
    %v3856 = vpop.permute.xlu0 %3855
    %3857 = vrot.lane.b32.xlu0 %v3628, 48
    %v3858 = vpop.permute.xlu0 %3857
    %3859 = vrot.lane.b32.xlu0 %v3629, 48
    %v3860 = vpop.permute.xlu0 %3859
    %3861 = vrot.lane.b32.xlu0 %v3630, 48
    %v3862 = vpop.permute.xlu0 %3861
    %3895 = vrot.lane.b32.xlu0 %v3631, 64
    %v3896 = vpop.permute.xlu0 %3895
    %3897 = vrot.lane.b32.xlu0 %v3632, 64
    %v3898 = vpop.permute.xlu0 %3897
    %3899 = vrot.lane.b32.xlu0 %v3633, 64
    %v3900 = vpop.permute.xlu0 %3899
    %3901 = vrot.lane.b32.xlu0 %v3634, 64
    %v3902 = vpop.permute.xlu0 %3901
    %3903 = vrot.lane.b32.xlu0 %v3635, 64
    %v3904 = vpop.permute.xlu0 %3903
    %3905 = vrot.lane.b32.xlu0 %v3636, 64
    %v3906 = vpop.permute.xlu0 %3905
    %3907 = vrot.lane.b32.xlu0 %v3637, 64
    %v3908 = vpop.permute.xlu0 %3907
    %3909 = vrot.lane.b32.xlu0 %v3638, 64
    %v3910 = vpop.permute.xlu0 %3909
    %3911 = vrot.lane.b32.xlu0 %v3639, 64
    %v3912 = vpop.permute.xlu0 %3911
    %3913 = vrot.lane.b32.xlu0 %v3640, 64
    %v3914 = vpop.permute.xlu0 %3913
    %3915 = vrot.lane.b32.xlu0 %v3641, 64
    %v3916 = vpop.permute.xlu0 %3915
    %3917 = vrot.lane.b32.xlu0 %v3642, 64
    %v3918 = vpop.permute.xlu0 %3917
    %3919 = vrot.lane.b32.xlu0 %v3643, 64
    %v3920 = vpop.permute.xlu0 %3919
    %3921 = vrot.lane.b32.xlu0 %v3644, 64
    %v3922 = vpop.permute.xlu0 %3921
    %3923 = vrot.lane.b32.xlu0 %v3645, 64
    %v3924 = vpop.permute.xlu0 %3923
    %3925 = vrot.lane.b32.xlu0 %v3646, 64
    %v3926 = vpop.permute.xlu0 %3925
    %3959 = vrot.lane.b32.xlu0 %v3569, 80
    %v3960 = vpop.permute.xlu0 %3959
    %3961 = vrot.lane.b32.xlu0 %v3570, 80
    %v3962 = vpop.permute.xlu0 %3961
    %3963 = vrot.lane.b32.xlu0 %v3571, 80
    %v3964 = vpop.permute.xlu0 %3963
    %3965 = vrot.lane.b32.xlu0 %v3572, 80
    %v3966 = vpop.permute.xlu0 %3965
    %3967 = vrot.lane.b32.xlu0 %v3573, 80
    %v3968 = vpop.permute.xlu0 %3967
    %3969 = vrot.lane.b32.xlu0 %v3574, 80
    %v3970 = vpop.permute.xlu0 %3969
    %3971 = vrot.lane.b32.xlu0 %v3575, 80
    %v3972 = vpop.permute.xlu0 %3971
    %3973 = vrot.lane.b32.xlu0 %v3576, 80
    %v3974 = vpop.permute.xlu0 %3973
    %3975 = vrot.lane.b32.xlu0 %v3577, 80
    %v3976 = vpop.permute.xlu0 %3975
    %3977 = vrot.lane.b32.xlu0 %v3578, 80
    %v3978 = vpop.permute.xlu0 %3977
    %3979 = vrot.lane.b32.xlu0 %v3579, 80
    %v3980 = vpop.permute.xlu0 %3979
    %3981 = vrot.lane.b32.xlu0 %v3580, 80
    %v3982 = vpop.permute.xlu0 %3981
    %3983 = vrot.lane.b32.xlu0 %v3581, 80
    %v3984 = vpop.permute.xlu0 %3983
    %3985 = vrot.lane.b32.xlu0 %v3582, 80
    %v3986 = vpop.permute.xlu0 %3985
    %3987 = vrot.lane.b32.xlu0 %v3647, 80
    %v3988 = vpop.permute.xlu0 %3987
    %3989 = vrot.lane.b32.xlu0 %v3648, 80
    %v3990 = vpop.permute.xlu0 %3989
    %4009 = vrot.lane.b32.xlu0 %v3585, 96
    %v4010 = vpop.permute.xlu0 %4009
    %4011 = vrot.lane.b32.xlu0 %v3586, 96
    %v4012 = vpop.permute.xlu0 %4011
    %4013 = vrot.lane.b32.xlu0 %v3587, 96
    %v4014 = vpop.permute.xlu0 %4013
    %4015 = vrot.lane.b32.xlu0 %v3588, 96
    %v4016 = vpop.permute.xlu0 %4015
    %4017 = vrot.lane.b32.xlu0 %v3589, 96
    %v4018 = vpop.permute.xlu0 %4017
    %4019 = vrot.lane.b32.xlu0 %v3590, 96
    %v4020 = vpop.permute.xlu0 %4019
    %4021 = vrot.lane.b32.xlu0 %v3591, 96
    %v4022 = vpop.permute.xlu0 %4021
    %4023 = vrot.lane.b32.xlu0 %v3592, 96
    %v4024 = vpop.permute.xlu0 %4023
    %4025 = vrot.lane.b32.xlu0 %v3593, 96
    %v4026 = vpop.permute.xlu0 %4025
    %4027 = vrot.lane.b32.xlu0 %v3594, 96
    %v4028 = vpop.permute.xlu0 %4027
    %4029 = vrot.lane.b32.xlu0 %v3595, 96
    %v4030 = vpop.permute.xlu0 %4029
    %4031 = vrot.lane.b32.xlu0 %v3596, 96
    %v4032 = vpop.permute.xlu0 %4031
    %4033 = vrot.lane.b32.xlu0 %v3597, 96
    %v4034 = vpop.permute.xlu0 %4033
    %4035 = vrot.lane.b32.xlu0 %v3598, 96
    %v4036 = vpop.permute.xlu0 %4035
    %4037 = vrot.lane.b32.xlu0 %v3649, 96
    %v4038 = vpop.permute.xlu0 %4037
    %4039 = vrot.lane.b32.xlu0 %v3650, 96
    %v4040 = vpop.permute.xlu0 %4039
    %4059 = vrot.lane.b32.xlu0 %v3601, 112
    %v4060 = vpop.permute.xlu0 %4059
    %4061 = vrot.lane.b32.xlu0 %v3602, 112
    %v4062 = vpop.permute.xlu0 %4061
    %4063 = vrot.lane.b32.xlu0 %v3603, 112
    %v4064 = vpop.permute.xlu0 %4063
    %4065 = vrot.lane.b32.xlu0 %v3604, 112
    %v4066 = vpop.permute.xlu0 %4065
    %4067 = vrot.lane.b32.xlu0 %v3605, 112
    %v4068 = vpop.permute.xlu0 %4067
    %4069 = vrot.lane.b32.xlu0 %v3606, 112
    %v4070 = vpop.permute.xlu0 %4069
    %4071 = vrot.lane.b32.xlu0 %v3607, 112
    %v4072 = vpop.permute.xlu0 %4071
    %4073 = vrot.lane.b32.xlu0 %v3608, 112
    %v4074 = vpop.permute.xlu0 %4073
    %4075 = vrot.lane.b32.xlu0 %v3609, 112
    %v4076 = vpop.permute.xlu0 %4075
    %4077 = vrot.lane.b32.xlu0 %v3610, 112
    %v4078 = vpop.permute.xlu0 %4077
    %4079 = vrot.lane.b32.xlu0 %v3611, 112
    %v4080 = vpop.permute.xlu0 %4079
    %4081 = vrot.lane.b32.xlu0 %v3612, 112
    %v4082 = vpop.permute.xlu0 %4081
    %4083 = vrot.lane.b32.xlu0 %v3613, 112
    %v4084 = vpop.permute.xlu0 %4083
    %4085 = vrot.lane.b32.xlu0 %v3614, 112
    %v4086 = vpop.permute.xlu0 %4085
    %4087 = vrot.lane.b32.xlu0 %v3651, 112
    %v4088 = vpop.permute.xlu0 %4087
    %4089 = vrot.lane.b32.xlu0 %v3652, 112
    %v4090 = vpop.permute.xlu0 %4089
    %4109 = vrot.lane.b32.xlu0 %v3633, 16
    %v4110 = vpop.permute.xlu0 %4109
    %4111 = vrot.lane.b32.xlu0 %v3634, 16
    %v4112 = vpop.permute.xlu0 %4111
    %4113 = vrot.lane.b32.xlu0 %v3635, 16
    %v4114 = vpop.permute.xlu0 %4113
    %4115 = vrot.lane.b32.xlu0 %v3636, 16
    %v4116 = vpop.permute.xlu0 %4115
    %4117 = vrot.lane.b32.xlu0 %v3637, 16
    %v4118 = vpop.permute.xlu0 %4117
    %4119 = vrot.lane.b32.xlu0 %v3638, 16
    %v4120 = vpop.permute.xlu0 %4119
    %4121 = vrot.lane.b32.xlu0 %v3639, 16
    %v4122 = vpop.permute.xlu0 %4121
    %4123 = vrot.lane.b32.xlu0 %v3640, 16
    %v4124 = vpop.permute.xlu0 %4123
    %4125 = vrot.lane.b32.xlu0 %v3641, 16
    %v4126 = vpop.permute.xlu0 %4125
    %4127 = vrot.lane.b32.xlu0 %v3642, 16
    %v4128 = vpop.permute.xlu0 %4127
    %4129 = vrot.lane.b32.xlu0 %v3643, 16
    %v4130 = vpop.permute.xlu0 %4129
    %4131 = vrot.lane.b32.xlu0 %v3644, 16
    %v4132 = vpop.permute.xlu0 %4131
    %4133 = vrot.lane.b32.xlu0 %v3645, 16
    %v4134 = vpop.permute.xlu0 %4133
    %4135 = vrot.lane.b32.xlu0 %v3646, 16
    %v4136 = vpop.permute.xlu0 %4135
    %4137 = vrot.lane.b32.xlu0 %v3655, 16
    %v4138 = vpop.permute.xlu0 %4137
    %4139 = vrot.lane.b32.xlu0 %v3656, 16
    %v4140 = vpop.permute.xlu0 %4139
    %4159 = vrot.lane.b32.xlu0 %v3571, 32
    %v4160 = vpop.permute.xlu0 %4159
    %4161 = vrot.lane.b32.xlu0 %v3572, 32
    %v4162 = vpop.permute.xlu0 %4161
    %4163 = vrot.lane.b32.xlu0 %v3573, 32
    %v4164 = vpop.permute.xlu0 %4163
    %4165 = vrot.lane.b32.xlu0 %v3574, 32
    %v4166 = vpop.permute.xlu0 %4165
    %4167 = vrot.lane.b32.xlu0 %v3575, 32
    %v4168 = vpop.permute.xlu0 %4167
    %4169 = vrot.lane.b32.xlu0 %v3576, 32
    %v4170 = vpop.permute.xlu0 %4169
    %4171 = vrot.lane.b32.xlu0 %v3577, 32
    %v4172 = vpop.permute.xlu0 %4171
    %4173 = vrot.lane.b32.xlu0 %v3578, 32
    %v4174 = vpop.permute.xlu0 %4173
    %4175 = vrot.lane.b32.xlu0 %v3579, 32
    %v4176 = vpop.permute.xlu0 %4175
    %4177 = vrot.lane.b32.xlu0 %v3580, 32
    %v4178 = vpop.permute.xlu0 %4177
    %4179 = vrot.lane.b32.xlu0 %v3581, 32
    %v4180 = vpop.permute.xlu0 %4179
    %4181 = vrot.lane.b32.xlu0 %v3582, 32
    %v4182 = vpop.permute.xlu0 %4181
    %4183 = vrot.lane.b32.xlu0 %v3647, 32
    %v4184 = vpop.permute.xlu0 %4183
    %4185 = vrot.lane.b32.xlu0 %v3648, 32
    %v4186 = vpop.permute.xlu0 %4185
    %4187 = vrot.lane.b32.xlu0 %v3657, 32
    %v4188 = vpop.permute.xlu0 %4187
    %4189 = vrot.lane.b32.xlu0 %v3658, 32
    %v4190 = vpop.permute.xlu0 %4189
    %4209 = vrot.lane.b32.xlu0 %v3587, 48
    %v4210 = vpop.permute.xlu0 %4209
    %4211 = vrot.lane.b32.xlu0 %v3588, 48
    %v4212 = vpop.permute.xlu0 %4211
    %4213 = vrot.lane.b32.xlu0 %v3589, 48
    %v4214 = vpop.permute.xlu0 %4213
    %4215 = vrot.lane.b32.xlu0 %v3590, 48
    %v4216 = vpop.permute.xlu0 %4215
    %4217 = vrot.lane.b32.xlu0 %v3591, 48
    %v4218 = vpop.permute.xlu0 %4217
    %4219 = vrot.lane.b32.xlu0 %v3592, 48
    %v4220 = vpop.permute.xlu0 %4219
    %4221 = vrot.lane.b32.xlu0 %v3593, 48
    %v4222 = vpop.permute.xlu0 %4221
    %4223 = vrot.lane.b32.xlu0 %v3594, 48
    %v4224 = vpop.permute.xlu0 %4223
    %4225 = vrot.lane.b32.xlu0 %v3595, 48
    %v4226 = vpop.permute.xlu0 %4225
    %4227 = vrot.lane.b32.xlu0 %v3596, 48
    %v4228 = vpop.permute.xlu0 %4227
    %4229 = vrot.lane.b32.xlu0 %v3597, 48
    %v4230 = vpop.permute.xlu0 %4229
    %4231 = vrot.lane.b32.xlu0 %v3598, 48
    %v4232 = vpop.permute.xlu0 %4231
    %4233 = vrot.lane.b32.xlu0 %v3649, 48
    %v4234 = vpop.permute.xlu0 %4233
    %4235 = vrot.lane.b32.xlu0 %v3650, 48
    %v4236 = vpop.permute.xlu0 %4235
    %4237 = vrot.lane.b32.xlu0 %v3659, 48
    %v4238 = vpop.permute.xlu0 %4237
    %4239 = vrot.lane.b32.xlu0 %v3660, 48
    %v4240 = vpop.permute.xlu0 %4239
    %4259 = vrot.lane.b32.xlu0 %v3603, 64
    %v4260 = vpop.permute.xlu0 %4259
    %4261 = vrot.lane.b32.xlu0 %v3604, 64
    %v4262 = vpop.permute.xlu0 %4261
    %4263 = vrot.lane.b32.xlu0 %v3605, 64
    %v4264 = vpop.permute.xlu0 %4263
    %4265 = vrot.lane.b32.xlu0 %v3606, 64
    %v4266 = vpop.permute.xlu0 %4265
    %4267 = vrot.lane.b32.xlu0 %v3607, 64
    %v4268 = vpop.permute.xlu0 %4267
    %4269 = vrot.lane.b32.xlu0 %v3608, 64
    %v4270 = vpop.permute.xlu0 %4269
    %4271 = vrot.lane.b32.xlu0 %v3609, 64
    %v4272 = vpop.permute.xlu0 %4271
    %4273 = vrot.lane.b32.xlu0 %v3610, 64
    %v4274 = vpop.permute.xlu0 %4273
    %4275 = vrot.lane.b32.xlu0 %v3611, 64
    %v4276 = vpop.permute.xlu0 %4275
    %4277 = vrot.lane.b32.xlu0 %v3612, 64
    %v4278 = vpop.permute.xlu0 %4277
    %4279 = vrot.lane.b32.xlu0 %v3613, 64
    %v4280 = vpop.permute.xlu0 %4279
    %4281 = vrot.lane.b32.xlu0 %v3614, 64
    %v4282 = vpop.permute.xlu0 %4281
    %4283 = vrot.lane.b32.xlu0 %v3651, 64
    %v4284 = vpop.permute.xlu0 %4283
    %4285 = vrot.lane.b32.xlu0 %v3652, 64
    %v4286 = vpop.permute.xlu0 %4285
    %4287 = vrot.lane.b32.xlu0 %v3661, 64
    %v4288 = vpop.permute.xlu0 %4287
    %4289 = vrot.lane.b32.xlu0 %v3662, 64
    %v4290 = vpop.permute.xlu0 %4289
    %4311 = vrot.lane.b32.xlu0 %v3619, 80
    %v4312 = vpop.permute.xlu0 %4311
    %4313 = vrot.lane.b32.xlu0 %v3620, 80
    %v4314 = vpop.permute.xlu0 %4313
    %4315 = vrot.lane.b32.xlu0 %v3621, 80
    %v4316 = vpop.permute.xlu0 %4315
    %4317 = vrot.lane.b32.xlu0 %v3622, 80
    %v4318 = vpop.permute.xlu0 %4317
    %4319 = vrot.lane.b32.xlu0 %v3623, 80
    %v4320 = vpop.permute.xlu0 %4319
    %4321 = vrot.lane.b32.xlu0 %v3624, 80
    %v4322 = vpop.permute.xlu0 %4321
    %4323 = vrot.lane.b32.xlu0 %v3625, 80
    %v4324 = vpop.permute.xlu0 %4323
    %4325 = vrot.lane.b32.xlu0 %v3626, 80
    %v4326 = vpop.permute.xlu0 %4325
    %4327 = vrot.lane.b32.xlu0 %v3627, 80
    %v4328 = vpop.permute.xlu0 %4327
    %4329 = vrot.lane.b32.xlu0 %v3628, 80
    %v4330 = vpop.permute.xlu0 %4329
    %4331 = vrot.lane.b32.xlu0 %v3629, 80
    %v4332 = vpop.permute.xlu0 %4331
    %4333 = vrot.lane.b32.xlu0 %v3630, 80
    %v4334 = vpop.permute.xlu0 %4333
    %4335 = vrot.lane.b32.xlu0 %v3653, 80
    %v4336 = vpop.permute.xlu0 %4335
    %4337 = vrot.lane.b32.xlu0 %v3654, 80
    %v4338 = vpop.permute.xlu0 %4337
    %4339 = vrot.lane.b32.xlu0 %v3663, 80
    %v4340 = vpop.permute.xlu0 %4339
    %4341 = vrot.lane.b32.xlu0 %v3664, 80
    %v4342 = vpop.permute.xlu0 %4341
    %4361 = vrot.lane.b32.xlu0 %v3635, 96
    %v4362 = vpop.permute.xlu0 %4361
    %4363 = vrot.lane.b32.xlu0 %v3636, 96
    %v4364 = vpop.permute.xlu0 %4363
    %4365 = vrot.lane.b32.xlu0 %v3637, 96
    %v4366 = vpop.permute.xlu0 %4365
    %4367 = vrot.lane.b32.xlu0 %v3638, 96
    %v4368 = vpop.permute.xlu0 %4367
    %4369 = vrot.lane.b32.xlu0 %v3639, 96
    %v4370 = vpop.permute.xlu0 %4369
    %4371 = vrot.lane.b32.xlu0 %v3640, 96
    %v4372 = vpop.permute.xlu0 %4371
    %4373 = vrot.lane.b32.xlu0 %v3641, 96
    %v4374 = vpop.permute.xlu0 %4373
    %4375 = vrot.lane.b32.xlu0 %v3642, 96
    %v4376 = vpop.permute.xlu0 %4375
    %4377 = vrot.lane.b32.xlu0 %v3643, 96
    %v4378 = vpop.permute.xlu0 %4377
    %4379 = vrot.lane.b32.xlu0 %v3644, 96
    %v4380 = vpop.permute.xlu0 %4379
    %4381 = vrot.lane.b32.xlu0 %v3645, 96
    %v4382 = vpop.permute.xlu0 %4381
    %4383 = vrot.lane.b32.xlu0 %v3646, 96
    %v4384 = vpop.permute.xlu0 %4383
    %4385 = vrot.lane.b32.xlu0 %v3655, 96
    %v4386 = vpop.permute.xlu0 %4385
    %4387 = vrot.lane.b32.xlu0 %v3656, 96
    %v4388 = vpop.permute.xlu0 %4387
    %4389 = vrot.lane.b32.xlu0 %v3665, 96
    %v4390 = vpop.permute.xlu0 %4389
    %4391 = vrot.lane.b32.xlu0 %v3666, 96
    %v4392 = vpop.permute.xlu0 %4391
    %4411 = vrot.lane.b32.xlu0 %v3573, 112
    %v4412 = vpop.permute.xlu0 %4411
    %4413 = vrot.lane.b32.xlu0 %v3574, 112
    %v4414 = vpop.permute.xlu0 %4413
    %4415 = vrot.lane.b32.xlu0 %v3575, 112
    %v4416 = vpop.permute.xlu0 %4415
    %4417 = vrot.lane.b32.xlu0 %v3576, 112
    %v4418 = vpop.permute.xlu0 %4417
    %4419 = vrot.lane.b32.xlu0 %v3577, 112
    %v4420 = vpop.permute.xlu0 %4419
    %4421 = vrot.lane.b32.xlu0 %v3578, 112
    %v4422 = vpop.permute.xlu0 %4421
    %4423 = vrot.lane.b32.xlu0 %v3579, 112
    %v4424 = vpop.permute.xlu0 %4423
    %4425 = vrot.lane.b32.xlu0 %v3580, 112
    %v4426 = vpop.permute.xlu0 %4425
    %4427 = vrot.lane.b32.xlu0 %v3581, 112
    %v4428 = vpop.permute.xlu0 %4427
    %4429 = vrot.lane.b32.xlu0 %v3582, 112
    %v4430 = vpop.permute.xlu0 %4429
    %4431 = vrot.lane.b32.xlu0 %v3647, 112
    %v4432 = vpop.permute.xlu0 %4431
    %4433 = vrot.lane.b32.xlu0 %v3648, 112
    %v4434 = vpop.permute.xlu0 %4433
    %4435 = vrot.lane.b32.xlu0 %v3657, 112
    %v4436 = vpop.permute.xlu0 %4435
    %4437 = vrot.lane.b32.xlu0 %v3658, 112
    %v4438 = vpop.permute.xlu0 %4437
    %4439 = vrot.lane.b32.xlu0 %v3667, 112
    %v4440 = vpop.permute.xlu0 %4439
    %4441 = vrot.lane.b32.xlu0 %v3668, 112
    %v4442 = vpop.permute.xlu0 %4441
    %v4459 = vsel %vm706, %v3567, %v3704
    %v4460 = vsel %vm706, %v3568, %v3706
    %v4461 = vsel %vm706, %v3569, %v3708
    %v4462 = vsel %vm706, %v3570, %v3710
    %v4463 = vsel %vm706, %v3571, %v3712
    %v4464 = vsel %vm706, %v3572, %v3714
    %v4465 = vsel %vm706, %v3573, %v3716
    %v4466 = vsel %vm706, %v3574, %v3718
    %v4467 = vsel %vm706, %v3575, %v3720
    %v4468 = vsel %vm706, %v3576, %v3722
    %v4469 = vsel %vm706, %v3577, %v3724
    %v4470 = vsel %vm706, %v3578, %v3726
    %v4471 = vsel %vm706, %v3579, %v3728
    %v4472 = vsel %vm706, %v3580, %v3730
    %v4473 = vsel %vm706, %v3581, %v3732
    %v4474 = vsel %vm706, %v3582, %v3734
    %v4475 = vsel %vm2423, %v4459, %v3768
    %v4476 = vsel %vm2423, %v4460, %v3770
    %v4477 = vsel %vm2423, %v4461, %v3772
    %v4478 = vsel %vm2423, %v4462, %v3774
    %v4479 = vsel %vm2423, %v4463, %v3776
    %v4480 = vsel %vm2423, %v4464, %v3778
    %v4481 = vsel %vm2423, %v4465, %v3780
    %v4482 = vsel %vm2423, %v4466, %v3782
    %v4483 = vsel %vm2423, %v4467, %v3784
    %v4484 = vsel %vm2423, %v4468, %v3786
    %v4485 = vsel %vm2423, %v4469, %v3788
    %v4486 = vsel %vm2423, %v4470, %v3790
    %v4487 = vsel %vm2423, %v4471, %v3792
    %v4488 = vsel %vm2423, %v4472, %v3794
    %v4489 = vsel %vm2423, %v4473, %v3796
    %v4490 = vsel %vm2423, %v4474, %v3798
    %v4491 = vsel %vm2440, %v4475, %v3832
    %v4492 = vsel %vm2440, %v4476, %v3834
    %v4493 = vsel %vm2440, %v4477, %v3836
    %v4494 = vsel %vm2440, %v4478, %v3838
    %v4495 = vsel %vm2440, %v4479, %v3840
    %v4496 = vsel %vm2440, %v4480, %v3842
    %v4497 = vsel %vm2440, %v4481, %v3844
    %v4498 = vsel %vm2440, %v4482, %v3846
    %v4499 = vsel %vm2440, %v4483, %v3848
    %v4500 = vsel %vm2440, %v4484, %v3850
    %v4501 = vsel %vm2440, %v4485, %v3852
    %v4502 = vsel %vm2440, %v4486, %v3854
    %v4503 = vsel %vm2440, %v4487, %v3856
    %v4504 = vsel %vm2440, %v4488, %v3858
    %v4505 = vsel %vm2440, %v4489, %v3860
    %v4506 = vsel %vm2440, %v4490, %v3862
    %v4507 = vsel %vm2457, %v4491, %v3896
    %v4508 = vsel %vm2457, %v4492, %v3898
    %v4509 = vsel %vm2457, %v4493, %v3900
    %v4510 = vsel %vm2457, %v4494, %v3902
    %v4511 = vsel %vm2457, %v4495, %v3904
    %v4512 = vsel %vm2457, %v4496, %v3906
    %v4513 = vsel %vm2457, %v4497, %v3908
    %v4514 = vsel %vm2457, %v4498, %v3910
    %v4515 = vsel %vm2457, %v4499, %v3912
    %v4516 = vsel %vm2457, %v4500, %v3914
    %v4517 = vsel %vm2457, %v4501, %v3916
    %v4518 = vsel %vm2457, %v4502, %v3918
    %v4519 = vsel %vm2457, %v4503, %v3920
    %v4520 = vsel %vm2457, %v4504, %v3922
    %v4521 = vsel %vm2457, %v4505, %v3924
    %v4522 = vsel %vm2457, %v4506, %v3926
    %v4523 = vsel %vm2474, %v4507, %v3960
    %v4524 = vsel %vm2474, %v4508, %v3962
    %v4525 = vsel %vm2474, %v4509, %v3964
    %v4526 = vsel %vm2474, %v4510, %v3966
    %v4527 = vsel %vm2474, %v4511, %v3968
    %v4528 = vsel %vm2474, %v4512, %v3970
    %v4529 = vsel %vm2474, %v4513, %v3972
    %v4530 = vsel %vm2474, %v4514, %v3974
    %v4531 = vsel %vm2474, %v4515, %v3976
    %v4532 = vsel %vm2474, %v4516, %v3978
    %v4533 = vsel %vm2474, %v4517, %v3980
    %v4534 = vsel %vm2474, %v4518, %v3982
    %v4535 = vsel %vm2474, %v4519, %v3984
    %v4536 = vsel %vm2474, %v4520, %v3986
    %v4537 = vsel %vm2474, %v4521, %v3988
    %v4538 = vsel %vm2474, %v4522, %v3990
    %v4539 = vsel %vm2491, %v4523, %v4010
    %v4540 = vsel %vm2491, %v4524, %v4012
    %v4541 = vsel %vm2491, %v4525, %v4014
    %v4542 = vsel %vm2491, %v4526, %v4016
    %v4543 = vsel %vm2491, %v4527, %v4018
    %v4544 = vsel %vm2491, %v4528, %v4020
    %v4545 = vsel %vm2491, %v4529, %v4022
    %v4546 = vsel %vm2491, %v4530, %v4024
    %v4547 = vsel %vm2491, %v4531, %v4026
    %v4548 = vsel %vm2491, %v4532, %v4028
    %v4549 = vsel %vm2491, %v4533, %v4030
    %v4550 = vsel %vm2491, %v4534, %v4032
    %v4551 = vsel %vm2491, %v4535, %v4034
    %v4552 = vsel %vm2491, %v4536, %v4036
    %v4553 = vsel %vm2491, %v4537, %v4038
    %v4554 = vsel %vm2491, %v4538, %v4040
    %v4555 = vsel %vm2508, %v4539, %v4060
    %v4556 = vsel %vm2508, %v4540, %v4062
    %v4557 = vsel %vm2508, %v4541, %v4064
    %v4558 = vsel %vm2508, %v4542, %v4066
    %v4559 = vsel %vm2508, %v4543, %v4068
    %v4560 = vsel %vm2508, %v4544, %v4070
    %v4561 = vsel %vm2508, %v4545, %v4072
    %v4562 = vsel %vm2508, %v4546, %v4074
    %v4563 = vsel %vm2508, %v4547, %v4076
    %v4564 = vsel %vm2508, %v4548, %v4078
    %v4565 = vsel %vm2508, %v4549, %v4080
    %v4566 = vsel %vm2508, %v4550, %v4082
    %v4567 = vsel %vm2508, %v4551, %v4084
    %v4568 = vsel %vm2508, %v4552, %v4086
    %v4569 = vsel %vm2508, %v4553, %v4088
    %v4570 = vsel %vm2508, %v4554, %v4090
    %v4571 = vsel %vm706, %v3617, %v4110
    %v4572 = vsel %vm706, %v3618, %v4112
    %v4573 = vsel %vm706, %v3619, %v4114
    %v4574 = vsel %vm706, %v3620, %v4116
    %v4575 = vsel %vm706, %v3621, %v4118
    %v4576 = vsel %vm706, %v3622, %v4120
    %v4577 = vsel %vm706, %v3623, %v4122
    %v4578 = vsel %vm706, %v3624, %v4124
    %v4579 = vsel %vm706, %v3625, %v4126
    %v4580 = vsel %vm706, %v3626, %v4128
    %v4581 = vsel %vm706, %v3627, %v4130
    %v4582 = vsel %vm706, %v3628, %v4132
    %v4583 = vsel %vm706, %v3629, %v4134
    %v4584 = vsel %vm706, %v3630, %v4136
    %v4585 = vsel %vm706, %v3653, %v4138
    %v4586 = vsel %vm706, %v3654, %v4140
    %v4587 = vsel %vm2423, %v4571, %v4160
    %v4588 = vsel %vm2423, %v4572, %v4162
    %v4589 = vsel %vm2423, %v4573, %v4164
    %v4590 = vsel %vm2423, %v4574, %v4166
    %v4591 = vsel %vm2423, %v4575, %v4168
    %v4592 = vsel %vm2423, %v4576, %v4170
    %v4593 = vsel %vm2423, %v4577, %v4172
    %v4594 = vsel %vm2423, %v4578, %v4174
    %v4595 = vsel %vm2423, %v4579, %v4176
    %v4596 = vsel %vm2423, %v4580, %v4178
    %v4597 = vsel %vm2423, %v4581, %v4180
    %v4598 = vsel %vm2423, %v4582, %v4182
    %v4599 = vsel %vm2423, %v4583, %v4184
    %v4600 = vsel %vm2423, %v4584, %v4186
    %v4601 = vsel %vm2423, %v4585, %v4188
    %v4602 = vsel %vm2423, %v4586, %v4190
    %v4603 = vsel %vm2440, %v4587, %v4210
    %v4604 = vsel %vm2440, %v4588, %v4212
    %v4605 = vsel %vm2440, %v4589, %v4214
    %v4606 = vsel %vm2440, %v4590, %v4216
    %v4607 = vsel %vm2440, %v4591, %v4218
    %v4608 = vsel %vm2440, %v4592, %v4220
    %v4609 = vsel %vm2440, %v4593, %v4222
    %v4610 = vsel %vm2440, %v4594, %v4224
    %v4611 = vsel %vm2440, %v4595, %v4226
    %v4612 = vsel %vm2440, %v4596, %v4228
    %v4613 = vsel %vm2440, %v4597, %v4230
    %v4614 = vsel %vm2440, %v4598, %v4232
    %v4615 = vsel %vm2440, %v4599, %v4234
    %v4616 = vsel %vm2440, %v4600, %v4236
    %v4617 = vsel %vm2440, %v4601, %v4238
    %v4618 = vsel %vm2440, %v4602, %v4240
    %v4619 = vsel %vm2457, %v4603, %v4260
    %v4620 = vsel %vm2457, %v4604, %v4262
    %v4621 = vsel %vm2457, %v4605, %v4264
    %v4622 = vsel %vm2457, %v4606, %v4266
    %v4623 = vsel %vm2457, %v4607, %v4268
    %v4624 = vsel %vm2457, %v4608, %v4270
    %v4625 = vsel %vm2457, %v4609, %v4272
    %v4626 = vsel %vm2457, %v4610, %v4274
    %v4627 = vsel %vm2457, %v4611, %v4276
    %v4628 = vsel %vm2457, %v4612, %v4278
    %v4629 = vsel %vm2457, %v4613, %v4280
    %v4630 = vsel %vm2457, %v4614, %v4282
    %v4631 = vsel %vm2457, %v4615, %v4284
    %v4632 = vsel %vm2457, %v4616, %v4286
    %v4633 = vsel %vm2457, %v4617, %v4288
    %v4634 = vsel %vm2457, %v4618, %v4290
    %v4635 = vsel %vm2474, %v4619, %v4312
    %v4636 = vsel %vm2474, %v4620, %v4314
    %v4637 = vsel %vm2474, %v4621, %v4316
    %v4638 = vsel %vm2474, %v4622, %v4318
    %v4639 = vsel %vm2474, %v4623, %v4320
    %v4640 = vsel %vm2474, %v4624, %v4322
    %v4641 = vsel %vm2474, %v4625, %v4324
    %v4642 = vsel %vm2474, %v4626, %v4326
    %v4643 = vsel %vm2474, %v4627, %v4328
    %v4644 = vsel %vm2474, %v4628, %v4330
    %v4645 = vsel %vm2474, %v4629, %v4332
    %v4646 = vsel %vm2474, %v4630, %v4334
    %v4647 = vsel %vm2474, %v4631, %v4336
    %v4648 = vsel %vm2474, %v4632, %v4338
    %v4649 = vsel %vm2474, %v4633, %v4340
    %v4650 = vsel %vm2474, %v4634, %v4342
    %v4651 = vsel %vm2491, %v4635, %v4362
    %v4652 = vsel %vm2491, %v4636, %v4364
    %v4653 = vsel %vm2491, %v4637, %v4366
    %v4654 = vsel %vm2491, %v4638, %v4368
    %v4655 = vsel %vm2491, %v4639, %v4370
    %v4656 = vsel %vm2491, %v4640, %v4372
    %v4657 = vsel %vm2491, %v4641, %v4374
    %v4658 = vsel %vm2491, %v4642, %v4376
    %v4659 = vsel %vm2491, %v4643, %v4378
    %v4660 = vsel %vm2491, %v4644, %v4380
    %v4661 = vsel %vm2491, %v4645, %v4382
    %v4662 = vsel %vm2491, %v4646, %v4384
    %v4663 = vsel %vm2491, %v4647, %v4386
    %v4664 = vsel %vm2491, %v4648, %v4388
    %v4665 = vsel %vm2491, %v4649, %v4390
    %v4666 = vsel %vm2491, %v4650, %v4392
    %v4667 = vsel %vm2508, %v4651, %v4412
    %v4668 = vsel %vm2508, %v4652, %v4414
    %v4669 = vsel %vm2508, %v4653, %v4416
    %v4670 = vsel %vm2508, %v4654, %v4418
    %v4671 = vsel %vm2508, %v4655, %v4420
    %v4672 = vsel %vm2508, %v4656, %v4422
    %v4673 = vsel %vm2508, %v4657, %v4424
    %v4674 = vsel %vm2508, %v4658, %v4426
    %v4675 = vsel %vm2508, %v4659, %v4428
    %v4676 = vsel %vm2508, %v4660, %v4430
    %v4677 = vsel %vm2508, %v4661, %v4432
    %v4678 = vsel %vm2508, %v4662, %v4434
    %v4679 = vsel %vm2508, %v4663, %v4436
    %v4680 = vsel %vm2508, %v4664, %v4438
    %v4681 = vsel %vm2508, %v4665, %v4440
    %v4682 = vsel %vm2508, %v4666, %v4442
    %4685 = vrot.lane.b32.xlu0 %v3605, 16
    %v4686 = vpop.permute.xlu0 %4685
    %4687 = vrot.lane.b32.xlu0 %v3606, 16
    %v4688 = vpop.permute.xlu0 %4687
    %4689 = vrot.lane.b32.xlu0 %v3607, 16
    %v4690 = vpop.permute.xlu0 %4689
    %4691 = vrot.lane.b32.xlu0 %v3608, 16
    %v4692 = vpop.permute.xlu0 %4691
    %4693 = vrot.lane.b32.xlu0 %v3609, 16
    %v4694 = vpop.permute.xlu0 %4693
    %4695 = vrot.lane.b32.xlu0 %v3610, 16
    %v4696 = vpop.permute.xlu0 %4695
    %4697 = vrot.lane.b32.xlu0 %v3611, 16
    %v4698 = vpop.permute.xlu0 %4697
    %4699 = vrot.lane.b32.xlu0 %v3612, 16
    %v4700 = vpop.permute.xlu0 %4699
    %4701 = vrot.lane.b32.xlu0 %v3613, 16
    %v4702 = vpop.permute.xlu0 %4701
    %4703 = vrot.lane.b32.xlu0 %v3614, 16
    %v4704 = vpop.permute.xlu0 %4703
    %4705 = vrot.lane.b32.xlu0 %v3651, 16
    %v4706 = vpop.permute.xlu0 %4705
    %4707 = vrot.lane.b32.xlu0 %v3652, 16
    %v4708 = vpop.permute.xlu0 %4707
    %4709 = vrot.lane.b32.xlu0 %v3661, 16
    %v4710 = vpop.permute.xlu0 %4709
    %4711 = vrot.lane.b32.xlu0 %v3662, 16
    %v4712 = vpop.permute.xlu0 %4711
    %4713 = vrot.lane.b32.xlu0 %v3671, 16
    %v4714 = vpop.permute.xlu0 %4713
    %4715 = vrot.lane.b32.xlu0 %v3672, 16
    %v4716 = vpop.permute.xlu0 %4715
    %4735 = vrot.lane.b32.xlu0 %v3621, 32
    %v4736 = vpop.permute.xlu0 %4735
    %4737 = vrot.lane.b32.xlu0 %v3622, 32
    %v4738 = vpop.permute.xlu0 %4737
    %4739 = vrot.lane.b32.xlu0 %v3623, 32
    %v4740 = vpop.permute.xlu0 %4739
    %4741 = vrot.lane.b32.xlu0 %v3624, 32
    %v4742 = vpop.permute.xlu0 %4741
    %4743 = vrot.lane.b32.xlu0 %v3625, 32
    %v4744 = vpop.permute.xlu0 %4743
    %4745 = vrot.lane.b32.xlu0 %v3626, 32
    %v4746 = vpop.permute.xlu0 %4745
    %4747 = vrot.lane.b32.xlu0 %v3627, 32
    %v4748 = vpop.permute.xlu0 %4747
    %4749 = vrot.lane.b32.xlu0 %v3628, 32
    %v4750 = vpop.permute.xlu0 %4749
    %4751 = vrot.lane.b32.xlu0 %v3629, 32
    %v4752 = vpop.permute.xlu0 %4751
    %4753 = vrot.lane.b32.xlu0 %v3630, 32
    %v4754 = vpop.permute.xlu0 %4753
    %4755 = vrot.lane.b32.xlu0 %v3653, 32
    %v4756 = vpop.permute.xlu0 %4755
    %4757 = vrot.lane.b32.xlu0 %v3654, 32
    %v4758 = vpop.permute.xlu0 %4757
    %4759 = vrot.lane.b32.xlu0 %v3663, 32
    %v4760 = vpop.permute.xlu0 %4759
    %4761 = vrot.lane.b32.xlu0 %v3664, 32
    %v4762 = vpop.permute.xlu0 %4761
    %4763 = vrot.lane.b32.xlu0 %v3673, 32
    %v4764 = vpop.permute.xlu0 %4763
    %4765 = vrot.lane.b32.xlu0 %v3674, 32
    %v4766 = vpop.permute.xlu0 %4765
    %4785 = vrot.lane.b32.xlu0 %v3637, 48
    %v4786 = vpop.permute.xlu0 %4785
    %4787 = vrot.lane.b32.xlu0 %v3638, 48
    %v4788 = vpop.permute.xlu0 %4787
    %4789 = vrot.lane.b32.xlu0 %v3639, 48
    %v4790 = vpop.permute.xlu0 %4789
    %4791 = vrot.lane.b32.xlu0 %v3640, 48
    %v4792 = vpop.permute.xlu0 %4791
    %4793 = vrot.lane.b32.xlu0 %v3641, 48
    %v4794 = vpop.permute.xlu0 %4793
    %4795 = vrot.lane.b32.xlu0 %v3642, 48
    %v4796 = vpop.permute.xlu0 %4795
    %4797 = vrot.lane.b32.xlu0 %v3643, 48
    %v4798 = vpop.permute.xlu0 %4797
    %4799 = vrot.lane.b32.xlu0 %v3644, 48
    %v4800 = vpop.permute.xlu0 %4799
    %4801 = vrot.lane.b32.xlu0 %v3645, 48
    %v4802 = vpop.permute.xlu0 %4801
    %4803 = vrot.lane.b32.xlu0 %v3646, 48
    %v4804 = vpop.permute.xlu0 %4803
    %4805 = vrot.lane.b32.xlu0 %v3655, 48
    %v4806 = vpop.permute.xlu0 %4805
    %4807 = vrot.lane.b32.xlu0 %v3656, 48
    %v4808 = vpop.permute.xlu0 %4807
    %4809 = vrot.lane.b32.xlu0 %v3665, 48
    %v4810 = vpop.permute.xlu0 %4809
    %4811 = vrot.lane.b32.xlu0 %v3666, 48
    %v4812 = vpop.permute.xlu0 %4811
    %4813 = vrot.lane.b32.xlu0 %v3675, 48
    %v4814 = vpop.permute.xlu0 %4813
    %4815 = vrot.lane.b32.xlu0 %v3676, 48
    %v4816 = vpop.permute.xlu0 %4815
    %4835 = vrot.lane.b32.xlu0 %v3575, 64
    %v4836 = vpop.permute.xlu0 %4835
    %4837 = vrot.lane.b32.xlu0 %v3576, 64
    %v4838 = vpop.permute.xlu0 %4837
    %4839 = vrot.lane.b32.xlu0 %v3577, 64
    %v4840 = vpop.permute.xlu0 %4839
    %4841 = vrot.lane.b32.xlu0 %v3578, 64
    %v4842 = vpop.permute.xlu0 %4841
    %4843 = vrot.lane.b32.xlu0 %v3579, 64
    %v4844 = vpop.permute.xlu0 %4843
    %4845 = vrot.lane.b32.xlu0 %v3580, 64
    %v4846 = vpop.permute.xlu0 %4845
    %4847 = vrot.lane.b32.xlu0 %v3581, 64
    %v4848 = vpop.permute.xlu0 %4847
    %4849 = vrot.lane.b32.xlu0 %v3582, 64
    %v4850 = vpop.permute.xlu0 %4849
    %4851 = vrot.lane.b32.xlu0 %v3647, 64
    %v4852 = vpop.permute.xlu0 %4851
    %4853 = vrot.lane.b32.xlu0 %v3648, 64
    %v4854 = vpop.permute.xlu0 %4853
    %4855 = vrot.lane.b32.xlu0 %v3657, 64
    %v4856 = vpop.permute.xlu0 %4855
    %4857 = vrot.lane.b32.xlu0 %v3658, 64
    %v4858 = vpop.permute.xlu0 %4857
    %4859 = vrot.lane.b32.xlu0 %v3667, 64
    %v4860 = vpop.permute.xlu0 %4859
    %4861 = vrot.lane.b32.xlu0 %v3668, 64
    %v4862 = vpop.permute.xlu0 %4861
    %4863 = vrot.lane.b32.xlu0 %v3677, 64
    %v4864 = vpop.permute.xlu0 %4863
    %4865 = vrot.lane.b32.xlu0 %v3678, 64
    %v4866 = vpop.permute.xlu0 %4865
    %4887 = vrot.lane.b32.xlu0 %v3591, 80
    %v4888 = vpop.permute.xlu0 %4887
    %4889 = vrot.lane.b32.xlu0 %v3592, 80
    %v4890 = vpop.permute.xlu0 %4889
    %4891 = vrot.lane.b32.xlu0 %v3593, 80
    %v4892 = vpop.permute.xlu0 %4891
    %4893 = vrot.lane.b32.xlu0 %v3594, 80
    %v4894 = vpop.permute.xlu0 %4893
    %4895 = vrot.lane.b32.xlu0 %v3595, 80
    %v4896 = vpop.permute.xlu0 %4895
    %4897 = vrot.lane.b32.xlu0 %v3596, 80
    %v4898 = vpop.permute.xlu0 %4897
    %4899 = vrot.lane.b32.xlu0 %v3597, 80
    %v4900 = vpop.permute.xlu0 %4899
    %4901 = vrot.lane.b32.xlu0 %v3598, 80
    %v4902 = vpop.permute.xlu0 %4901
    %4903 = vrot.lane.b32.xlu0 %v3649, 80
    %v4904 = vpop.permute.xlu0 %4903
    %4905 = vrot.lane.b32.xlu0 %v3650, 80
    %v4906 = vpop.permute.xlu0 %4905
    %4907 = vrot.lane.b32.xlu0 %v3659, 80
    %v4908 = vpop.permute.xlu0 %4907
    %4909 = vrot.lane.b32.xlu0 %v3660, 80
    %v4910 = vpop.permute.xlu0 %4909
    %4911 = vrot.lane.b32.xlu0 %v3669, 80
    %v4912 = vpop.permute.xlu0 %4911
    %4913 = vrot.lane.b32.xlu0 %v3670, 80
    %v4914 = vpop.permute.xlu0 %4913
    %4915 = vrot.lane.b32.xlu0 %v3679, 80
    %v4916 = vpop.permute.xlu0 %4915
    %4917 = vrot.lane.b32.xlu0 %v3680, 80
    %v4918 = vpop.permute.xlu0 %4917
    %4937 = vrot.lane.b32.xlu0 %v3607, 96
    %v4938 = vpop.permute.xlu0 %4937
    %4939 = vrot.lane.b32.xlu0 %v3608, 96
    %v4940 = vpop.permute.xlu0 %4939
    %4941 = vrot.lane.b32.xlu0 %v3609, 96
    %v4942 = vpop.permute.xlu0 %4941
    %4943 = vrot.lane.b32.xlu0 %v3610, 96
    %v4944 = vpop.permute.xlu0 %4943
    %4945 = vrot.lane.b32.xlu0 %v3611, 96
    %v4946 = vpop.permute.xlu0 %4945
    %4947 = vrot.lane.b32.xlu0 %v3612, 96
    %v4948 = vpop.permute.xlu0 %4947
    %4949 = vrot.lane.b32.xlu0 %v3613, 96
    %v4950 = vpop.permute.xlu0 %4949
    %4951 = vrot.lane.b32.xlu0 %v3614, 96
    %v4952 = vpop.permute.xlu0 %4951
    %4953 = vrot.lane.b32.xlu0 %v3651, 96
    %v4954 = vpop.permute.xlu0 %4953
    %4955 = vrot.lane.b32.xlu0 %v3652, 96
    %v4956 = vpop.permute.xlu0 %4955
    %4957 = vrot.lane.b32.xlu0 %v3661, 96
    %v4958 = vpop.permute.xlu0 %4957
    %4959 = vrot.lane.b32.xlu0 %v3662, 96
    %v4960 = vpop.permute.xlu0 %4959
    %4961 = vrot.lane.b32.xlu0 %v3671, 96
    %v4962 = vpop.permute.xlu0 %4961
    %4963 = vrot.lane.b32.xlu0 %v3672, 96
    %v4964 = vpop.permute.xlu0 %4963
    %4965 = vrot.lane.b32.xlu0 %v3681, 96
    %v4966 = vpop.permute.xlu0 %4965
    %4967 = vrot.lane.b32.xlu0 %v3682, 96
    %v4968 = vpop.permute.xlu0 %4967
    %4987 = vrot.lane.b32.xlu0 %v3623, 112
    %v4988 = vpop.permute.xlu0 %4987
    %4989 = vrot.lane.b32.xlu0 %v3624, 112
    %v4990 = vpop.permute.xlu0 %4989
    %4991 = vrot.lane.b32.xlu0 %v3625, 112
    %v4992 = vpop.permute.xlu0 %4991
    %4993 = vrot.lane.b32.xlu0 %v3626, 112
    %v4994 = vpop.permute.xlu0 %4993
    %4995 = vrot.lane.b32.xlu0 %v3627, 112
    %v4996 = vpop.permute.xlu0 %4995
    %4997 = vrot.lane.b32.xlu0 %v3628, 112
    %v4998 = vpop.permute.xlu0 %4997
    %4999 = vrot.lane.b32.xlu0 %v3629, 112
    %v5000 = vpop.permute.xlu0 %4999
    %5001 = vrot.lane.b32.xlu0 %v3630, 112
    %v5002 = vpop.permute.xlu0 %5001
    %5003 = vrot.lane.b32.xlu0 %v3653, 112
    %v5004 = vpop.permute.xlu0 %5003
    %5005 = vrot.lane.b32.xlu0 %v3654, 112
    %v5006 = vpop.permute.xlu0 %5005
    %5007 = vrot.lane.b32.xlu0 %v3663, 112
    %v5008 = vpop.permute.xlu0 %5007
    %5009 = vrot.lane.b32.xlu0 %v3664, 112
    %v5010 = vpop.permute.xlu0 %5009
    %5011 = vrot.lane.b32.xlu0 %v3673, 112
    %v5012 = vpop.permute.xlu0 %5011
    %5013 = vrot.lane.b32.xlu0 %v3674, 112
    %v5014 = vpop.permute.xlu0 %5013
    %5015 = vrot.lane.b32.xlu0 %v3683, 112
    %v5016 = vpop.permute.xlu0 %5015
    %5017 = vrot.lane.b32.xlu0 %v3684, 112
    %v5018 = vpop.permute.xlu0 %5017
    %v5035 = vsel %vm706, %v3589, %v4686
    %v5036 = vsel %vm706, %v3590, %v4688
    %v5037 = vsel %vm706, %v3591, %v4690
    %v5038 = vsel %vm706, %v3592, %v4692
    %v5039 = vsel %vm706, %v3593, %v4694
    %v5040 = vsel %vm706, %v3594, %v4696
    %v5041 = vsel %vm706, %v3595, %v4698
    %v5042 = vsel %vm706, %v3596, %v4700
    %v5043 = vsel %vm706, %v3597, %v4702
    %v5044 = vsel %vm706, %v3598, %v4704
    %v5045 = vsel %vm706, %v3649, %v4706
    %v5046 = vsel %vm706, %v3650, %v4708
    %v5047 = vsel %vm706, %v3659, %v4710
    %v5048 = vsel %vm706, %v3660, %v4712
    %v5049 = vsel %vm706, %v3669, %v4714
    %v5050 = vsel %vm706, %v3670, %v4716
    %v5051 = vsel %vm2423, %v5035, %v4736
    %v5052 = vsel %vm2423, %v5036, %v4738
    %v5053 = vsel %vm2423, %v5037, %v4740
    %v5054 = vsel %vm2423, %v5038, %v4742
    %v5055 = vsel %vm2423, %v5039, %v4744
    %v5056 = vsel %vm2423, %v5040, %v4746
    %v5057 = vsel %vm2423, %v5041, %v4748
    %v5058 = vsel %vm2423, %v5042, %v4750
    %v5059 = vsel %vm2423, %v5043, %v4752
    %v5060 = vsel %vm2423, %v5044, %v4754
    %v5061 = vsel %vm2423, %v5045, %v4756
    %v5062 = vsel %vm2423, %v5046, %v4758
    %v5063 = vsel %vm2423, %v5047, %v4760
    %v5064 = vsel %vm2423, %v5048, %v4762
    %v5065 = vsel %vm2423, %v5049, %v4764
    %v5066 = vsel %vm2423, %v5050, %v4766
    %v5067 = vsel %vm2440, %v5051, %v4786
    %v5068 = vsel %vm2440, %v5052, %v4788
    %v5069 = vsel %vm2440, %v5053, %v4790
    %v5070 = vsel %vm2440, %v5054, %v4792
    %v5071 = vsel %vm2440, %v5055, %v4794
    %v5072 = vsel %vm2440, %v5056, %v4796
    %v5073 = vsel %vm2440, %v5057, %v4798
    %v5074 = vsel %vm2440, %v5058, %v4800
    %v5075 = vsel %vm2440, %v5059, %v4802
    %v5076 = vsel %vm2440, %v5060, %v4804
    %v5077 = vsel %vm2440, %v5061, %v4806
    %v5078 = vsel %vm2440, %v5062, %v4808
    %v5079 = vsel %vm2440, %v5063, %v4810
    %v5080 = vsel %vm2440, %v5064, %v4812
    %v5081 = vsel %vm2440, %v5065, %v4814
    %v5082 = vsel %vm2440, %v5066, %v4816
    %v5083 = vsel %vm2457, %v5067, %v4836
    %v5084 = vsel %vm2457, %v5068, %v4838
    %v5085 = vsel %vm2457, %v5069, %v4840
    %v5086 = vsel %vm2457, %v5070, %v4842
    %v5087 = vsel %vm2457, %v5071, %v4844
    %v5088 = vsel %vm2457, %v5072, %v4846
    %v5089 = vsel %vm2457, %v5073, %v4848
    %v5090 = vsel %vm2457, %v5074, %v4850
    %v5091 = vsel %vm2457, %v5075, %v4852
    %v5092 = vsel %vm2457, %v5076, %v4854
    %v5093 = vsel %vm2457, %v5077, %v4856
    %v5094 = vsel %vm2457, %v5078, %v4858
    %v5095 = vsel %vm2457, %v5079, %v4860
    %v5096 = vsel %vm2457, %v5080, %v4862
    %v5097 = vsel %vm2457, %v5081, %v4864
    %v5098 = vsel %vm2457, %v5082, %v4866
    %v5099 = vsel %vm2474, %v5083, %v4888
    %v5100 = vsel %vm2474, %v5084, %v4890
    %v5101 = vsel %vm2474, %v5085, %v4892
    %v5102 = vsel %vm2474, %v5086, %v4894
    %v5103 = vsel %vm2474, %v5087, %v4896
    %v5104 = vsel %vm2474, %v5088, %v4898
    %v5105 = vsel %vm2474, %v5089, %v4900
    %v5106 = vsel %vm2474, %v5090, %v4902
    %v5107 = vsel %vm2474, %v5091, %v4904
    %v5108 = vsel %vm2474, %v5092, %v4906
    %v5109 = vsel %vm2474, %v5093, %v4908
    %v5110 = vsel %vm2474, %v5094, %v4910
    %v5111 = vsel %vm2474, %v5095, %v4912
    %v5112 = vsel %vm2474, %v5096, %v4914
    %v5113 = vsel %vm2474, %v5097, %v4916
    %v5114 = vsel %vm2474, %v5098, %v4918
    %v5115 = vsel %vm2491, %v5099, %v4938
    %v5116 = vsel %vm2491, %v5100, %v4940
    %v5117 = vsel %vm2491, %v5101, %v4942
    %v5118 = vsel %vm2491, %v5102, %v4944
    %v5119 = vsel %vm2491, %v5103, %v4946
    %v5120 = vsel %vm2491, %v5104, %v4948
    %v5121 = vsel %vm2491, %v5105, %v4950
    %v5122 = vsel %vm2491, %v5106, %v4952
    %v5123 = vsel %vm2491, %v5107, %v4954
    %v5124 = vsel %vm2491, %v5108, %v4956
    %v5125 = vsel %vm2491, %v5109, %v4958
    %v5126 = vsel %vm2491, %v5110, %v4960
    %v5127 = vsel %vm2491, %v5111, %v4962
    %v5128 = vsel %vm2491, %v5112, %v4964
    %v5129 = vsel %vm2491, %v5113, %v4966
    %v5130 = vsel %vm2491, %v5114, %v4968
    %v5131 = vsel %vm2508, %v5115, %v4988
    %v5132 = vsel %vm2508, %v5116, %v4990
    %v5133 = vsel %vm2508, %v5117, %v4992
    %v5134 = vsel %vm2508, %v5118, %v4994
    %v5135 = vsel %vm2508, %v5119, %v4996
    %v5136 = vsel %vm2508, %v5120, %v4998
    %v5137 = vsel %vm2508, %v5121, %v5000
    %v5138 = vsel %vm2508, %v5122, %v5002
    %v5139 = vsel %vm2508, %v5123, %v5004
    %v5140 = vsel %vm2508, %v5124, %v5006
    %v5141 = vsel %vm2508, %v5125, %v5008
    %v5142 = vsel %vm2508, %v5126, %v5010
    %v5143 = vsel %vm2508, %v5127, %v5012
    %v5144 = vsel %vm2508, %v5128, %v5014
    %v5145 = vsel %vm2508, %v5129, %v5016
    %v5146 = vsel %vm2508, %v5130, %v5018
    %v5147 = vpack.c.bf16 %v4556, %v4555
    %v5148 = vpack.c.bf16 %v4668, %v4667
    %v5149 = vpack.c.bf16 %v5132, %v5131
    %v5150 = vpack.c.bf16 %v3640, %v3639
    %v5151 = vpack.c.bf16 %v4558, %v4557
    %v5152 = vpack.c.bf16 %v4670, %v4669
    %v5153 = vpack.c.bf16 %v5134, %v5133
    %v5154 = vpack.c.bf16 %v3642, %v3641
    %v5155 = vpack.c.bf16 %v4560, %v4559
    %v5156 = vpack.c.bf16 %v4672, %v4671
    %v5157 = vpack.c.bf16 %v5136, %v5135
    %v5158 = vpack.c.bf16 %v3644, %v3643
    %v5159 = vpack.c.bf16 %v4562, %v4561
    %v5160 = vpack.c.bf16 %v4674, %v4673
    %v5161 = vpack.c.bf16 %v5138, %v5137
    %v5162 = vpack.c.bf16 %v3646, %v3645
    %v5163 = vpack.c.bf16 %v4564, %v4563
    %v5164 = vpack.c.bf16 %v4676, %v4675
    %v5165 = vpack.c.bf16 %v5140, %v5139
    %v5166 = vpack.c.bf16 %v3656, %v3655
    %v5167 = vpack.c.bf16 %v4566, %v4565
    %v5168 = vpack.c.bf16 %v4678, %v4677
    %v5169 = vpack.c.bf16 %v5142, %v5141
    %v5170 = vpack.c.bf16 %v3666, %v3665
    %v5171 = vpack.c.bf16 %v4568, %v4567
    %v5172 = vpack.c.bf16 %v4680, %v4679
    %v5173 = vpack.c.bf16 %v5144, %v5143
    %v5174 = vpack.c.bf16 %v3676, %v3675
    %v5175 = vpack.c.bf16 %v4570, %v4569
    %v5176 = vpack.c.bf16 %v4682, %v4681
    %v5177 = vpack.c.bf16 %v5146, %v5145
    %v5178 = vpack.c.bf16 %v3686, %v3685
    %v5179 = vld [vmem:[%s4] sm:$0xf]
    %v5180 = vld [vmem:[%s4 + $0x4] sm:$0xf]
    %v5181 = vld [vmem:[%s4 + $0x8] sm:$0xf]
    %v5182 = vld [vmem:[%s4 + $0xc] sm:$0xf]
    %v5183 = vld [vmem:[%s4 + $0x10] sm:$0xf]
    %v5184 = vld [vmem:[%s4 + $0x14] sm:$0xf]
    %v5185 = vld [vmem:[%s4 + $0x18] sm:$0xf]
    %v5186 = vld [vmem:[%s4 + $0x1c] sm:$0xf]
    %v5187 = vld [vmem:[%s4 + $0x20] sm:$0xf]
    %v5188 = vld [vmem:[%s4 + $0x24] sm:$0xf]
    %v5189 = vld [vmem:[%s4 + $0x28] sm:$0xf]
    %v5190 = vld [vmem:[%s4 + $0x2c] sm:$0xf]
    %v5191 = vld [vmem:[%s4 + $0x30] sm:$0xf]
    %v5192 = vld [vmem:[%s4 + $0x34] sm:$0xf]
    %v5193 = vld [vmem:[%s4 + $0x38] sm:$0xf]
    %v5194 = vld [vmem:[%s4 + $0x3c] sm:$0xf]
    %v5195 = vld [vmem:[%s4 + $0x40] sm:$0xf]
    %v5196 = vld [vmem:[%s4 + $0x44] sm:$0xf]
    %v5197 = vld [vmem:[%s4 + $0x48] sm:$0xf]
    %v5198 = vld [vmem:[%s4 + $0x4c] sm:$0xf]
    %v5199 = vld [vmem:[%s4 + $0x50] sm:$0xf]
    %v5200 = vld [vmem:[%s4 + $0x54] sm:$0xf]
    %v5201 = vld [vmem:[%s4 + $0x58] sm:$0xf]
    %v5202 = vld [vmem:[%s4 + $0x5c] sm:$0xf]
    %v5203 = vld [vmem:[%s4 + $0x60] sm:$0xf]
    %v5204 = vld [vmem:[%s4 + $0x64] sm:$0xf]
    %v5205 = vld [vmem:[%s4 + $0x68] sm:$0xf]
    %v5206 = vld [vmem:[%s4 + $0x6c] sm:$0xf]
    %v5207 = vld [vmem:[%s4 + $0x70] sm:$0xf]
    %v5208 = vld [vmem:[%s4 + $0x74] sm:$0xf]
    %v5209 = vld [vmem:[%s4 + $0x78] sm:$0xf]
    %v5210 = vld [vmem:[%s4 + $0x7c] sm:$0xf]
    %v5211 = vld [vmem:[%s4 + $0x80] sm:$0xf]
    %v5212 = vld [vmem:[%s4 + $0x84] sm:$0xf]
    %v5213 = vld [vmem:[%s4 + $0x88] sm:$0xf]
    %v5214 = vld [vmem:[%s4 + $0x8c] sm:$0xf]
    %v5215 = vld [vmem:[%s4 + $0x90] sm:$0xf]
    %v5216 = vld [vmem:[%s4 + $0x94] sm:$0xf]
    %v5217 = vld [vmem:[%s4 + $0x98] sm:$0xf]
    %v5218 = vld [vmem:[%s4 + $0x9c] sm:$0xf]
    %v5219 = vld [vmem:[%s4 + $0xa0] sm:$0xf]
    %v5220 = vld [vmem:[%s4 + $0xa4] sm:$0xf]
    %v5221 = vld [vmem:[%s4 + $0xa8] sm:$0xf]
    %v5222 = vld [vmem:[%s4 + $0xac] sm:$0xf]
    %v5223 = vld [vmem:[%s4 + $0xb0] sm:$0xf]
    %v5224 = vld [vmem:[%s4 + $0xb4] sm:$0xf]
    %v5225 = vld [vmem:[%s4 + $0xb8] sm:$0xf]
    %v5226 = vld [vmem:[%s4 + $0xbc] sm:$0xf]
    %v5227 = vld [vmem:[%s4 + $0xc0] sm:$0xf]
    %v5228 = vld [vmem:[%s4 + $0xc4] sm:$0xf]
    %v5279 = vunpack.c.l.b16 %v5179
    %v5280 = vunpack.c.l.b16 %v5180
    %v5281 = vunpack.c.l.b16 %v5181
    %v5282 = vunpack.c.l.b16 %v5182
    %v5283 = vunpack.c.l.b16 %v5183
    %v5284 = vunpack.c.l.b16 %v5184
    %v5285 = vunpack.c.l.b16 %v5185
    %v5286 = vunpack.c.l.b16 %v5186
    %v5287 = vunpack.c.l.b16 %v5187
    %v5288 = vunpack.c.l.b16 %v5188
    %v5289 = vunpack.c.l.b16 %v5189
    %v5290 = vunpack.c.l.b16 %v5190
    %v5291 = vunpack.c.l.b16 %v5191
    %v5292 = vunpack.c.l.b16 %v5192
    %v5293 = vunpack.c.l.b16 %v5193
    %v5294 = vunpack.c.l.b16 %v5194
    %v5295 = vunpack.c.l.b16 %v5195
    %v5296 = vunpack.c.l.b16 %v5196
    %v5297 = vunpack.c.l.b16 %v5197
    %v5298 = vunpack.c.l.b16 %v5198
    %v5299 = vunpack.c.l.b16 %v5199
    %v5300 = vunpack.c.l.b16 %v5200
    %v5301 = vunpack.c.l.b16 %v5201
    %v5302 = vunpack.c.l.b16 %v5202
    %v5303 = vunpack.c.l.b16 %v5203
    %v5304 = vunpack.c.l.b16 %v5204
    %v5305 = vunpack.c.l.b16 %v5205
    %v5306 = vunpack.c.l.b16 %v5206
    %v5307 = vunpack.c.l.b16 %v5207
    %v5308 = vunpack.c.l.b16 %v5208
    %v5309 = vunpack.c.l.b16 %v5209
    %v5310 = vunpack.c.l.b16 %v5210
    %v5311 = vunpack.c.l.b16 %v5211
    %v5312 = vunpack.c.l.b16 %v5212
    %v5313 = vunpack.c.l.b16 %v5213
    %v5314 = vunpack.c.l.b16 %v5214
    %v5315 = vunpack.c.l.b16 %v5215
    %v5316 = vunpack.c.l.b16 %v5216
    %v5317 = vunpack.c.l.b16 %v5217
    %v5318 = vunpack.c.l.b16 %v5218
    %v5319 = vunpack.c.l.b16 %v5219
    %v5320 = vunpack.c.l.b16 %v5220
    %v5321 = vunpack.c.l.b16 %v5221
    %v5322 = vunpack.c.l.b16 %v5222
    %v5323 = vunpack.c.l.b16 %v5223
    %v5324 = vunpack.c.l.b16 %v5224
    %v5325 = vunpack.c.l.b16 %v5225
    %v5326 = vunpack.c.l.b16 %v5226
    %v5327 = vunpack.c.l.b16 %v5227
    %v5328 = vunpack.c.l.b16 %v5228
    %v5329 = vpack.c.b16 %v5280, %v5279
    %v5330 = vpack.c.b16 %v5282, %v5281
    %v5331 = vpack.c.b16 %v5284, %v5283
    %v5332 = vpack.c.b16 %v5286, %v5285
    %v5333 = vpack.c.b16 %v5288, %v5287
    %v5334 = vpack.c.b16 %v5290, %v5289
    %v5335 = vpack.c.b16 %v5292, %v5291
    %v5336 = vpack.c.b16 %v5294, %v5293
    %v5337 = vpack.c.b16 %v5296, %v5295
    %v5338 = vpack.c.b16 %v5298, %v5297
    %v5339 = vpack.c.b16 %v5300, %v5299
    %v5340 = vpack.c.b16 %v5302, %v5301
    %v5341 = vpack.c.b16 %v5304, %v5303
    %v5342 = vpack.c.b16 %v5306, %v5305
    %v5343 = vpack.c.b16 %v5308, %v5307
    %v5344 = vpack.c.b16 %v5310, %v5309
    %v5345 = vpack.c.b16 %v5312, %v5311
    %v5346 = vpack.c.b16 %v5314, %v5313
    %v5347 = vpack.c.b16 %v5316, %v5315
    %v5348 = vpack.c.b16 %v5318, %v5317
    %v5349 = vpack.c.b16 %v5320, %v5319
    %v5350 = vpack.c.b16 %v5322, %v5321
    %v5351 = vpack.c.b16 %v5324, %v5323
    %v5352 = vpack.c.b16 %v5326, %v5325
    %v5353 = vpack.c.b16 %v5328, %v5327
    %v5380 = vsel %vm706, %v5150, 0
    %v5383 = vsel %vm706, %v5154, 0
    %v5386 = vsel %vm706, %v5158, 0
    %v5389 = vsel %vm706, %v5162, 0
    %v5392 = vsel %vm706, %v5166, 0
    %v5395 = vsel %vm706, %v5170, 0
    %v5398 = vsel %vm706, %v5174, 0
    %v5401 = vsel %vm706, %v5178, 0
    %5403 = vmatprep.subr.bf16.mxu0 0
    %5404 = vmatpush1.bf16.msra.mxu0 %v5329
    %5405 = vmatprep.subr.bf16.mxu0 0
    %5406 = vmatpush1.bf16.msra.mxu0 %v5330
    %5407 = vmatprep.subr.bf16.mxu0 0
    %5408 = vmatpush1.bf16.msra.mxu0 %v5331
    %5409 = vmatprep.subr.bf16.mxu0 0
    %5410 = vmatpush1.bf16.msra.mxu0 %v5332
    %5411 = vmatprep.subr.bf16.mxu0 0
    %5412 = vmatpush1.bf16.msra.mxu0 %v5333
    %5413 = vmatprep.subr.bf16.mxu0 0
    %5414 = vmatpush1.bf16.msra.mxu0 %v5334
    %5415 = vmatprep.subr.bf16.mxu0 0
    %5416 = vmatpush1.bf16.msra.mxu0 %v5335
    %5417 = vmatprep.subr.bf16.mxu0 0
    %5418 = vmatpush1.bf16.msra.mxu0 %v5336
    %5419 = vmatprep.subr.bf16.mxu0 0
    %5420 = vmatpush1.bf16.msra.mxu0 %v5337
    %5421 = vmatprep.subr.bf16.mxu0 0
    %5422 = vmatpush1.bf16.msra.mxu0 %v5338
    %5423 = vmatprep.subr.bf16.mxu0 0
    %5424 = vmatpush1.bf16.msra.mxu0 %v5339
    %5425 = vmatprep.subr.bf16.mxu0 0
    %5426 = vmatpush1.bf16.msra.mxu0 %v5340
    %5427 = vmatprep.subr.bf16.mxu0 0
    %5428 = vmatpush1.bf16.msra.mxu0 %v5341
    %5429 = vmatprep.subr.bf16.mxu0 0
    %5430 = vmatpush1.bf16.msra.mxu0 %v5342
    %5431 = vmatprep.subr.bf16.mxu0 0
    %5432 = vmatpush1.bf16.msra.mxu0 %v5343
    %5433 = vmatprep.subr.bf16.mxu0 0
    %5434 = vmatpush1.bf16.msra.mxu0 %v5344
    %5435 = vmatprep.mubr.bf16.mxu0 %v5148
    %5436 = vmatmul.mubr.bf16.gmra.mrb[0].mxu0 %v5147
    %v5437 = vpop.f32.mrb[0].mxu0
    %v5438 = vadd.f32 0.0, %v5437
    %v5439 = vpop.f32.mrb[0].mxu0
    %v5440 = vpop.f32.mrb[0].mxu0
    %v5441 = vadd.f32 0.0, %v5440
    %v5442 = vpop.f32.mrb[0].mxu0
    %5443 = vmatprep.mubr.bf16.mxu0 %v5152
    %5444 = vmatmul.mubr.bf16.gmra.mrb[0].mxu0 %v5151
    %v5445 = vpop.f32.mrb[0].mxu0
    %v5446 = vadd.f32 0.0, %v5445
    %v5447 = vpop.f32.mrb[0].mxu0
    %v5448 = vpop.f32.mrb[0].mxu0
    %v5449 = vadd.f32 0.0, %v5448
    %v5450 = vpop.f32.mrb[0].mxu0
    %5451 = vmatprep.mubr.bf16.mxu0 %v5156
    %5452 = vmatmul.mubr.bf16.gmra.mrb[0].mxu0 %v5155
    %v5453 = vpop.f32.mrb[0].mxu0
    %v5454 = vadd.f32 0.0, %v5453
    %v5455 = vpop.f32.mrb[0].mxu0
    %v5456 = vpop.f32.mrb[0].mxu0
    %v5457 = vadd.f32 0.0, %v5456
    %v5458 = vpop.f32.mrb[0].mxu0
    %5459 = vmatprep.mubr.bf16.mxu0 %v5160
    %5460 = vmatmul.mubr.bf16.gmra.mrb[0].mxu0 %v5159
    %v5461 = vpop.f32.mrb[0].mxu0
    %v5462 = vadd.f32 0.0, %v5461
    %v5463 = vpop.f32.mrb[0].mxu0
    %v5464 = vpop.f32.mrb[0].mxu0
    %v5465 = vadd.f32 0.0, %v5464
    %v5466 = vpop.f32.mrb[0].mxu0
    %5467 = vmatprep.mubr.bf16.mxu0 %v5164
    %5468 = vmatmul.mubr.bf16.gmra.mrb[0].mxu0 %v5163
    %v5469 = vpop.f32.mrb[0].mxu0
    %v5470 = vadd.f32 0.0, %v5469
    %v5471 = vpop.f32.mrb[0].mxu0
    %v5472 = vpop.f32.mrb[0].mxu0
    %v5473 = vadd.f32 0.0, %v5472
    %v5474 = vpop.f32.mrb[0].mxu0
    %5475 = vmatprep.mubr.bf16.mxu0 %v5168
    %5476 = vmatmul.mubr.bf16.gmra.mrb[0].mxu0 %v5167
    %v5477 = vpop.f32.mrb[0].mxu0
    %v5478 = vadd.f32 0.0, %v5477
    %v5479 = vpop.f32.mrb[0].mxu0
    %v5480 = vpop.f32.mrb[0].mxu0
    %v5481 = vadd.f32 0.0, %v5480
    %v5482 = vpop.f32.mrb[0].mxu0
    %5483 = vmatprep.mubr.bf16.mxu0 %v5172
    %5484 = vmatmul.mubr.bf16.gmra.mrb[0].mxu0 %v5171
    %v5485 = vpop.f32.mrb[0].mxu0
    %v5486 = vadd.f32 0.0, %v5485
    %v5487 = vpop.f32.mrb[0].mxu0
    %v5488 = vpop.f32.mrb[0].mxu0
    %v5489 = vadd.f32 0.0, %v5488
    %v5490 = vpop.f32.mrb[0].mxu0
    %5491 = vmatprep.mubr.bf16.mxu0 %v5176
    %5492 = vmatmul.mubr.bf16.gmra.mrb[0].mxu0 %v5175
    %v5493 = vpop.f32.mrb[0].mxu0
    %v5494 = vadd.f32 0.0, %v5493
    %v5495 = vpop.f32.mrb[0].mxu0
    %v5496 = vpop.f32.mrb[0].mxu0
    %v5497 = vadd.f32 0.0, %v5496
    %v5498 = vpop.f32.mrb[0].mxu0
    %5499 = vdwg.mxu0
    %5500 = vmatprep.subr.bf16.mxu0 0
    %5501 = vmatpush1.bf16.msra.mxu0 %v5345
    %5502 = vmatprep.subr.bf16.mxu0 0
    %5503 = vmatpush1.bf16.msra.mxu0 %v5346
    %5504 = vmatprep.subr.bf16.mxu0 0
    %5505 = vmatpush1.bf16.msra.mxu0 %v5347
    %5506 = vmatprep.subr.bf16.mxu0 0
    %5507 = vmatpush1.bf16.msra.mxu0 %v5348
    %5508 = vmatprep.subr.bf16.mxu0 0
    %5509 = vmatpush1.bf16.msra.mxu0 %v5349
    %5510 = vmatprep.subr.bf16.mxu0 0
    %5511 = vmatpush1.bf16.msra.mxu0 %v5350
    %5512 = vmatprep.subr.bf16.mxu0 0
    %5513 = vmatpush1.bf16.msra.mxu0 %v5351
    %5514 = vmatprep.subr.bf16.mxu0 0
    %5515 = vmatpush1.bf16.msra.mxu0 %v5352
    %5516 = vmatprep.subr.bf16.mxu0 0
    %5517 = vmatpush1.bf16.msra.mxu0 %v5353
    %5518 = vmatprep.subr.bf16.mxu0 0
    %5519 = vmatpush1.bf16.msra.mxu0 0
    %5520 = vmatprep.subr.bf16.mxu0 0
    %5521 = vmatpush1.bf16.msra.mxu0 0
    %5522 = vmatprep.subr.bf16.mxu0 0
    %5523 = vmatpush1.bf16.msra.mxu0 0
    %5524 = vmatprep.subr.bf16.mxu0 0
    %5525 = vmatpush1.bf16.msra.mxu0 0
    %5526 = vmatprep.subr.bf16.mxu0 0
    %5527 = vmatpush1.bf16.msra.mxu0 0
    %5528 = vmatprep.subr.bf16.mxu0 0
    %5529 = vmatpush1.bf16.msra.mxu0 0
    %5530 = vmatprep.subr.bf16.mxu0 0
    %5531 = vmatpush1.bf16.msra.mxu0 0
    %5532 = vmatprep.mubr.bf16.mxu0 %v5380
    %5533 = vmatmul.mubr.bf16.gmra.mrb[0].mxu0 %v5149
    %v5534 = vpop.f32.mrb[0].mxu0
    %v5535 = vadd.f32 %v5438, %v5534
    %v5536 = vpop.f32.mrb[0].mxu0
    %v5537 = vpop.f32.mrb[0].mxu0
    %v5538 = vadd.f32 %v5441, %v5537
    %v5539 = vpop.f32.mrb[0].mxu0
    %5540 = vmatprep.mubr.bf16.mxu0 %v5383
    %5541 = vmatmul.mubr.bf16.gmra.mrb[0].mxu0 %v5153
    %v5542 = vpop.f32.mrb[0].mxu0
    %v5543 = vadd.f32 %v5446, %v5542
    %v5544 = vpop.f32.mrb[0].mxu0
    %v5545 = vpop.f32.mrb[0].mxu0
    %v5546 = vadd.f32 %v5449, %v5545
    %v5547 = vpop.f32.mrb[0].mxu0
    %5548 = vmatprep.mubr.bf16.mxu0 %v5386
    %5549 = vmatmul.mubr.bf16.gmra.mrb[0].mxu0 %v5157
    %v5550 = vpop.f32.mrb[0].mxu0
    %v5551 = vadd.f32 %v5454, %v5550
    %v5552 = vpop.f32.mrb[0].mxu0
    %v5553 = vpop.f32.mrb[0].mxu0
    %v5554 = vadd.f32 %v5457, %v5553
    %v5555 = vpop.f32.mrb[0].mxu0
    %5556 = vmatprep.mubr.bf16.mxu0 %v5389
    %5557 = vmatmul.mubr.bf16.gmra.mrb[0].mxu0 %v5161
    %v5558 = vpop.f32.mrb[0].mxu0
    %v5559 = vadd.f32 %v5462, %v5558
    %v5560 = vpop.f32.mrb[0].mxu0
    %v5561 = vpop.f32.mrb[0].mxu0
    %v5562 = vadd.f32 %v5465, %v5561
    %v5563 = vpop.f32.mrb[0].mxu0
    %5564 = vmatprep.mubr.bf16.mxu0 %v5392
    %5565 = vmatmul.mubr.bf16.gmra.mrb[0].mxu0 %v5165
    %v5566 = vpop.f32.mrb[0].mxu0
    %v5567 = vadd.f32 %v5470, %v5566
    %v5568 = vpop.f32.mrb[0].mxu0
    %v5569 = vpop.f32.mrb[0].mxu0
    %v5570 = vadd.f32 %v5473, %v5569
    %v5571 = vpop.f32.mrb[0].mxu0
    %5572 = vmatprep.mubr.bf16.mxu0 %v5395
    %5573 = vmatmul.mubr.bf16.gmra.mrb[0].mxu0 %v5169
    %v5574 = vpop.f32.mrb[0].mxu0
    %v5575 = vadd.f32 %v5478, %v5574
    %v5576 = vpop.f32.mrb[0].mxu0
    %v5577 = vpop.f32.mrb[0].mxu0
    %v5578 = vadd.f32 %v5481, %v5577
    %v5579 = vpop.f32.mrb[0].mxu0
    %5580 = vmatprep.mubr.bf16.mxu0 %v5398
    %5581 = vmatmul.mubr.bf16.gmra.mrb[0].mxu0 %v5173
    %v5582 = vpop.f32.mrb[0].mxu0
    %v5583 = vadd.f32 %v5486, %v5582
    %v5584 = vpop.f32.mrb[0].mxu0
    %v5585 = vpop.f32.mrb[0].mxu0
    %v5586 = vadd.f32 %v5489, %v5585
    %v5587 = vpop.f32.mrb[0].mxu0
    %5588 = vmatprep.mubr.bf16.mxu0 %v5401
    %5589 = vmatmul.mubr.bf16.gmra.mrb[0].mxu0 %v5177
    %v5590 = vpop.f32.mrb[0].mxu0
    %v5591 = vadd.f32 %v5494, %v5590
    %v5592 = vpop.f32.mrb[0].mxu0
    %v5593 = vpop.f32.mrb[0].mxu0
    %v5594 = vadd.f32 %v5497, %v5593
    %v5595 = vpop.f32.mrb[0].mxu0
    %5596 = vdwg.mxu0
    %5597 = vst.msk [vmem:[#allocation3 + $0x80] sm:$0xff] %vm2423, %v5535
    %5598 = vst.msk [vmem:[#allocation3 + $0x88] sm:$0xff] %vm2423, %v5538
    %5599 = vst.msk [vmem:[#allocation3 + $0x90] sm:$0xff] %vm2423, %v5543
    %5600 = vst.msk [vmem:[#allocation3 + $0x98] sm:$0xff] %vm2423, %v5546
    %5601 = vst.msk [vmem:[#allocation3 + $0xa0] sm:$0xff] %vm2423, %v5551
    %5602 = vst.msk [vmem:[#allocation3 + $0xa8] sm:$0xff] %vm2423, %v5554
    %5603 = vst.msk [vmem:[#allocation3 + $0xb0] sm:$0xff] %vm2423, %v5559
    %5604 = vst.msk [vmem:[#allocation3 + $0xb8] sm:$0xff] %vm2423, %v5562
    %5605 = vst.msk [vmem:[#allocation3 + $0xc0] sm:$0xff] %vm2423, %v5567
    %5606 = vst.msk [vmem:[#allocation3 + $0xc8] sm:$0xff] %vm2423, %v5570
    %5607 = vst.msk [vmem:[#allocation3 + $0xd0] sm:$0xff] %vm2423, %v5575
    %5608 = vst.msk [vmem:[#allocation3 + $0xd8] sm:$0xff] %vm2423, %v5578
    %5609 = vst.msk [vmem:[#allocation3 + $0xe0] sm:$0xff] %vm2423, %v5583
    %5610 = vst.msk [vmem:[#allocation3 + $0xe8] sm:$0xff] %vm2423, %v5586
    %5611 = vst.msk [vmem:[#allocation3 + $0xf0] sm:$0xff] %vm2423, %v5591
    %5612 = vst.msk [vmem:[#allocation3 + $0xf8] sm:$0xff] %vm2423, %v5594
    %v5613 = vld [vmem:[#allocation2 + $0x100] sm:$0xff]
    %v5614 = vld [vmem:[#allocation2 + $0x108] sm:$0xff]
    %v5615 = vld [vmem:[#allocation2 + $0x110] sm:$0xff]
    %v5616 = vld [vmem:[#allocation2 + $0x118] sm:$0xff]
    %v5617 = vld [vmem:[#allocation2 + $0x120] sm:$0xff]
    %v5618 = vld [vmem:[#allocation2 + $0x128] sm:$0xff]
    %v5619 = vld [vmem:[#allocation2 + $0x130] sm:$0xff]
    %v5620 = vld [vmem:[#allocation2 + $0x138] sm:$0xff]
    %v5621 = vld [vmem:[#allocation2 + $0x140] sm:$0xff]
    %v5622 = vld [vmem:[#allocation2 + $0x148] sm:$0xff]
    %v5623 = vld [vmem:[#allocation2 + $0x150] sm:$0xff]
    %v5624 = vld [vmem:[#allocation2 + $0x158] sm:$0xff]
    %v5625 = vld [vmem:[#allocation2 + $0x160] sm:$0xff]
    %v5626 = vld [vmem:[#allocation2 + $0x168] sm:$0xff]
    %v5627 = vld [vmem:[#allocation2 + $0x170] sm:$0xff]
    %v5628 = vld [vmem:[#allocation2 + $0x178] sm:$0xff]
    %v5629 = vld [vmem:[#allocation2 + $0x101] sm:$0xff]
    %v5630 = vld [vmem:[#allocation2 + $0x109] sm:$0xff]
    %v5631 = vld [vmem:[#allocation2 + $0x111] sm:$0xff]
    %v5632 = vld [vmem:[#allocation2 + $0x119] sm:$0xff]
    %v5633 = vld [vmem:[#allocation2 + $0x121] sm:$0xff]
    %v5634 = vld [vmem:[#allocation2 + $0x129] sm:$0xff]
    %v5635 = vld [vmem:[#allocation2 + $0x131] sm:$0xff]
    %v5636 = vld [vmem:[#allocation2 + $0x139] sm:$0xff]
    %v5637 = vld [vmem:[#allocation2 + $0x141] sm:$0xff]
    %v5638 = vld [vmem:[#allocation2 + $0x149] sm:$0xff]
    %v5639 = vld [vmem:[#allocation2 + $0x151] sm:$0xff]
    %v5640 = vld [vmem:[#allocation2 + $0x159] sm:$0xff]
    %v5641 = vld [vmem:[#allocation2 + $0x161] sm:$0xff]
    %v5642 = vld [vmem:[#allocation2 + $0x169] sm:$0xff]
    %v5643 = vld [vmem:[#allocation2 + $0x171] sm:$0xff]
    %v5644 = vld [vmem:[#allocation2 + $0x179] sm:$0xff]
    %v5645 = vld [vmem:[#allocation2 + $0x102] sm:$0xff]
    %v5646 = vld [vmem:[#allocation2 + $0x10a] sm:$0xff]
    %v5647 = vld [vmem:[#allocation2 + $0x112] sm:$0xff]
    %v5648 = vld [vmem:[#allocation2 + $0x11a] sm:$0xff]
    %v5649 = vld [vmem:[#allocation2 + $0x122] sm:$0xff]
    %v5650 = vld [vmem:[#allocation2 + $0x12a] sm:$0xff]
    %v5651 = vld [vmem:[#allocation2 + $0x132] sm:$0xff]
    %v5652 = vld [vmem:[#allocation2 + $0x13a] sm:$0xff]
    %v5653 = vld [vmem:[#allocation2 + $0x142] sm:$0xff]
    %v5654 = vld [vmem:[#allocation2 + $0x14a] sm:$0xff]
    %v5655 = vld [vmem:[#allocation2 + $0x152] sm:$0xff]
    %v5656 = vld [vmem:[#allocation2 + $0x15a] sm:$0xff]
    %v5657 = vld [vmem:[#allocation2 + $0x162] sm:$0xff]
    %v5658 = vld [vmem:[#allocation2 + $0x16a] sm:$0xff]
    %v5659 = vld [vmem:[#allocation2 + $0x172] sm:$0xff]
    %v5660 = vld [vmem:[#allocation2 + $0x17a] sm:$0xff]
    %v5661 = vld [vmem:[#allocation2 + $0x103] sm:$0xff]
    %v5662 = vld [vmem:[#allocation2 + $0x10b] sm:$0xff]
    %v5663 = vld [vmem:[#allocation2 + $0x113] sm:$0xff]
    %v5664 = vld [vmem:[#allocation2 + $0x11b] sm:$0xff]
    %v5665 = vld [vmem:[#allocation2 + $0x123] sm:$0xff]
    %v5666 = vld [vmem:[#allocation2 + $0x12b] sm:$0xff]
    %v5667 = vld [vmem:[#allocation2 + $0x133] sm:$0xff]
    %v5668 = vld [vmem:[#allocation2 + $0x13b] sm:$0xff]
    %v5669 = vld [vmem:[#allocation2 + $0x143] sm:$0xff]
    %v5670 = vld [vmem:[#allocation2 + $0x14b] sm:$0xff]
    %v5671 = vld [vmem:[#allocation2 + $0x153] sm:$0xff]
    %v5672 = vld [vmem:[#allocation2 + $0x15b] sm:$0xff]
    %v5673 = vld [vmem:[#allocation2 + $0x163] sm:$0xff]
    %v5674 = vld [vmem:[#allocation2 + $0x16b] sm:$0xff]
    %v5675 = vld [vmem:[#allocation2 + $0x173] sm:$0xff]
    %v5676 = vld [vmem:[#allocation2 + $0x17b] sm:$0xff]
    %v5677 = vld [vmem:[#allocation2 + $0x104] sm:$0xff]
    %v5678 = vld [vmem:[#allocation2 + $0x10c] sm:$0xff]
    %v5679 = vld [vmem:[#allocation2 + $0x114] sm:$0xff]
    %v5680 = vld [vmem:[#allocation2 + $0x11c] sm:$0xff]
    %v5681 = vld [vmem:[#allocation2 + $0x124] sm:$0xff]
    %v5682 = vld [vmem:[#allocation2 + $0x12c] sm:$0xff]
    %v5683 = vld [vmem:[#allocation2 + $0x134] sm:$0xff]
    %v5684 = vld [vmem:[#allocation2 + $0x13c] sm:$0xff]
    %v5685 = vld [vmem:[#allocation2 + $0x144] sm:$0xff]
    %v5686 = vld [vmem:[#allocation2 + $0x14c] sm:$0xff]
    %v5687 = vld [vmem:[#allocation2 + $0x154] sm:$0xff]
    %v5688 = vld [vmem:[#allocation2 + $0x15c] sm:$0xff]
    %v5689 = vld [vmem:[#allocation2 + $0x164] sm:$0xff]
    %v5690 = vld [vmem:[#allocation2 + $0x16c] sm:$0xff]
    %v5691 = vld [vmem:[#allocation2 + $0x174] sm:$0xff]
    %v5692 = vld [vmem:[#allocation2 + $0x17c] sm:$0xff]
    %v5693 = vld [vmem:[#allocation2 + $0x180] sm:$0xff]
    %v5694 = vld [vmem:[#allocation2 + $0x188] sm:$0xff]
    %v5695 = vld [vmem:[#allocation2 + $0x181] sm:$0xff]
    %v5696 = vld [vmem:[#allocation2 + $0x189] sm:$0xff]
    %v5697 = vld [vmem:[#allocation2 + $0x182] sm:$0xff]
    %v5698 = vld [vmem:[#allocation2 + $0x18a] sm:$0xff]
    %v5699 = vld [vmem:[#allocation2 + $0x183] sm:$0xff]
    %v5700 = vld [vmem:[#allocation2 + $0x18b] sm:$0xff]
    %v5701 = vld [vmem:[#allocation2 + $0x184] sm:$0xff]
    %v5702 = vld [vmem:[#allocation2 + $0x18c] sm:$0xff]
    %v5703 = vld [vmem:[#allocation2 + $0x190] sm:$0xff]
    %v5704 = vld [vmem:[#allocation2 + $0x198] sm:$0xff]
    %v5705 = vld [vmem:[#allocation2 + $0x191] sm:$0xff]
    %v5706 = vld [vmem:[#allocation2 + $0x199] sm:$0xff]
    %v5707 = vld [vmem:[#allocation2 + $0x192] sm:$0xff]
    %v5708 = vld [vmem:[#allocation2 + $0x19a] sm:$0xff]
    %v5709 = vld [vmem:[#allocation2 + $0x193] sm:$0xff]
    %v5710 = vld [vmem:[#allocation2 + $0x19b] sm:$0xff]
    %v5711 = vld [vmem:[#allocation2 + $0x194] sm:$0xff]
    %v5712 = vld [vmem:[#allocation2 + $0x19c] sm:$0xff]
    %v5713 = vld [vmem:[#allocation2 + $0x1a0] sm:$0xff]
    %v5714 = vld [vmem:[#allocation2 + $0x1a8] sm:$0xff]
    %v5715 = vld [vmem:[#allocation2 + $0x1a1] sm:$0xff]
    %v5716 = vld [vmem:[#allocation2 + $0x1a9] sm:$0xff]
    %v5717 = vld [vmem:[#allocation2 + $0x1a2] sm:$0xff]
    %v5718 = vld [vmem:[#allocation2 + $0x1aa] sm:$0xff]
    %v5719 = vld [vmem:[#allocation2 + $0x1a3] sm:$0xff]
    %v5720 = vld [vmem:[#allocation2 + $0x1ab] sm:$0xff]
    %v5721 = vld [vmem:[#allocation2 + $0x1a4] sm:$0xff]
    %v5722 = vld [vmem:[#allocation2 + $0x1ac] sm:$0xff]
    %v5723 = vld [vmem:[#allocation2 + $0x1b0] sm:$0xff]
    %v5724 = vld [vmem:[#allocation2 + $0x1b8] sm:$0xff]
    %v5725 = vld [vmem:[#allocation2 + $0x1b1] sm:$0xff]
    %v5726 = vld [vmem:[#allocation2 + $0x1b9] sm:$0xff]
    %v5727 = vld [vmem:[#allocation2 + $0x1b2] sm:$0xff]
    %v5728 = vld [vmem:[#allocation2 + $0x1ba] sm:$0xff]
    %v5729 = vld [vmem:[#allocation2 + $0x1b3] sm:$0xff]
    %v5730 = vld [vmem:[#allocation2 + $0x1bb] sm:$0xff]
    %v5731 = vld [vmem:[#allocation2 + $0x1b4] sm:$0xff]
    %v5732 = vld [vmem:[#allocation2 + $0x1bc] sm:$0xff]
    %5749 = vrot.lane.b32.xlu0 %v5629, 16
    %v5750 = vpop.permute.xlu0 %5749
    %5751 = vrot.lane.b32.xlu0 %v5630, 16
    %v5752 = vpop.permute.xlu0 %5751
    %5753 = vrot.lane.b32.xlu0 %v5631, 16
    %v5754 = vpop.permute.xlu0 %5753
    %5755 = vrot.lane.b32.xlu0 %v5632, 16
    %v5756 = vpop.permute.xlu0 %5755
    %5757 = vrot.lane.b32.xlu0 %v5633, 16
    %v5758 = vpop.permute.xlu0 %5757
    %5759 = vrot.lane.b32.xlu0 %v5634, 16
    %v5760 = vpop.permute.xlu0 %5759
    %5761 = vrot.lane.b32.xlu0 %v5635, 16
    %v5762 = vpop.permute.xlu0 %5761
    %5763 = vrot.lane.b32.xlu0 %v5636, 16
    %v5764 = vpop.permute.xlu0 %5763
    %5765 = vrot.lane.b32.xlu0 %v5637, 16
    %v5766 = vpop.permute.xlu0 %5765
    %5767 = vrot.lane.b32.xlu0 %v5638, 16
    %v5768 = vpop.permute.xlu0 %5767
    %5769 = vrot.lane.b32.xlu0 %v5639, 16
    %v5770 = vpop.permute.xlu0 %5769
    %5771 = vrot.lane.b32.xlu0 %v5640, 16
    %v5772 = vpop.permute.xlu0 %5771
    %5773 = vrot.lane.b32.xlu0 %v5641, 16
    %v5774 = vpop.permute.xlu0 %5773
    %5775 = vrot.lane.b32.xlu0 %v5642, 16
    %v5776 = vpop.permute.xlu0 %5775
    %5777 = vrot.lane.b32.xlu0 %v5643, 16
    %v5778 = vpop.permute.xlu0 %5777
    %5779 = vrot.lane.b32.xlu0 %v5644, 16
    %v5780 = vpop.permute.xlu0 %5779
    %5813 = vrot.lane.b32.xlu0 %v5645, 32
    %v5814 = vpop.permute.xlu0 %5813
    %5815 = vrot.lane.b32.xlu0 %v5646, 32
    %v5816 = vpop.permute.xlu0 %5815
    %5817 = vrot.lane.b32.xlu0 %v5647, 32
    %v5818 = vpop.permute.xlu0 %5817
    %5819 = vrot.lane.b32.xlu0 %v5648, 32
    %v5820 = vpop.permute.xlu0 %5819
    %5821 = vrot.lane.b32.xlu0 %v5649, 32
    %v5822 = vpop.permute.xlu0 %5821
    %5823 = vrot.lane.b32.xlu0 %v5650, 32
    %v5824 = vpop.permute.xlu0 %5823
    %5825 = vrot.lane.b32.xlu0 %v5651, 32
    %v5826 = vpop.permute.xlu0 %5825
    %5827 = vrot.lane.b32.xlu0 %v5652, 32
    %v5828 = vpop.permute.xlu0 %5827
    %5829 = vrot.lane.b32.xlu0 %v5653, 32
    %v5830 = vpop.permute.xlu0 %5829
    %5831 = vrot.lane.b32.xlu0 %v5654, 32
    %v5832 = vpop.permute.xlu0 %5831
    %5833 = vrot.lane.b32.xlu0 %v5655, 32
    %v5834 = vpop.permute.xlu0 %5833
    %5835 = vrot.lane.b32.xlu0 %v5656, 32
    %v5836 = vpop.permute.xlu0 %5835
    %5837 = vrot.lane.b32.xlu0 %v5657, 32
    %v5838 = vpop.permute.xlu0 %5837
    %5839 = vrot.lane.b32.xlu0 %v5658, 32
    %v5840 = vpop.permute.xlu0 %5839
    %5841 = vrot.lane.b32.xlu0 %v5659, 32
    %v5842 = vpop.permute.xlu0 %5841
    %5843 = vrot.lane.b32.xlu0 %v5660, 32
    %v5844 = vpop.permute.xlu0 %5843
    %5877 = vrot.lane.b32.xlu0 %v5661, 48
    %v5878 = vpop.permute.xlu0 %5877
    %5879 = vrot.lane.b32.xlu0 %v5662, 48
    %v5880 = vpop.permute.xlu0 %5879
    %5881 = vrot.lane.b32.xlu0 %v5663, 48
    %v5882 = vpop.permute.xlu0 %5881
    %5883 = vrot.lane.b32.xlu0 %v5664, 48
    %v5884 = vpop.permute.xlu0 %5883
    %5885 = vrot.lane.b32.xlu0 %v5665, 48
    %v5886 = vpop.permute.xlu0 %5885
    %5887 = vrot.lane.b32.xlu0 %v5666, 48
    %v5888 = vpop.permute.xlu0 %5887
    %5889 = vrot.lane.b32.xlu0 %v5667, 48
    %v5890 = vpop.permute.xlu0 %5889
    %5891 = vrot.lane.b32.xlu0 %v5668, 48
    %v5892 = vpop.permute.xlu0 %5891
    %5893 = vrot.lane.b32.xlu0 %v5669, 48
    %v5894 = vpop.permute.xlu0 %5893
    %5895 = vrot.lane.b32.xlu0 %v5670, 48
    %v5896 = vpop.permute.xlu0 %5895
    %5897 = vrot.lane.b32.xlu0 %v5671, 48
    %v5898 = vpop.permute.xlu0 %5897
    %5899 = vrot.lane.b32.xlu0 %v5672, 48
    %v5900 = vpop.permute.xlu0 %5899
    %5901 = vrot.lane.b32.xlu0 %v5673, 48
    %v5902 = vpop.permute.xlu0 %5901
    %5903 = vrot.lane.b32.xlu0 %v5674, 48
    %v5904 = vpop.permute.xlu0 %5903
    %5905 = vrot.lane.b32.xlu0 %v5675, 48
    %v5906 = vpop.permute.xlu0 %5905
    %5907 = vrot.lane.b32.xlu0 %v5676, 48
    %v5908 = vpop.permute.xlu0 %5907
    %5941 = vrot.lane.b32.xlu0 %v5677, 64
    %v5942 = vpop.permute.xlu0 %5941
    %5943 = vrot.lane.b32.xlu0 %v5678, 64
    %v5944 = vpop.permute.xlu0 %5943
    %5945 = vrot.lane.b32.xlu0 %v5679, 64
    %v5946 = vpop.permute.xlu0 %5945
    %5947 = vrot.lane.b32.xlu0 %v5680, 64
    %v5948 = vpop.permute.xlu0 %5947
    %5949 = vrot.lane.b32.xlu0 %v5681, 64
    %v5950 = vpop.permute.xlu0 %5949
    %5951 = vrot.lane.b32.xlu0 %v5682, 64
    %v5952 = vpop.permute.xlu0 %5951
    %5953 = vrot.lane.b32.xlu0 %v5683, 64
    %v5954 = vpop.permute.xlu0 %5953
    %5955 = vrot.lane.b32.xlu0 %v5684, 64
    %v5956 = vpop.permute.xlu0 %5955
    %5957 = vrot.lane.b32.xlu0 %v5685, 64
    %v5958 = vpop.permute.xlu0 %5957
    %5959 = vrot.lane.b32.xlu0 %v5686, 64
    %v5960 = vpop.permute.xlu0 %5959
    %5961 = vrot.lane.b32.xlu0 %v5687, 64
    %v5962 = vpop.permute.xlu0 %5961
    %5963 = vrot.lane.b32.xlu0 %v5688, 64
    %v5964 = vpop.permute.xlu0 %5963
    %5965 = vrot.lane.b32.xlu0 %v5689, 64
    %v5966 = vpop.permute.xlu0 %5965
    %5967 = vrot.lane.b32.xlu0 %v5690, 64
    %v5968 = vpop.permute.xlu0 %5967
    %5969 = vrot.lane.b32.xlu0 %v5691, 64
    %v5970 = vpop.permute.xlu0 %5969
    %5971 = vrot.lane.b32.xlu0 %v5692, 64
    %v5972 = vpop.permute.xlu0 %5971
    %6005 = vrot.lane.b32.xlu0 %v5615, 80
    %v6006 = vpop.permute.xlu0 %6005
    %6007 = vrot.lane.b32.xlu0 %v5616, 80
    %v6008 = vpop.permute.xlu0 %6007
    %6009 = vrot.lane.b32.xlu0 %v5617, 80
    %v6010 = vpop.permute.xlu0 %6009
    %6011 = vrot.lane.b32.xlu0 %v5618, 80
    %v6012 = vpop.permute.xlu0 %6011
    %6013 = vrot.lane.b32.xlu0 %v5619, 80
    %v6014 = vpop.permute.xlu0 %6013
    %6015 = vrot.lane.b32.xlu0 %v5620, 80
    %v6016 = vpop.permute.xlu0 %6015
    %6017 = vrot.lane.b32.xlu0 %v5621, 80
    %v6018 = vpop.permute.xlu0 %6017
    %6019 = vrot.lane.b32.xlu0 %v5622, 80
    %v6020 = vpop.permute.xlu0 %6019
    %6021 = vrot.lane.b32.xlu0 %v5623, 80
    %v6022 = vpop.permute.xlu0 %6021
    %6023 = vrot.lane.b32.xlu0 %v5624, 80
    %v6024 = vpop.permute.xlu0 %6023
    %6025 = vrot.lane.b32.xlu0 %v5625, 80
    %v6026 = vpop.permute.xlu0 %6025
    %6027 = vrot.lane.b32.xlu0 %v5626, 80
    %v6028 = vpop.permute.xlu0 %6027
    %6029 = vrot.lane.b32.xlu0 %v5627, 80
    %v6030 = vpop.permute.xlu0 %6029
    %6031 = vrot.lane.b32.xlu0 %v5628, 80
    %v6032 = vpop.permute.xlu0 %6031
    %6033 = vrot.lane.b32.xlu0 %v5693, 80
    %v6034 = vpop.permute.xlu0 %6033
    %6035 = vrot.lane.b32.xlu0 %v5694, 80
    %v6036 = vpop.permute.xlu0 %6035
    %6055 = vrot.lane.b32.xlu0 %v5631, 96
    %v6056 = vpop.permute.xlu0 %6055
    %6057 = vrot.lane.b32.xlu0 %v5632, 96
    %v6058 = vpop.permute.xlu0 %6057
    %6059 = vrot.lane.b32.xlu0 %v5633, 96
    %v6060 = vpop.permute.xlu0 %6059
    %6061 = vrot.lane.b32.xlu0 %v5634, 96
    %v6062 = vpop.permute.xlu0 %6061
    %6063 = vrot.lane.b32.xlu0 %v5635, 96
    %v6064 = vpop.permute.xlu0 %6063
    %6065 = vrot.lane.b32.xlu0 %v5636, 96
    %v6066 = vpop.permute.xlu0 %6065
    %6067 = vrot.lane.b32.xlu0 %v5637, 96
    %v6068 = vpop.permute.xlu0 %6067
    %6069 = vrot.lane.b32.xlu0 %v5638, 96
    %v6070 = vpop.permute.xlu0 %6069
    %6071 = vrot.lane.b32.xlu0 %v5639, 96
    %v6072 = vpop.permute.xlu0 %6071
    %6073 = vrot.lane.b32.xlu0 %v5640, 96
    %v6074 = vpop.permute.xlu0 %6073
    %6075 = vrot.lane.b32.xlu0 %v5641, 96
    %v6076 = vpop.permute.xlu0 %6075
    %6077 = vrot.lane.b32.xlu0 %v5642, 96
    %v6078 = vpop.permute.xlu0 %6077
    %6079 = vrot.lane.b32.xlu0 %v5643, 96
    %v6080 = vpop.permute.xlu0 %6079
    %6081 = vrot.lane.b32.xlu0 %v5644, 96
    %v6082 = vpop.permute.xlu0 %6081
    %6083 = vrot.lane.b32.xlu0 %v5695, 96
    %v6084 = vpop.permute.xlu0 %6083
    %6085 = vrot.lane.b32.xlu0 %v5696, 96
    %v6086 = vpop.permute.xlu0 %6085
    %6105 = vrot.lane.b32.xlu0 %v5647, 112
    %v6106 = vpop.permute.xlu0 %6105
    %6107 = vrot.lane.b32.xlu0 %v5648, 112
    %v6108 = vpop.permute.xlu0 %6107
    %6109 = vrot.lane.b32.xlu0 %v5649, 112
    %v6110 = vpop.permute.xlu0 %6109
    %6111 = vrot.lane.b32.xlu0 %v5650, 112
    %v6112 = vpop.permute.xlu0 %6111
    %6113 = vrot.lane.b32.xlu0 %v5651, 112
    %v6114 = vpop.permute.xlu0 %6113
    %6115 = vrot.lane.b32.xlu0 %v5652, 112
    %v6116 = vpop.permute.xlu0 %6115
    %6117 = vrot.lane.b32.xlu0 %v5653, 112
    %v6118 = vpop.permute.xlu0 %6117
    %6119 = vrot.lane.b32.xlu0 %v5654, 112
    %v6120 = vpop.permute.xlu0 %6119
    %6121 = vrot.lane.b32.xlu0 %v5655, 112
    %v6122 = vpop.permute.xlu0 %6121
    %6123 = vrot.lane.b32.xlu0 %v5656, 112
    %v6124 = vpop.permute.xlu0 %6123
    %6125 = vrot.lane.b32.xlu0 %v5657, 112
    %v6126 = vpop.permute.xlu0 %6125
    %6127 = vrot.lane.b32.xlu0 %v5658, 112
    %v6128 = vpop.permute.xlu0 %6127
    %6129 = vrot.lane.b32.xlu0 %v5659, 112
    %v6130 = vpop.permute.xlu0 %6129
    %6131 = vrot.lane.b32.xlu0 %v5660, 112
    %v6132 = vpop.permute.xlu0 %6131
    %6133 = vrot.lane.b32.xlu0 %v5697, 112
    %v6134 = vpop.permute.xlu0 %6133
    %6135 = vrot.lane.b32.xlu0 %v5698, 112
    %v6136 = vpop.permute.xlu0 %6135
    %6155 = vrot.lane.b32.xlu0 %v5679, 16
    %v6156 = vpop.permute.xlu0 %6155
    %6157 = vrot.lane.b32.xlu0 %v5680, 16
    %v6158 = vpop.permute.xlu0 %6157
    %6159 = vrot.lane.b32.xlu0 %v5681, 16
    %v6160 = vpop.permute.xlu0 %6159
    %6161 = vrot.lane.b32.xlu0 %v5682, 16
    %v6162 = vpop.permute.xlu0 %6161
    %6163 = vrot.lane.b32.xlu0 %v5683, 16
    %v6164 = vpop.permute.xlu0 %6163
    %6165 = vrot.lane.b32.xlu0 %v5684, 16
    %v6166 = vpop.permute.xlu0 %6165
    %6167 = vrot.lane.b32.xlu0 %v5685, 16
    %v6168 = vpop.permute.xlu0 %6167
    %6169 = vrot.lane.b32.xlu0 %v5686, 16
    %v6170 = vpop.permute.xlu0 %6169
    %6171 = vrot.lane.b32.xlu0 %v5687, 16
    %v6172 = vpop.permute.xlu0 %6171
    %6173 = vrot.lane.b32.xlu0 %v5688, 16
    %v6174 = vpop.permute.xlu0 %6173
    %6175 = vrot.lane.b32.xlu0 %v5689, 16
    %v6176 = vpop.permute.xlu0 %6175
    %6177 = vrot.lane.b32.xlu0 %v5690, 16
    %v6178 = vpop.permute.xlu0 %6177
    %6179 = vrot.lane.b32.xlu0 %v5691, 16
    %v6180 = vpop.permute.xlu0 %6179
    %6181 = vrot.lane.b32.xlu0 %v5692, 16
    %v6182 = vpop.permute.xlu0 %6181
    %6183 = vrot.lane.b32.xlu0 %v5701, 16
    %v6184 = vpop.permute.xlu0 %6183
    %6185 = vrot.lane.b32.xlu0 %v5702, 16
    %v6186 = vpop.permute.xlu0 %6185
    %6205 = vrot.lane.b32.xlu0 %v5617, 32
    %v6206 = vpop.permute.xlu0 %6205
    %6207 = vrot.lane.b32.xlu0 %v5618, 32
    %v6208 = vpop.permute.xlu0 %6207
    %6209 = vrot.lane.b32.xlu0 %v5619, 32
    %v6210 = vpop.permute.xlu0 %6209
    %6211 = vrot.lane.b32.xlu0 %v5620, 32
    %v6212 = vpop.permute.xlu0 %6211
    %6213 = vrot.lane.b32.xlu0 %v5621, 32
    %v6214 = vpop.permute.xlu0 %6213
    %6215 = vrot.lane.b32.xlu0 %v5622, 32
    %v6216 = vpop.permute.xlu0 %6215
    %6217 = vrot.lane.b32.xlu0 %v5623, 32
    %v6218 = vpop.permute.xlu0 %6217
    %6219 = vrot.lane.b32.xlu0 %v5624, 32
    %v6220 = vpop.permute.xlu0 %6219
    %6221 = vrot.lane.b32.xlu0 %v5625, 32
    %v6222 = vpop.permute.xlu0 %6221
    %6223 = vrot.lane.b32.xlu0 %v5626, 32
    %v6224 = vpop.permute.xlu0 %6223
    %6225 = vrot.lane.b32.xlu0 %v5627, 32
    %v6226 = vpop.permute.xlu0 %6225
    %6227 = vrot.lane.b32.xlu0 %v5628, 32
    %v6228 = vpop.permute.xlu0 %6227
    %6229 = vrot.lane.b32.xlu0 %v5693, 32
    %v6230 = vpop.permute.xlu0 %6229
    %6231 = vrot.lane.b32.xlu0 %v5694, 32
    %v6232 = vpop.permute.xlu0 %6231
    %6233 = vrot.lane.b32.xlu0 %v5703, 32
    %v6234 = vpop.permute.xlu0 %6233
    %6235 = vrot.lane.b32.xlu0 %v5704, 32
    %v6236 = vpop.permute.xlu0 %6235
    %6255 = vrot.lane.b32.xlu0 %v5633, 48
    %v6256 = vpop.permute.xlu0 %6255
    %6257 = vrot.lane.b32.xlu0 %v5634, 48
    %v6258 = vpop.permute.xlu0 %6257
    %6259 = vrot.lane.b32.xlu0 %v5635, 48
    %v6260 = vpop.permute.xlu0 %6259
    %6261 = vrot.lane.b32.xlu0 %v5636, 48
    %v6262 = vpop.permute.xlu0 %6261
    %6263 = vrot.lane.b32.xlu0 %v5637, 48
    %v6264 = vpop.permute.xlu0 %6263
    %6265 = vrot.lane.b32.xlu0 %v5638, 48
    %v6266 = vpop.permute.xlu0 %6265
    %6267 = vrot.lane.b32.xlu0 %v5639, 48
    %v6268 = vpop.permute.xlu0 %6267
    %6269 = vrot.lane.b32.xlu0 %v5640, 48
    %v6270 = vpop.permute.xlu0 %6269
    %6271 = vrot.lane.b32.xlu0 %v5641, 48
    %v6272 = vpop.permute.xlu0 %6271
    %6273 = vrot.lane.b32.xlu0 %v5642, 48
    %v6274 = vpop.permute.xlu0 %6273
    %6275 = vrot.lane.b32.xlu0 %v5643, 48
    %v6276 = vpop.permute.xlu0 %6275
    %6277 = vrot.lane.b32.xlu0 %v5644, 48
    %v6278 = vpop.permute.xlu0 %6277
    %6279 = vrot.lane.b32.xlu0 %v5695, 48
    %v6280 = vpop.permute.xlu0 %6279
    %6281 = vrot.lane.b32.xlu0 %v5696, 48
    %v6282 = vpop.permute.xlu0 %6281
    %6283 = vrot.lane.b32.xlu0 %v5705, 48
    %v6284 = vpop.permute.xlu0 %6283
    %6285 = vrot.lane.b32.xlu0 %v5706, 48
    %v6286 = vpop.permute.xlu0 %6285
    %6305 = vrot.lane.b32.xlu0 %v5649, 64
    %v6306 = vpop.permute.xlu0 %6305
    %6307 = vrot.lane.b32.xlu0 %v5650, 64
    %v6308 = vpop.permute.xlu0 %6307
    %6309 = vrot.lane.b32.xlu0 %v5651, 64
    %v6310 = vpop.permute.xlu0 %6309
    %6311 = vrot.lane.b32.xlu0 %v5652, 64
    %v6312 = vpop.permute.xlu0 %6311
    %6313 = vrot.lane.b32.xlu0 %v5653, 64
    %v6314 = vpop.permute.xlu0 %6313
    %6315 = vrot.lane.b32.xlu0 %v5654, 64
    %v6316 = vpop.permute.xlu0 %6315
    %6317 = vrot.lane.b32.xlu0 %v5655, 64
    %v6318 = vpop.permute.xlu0 %6317
    %6319 = vrot.lane.b32.xlu0 %v5656, 64
    %v6320 = vpop.permute.xlu0 %6319
    %6321 = vrot.lane.b32.xlu0 %v5657, 64
    %v6322 = vpop.permute.xlu0 %6321
    %6323 = vrot.lane.b32.xlu0 %v5658, 64
    %v6324 = vpop.permute.xlu0 %6323
    %6325 = vrot.lane.b32.xlu0 %v5659, 64
    %v6326 = vpop.permute.xlu0 %6325
    %6327 = vrot.lane.b32.xlu0 %v5660, 64
    %v6328 = vpop.permute.xlu0 %6327
    %6329 = vrot.lane.b32.xlu0 %v5697, 64
    %v6330 = vpop.permute.xlu0 %6329
    %6331 = vrot.lane.b32.xlu0 %v5698, 64
    %v6332 = vpop.permute.xlu0 %6331
    %6333 = vrot.lane.b32.xlu0 %v5707, 64
    %v6334 = vpop.permute.xlu0 %6333
    %6335 = vrot.lane.b32.xlu0 %v5708, 64
    %v6336 = vpop.permute.xlu0 %6335
    %6357 = vrot.lane.b32.xlu0 %v5665, 80
    %v6358 = vpop.permute.xlu0 %6357
    %6359 = vrot.lane.b32.xlu0 %v5666, 80
    %v6360 = vpop.permute.xlu0 %6359
    %6361 = vrot.lane.b32.xlu0 %v5667, 80
    %v6362 = vpop.permute.xlu0 %6361
    %6363 = vrot.lane.b32.xlu0 %v5668, 80
    %v6364 = vpop.permute.xlu0 %6363
    %6365 = vrot.lane.b32.xlu0 %v5669, 80
    %v6366 = vpop.permute.xlu0 %6365
    %6367 = vrot.lane.b32.xlu0 %v5670, 80
    %v6368 = vpop.permute.xlu0 %6367
    %6369 = vrot.lane.b32.xlu0 %v5671, 80
    %v6370 = vpop.permute.xlu0 %6369
    %6371 = vrot.lane.b32.xlu0 %v5672, 80
    %v6372 = vpop.permute.xlu0 %6371
    %6373 = vrot.lane.b32.xlu0 %v5673, 80
    %v6374 = vpop.permute.xlu0 %6373
    %6375 = vrot.lane.b32.xlu0 %v5674, 80
    %v6376 = vpop.permute.xlu0 %6375
    %6377 = vrot.lane.b32.xlu0 %v5675, 80
    %v6378 = vpop.permute.xlu0 %6377
    %6379 = vrot.lane.b32.xlu0 %v5676, 80
    %v6380 = vpop.permute.xlu0 %6379
    %6381 = vrot.lane.b32.xlu0 %v5699, 80
    %v6382 = vpop.permute.xlu0 %6381
    %6383 = vrot.lane.b32.xlu0 %v5700, 80
    %v6384 = vpop.permute.xlu0 %6383
    %6385 = vrot.lane.b32.xlu0 %v5709, 80
    %v6386 = vpop.permute.xlu0 %6385
    %6387 = vrot.lane.b32.xlu0 %v5710, 80
    %v6388 = vpop.permute.xlu0 %6387
    %6407 = vrot.lane.b32.xlu0 %v5681, 96
    %v6408 = vpop.permute.xlu0 %6407
    %6409 = vrot.lane.b32.xlu0 %v5682, 96
    %v6410 = vpop.permute.xlu0 %6409
    %6411 = vrot.lane.b32.xlu0 %v5683, 96
    %v6412 = vpop.permute.xlu0 %6411
    %6413 = vrot.lane.b32.xlu0 %v5684, 96
    %v6414 = vpop.permute.xlu0 %6413
    %6415 = vrot.lane.b32.xlu0 %v5685, 96
    %v6416 = vpop.permute.xlu0 %6415
    %6417 = vrot.lane.b32.xlu0 %v5686, 96
    %v6418 = vpop.permute.xlu0 %6417
    %6419 = vrot.lane.b32.xlu0 %v5687, 96
    %v6420 = vpop.permute.xlu0 %6419
    %6421 = vrot.lane.b32.xlu0 %v5688, 96
    %v6422 = vpop.permute.xlu0 %6421
    %6423 = vrot.lane.b32.xlu0 %v5689, 96
    %v6424 = vpop.permute.xlu0 %6423
    %6425 = vrot.lane.b32.xlu0 %v5690, 96
    %v6426 = vpop.permute.xlu0 %6425
    %6427 = vrot.lane.b32.xlu0 %v5691, 96
    %v6428 = vpop.permute.xlu0 %6427
    %6429 = vrot.lane.b32.xlu0 %v5692, 96
    %v6430 = vpop.permute.xlu0 %6429
    %6431 = vrot.lane.b32.xlu0 %v5701, 96
    %v6432 = vpop.permute.xlu0 %6431
    %6433 = vrot.lane.b32.xlu0 %v5702, 96
    %v6434 = vpop.permute.xlu0 %6433
    %6435 = vrot.lane.b32.xlu0 %v5711, 96
    %v6436 = vpop.permute.xlu0 %6435
    %6437 = vrot.lane.b32.xlu0 %v5712, 96
    %v6438 = vpop.permute.xlu0 %6437
    %6457 = vrot.lane.b32.xlu0 %v5619, 112
    %v6458 = vpop.permute.xlu0 %6457
    %6459 = vrot.lane.b32.xlu0 %v5620, 112
    %v6460 = vpop.permute.xlu0 %6459
    %6461 = vrot.lane.b32.xlu0 %v5621, 112
    %v6462 = vpop.permute.xlu0 %6461
    %6463 = vrot.lane.b32.xlu0 %v5622, 112
    %v6464 = vpop.permute.xlu0 %6463
    %6465 = vrot.lane.b32.xlu0 %v5623, 112
    %v6466 = vpop.permute.xlu0 %6465
    %6467 = vrot.lane.b32.xlu0 %v5624, 112
    %v6468 = vpop.permute.xlu0 %6467
    %6469 = vrot.lane.b32.xlu0 %v5625, 112
    %v6470 = vpop.permute.xlu0 %6469
    %6471 = vrot.lane.b32.xlu0 %v5626, 112
    %v6472 = vpop.permute.xlu0 %6471
    %6473 = vrot.lane.b32.xlu0 %v5627, 112
    %v6474 = vpop.permute.xlu0 %6473
    %6475 = vrot.lane.b32.xlu0 %v5628, 112
    %v6476 = vpop.permute.xlu0 %6475
    %6477 = vrot.lane.b32.xlu0 %v5693, 112
    %v6478 = vpop.permute.xlu0 %6477
    %6479 = vrot.lane.b32.xlu0 %v5694, 112
    %v6480 = vpop.permute.xlu0 %6479
    %6481 = vrot.lane.b32.xlu0 %v5703, 112
    %v6482 = vpop.permute.xlu0 %6481
    %6483 = vrot.lane.b32.xlu0 %v5704, 112
    %v6484 = vpop.permute.xlu0 %6483
    %6485 = vrot.lane.b32.xlu0 %v5713, 112
    %v6486 = vpop.permute.xlu0 %6485
    %6487 = vrot.lane.b32.xlu0 %v5714, 112
    %v6488 = vpop.permute.xlu0 %6487
    %v6505 = vsel %vm706, %v5613, %v5750
    %v6506 = vsel %vm706, %v5614, %v5752
    %v6507 = vsel %vm706, %v5615, %v5754
    %v6508 = vsel %vm706, %v5616, %v5756
    %v6509 = vsel %vm706, %v5617, %v5758
    %v6510 = vsel %vm706, %v5618, %v5760
    %v6511 = vsel %vm706, %v5619, %v5762
    %v6512 = vsel %vm706, %v5620, %v5764
    %v6513 = vsel %vm706, %v5621, %v5766
    %v6514 = vsel %vm706, %v5622, %v5768
    %v6515 = vsel %vm706, %v5623, %v5770
    %v6516 = vsel %vm706, %v5624, %v5772
    %v6517 = vsel %vm706, %v5625, %v5774
    %v6518 = vsel %vm706, %v5626, %v5776
    %v6519 = vsel %vm706, %v5627, %v5778
    %v6520 = vsel %vm706, %v5628, %v5780
    %v6521 = vsel %vm2423, %v6505, %v5814
    %v6522 = vsel %vm2423, %v6506, %v5816
    %v6523 = vsel %vm2423, %v6507, %v5818
    %v6524 = vsel %vm2423, %v6508, %v5820
    %v6525 = vsel %vm2423, %v6509, %v5822
    %v6526 = vsel %vm2423, %v6510, %v5824
    %v6527 = vsel %vm2423, %v6511, %v5826
    %v6528 = vsel %vm2423, %v6512, %v5828
    %v6529 = vsel %vm2423, %v6513, %v5830
    %v6530 = vsel %vm2423, %v6514, %v5832
    %v6531 = vsel %vm2423, %v6515, %v5834
    %v6532 = vsel %vm2423, %v6516, %v5836
    %v6533 = vsel %vm2423, %v6517, %v5838
    %v6534 = vsel %vm2423, %v6518, %v5840
    %v6535 = vsel %vm2423, %v6519, %v5842
    %v6536 = vsel %vm2423, %v6520, %v5844
    %v6537 = vsel %vm2440, %v6521, %v5878
    %v6538 = vsel %vm2440, %v6522, %v5880
    %v6539 = vsel %vm2440, %v6523, %v5882
    %v6540 = vsel %vm2440, %v6524, %v5884
    %v6541 = vsel %vm2440, %v6525, %v5886
    %v6542 = vsel %vm2440, %v6526, %v5888
    %v6543 = vsel %vm2440, %v6527, %v5890
    %v6544 = vsel %vm2440, %v6528, %v5892
    %v6545 = vsel %vm2440, %v6529, %v5894
    %v6546 = vsel %vm2440, %v6530, %v5896
    %v6547 = vsel %vm2440, %v6531, %v5898
    %v6548 = vsel %vm2440, %v6532, %v5900
    %v6549 = vsel %vm2440, %v6533, %v5902
    %v6550 = vsel %vm2440, %v6534, %v5904
    %v6551 = vsel %vm2440, %v6535, %v5906
    %v6552 = vsel %vm2440, %v6536, %v5908
    %v6553 = vsel %vm2457, %v6537, %v5942
    %v6554 = vsel %vm2457, %v6538, %v5944
    %v6555 = vsel %vm2457, %v6539, %v5946
    %v6556 = vsel %vm2457, %v6540, %v5948
    %v6557 = vsel %vm2457, %v6541, %v5950
    %v6558 = vsel %vm2457, %v6542, %v5952
    %v6559 = vsel %vm2457, %v6543, %v5954
    %v6560 = vsel %vm2457, %v6544, %v5956
    %v6561 = vsel %vm2457, %v6545, %v5958
    %v6562 = vsel %vm2457, %v6546, %v5960
    %v6563 = vsel %vm2457, %v6547, %v5962
    %v6564 = vsel %vm2457, %v6548, %v5964
    %v6565 = vsel %vm2457, %v6549, %v5966
    %v6566 = vsel %vm2457, %v6550, %v5968
    %v6567 = vsel %vm2457, %v6551, %v5970
    %v6568 = vsel %vm2457, %v6552, %v5972
    %v6569 = vsel %vm2474, %v6553, %v6006
    %v6570 = vsel %vm2474, %v6554, %v6008
    %v6571 = vsel %vm2474, %v6555, %v6010
    %v6572 = vsel %vm2474, %v6556, %v6012
    %v6573 = vsel %vm2474, %v6557, %v6014
    %v6574 = vsel %vm2474, %v6558, %v6016
    %v6575 = vsel %vm2474, %v6559, %v6018
    %v6576 = vsel %vm2474, %v6560, %v6020
    %v6577 = vsel %vm2474, %v6561, %v6022
    %v6578 = vsel %vm2474, %v6562, %v6024
    %v6579 = vsel %vm2474, %v6563, %v6026
    %v6580 = vsel %vm2474, %v6564, %v6028
    %v6581 = vsel %vm2474, %v6565, %v6030
    %v6582 = vsel %vm2474, %v6566, %v6032
    %v6583 = vsel %vm2474, %v6567, %v6034
    %v6584 = vsel %vm2474, %v6568, %v6036
    %v6585 = vsel %vm2491, %v6569, %v6056
    %v6586 = vsel %vm2491, %v6570, %v6058
    %v6587 = vsel %vm2491, %v6571, %v6060
    %v6588 = vsel %vm2491, %v6572, %v6062
    %v6589 = vsel %vm2491, %v6573, %v6064
    %v6590 = vsel %vm2491, %v6574, %v6066
    %v6591 = vsel %vm2491, %v6575, %v6068
    %v6592 = vsel %vm2491, %v6576, %v6070
    %v6593 = vsel %vm2491, %v6577, %v6072
    %v6594 = vsel %vm2491, %v6578, %v6074
    %v6595 = vsel %vm2491, %v6579, %v6076
    %v6596 = vsel %vm2491, %v6580, %v6078
    %v6597 = vsel %vm2491, %v6581, %v6080
    %v6598 = vsel %vm2491, %v6582, %v6082
    %v6599 = vsel %vm2491, %v6583, %v6084
    %v6600 = vsel %vm2491, %v6584, %v6086
    %v6601 = vsel %vm2508, %v6585, %v6106
    %v6602 = vsel %vm2508, %v6586, %v6108
    %v6603 = vsel %vm2508, %v6587, %v6110
    %v6604 = vsel %vm2508, %v6588, %v6112
    %v6605 = vsel %vm2508, %v6589, %v6114
    %v6606 = vsel %vm2508, %v6590, %v6116
    %v6607 = vsel %vm2508, %v6591, %v6118
    %v6608 = vsel %vm2508, %v6592, %v6120
    %v6609 = vsel %vm2508, %v6593, %v6122
    %v6610 = vsel %vm2508, %v6594, %v6124
    %v6611 = vsel %vm2508, %v6595, %v6126
    %v6612 = vsel %vm2508, %v6596, %v6128
    %v6613 = vsel %vm2508, %v6597, %v6130
    %v6614 = vsel %vm2508, %v6598, %v6132
    %v6615 = vsel %vm2508, %v6599, %v6134
    %v6616 = vsel %vm2508, %v6600, %v6136
    %v6617 = vsel %vm706, %v5663, %v6156
    %v6618 = vsel %vm706, %v5664, %v6158
    %v6619 = vsel %vm706, %v5665, %v6160
    %v6620 = vsel %vm706, %v5666, %v6162
    %v6621 = vsel %vm706, %v5667, %v6164
    %v6622 = vsel %vm706, %v5668, %v6166
    %v6623 = vsel %vm706, %v5669, %v6168
    %v6624 = vsel %vm706, %v5670, %v6170
    %v6625 = vsel %vm706, %v5671, %v6172
    %v6626 = vsel %vm706, %v5672, %v6174
    %v6627 = vsel %vm706, %v5673, %v6176
    %v6628 = vsel %vm706, %v5674, %v6178
    %v6629 = vsel %vm706, %v5675, %v6180
    %v6630 = vsel %vm706, %v5676, %v6182
    %v6631 = vsel %vm706, %v5699, %v6184
    %v6632 = vsel %vm706, %v5700, %v6186
    %v6633 = vsel %vm2423, %v6617, %v6206
    %v6634 = vsel %vm2423, %v6618, %v6208
    %v6635 = vsel %vm2423, %v6619, %v6210
    %v6636 = vsel %vm2423, %v6620, %v6212
    %v6637 = vsel %vm2423, %v6621, %v6214
    %v6638 = vsel %vm2423, %v6622, %v6216
    %v6639 = vsel %vm2423, %v6623, %v6218
    %v6640 = vsel %vm2423, %v6624, %v6220
    %v6641 = vsel %vm2423, %v6625, %v6222
    %v6642 = vsel %vm2423, %v6626, %v6224
    %v6643 = vsel %vm2423, %v6627, %v6226
    %v6644 = vsel %vm2423, %v6628, %v6228
    %v6645 = vsel %vm2423, %v6629, %v6230
    %v6646 = vsel %vm2423, %v6630, %v6232
    %v6647 = vsel %vm2423, %v6631, %v6234
    %v6648 = vsel %vm2423, %v6632, %v6236
    %v6649 = vsel %vm2440, %v6633, %v6256
    %v6650 = vsel %vm2440, %v6634, %v6258
    %v6651 = vsel %vm2440, %v6635, %v6260
    %v6652 = vsel %vm2440, %v6636, %v6262
    %v6653 = vsel %vm2440, %v6637, %v6264
    %v6654 = vsel %vm2440, %v6638, %v6266
    %v6655 = vsel %vm2440, %v6639, %v6268
    %v6656 = vsel %vm2440, %v6640, %v6270
    %v6657 = vsel %vm2440, %v6641, %v6272
    %v6658 = vsel %vm2440, %v6642, %v6274
    %v6659 = vsel %vm2440, %v6643, %v6276
    %v6660 = vsel %vm2440, %v6644, %v6278
    %v6661 = vsel %vm2440, %v6645, %v6280
    %v6662 = vsel %vm2440, %v6646, %v6282
    %v6663 = vsel %vm2440, %v6647, %v6284
    %v6664 = vsel %vm2440, %v6648, %v6286
    %v6665 = vsel %vm2457, %v6649, %v6306
    %v6666 = vsel %vm2457, %v6650, %v6308
    %v6667 = vsel %vm2457, %v6651, %v6310
    %v6668 = vsel %vm2457, %v6652, %v6312
    %v6669 = vsel %vm2457, %v6653, %v6314
    %v6670 = vsel %vm2457, %v6654, %v6316
    %v6671 = vsel %vm2457, %v6655, %v6318
    %v6672 = vsel %vm2457, %v6656, %v6320
    %v6673 = vsel %vm2457, %v6657, %v6322
    %v6674 = vsel %vm2457, %v6658, %v6324
    %v6675 = vsel %vm2457, %v6659, %v6326
    %v6676 = vsel %vm2457, %v6660, %v6328
    %v6677 = vsel %vm2457, %v6661, %v6330
    %v6678 = vsel %vm2457, %v6662, %v6332
    %v6679 = vsel %vm2457, %v6663, %v6334
    %v6680 = vsel %vm2457, %v6664, %v6336
    %v6681 = vsel %vm2474, %v6665, %v6358
    %v6682 = vsel %vm2474, %v6666, %v6360
    %v6683 = vsel %vm2474, %v6667, %v6362
    %v6684 = vsel %vm2474, %v6668, %v6364
    %v6685 = vsel %vm2474, %v6669, %v6366
    %v6686 = vsel %vm2474, %v6670, %v6368
    %v6687 = vsel %vm2474, %v6671, %v6370
    %v6688 = vsel %vm2474, %v6672, %v6372
    %v6689 = vsel %vm2474, %v6673, %v6374
    %v6690 = vsel %vm2474, %v6674, %v6376
    %v6691 = vsel %vm2474, %v6675, %v6378
    %v6692 = vsel %vm2474, %v6676, %v6380
    %v6693 = vsel %vm2474, %v6677, %v6382
    %v6694 = vsel %vm2474, %v6678, %v6384
    %v6695 = vsel %vm2474, %v6679, %v6386
    %v6696 = vsel %vm2474, %v6680, %v6388
    %v6697 = vsel %vm2491, %v6681, %v6408
    %v6698 = vsel %vm2491, %v6682, %v6410
    %v6699 = vsel %vm2491, %v6683, %v6412
    %v6700 = vsel %vm2491, %v6684, %v6414
    %v6701 = vsel %vm2491, %v6685, %v6416
    %v6702 = vsel %vm2491, %v6686, %v6418
    %v6703 = vsel %vm2491, %v6687, %v6420
    %v6704 = vsel %vm2491, %v6688, %v6422
    %v6705 = vsel %vm2491, %v6689, %v6424
    %v6706 = vsel %vm2491, %v6690, %v6426
    %v6707 = vsel %vm2491, %v6691, %v6428
    %v6708 = vsel %vm2491, %v6692, %v6430
    %v6709 = vsel %vm2491, %v6693, %v6432
    %v6710 = vsel %vm2491, %v6694, %v6434
    %v6711 = vsel %vm2491, %v6695, %v6436
    %v6712 = vsel %vm2491, %v6696, %v6438
    %v6713 = vsel %vm2508, %v6697, %v6458
    %v6714 = vsel %vm2508, %v6698, %v6460
    %v6715 = vsel %vm2508, %v6699, %v6462
    %v6716 = vsel %vm2508, %v6700, %v6464
    %v6717 = vsel %vm2508, %v6701, %v6466
    %v6718 = vsel %vm2508, %v6702, %v6468
    %v6719 = vsel %vm2508, %v6703, %v6470
    %v6720 = vsel %vm2508, %v6704, %v6472
    %v6721 = vsel %vm2508, %v6705, %v6474
    %v6722 = vsel %vm2508, %v6706, %v6476
    %v6723 = vsel %vm2508, %v6707, %v6478
    %v6724 = vsel %vm2508, %v6708, %v6480
    %v6725 = vsel %vm2508, %v6709, %v6482
    %v6726 = vsel %vm2508, %v6710, %v6484
    %v6727 = vsel %vm2508, %v6711, %v6486
    %v6728 = vsel %vm2508, %v6712, %v6488
    %6731 = vrot.lane.b32.xlu0 %v5651, 16
    %v6732 = vpop.permute.xlu0 %6731
    %6733 = vrot.lane.b32.xlu0 %v5652, 16
    %v6734 = vpop.permute.xlu0 %6733
    %6735 = vrot.lane.b32.xlu0 %v5653, 16
    %v6736 = vpop.permute.xlu0 %6735
    %6737 = vrot.lane.b32.xlu0 %v5654, 16
    %v6738 = vpop.permute.xlu0 %6737
    %6739 = vrot.lane.b32.xlu0 %v5655, 16
    %v6740 = vpop.permute.xlu0 %6739
    %6741 = vrot.lane.b32.xlu0 %v5656, 16
    %v6742 = vpop.permute.xlu0 %6741
    %6743 = vrot.lane.b32.xlu0 %v5657, 16
    %v6744 = vpop.permute.xlu0 %6743
    %6745 = vrot.lane.b32.xlu0 %v5658, 16
    %v6746 = vpop.permute.xlu0 %6745
    %6747 = vrot.lane.b32.xlu0 %v5659, 16
    %v6748 = vpop.permute.xlu0 %6747
    %6749 = vrot.lane.b32.xlu0 %v5660, 16
    %v6750 = vpop.permute.xlu0 %6749
    %6751 = vrot.lane.b32.xlu0 %v5697, 16
    %v6752 = vpop.permute.xlu0 %6751
    %6753 = vrot.lane.b32.xlu0 %v5698, 16
    %v6754 = vpop.permute.xlu0 %6753
    %6755 = vrot.lane.b32.xlu0 %v5707, 16
    %v6756 = vpop.permute.xlu0 %6755
    %6757 = vrot.lane.b32.xlu0 %v5708, 16
    %v6758 = vpop.permute.xlu0 %6757
    %6759 = vrot.lane.b32.xlu0 %v5717, 16
    %v6760 = vpop.permute.xlu0 %6759
    %6761 = vrot.lane.b32.xlu0 %v5718, 16
    %v6762 = vpop.permute.xlu0 %6761
    %6781 = vrot.lane.b32.xlu0 %v5667, 32
    %v6782 = vpop.permute.xlu0 %6781
    %6783 = vrot.lane.b32.xlu0 %v5668, 32
    %v6784 = vpop.permute.xlu0 %6783
    %6785 = vrot.lane.b32.xlu0 %v5669, 32
    %v6786 = vpop.permute.xlu0 %6785
    %6787 = vrot.lane.b32.xlu0 %v5670, 32
    %v6788 = vpop.permute.xlu0 %6787
    %6789 = vrot.lane.b32.xlu0 %v5671, 32
    %v6790 = vpop.permute.xlu0 %6789
    %6791 = vrot.lane.b32.xlu0 %v5672, 32
    %v6792 = vpop.permute.xlu0 %6791
    %6793 = vrot.lane.b32.xlu0 %v5673, 32
    %v6794 = vpop.permute.xlu0 %6793
    %6795 = vrot.lane.b32.xlu0 %v5674, 32
    %v6796 = vpop.permute.xlu0 %6795
    %6797 = vrot.lane.b32.xlu0 %v5675, 32
    %v6798 = vpop.permute.xlu0 %6797
    %6799 = vrot.lane.b32.xlu0 %v5676, 32
    %v6800 = vpop.permute.xlu0 %6799
    %6801 = vrot.lane.b32.xlu0 %v5699, 32
    %v6802 = vpop.permute.xlu0 %6801
    %6803 = vrot.lane.b32.xlu0 %v5700, 32
    %v6804 = vpop.permute.xlu0 %6803
    %6805 = vrot.lane.b32.xlu0 %v5709, 32
    %v6806 = vpop.permute.xlu0 %6805
    %6807 = vrot.lane.b32.xlu0 %v5710, 32
    %v6808 = vpop.permute.xlu0 %6807
    %6809 = vrot.lane.b32.xlu0 %v5719, 32
    %v6810 = vpop.permute.xlu0 %6809
    %6811 = vrot.lane.b32.xlu0 %v5720, 32
    %v6812 = vpop.permute.xlu0 %6811
    %6831 = vrot.lane.b32.xlu0 %v5683, 48
    %v6832 = vpop.permute.xlu0 %6831
    %6833 = vrot.lane.b32.xlu0 %v5684, 48
    %v6834 = vpop.permute.xlu0 %6833
    %6835 = vrot.lane.b32.xlu0 %v5685, 48
    %v6836 = vpop.permute.xlu0 %6835
    %6837 = vrot.lane.b32.xlu0 %v5686, 48
    %v6838 = vpop.permute.xlu0 %6837
    %6839 = vrot.lane.b32.xlu0 %v5687, 48
    %v6840 = vpop.permute.xlu0 %6839
    %6841 = vrot.lane.b32.xlu0 %v5688, 48
    %v6842 = vpop.permute.xlu0 %6841
    %6843 = vrot.lane.b32.xlu0 %v5689, 48
    %v6844 = vpop.permute.xlu0 %6843
    %6845 = vrot.lane.b32.xlu0 %v5690, 48
    %v6846 = vpop.permute.xlu0 %6845
    %6847 = vrot.lane.b32.xlu0 %v5691, 48
    %v6848 = vpop.permute.xlu0 %6847
    %6849 = vrot.lane.b32.xlu0 %v5692, 48
    %v6850 = vpop.permute.xlu0 %6849
    %6851 = vrot.lane.b32.xlu0 %v5701, 48
    %v6852 = vpop.permute.xlu0 %6851
    %6853 = vrot.lane.b32.xlu0 %v5702, 48
    %v6854 = vpop.permute.xlu0 %6853
    %6855 = vrot.lane.b32.xlu0 %v5711, 48
    %v6856 = vpop.permute.xlu0 %6855
    %6857 = vrot.lane.b32.xlu0 %v5712, 48
    %v6858 = vpop.permute.xlu0 %6857
    %6859 = vrot.lane.b32.xlu0 %v5721, 48
    %v6860 = vpop.permute.xlu0 %6859
    %6861 = vrot.lane.b32.xlu0 %v5722, 48
    %v6862 = vpop.permute.xlu0 %6861
    %6881 = vrot.lane.b32.xlu0 %v5621, 64
    %v6882 = vpop.permute.xlu0 %6881
    %6883 = vrot.lane.b32.xlu0 %v5622, 64
    %v6884 = vpop.permute.xlu0 %6883
    %6885 = vrot.lane.b32.xlu0 %v5623, 64
    %v6886 = vpop.permute.xlu0 %6885
    %6887 = vrot.lane.b32.xlu0 %v5624, 64
    %v6888 = vpop.permute.xlu0 %6887
    %6889 = vrot.lane.b32.xlu0 %v5625, 64
    %v6890 = vpop.permute.xlu0 %6889
    %6891 = vrot.lane.b32.xlu0 %v5626, 64
    %v6892 = vpop.permute.xlu0 %6891
    %6893 = vrot.lane.b32.xlu0 %v5627, 64
    %v6894 = vpop.permute.xlu0 %6893
    %6895 = vrot.lane.b32.xlu0 %v5628, 64
    %v6896 = vpop.permute.xlu0 %6895
    %6897 = vrot.lane.b32.xlu0 %v5693, 64
    %v6898 = vpop.permute.xlu0 %6897
    %6899 = vrot.lane.b32.xlu0 %v5694, 64
    %v6900 = vpop.permute.xlu0 %6899
    %6901 = vrot.lane.b32.xlu0 %v5703, 64
    %v6902 = vpop.permute.xlu0 %6901
    %6903 = vrot.lane.b32.xlu0 %v5704, 64
    %v6904 = vpop.permute.xlu0 %6903
    %6905 = vrot.lane.b32.xlu0 %v5713, 64
    %v6906 = vpop.permute.xlu0 %6905
    %6907 = vrot.lane.b32.xlu0 %v5714, 64
    %v6908 = vpop.permute.xlu0 %6907
    %6909 = vrot.lane.b32.xlu0 %v5723, 64
    %v6910 = vpop.permute.xlu0 %6909
    %6911 = vrot.lane.b32.xlu0 %v5724, 64
    %v6912 = vpop.permute.xlu0 %6911
    %6933 = vrot.lane.b32.xlu0 %v5637, 80
    %v6934 = vpop.permute.xlu0 %6933
    %6935 = vrot.lane.b32.xlu0 %v5638, 80
    %v6936 = vpop.permute.xlu0 %6935
    %6937 = vrot.lane.b32.xlu0 %v5639, 80
    %v6938 = vpop.permute.xlu0 %6937
    %6939 = vrot.lane.b32.xlu0 %v5640, 80
    %v6940 = vpop.permute.xlu0 %6939
    %6941 = vrot.lane.b32.xlu0 %v5641, 80
    %v6942 = vpop.permute.xlu0 %6941
    %6943 = vrot.lane.b32.xlu0 %v5642, 80
    %v6944 = vpop.permute.xlu0 %6943
    %6945 = vrot.lane.b32.xlu0 %v5643, 80
    %v6946 = vpop.permute.xlu0 %6945
    %6947 = vrot.lane.b32.xlu0 %v5644, 80
    %v6948 = vpop.permute.xlu0 %6947
    %6949 = vrot.lane.b32.xlu0 %v5695, 80
    %v6950 = vpop.permute.xlu0 %6949
    %6951 = vrot.lane.b32.xlu0 %v5696, 80
    %v6952 = vpop.permute.xlu0 %6951
    %6953 = vrot.lane.b32.xlu0 %v5705, 80
    %v6954 = vpop.permute.xlu0 %6953
    %6955 = vrot.lane.b32.xlu0 %v5706, 80
    %v6956 = vpop.permute.xlu0 %6955
    %6957 = vrot.lane.b32.xlu0 %v5715, 80
    %v6958 = vpop.permute.xlu0 %6957
    %6959 = vrot.lane.b32.xlu0 %v5716, 80
    %v6960 = vpop.permute.xlu0 %6959
    %6961 = vrot.lane.b32.xlu0 %v5725, 80
    %v6962 = vpop.permute.xlu0 %6961
    %6963 = vrot.lane.b32.xlu0 %v5726, 80
    %v6964 = vpop.permute.xlu0 %6963
    %6983 = vrot.lane.b32.xlu0 %v5653, 96
    %v6984 = vpop.permute.xlu0 %6983
    %6985 = vrot.lane.b32.xlu0 %v5654, 96
    %v6986 = vpop.permute.xlu0 %6985
    %6987 = vrot.lane.b32.xlu0 %v5655, 96
    %v6988 = vpop.permute.xlu0 %6987
    %6989 = vrot.lane.b32.xlu0 %v5656, 96
    %v6990 = vpop.permute.xlu0 %6989
    %6991 = vrot.lane.b32.xlu0 %v5657, 96
    %v6992 = vpop.permute.xlu0 %6991
    %6993 = vrot.lane.b32.xlu0 %v5658, 96
    %v6994 = vpop.permute.xlu0 %6993
    %6995 = vrot.lane.b32.xlu0 %v5659, 96
    %v6996 = vpop.permute.xlu0 %6995
    %6997 = vrot.lane.b32.xlu0 %v5660, 96
    %v6998 = vpop.permute.xlu0 %6997
    %6999 = vrot.lane.b32.xlu0 %v5697, 96
    %v7000 = vpop.permute.xlu0 %6999
    %7001 = vrot.lane.b32.xlu0 %v5698, 96
    %v7002 = vpop.permute.xlu0 %7001
    %7003 = vrot.lane.b32.xlu0 %v5707, 96
    %v7004 = vpop.permute.xlu0 %7003
    %7005 = vrot.lane.b32.xlu0 %v5708, 96
    %v7006 = vpop.permute.xlu0 %7005
    %7007 = vrot.lane.b32.xlu0 %v5717, 96
    %v7008 = vpop.permute.xlu0 %7007
    %7009 = vrot.lane.b32.xlu0 %v5718, 96
    %v7010 = vpop.permute.xlu0 %7009
    %7011 = vrot.lane.b32.xlu0 %v5727, 96
    %v7012 = vpop.permute.xlu0 %7011
    %7013 = vrot.lane.b32.xlu0 %v5728, 96
    %v7014 = vpop.permute.xlu0 %7013
    %7033 = vrot.lane.b32.xlu0 %v5669, 112
    %v7034 = vpop.permute.xlu0 %7033
    %7035 = vrot.lane.b32.xlu0 %v5670, 112
    %v7036 = vpop.permute.xlu0 %7035
    %7037 = vrot.lane.b32.xlu0 %v5671, 112
    %v7038 = vpop.permute.xlu0 %7037
    %7039 = vrot.lane.b32.xlu0 %v5672, 112
    %v7040 = vpop.permute.xlu0 %7039
    %7041 = vrot.lane.b32.xlu0 %v5673, 112
    %v7042 = vpop.permute.xlu0 %7041
    %7043 = vrot.lane.b32.xlu0 %v5674, 112
    %v7044 = vpop.permute.xlu0 %7043
    %7045 = vrot.lane.b32.xlu0 %v5675, 112
    %v7046 = vpop.permute.xlu0 %7045
    %7047 = vrot.lane.b32.xlu0 %v5676, 112
    %v7048 = vpop.permute.xlu0 %7047
    %7049 = vrot.lane.b32.xlu0 %v5699, 112
    %v7050 = vpop.permute.xlu0 %7049
    %7051 = vrot.lane.b32.xlu0 %v5700, 112
    %v7052 = vpop.permute.xlu0 %7051
    %7053 = vrot.lane.b32.xlu0 %v5709, 112
    %v7054 = vpop.permute.xlu0 %7053
    %7055 = vrot.lane.b32.xlu0 %v5710, 112
    %v7056 = vpop.permute.xlu0 %7055
    %7057 = vrot.lane.b32.xlu0 %v5719, 112
    %v7058 = vpop.permute.xlu0 %7057
    %7059 = vrot.lane.b32.xlu0 %v5720, 112
    %v7060 = vpop.permute.xlu0 %7059
    %7061 = vrot.lane.b32.xlu0 %v5729, 112
    %v7062 = vpop.permute.xlu0 %7061
    %7063 = vrot.lane.b32.xlu0 %v5730, 112
    %v7064 = vpop.permute.xlu0 %7063
    %v7081 = vsel %vm706, %v5635, %v6732
    %v7082 = vsel %vm706, %v5636, %v6734
    %v7083 = vsel %vm706, %v5637, %v6736
    %v7084 = vsel %vm706, %v5638, %v6738
    %v7085 = vsel %vm706, %v5639, %v6740
    %v7086 = vsel %vm706, %v5640, %v6742
    %v7087 = vsel %vm706, %v5641, %v6744
    %v7088 = vsel %vm706, %v5642, %v6746
    %v7089 = vsel %vm706, %v5643, %v6748
    %v7090 = vsel %vm706, %v5644, %v6750
    %v7091 = vsel %vm706, %v5695, %v6752
    %v7092 = vsel %vm706, %v5696, %v6754
    %v7093 = vsel %vm706, %v5705, %v6756
    %v7094 = vsel %vm706, %v5706, %v6758
    %v7095 = vsel %vm706, %v5715, %v6760
    %v7096 = vsel %vm706, %v5716, %v6762
    %v7097 = vsel %vm2423, %v7081, %v6782
    %v7098 = vsel %vm2423, %v7082, %v6784
    %v7099 = vsel %vm2423, %v7083, %v6786
    %v7100 = vsel %vm2423, %v7084, %v6788
    %v7101 = vsel %vm2423, %v7085, %v6790
    %v7102 = vsel %vm2423, %v7086, %v6792
    %v7103 = vsel %vm2423, %v7087, %v6794
    %v7104 = vsel %vm2423, %v7088, %v6796
    %v7105 = vsel %vm2423, %v7089, %v6798
    %v7106 = vsel %vm2423, %v7090, %v6800
    %v7107 = vsel %vm2423, %v7091, %v6802
    %v7108 = vsel %vm2423, %v7092, %v6804
    %v7109 = vsel %vm2423, %v7093, %v6806
    %v7110 = vsel %vm2423, %v7094, %v6808
    %v7111 = vsel %vm2423, %v7095, %v6810
    %v7112 = vsel %vm2423, %v7096, %v6812
    %v7113 = vsel %vm2440, %v7097, %v6832
    %v7114 = vsel %vm2440, %v7098, %v6834
    %v7115 = vsel %vm2440, %v7099, %v6836
    %v7116 = vsel %vm2440, %v7100, %v6838
    %v7117 = vsel %vm2440, %v7101, %v6840
    %v7118 = vsel %vm2440, %v7102, %v6842
    %v7119 = vsel %vm2440, %v7103, %v6844
    %v7120 = vsel %vm2440, %v7104, %v6846
    %v7121 = vsel %vm2440, %v7105, %v6848
    %v7122 = vsel %vm2440, %v7106, %v6850
    %v7123 = vsel %vm2440, %v7107, %v6852
    %v7124 = vsel %vm2440, %v7108, %v6854
    %v7125 = vsel %vm2440, %v7109, %v6856
    %v7126 = vsel %vm2440, %v7110, %v6858
    %v7127 = vsel %vm2440, %v7111, %v6860
    %v7128 = vsel %vm2440, %v7112, %v6862
    %v7129 = vsel %vm2457, %v7113, %v6882
    %v7130 = vsel %vm2457, %v7114, %v6884
    %v7131 = vsel %vm2457, %v7115, %v6886
    %v7132 = vsel %vm2457, %v7116, %v6888
    %v7133 = vsel %vm2457, %v7117, %v6890
    %v7134 = vsel %vm2457, %v7118, %v6892
    %v7135 = vsel %vm2457, %v7119, %v6894
    %v7136 = vsel %vm2457, %v7120, %v6896
    %v7137 = vsel %vm2457, %v7121, %v6898
    %v7138 = vsel %vm2457, %v7122, %v6900
    %v7139 = vsel %vm2457, %v7123, %v6902
    %v7140 = vsel %vm2457, %v7124, %v6904
    %v7141 = vsel %vm2457, %v7125, %v6906
    %v7142 = vsel %vm2457, %v7126, %v6908
    %v7143 = vsel %vm2457, %v7127, %v6910
    %v7144 = vsel %vm2457, %v7128, %v6912
    %v7145 = vsel %vm2474, %v7129, %v6934
    %v7146 = vsel %vm2474, %v7130, %v6936
    %v7147 = vsel %vm2474, %v7131, %v6938
    %v7148 = vsel %vm2474, %v7132, %v6940
    %v7149 = vsel %vm2474, %v7133, %v6942
    %v7150 = vsel %vm2474, %v7134, %v6944
    %v7151 = vsel %vm2474, %v7135, %v6946
    %v7152 = vsel %vm2474, %v7136, %v6948
    %v7153 = vsel %vm2474, %v7137, %v6950
    %v7154 = vsel %vm2474, %v7138, %v6952
    %v7155 = vsel %vm2474, %v7139, %v6954
    %v7156 = vsel %vm2474, %v7140, %v6956
    %v7157 = vsel %vm2474, %v7141, %v6958
    %v7158 = vsel %vm2474, %v7142, %v6960
    %v7159 = vsel %vm2474, %v7143, %v6962
    %v7160 = vsel %vm2474, %v7144, %v6964
    %v7161 = vsel %vm2491, %v7145, %v6984
    %v7162 = vsel %vm2491, %v7146, %v6986
    %v7163 = vsel %vm2491, %v7147, %v6988
    %v7164 = vsel %vm2491, %v7148, %v6990
    %v7165 = vsel %vm2491, %v7149, %v6992
    %v7166 = vsel %vm2491, %v7150, %v6994
    %v7167 = vsel %vm2491, %v7151, %v6996
    %v7168 = vsel %vm2491, %v7152, %v6998
    %v7169 = vsel %vm2491, %v7153, %v7000
    %v7170 = vsel %vm2491, %v7154, %v7002
    %v7171 = vsel %vm2491, %v7155, %v7004
    %v7172 = vsel %vm2491, %v7156, %v7006
    %v7173 = vsel %vm2491, %v7157, %v7008
    %v7174 = vsel %vm2491, %v7158, %v7010
    %v7175 = vsel %vm2491, %v7159, %v7012
    %v7176 = vsel %vm2491, %v7160, %v7014
    %v7177 = vsel %vm2508, %v7161, %v7034
    %v7178 = vsel %vm2508, %v7162, %v7036
    %v7179 = vsel %vm2508, %v7163, %v7038
    %v7180 = vsel %vm2508, %v7164, %v7040
    %v7181 = vsel %vm2508, %v7165, %v7042
    %v7182 = vsel %vm2508, %v7166, %v7044
    %v7183 = vsel %vm2508, %v7167, %v7046
    %v7184 = vsel %vm2508, %v7168, %v7048
    %v7185 = vsel %vm2508, %v7169, %v7050
    %v7186 = vsel %vm2508, %v7170, %v7052
    %v7187 = vsel %vm2508, %v7171, %v7054
    %v7188 = vsel %vm2508, %v7172, %v7056
    %v7189 = vsel %vm2508, %v7173, %v7058
    %v7190 = vsel %vm2508, %v7174, %v7060
    %v7191 = vsel %vm2508, %v7175, %v7062
    %v7192 = vsel %vm2508, %v7176, %v7064
    %v7193 = vpack.c.bf16 %v6602, %v6601
    %v7194 = vpack.c.bf16 %v6714, %v6713
    %v7195 = vpack.c.bf16 %v7178, %v7177
    %v7196 = vpack.c.bf16 %v5686, %v5685
    %v7197 = vpack.c.bf16 %v6604, %v6603
    %v7198 = vpack.c.bf16 %v6716, %v6715
    %v7199 = vpack.c.bf16 %v7180, %v7179
    %v7200 = vpack.c.bf16 %v5688, %v5687
    %v7201 = vpack.c.bf16 %v6606, %v6605
    %v7202 = vpack.c.bf16 %v6718, %v6717
    %v7203 = vpack.c.bf16 %v7182, %v7181
    %v7204 = vpack.c.bf16 %v5690, %v5689
    %v7205 = vpack.c.bf16 %v6608, %v6607
    %v7206 = vpack.c.bf16 %v6720, %v6719
    %v7207 = vpack.c.bf16 %v7184, %v7183
    %v7208 = vpack.c.bf16 %v5692, %v5691
    %v7209 = vpack.c.bf16 %v6610, %v6609
    %v7210 = vpack.c.bf16 %v6722, %v6721
    %v7211 = vpack.c.bf16 %v7186, %v7185
    %v7212 = vpack.c.bf16 %v5702, %v5701
    %v7213 = vpack.c.bf16 %v6612, %v6611
    %v7214 = vpack.c.bf16 %v6724, %v6723
    %v7215 = vpack.c.bf16 %v7188, %v7187
    %v7216 = vpack.c.bf16 %v5712, %v5711
    %v7217 = vpack.c.bf16 %v6614, %v6613
    %v7218 = vpack.c.bf16 %v6726, %v6725
    %v7219 = vpack.c.bf16 %v7190, %v7189
    %v7220 = vpack.c.bf16 %v5722, %v5721
    %v7221 = vpack.c.bf16 %v6616, %v6615
    %v7222 = vpack.c.bf16 %v6728, %v6727
    %v7223 = vpack.c.bf16 %v7192, %v7191
    %v7224 = vpack.c.bf16 %v5732, %v5731
    %v7225 = vld [vmem:[%s4] sm:$0xf]
    %v7226 = vld [vmem:[%s4 + $0x4] sm:$0xf]
    %v7227 = vld [vmem:[%s4 + $0x8] sm:$0xf]
    %v7228 = vld [vmem:[%s4 + $0xc] sm:$0xf]
    %v7229 = vld [vmem:[%s4 + $0x10] sm:$0xf]
    %v7230 = vld [vmem:[%s4 + $0x14] sm:$0xf]
    %v7231 = vld [vmem:[%s4 + $0x18] sm:$0xf]
    %v7232 = vld [vmem:[%s4 + $0x1c] sm:$0xf]
    %v7233 = vld [vmem:[%s4 + $0x20] sm:$0xf]
    %v7234 = vld [vmem:[%s4 + $0x24] sm:$0xf]
    %v7235 = vld [vmem:[%s4 + $0x28] sm:$0xf]
    %v7236 = vld [vmem:[%s4 + $0x2c] sm:$0xf]
    %v7237 = vld [vmem:[%s4 + $0x30] sm:$0xf]
    %v7238 = vld [vmem:[%s4 + $0x34] sm:$0xf]
    %v7239 = vld [vmem:[%s4 + $0x38] sm:$0xf]
    %v7240 = vld [vmem:[%s4 + $0x3c] sm:$0xf]
    %v7241 = vld [vmem:[%s4 + $0x40] sm:$0xf]
    %v7242 = vld [vmem:[%s4 + $0x44] sm:$0xf]
    %v7243 = vld [vmem:[%s4 + $0x48] sm:$0xf]
    %v7244 = vld [vmem:[%s4 + $0x4c] sm:$0xf]
    %v7245 = vld [vmem:[%s4 + $0x50] sm:$0xf]
    %v7246 = vld [vmem:[%s4 + $0x54] sm:$0xf]
    %v7247 = vld [vmem:[%s4 + $0x58] sm:$0xf]
    %v7248 = vld [vmem:[%s4 + $0x5c] sm:$0xf]
    %v7249 = vld [vmem:[%s4 + $0x60] sm:$0xf]
    %v7250 = vld [vmem:[%s4 + $0x64] sm:$0xf]
    %v7251 = vld [vmem:[%s4 + $0x68] sm:$0xf]
    %v7252 = vld [vmem:[%s4 + $0x6c] sm:$0xf]
    %v7253 = vld [vmem:[%s4 + $0x70] sm:$0xf]
    %v7254 = vld [vmem:[%s4 + $0x74] sm:$0xf]
    %v7255 = vld [vmem:[%s4 + $0x78] sm:$0xf]
    %v7256 = vld [vmem:[%s4 + $0x7c] sm:$0xf]
    %v7257 = vld [vmem:[%s4 + $0x80] sm:$0xf]
    %v7258 = vld [vmem:[%s4 + $0x84] sm:$0xf]
    %v7259 = vld [vmem:[%s4 + $0x88] sm:$0xf]
    %v7260 = vld [vmem:[%s4 + $0x8c] sm:$0xf]
    %v7261 = vld [vmem:[%s4 + $0x90] sm:$0xf]
    %v7262 = vld [vmem:[%s4 + $0x94] sm:$0xf]
    %v7263 = vld [vmem:[%s4 + $0x98] sm:$0xf]
    %v7264 = vld [vmem:[%s4 + $0x9c] sm:$0xf]
    %v7265 = vld [vmem:[%s4 + $0xa0] sm:$0xf]
    %v7266 = vld [vmem:[%s4 + $0xa4] sm:$0xf]
    %v7267 = vld [vmem:[%s4 + $0xa8] sm:$0xf]
    %v7268 = vld [vmem:[%s4 + $0xac] sm:$0xf]
    %v7269 = vld [vmem:[%s4 + $0xb0] sm:$0xf]
    %v7270 = vld [vmem:[%s4 + $0xb4] sm:$0xf]
    %v7271 = vld [vmem:[%s4 + $0xb8] sm:$0xf]
    %v7272 = vld [vmem:[%s4 + $0xbc] sm:$0xf]
    %v7273 = vld [vmem:[%s4 + $0xc0] sm:$0xf]
    %v7274 = vld [vmem:[%s4 + $0xc4] sm:$0xf]
    %v7325 = vunpack.c.l.b16 %v7225
    %v7326 = vunpack.c.l.b16 %v7226
    %v7327 = vunpack.c.l.b16 %v7227
    %v7328 = vunpack.c.l.b16 %v7228
    %v7329 = vunpack.c.l.b16 %v7229
    %v7330 = vunpack.c.l.b16 %v7230
    %v7331 = vunpack.c.l.b16 %v7231
    %v7332 = vunpack.c.l.b16 %v7232
    %v7333 = vunpack.c.l.b16 %v7233
    %v7334 = vunpack.c.l.b16 %v7234
    %v7335 = vunpack.c.l.b16 %v7235
    %v7336 = vunpack.c.l.b16 %v7236
    %v7337 = vunpack.c.l.b16 %v7237
    %v7338 = vunpack.c.l.b16 %v7238
    %v7339 = vunpack.c.l.b16 %v7239
    %v7340 = vunpack.c.l.b16 %v7240
    %v7341 = vunpack.c.l.b16 %v7241
    %v7342 = vunpack.c.l.b16 %v7242
    %v7343 = vunpack.c.l.b16 %v7243
    %v7344 = vunpack.c.l.b16 %v7244
    %v7345 = vunpack.c.l.b16 %v7245
    %v7346 = vunpack.c.l.b16 %v7246
    %v7347 = vunpack.c.l.b16 %v7247
    %v7348 = vunpack.c.l.b16 %v7248
    %v7349 = vunpack.c.l.b16 %v7249
    %v7350 = vunpack.c.l.b16 %v7250
    %v7351 = vunpack.c.l.b16 %v7251
    %v7352 = vunpack.c.l.b16 %v7252
    %v7353 = vunpack.c.l.b16 %v7253
    %v7354 = vunpack.c.l.b16 %v7254
    %v7355 = vunpack.c.l.b16 %v7255
    %v7356 = vunpack.c.l.b16 %v7256
    %v7357 = vunpack.c.l.b16 %v7257
    %v7358 = vunpack.c.l.b16 %v7258
    %v7359 = vunpack.c.l.b16 %v7259
    %v7360 = vunpack.c.l.b16 %v7260
    %v7361 = vunpack.c.l.b16 %v7261
    %v7362 = vunpack.c.l.b16 %v7262
    %v7363 = vunpack.c.l.b16 %v7263
    %v7364 = vunpack.c.l.b16 %v7264
    %v7365 = vunpack.c.l.b16 %v7265
    %v7366 = vunpack.c.l.b16 %v7266
    %v7367 = vunpack.c.l.b16 %v7267
    %v7368 = vunpack.c.l.b16 %v7268
    %v7369 = vunpack.c.l.b16 %v7269
    %v7370 = vunpack.c.l.b16 %v7270
    %v7371 = vunpack.c.l.b16 %v7271
    %v7372 = vunpack.c.l.b16 %v7272
    %v7373 = vunpack.c.l.b16 %v7273
    %v7374 = vunpack.c.l.b16 %v7274
    %v7375 = vpack.c.b16 %v7326, %v7325
    %v7376 = vpack.c.b16 %v7328, %v7327
    %v7377 = vpack.c.b16 %v7330, %v7329
    %v7378 = vpack.c.b16 %v7332, %v7331
    %v7379 = vpack.c.b16 %v7334, %v7333
    %v7380 = vpack.c.b16 %v7336, %v7335
    %v7381 = vpack.c.b16 %v7338, %v7337
    %v7382 = vpack.c.b16 %v7340, %v7339
    %v7383 = vpack.c.b16 %v7342, %v7341
    %v7384 = vpack.c.b16 %v7344, %v7343
    %v7385 = vpack.c.b16 %v7346, %v7345
    %v7386 = vpack.c.b16 %v7348, %v7347
    %v7387 = vpack.c.b16 %v7350, %v7349
    %v7388 = vpack.c.b16 %v7352, %v7351
    %v7389 = vpack.c.b16 %v7354, %v7353
    %v7390 = vpack.c.b16 %v7356, %v7355
    %v7391 = vpack.c.b16 %v7358, %v7357
    %v7392 = vpack.c.b16 %v7360, %v7359
    %v7393 = vpack.c.b16 %v7362, %v7361
    %v7394 = vpack.c.b16 %v7364, %v7363
    %v7395 = vpack.c.b16 %v7366, %v7365
    %v7396 = vpack.c.b16 %v7368, %v7367
    %v7397 = vpack.c.b16 %v7370, %v7369
    %v7398 = vpack.c.b16 %v7372, %v7371
    %v7399 = vpack.c.b16 %v7374, %v7373
    %v7426 = vsel %vm706, %v7196, 0
    %v7429 = vsel %vm706, %v7200, 0
    %v7432 = vsel %vm706, %v7204, 0
    %v7435 = vsel %vm706, %v7208, 0
    %v7438 = vsel %vm706, %v7212, 0
    %v7441 = vsel %vm706, %v7216, 0
    %v7444 = vsel %vm706, %v7220, 0
    %v7447 = vsel %vm706, %v7224, 0
    %7449 = vmatprep.subr.bf16.mxu0 0
    %7450 = vmatpush1.bf16.msra.mxu0 %v7375
    %7451 = vmatprep.subr.bf16.mxu0 0
    %7452 = vmatpush1.bf16.msra.mxu0 %v7376
    %7453 = vmatprep.subr.bf16.mxu0 0
    %7454 = vmatpush1.bf16.msra.mxu0 %v7377
    %7455 = vmatprep.subr.bf16.mxu0 0
    %7456 = vmatpush1.bf16.msra.mxu0 %v7378
    %7457 = vmatprep.subr.bf16.mxu0 0
    %7458 = vmatpush1.bf16.msra.mxu0 %v7379
    %7459 = vmatprep.subr.bf16.mxu0 0
    %7460 = vmatpush1.bf16.msra.mxu0 %v7380
    %7461 = vmatprep.subr.bf16.mxu0 0
    %7462 = vmatpush1.bf16.msra.mxu0 %v7381
    %7463 = vmatprep.subr.bf16.mxu0 0
    %7464 = vmatpush1.bf16.msra.mxu0 %v7382
    %7465 = vmatprep.subr.bf16.mxu0 0
    %7466 = vmatpush1.bf16.msra.mxu0 %v7383
    %7467 = vmatprep.subr.bf16.mxu0 0
    %7468 = vmatpush1.bf16.msra.mxu0 %v7384
    %7469 = vmatprep.subr.bf16.mxu0 0
    %7470 = vmatpush1.bf16.msra.mxu0 %v7385
    %7471 = vmatprep.subr.bf16.mxu0 0
    %7472 = vmatpush1.bf16.msra.mxu0 %v7386
    %7473 = vmatprep.subr.bf16.mxu0 0
    %7474 = vmatpush1.bf16.msra.mxu0 %v7387
    %7475 = vmatprep.subr.bf16.mxu0 0
    %7476 = vmatpush1.bf16.msra.mxu0 %v7388
    %7477 = vmatprep.subr.bf16.mxu0 0
    %7478 = vmatpush1.bf16.msra.mxu0 %v7389
    %7479 = vmatprep.subr.bf16.mxu0 0
    %7480 = vmatpush1.bf16.msra.mxu0 %v7390
    %7481 = vmatprep.mubr.bf16.mxu0 %v7194
    %7482 = vmatmul.mubr.bf16.gmra.mrb[0].mxu0 %v7193
    %v7483 = vpop.f32.mrb[0].mxu0
    %v7484 = vadd.f32 0.0, %v7483
    %v7485 = vpop.f32.mrb[0].mxu0
    %v7486 = vpop.f32.mrb[0].mxu0
    %v7487 = vadd.f32 0.0, %v7486
    %v7488 = vpop.f32.mrb[0].mxu0
    %7489 = vmatprep.mubr.bf16.mxu0 %v7198
    %7490 = vmatmul.mubr.bf16.gmra.mrb[0].mxu0 %v7197
    %v7491 = vpop.f32.mrb[0].mxu0
    %v7492 = vadd.f32 0.0, %v7491
    %v7493 = vpop.f32.mrb[0].mxu0
    %v7494 = vpop.f32.mrb[0].mxu0
    %v7495 = vadd.f32 0.0, %v7494
    %v7496 = vpop.f32.mrb[0].mxu0
    %7497 = vmatprep.mubr.bf16.mxu0 %v7202
    %7498 = vmatmul.mubr.bf16.gmra.mrb[0].mxu0 %v7201
    %v7499 = vpop.f32.mrb[0].mxu0
    %v7500 = vadd.f32 0.0, %v7499
    %v7501 = vpop.f32.mrb[0].mxu0
    %v7502 = vpop.f32.mrb[0].mxu0
    %v7503 = vadd.f32 0.0, %v7502
    %v7504 = vpop.f32.mrb[0].mxu0
    %7505 = vmatprep.mubr.bf16.mxu0 %v7206
    %7506 = vmatmul.mubr.bf16.gmra.mrb[0].mxu0 %v7205
    %v7507 = vpop.f32.mrb[0].mxu0
    %v7508 = vadd.f32 0.0, %v7507
    %v7509 = vpop.f32.mrb[0].mxu0
    %v7510 = vpop.f32.mrb[0].mxu0
    %v7511 = vadd.f32 0.0, %v7510
    %v7512 = vpop.f32.mrb[0].mxu0
    %7513 = vmatprep.mubr.bf16.mxu0 %v7210
    %7514 = vmatmul.mubr.bf16.gmra.mrb[0].mxu0 %v7209
    %v7515 = vpop.f32.mrb[0].mxu0
    %v7516 = vadd.f32 0.0, %v7515
    %v7517 = vpop.f32.mrb[0].mxu0
    %v7518 = vpop.f32.mrb[0].mxu0
    %v7519 = vadd.f32 0.0, %v7518
    %v7520 = vpop.f32.mrb[0].mxu0
    %7521 = vmatprep.mubr.bf16.mxu0 %v7214
    %7522 = vmatmul.mubr.bf16.gmra.mrb[0].mxu0 %v7213
    %v7523 = vpop.f32.mrb[0].mxu0
    %v7524 = vadd.f32 0.0, %v7523
    %v7525 = vpop.f32.mrb[0].mxu0
    %v7526 = vpop.f32.mrb[0].mxu0
    %v7527 = vadd.f32 0.0, %v7526
    %v7528 = vpop.f32.mrb[0].mxu0
    %7529 = vmatprep.mubr.bf16.mxu0 %v7218
    %7530 = vmatmul.mubr.bf16.gmra.mrb[0].mxu0 %v7217
    %v7531 = vpop.f32.mrb[0].mxu0
    %v7532 = vadd.f32 0.0, %v7531
    %v7533 = vpop.f32.mrb[0].mxu0
    %v7534 = vpop.f32.mrb[0].mxu0
    %v7535 = vadd.f32 0.0, %v7534
    %v7536 = vpop.f32.mrb[0].mxu0
    %7537 = vmatprep.mubr.bf16.mxu0 %v7222
    %7538 = vmatmul.mubr.bf16.gmra.mrb[0].mxu0 %v7221
    %v7539 = vpop.f32.mrb[0].mxu0
    %v7540 = vadd.f32 0.0, %v7539
    %v7541 = vpop.f32.mrb[0].mxu0
    %v7542 = vpop.f32.mrb[0].mxu0
    %v7543 = vadd.f32 0.0, %v7542
    %v7544 = vpop.f32.mrb[0].mxu0
    %7545 = vdwg.mxu0
    %7546 = vmatprep.subr.bf16.mxu0 0
    %7547 = vmatpush1.bf16.msra.mxu0 %v7391
    %7548 = vmatprep.subr.bf16.mxu0 0
    %7549 = vmatpush1.bf16.msra.mxu0 %v7392
    %7550 = vmatprep.subr.bf16.mxu0 0
    %7551 = vmatpush1.bf16.msra.mxu0 %v7393
    %7552 = vmatprep.subr.bf16.mxu0 0
    %7553 = vmatpush1.bf16.msra.mxu0 %v7394
    %7554 = vmatprep.subr.bf16.mxu0 0
    %7555 = vmatpush1.bf16.msra.mxu0 %v7395
    %7556 = vmatprep.subr.bf16.mxu0 0
    %7557 = vmatpush1.bf16.msra.mxu0 %v7396
    %7558 = vmatprep.subr.bf16.mxu0 0
    %7559 = vmatpush1.bf16.msra.mxu0 %v7397
    %7560 = vmatprep.subr.bf16.mxu0 0
    %7561 = vmatpush1.bf16.msra.mxu0 %v7398
    %7562 = vmatprep.subr.bf16.mxu0 0
    %7563 = vmatpush1.bf16.msra.mxu0 %v7399
    %7564 = vmatprep.subr.bf16.mxu0 0
    %7565 = vmatpush1.bf16.msra.mxu0 0
    %7566 = vmatprep.subr.bf16.mxu0 0
    %7567 = vmatpush1.bf16.msra.mxu0 0
    %7568 = vmatprep.subr.bf16.mxu0 0
    %7569 = vmatpush1.bf16.msra.mxu0 0
    %7570 = vmatprep.subr.bf16.mxu0 0
    %7571 = vmatpush1.bf16.msra.mxu0 0
    %7572 = vmatprep.subr.bf16.mxu0 0
    %7573 = vmatpush1.bf16.msra.mxu0 0
    %7574 = vmatprep.subr.bf16.mxu0 0
    %7575 = vmatpush1.bf16.msra.mxu0 0
    %7576 = vmatprep.subr.bf16.mxu0 0
    %7577 = vmatpush1.bf16.msra.mxu0 0
    %7578 = vmatprep.mubr.bf16.mxu0 %v7426
    %7579 = vmatmul.mubr.bf16.gmra.mrb[0].mxu0 %v7195
    %v7580 = vpop.f32.mrb[0].mxu0
    %v7581 = vadd.f32 %v7484, %v7580
    %v7582 = vpop.f32.mrb[0].mxu0
    %v7583 = vpop.f32.mrb[0].mxu0
    %v7584 = vadd.f32 %v7487, %v7583
    %v7585 = vpop.f32.mrb[0].mxu0
    %7586 = vmatprep.mubr.bf16.mxu0 %v7429
    %7587 = vmatmul.mubr.bf16.gmra.mrb[0].mxu0 %v7199
    %v7588 = vpop.f32.mrb[0].mxu0
    %v7589 = vadd.f32 %v7492, %v7588
    %v7590 = vpop.f32.mrb[0].mxu0
    %v7591 = vpop.f32.mrb[0].mxu0
    %v7592 = vadd.f32 %v7495, %v7591
    %v7593 = vpop.f32.mrb[0].mxu0
    %7594 = vmatprep.mubr.bf16.mxu0 %v7432
    %7595 = vmatmul.mubr.bf16.gmra.mrb[0].mxu0 %v7203
    %v7596 = vpop.f32.mrb[0].mxu0
    %v7597 = vadd.f32 %v7500, %v7596
    %v7598 = vpop.f32.mrb[0].mxu0
    %v7599 = vpop.f32.mrb[0].mxu0
    %v7600 = vadd.f32 %v7503, %v7599
    %v7601 = vpop.f32.mrb[0].mxu0
    %7602 = vmatprep.mubr.bf16.mxu0 %v7435
    %7603 = vmatmul.mubr.bf16.gmra.mrb[0].mxu0 %v7207
    %v7604 = vpop.f32.mrb[0].mxu0
    %v7605 = vadd.f32 %v7508, %v7604
    %v7606 = vpop.f32.mrb[0].mxu0
    %v7607 = vpop.f32.mrb[0].mxu0
    %v7608 = vadd.f32 %v7511, %v7607
    %v7609 = vpop.f32.mrb[0].mxu0
    %7610 = vmatprep.mubr.bf16.mxu0 %v7438
    %7611 = vmatmul.mubr.bf16.gmra.mrb[0].mxu0 %v7211
    %v7612 = vpop.f32.mrb[0].mxu0
    %v7613 = vadd.f32 %v7516, %v7612
    %v7614 = vpop.f32.mrb[0].mxu0
    %v7615 = vpop.f32.mrb[0].mxu0
    %v7616 = vadd.f32 %v7519, %v7615
    %v7617 = vpop.f32.mrb[0].mxu0
    %7618 = vmatprep.mubr.bf16.mxu0 %v7441
    %7619 = vmatmul.mubr.bf16.gmra.mrb[0].mxu0 %v7215
    %v7620 = vpop.f32.mrb[0].mxu0
    %v7621 = vadd.f32 %v7524, %v7620
    %v7622 = vpop.f32.mrb[0].mxu0
    %v7623 = vpop.f32.mrb[0].mxu0
    %v7624 = vadd.f32 %v7527, %v7623
    %v7625 = vpop.f32.mrb[0].mxu0
    %7626 = vmatprep.mubr.bf16.mxu0 %v7444
    %7627 = vmatmul.mubr.bf16.gmra.mrb[0].mxu0 %v7219
    %v7628 = vpop.f32.mrb[0].mxu0
    %v7629 = vadd.f32 %v7532, %v7628
    %v7630 = vpop.f32.mrb[0].mxu0
    %v7631 = vpop.f32.mrb[0].mxu0
    %v7632 = vadd.f32 %v7535, %v7631
    %v7633 = vpop.f32.mrb[0].mxu0
    %7634 = vmatprep.mubr.bf16.mxu0 %v7447
    %7635 = vmatmul.mubr.bf16.gmra.mrb[0].mxu0 %v7223
    %v7636 = vpop.f32.mrb[0].mxu0
    %v7637 = vadd.f32 %v7540, %v7636
    %v7638 = vpop.f32.mrb[0].mxu0
    %v7639 = vpop.f32.mrb[0].mxu0
    %v7640 = vadd.f32 %v7543, %v7639
    %v7641 = vpop.f32.mrb[0].mxu0
    %7642 = vdwg.mxu0
    %7643 = vst.msk [vmem:[#allocation3 + $0x100] sm:$0xff] %vm2423, %v7581
    %7644 = vst.msk [vmem:[#allocation3 + $0x108] sm:$0xff] %vm2423, %v7584
    %7645 = vst.msk [vmem:[#allocation3 + $0x110] sm:$0xff] %vm2423, %v7589
    %7646 = vst.msk [vmem:[#allocation3 + $0x118] sm:$0xff] %vm2423, %v7592
    %7647 = vst.msk [vmem:[#allocation3 + $0x120] sm:$0xff] %vm2423, %v7597
    %7648 = vst.msk [vmem:[#allocation3 + $0x128] sm:$0xff] %vm2423, %v7600
    %7649 = vst.msk [vmem:[#allocation3 + $0x130] sm:$0xff] %vm2423, %v7605
    %7650 = vst.msk [vmem:[#allocation3 + $0x138] sm:$0xff] %vm2423, %v7608
    %7651 = vst.msk [vmem:[#allocation3 + $0x140] sm:$0xff] %vm2423, %v7613
    %7652 = vst.msk [vmem:[#allocation3 + $0x148] sm:$0xff] %vm2423, %v7616
    %7653 = vst.msk [vmem:[#allocation3 + $0x150] sm:$0xff] %vm2423, %v7621
    %7654 = vst.msk [vmem:[#allocation3 + $0x158] sm:$0xff] %vm2423, %v7624
    %7655 = vst.msk [vmem:[#allocation3 + $0x160] sm:$0xff] %vm2423, %v7629
    %7656 = vst.msk [vmem:[#allocation3 + $0x168] sm:$0xff] %vm2423, %v7632
    %7657 = vst.msk [vmem:[#allocation3 + $0x170] sm:$0xff] %vm2423, %v7637
    %7658 = vst.msk [vmem:[#allocation3 + $0x178] sm:$0xff] %vm2423, %v7640
    %v7659 = vld [vmem:[#allocation2 + $0x180] sm:$0xff]
    %v7660 = vld [vmem:[#allocation2 + $0x188] sm:$0xff]
    %v7661 = vld [vmem:[#allocation2 + $0x190] sm:$0xff]
    %v7662 = vld [vmem:[#allocation2 + $0x198] sm:$0xff]
    %v7663 = vld [vmem:[#allocation2 + $0x1a0] sm:$0xff]
    %v7664 = vld [vmem:[#allocation2 + $0x1a8] sm:$0xff]
    %v7665 = vld [vmem:[#allocation2 + $0x1b0] sm:$0xff]
    %v7666 = vld [vmem:[#allocation2 + $0x1b8] sm:$0xff]
    %v7667 = vld [vmem:[#allocation2 + $0x1c0] sm:$0xff]
    %v7668 = vld [vmem:[#allocation2 + $0x1c8] sm:$0xff]
    %v7669 = vld [vmem:[#allocation2 + $0x1d0] sm:$0xff]
    %v7670 = vld [vmem:[#allocation2 + $0x1d8] sm:$0xff]
    %v7671 = vld [vmem:[#allocation2 + $0x1e0] sm:$0xff]
    %v7672 = vld [vmem:[#allocation2 + $0x1e8] sm:$0xff]
    %v7673 = vld [vmem:[#allocation2 + $0x1f0] sm:$0xff]
    %v7674 = vld [vmem:[#allocation2 + $0x1f8] sm:$0xff]
    %v7675 = vld [vmem:[#allocation2 + $0x181] sm:$0xff]
    %v7676 = vld [vmem:[#allocation2 + $0x189] sm:$0xff]
    %v7677 = vld [vmem:[#allocation2 + $0x191] sm:$0xff]
    %v7678 = vld [vmem:[#allocation2 + $0x199] sm:$0xff]
    %v7679 = vld [vmem:[#allocation2 + $0x1a1] sm:$0xff]
    %v7680 = vld [vmem:[#allocation2 + $0x1a9] sm:$0xff]
    %v7681 = vld [vmem:[#allocation2 + $0x1b1] sm:$0xff]
    %v7682 = vld [vmem:[#allocation2 + $0x1b9] sm:$0xff]
    %v7683 = vld [vmem:[#allocation2 + $0x1c1] sm:$0xff]
    %v7684 = vld [vmem:[#allocation2 + $0x1c9] sm:$0xff]
    %v7685 = vld [vmem:[#allocation2 + $0x1d1] sm:$0xff]
    %v7686 = vld [vmem:[#allocation2 + $0x1d9] sm:$0xff]
    %v7687 = vld [vmem:[#allocation2 + $0x1e1] sm:$0xff]
    %v7688 = vld [vmem:[#allocation2 + $0x1e9] sm:$0xff]
    %v7689 = vld [vmem:[#allocation2 + $0x1f1] sm:$0xff]
    %v7690 = vld [vmem:[#allocation2 + $0x1f9] sm:$0xff]
    %v7691 = vld [vmem:[#allocation2 + $0x182] sm:$0xff]
    %v7692 = vld [vmem:[#allocation2 + $0x18a] sm:$0xff]
    %v7693 = vld [vmem:[#allocation2 + $0x192] sm:$0xff]
    %v7694 = vld [vmem:[#allocation2 + $0x19a] sm:$0xff]
    %v7695 = vld [vmem:[#allocation2 + $0x1a2] sm:$0xff]
    %v7696 = vld [vmem:[#allocation2 + $0x1aa] sm:$0xff]
    %v7697 = vld [vmem:[#allocation2 + $0x1b2] sm:$0xff]
    %v7698 = vld [vmem:[#allocation2 + $0x1ba] sm:$0xff]
    %v7699 = vld [vmem:[#allocation2 + $0x1c2] sm:$0xff]
    %v7700 = vld [vmem:[#allocation2 + $0x1ca] sm:$0xff]
    %v7701 = vld [vmem:[#allocation2 + $0x1d2] sm:$0xff]
    %v7702 = vld [vmem:[#allocation2 + $0x1da] sm:$0xff]
    %v7703 = vld [vmem:[#allocation2 + $0x1e2] sm:$0xff]
    %v7704 = vld [vmem:[#allocation2 + $0x1ea] sm:$0xff]
    %v7705 = vld [vmem:[#allocation2 + $0x1f2] sm:$0xff]
    %v7706 = vld [vmem:[#allocation2 + $0x1fa] sm:$0xff]
    %v7707 = vld [vmem:[#allocation2 + $0x183] sm:$0xff]
    %v7708 = vld [vmem:[#allocation2 + $0x18b] sm:$0xff]
    %v7709 = vld [vmem:[#allocation2 + $0x193] sm:$0xff]
    %v7710 = vld [vmem:[#allocation2 + $0x19b] sm:$0xff]
    %v7711 = vld [vmem:[#allocation2 + $0x1a3] sm:$0xff]
    %v7712 = vld [vmem:[#allocation2 + $0x1ab] sm:$0xff]
    %v7713 = vld [vmem:[#allocation2 + $0x1b3] sm:$0xff]
    %v7714 = vld [vmem:[#allocation2 + $0x1bb] sm:$0xff]
    %v7715 = vld [vmem:[#allocation2 + $0x1c3] sm:$0xff]
    %v7716 = vld [vmem:[#allocation2 + $0x1cb] sm:$0xff]
    %v7717 = vld [vmem:[#allocation2 + $0x1d3] sm:$0xff]
    %v7718 = vld [vmem:[#allocation2 + $0x1db] sm:$0xff]
    %v7719 = vld [vmem:[#allocation2 + $0x1e3] sm:$0xff]
    %v7720 = vld [vmem:[#allocation2 + $0x1eb] sm:$0xff]
    %v7721 = vld [vmem:[#allocation2 + $0x1f3] sm:$0xff]
    %v7722 = vld [vmem:[#allocation2 + $0x1fb] sm:$0xff]
    %v7723 = vld [vmem:[#allocation2 + $0x184] sm:$0xff]
    %v7724 = vld [vmem:[#allocation2 + $0x18c] sm:$0xff]
    %v7725 = vld [vmem:[#allocation2 + $0x194] sm:$0xff]
    %v7726 = vld [vmem:[#allocation2 + $0x19c] sm:$0xff]
    %v7727 = vld [vmem:[#allocation2 + $0x1a4] sm:$0xff]
    %v7728 = vld [vmem:[#allocation2 + $0x1ac] sm:$0xff]
    %v7729 = vld [vmem:[#allocation2 + $0x1b4] sm:$0xff]
    %v7730 = vld [vmem:[#allocation2 + $0x1bc] sm:$0xff]
    %v7731 = vld [vmem:[#allocation2 + $0x1c4] sm:$0xff]
    %v7732 = vld [vmem:[#allocation2 + $0x1cc] sm:$0xff]
    %v7733 = vld [vmem:[#allocation2 + $0x1d4] sm:$0xff]
    %v7734 = vld [vmem:[#allocation2 + $0x1dc] sm:$0xff]
    %v7735 = vld [vmem:[#allocation2 + $0x1e4] sm:$0xff]
    %v7736 = vld [vmem:[#allocation2 + $0x1ec] sm:$0xff]
    %v7737 = vld [vmem:[#allocation2 + $0x1f4] sm:$0xff]
    %v7738 = vld [vmem:[#allocation2 + $0x1fc] sm:$0xff]
    %v7739 = vld [vmem:[#allocation2 + $0x200] sm:$0xff]
    %v7740 = vld [vmem:[#allocation2 + $0x208] sm:$0xff]
    %v7741 = vld [vmem:[#allocation2 + $0x201] sm:$0xff]
    %v7742 = vld [vmem:[#allocation2 + $0x209] sm:$0xff]
    %v7743 = vld [vmem:[#allocation2 + $0x202] sm:$0xff]
    %v7744 = vld [vmem:[#allocation2 + $0x20a] sm:$0xff]
    %v7745 = vld [vmem:[#allocation2 + $0x203] sm:$0xff]
    %v7746 = vld [vmem:[#allocation2 + $0x20b] sm:$0xff]
    %v7747 = vld [vmem:[#allocation2 + $0x204] sm:$0xff]
    %v7748 = vld [vmem:[#allocation2 + $0x20c] sm:$0xff]
    %v7749 = vld [vmem:[#allocation2 + $0x210] sm:$0xff]
    %v7750 = vld [vmem:[#allocation2 + $0x218] sm:$0xff]
    %v7751 = vld [vmem:[#allocation2 + $0x211] sm:$0xff]
    %v7752 = vld [vmem:[#allocation2 + $0x219] sm:$0xff]
    %v7753 = vld [vmem:[#allocation2 + $0x212] sm:$0xff]
    %v7754 = vld [vmem:[#allocation2 + $0x21a] sm:$0xff]
    %v7755 = vld [vmem:[#allocation2 + $0x213] sm:$0xff]
    %v7756 = vld [vmem:[#allocation2 + $0x21b] sm:$0xff]
    %v7757 = vld [vmem:[#allocation2 + $0x214] sm:$0xff]
    %v7758 = vld [vmem:[#allocation2 + $0x21c] sm:$0xff]
    %v7759 = vld [vmem:[#allocation2 + $0x220] sm:$0xff]
    %v7760 = vld [vmem:[#allocation2 + $0x228] sm:$0xff]
    %v7761 = vld [vmem:[#allocation2 + $0x221] sm:$0xff]
    %v7762 = vld [vmem:[#allocation2 + $0x229] sm:$0xff]
    %v7763 = vld [vmem:[#allocation2 + $0x222] sm:$0xff]
    %v7764 = vld [vmem:[#allocation2 + $0x22a] sm:$0xff]
    %v7765 = vld [vmem:[#allocation2 + $0x223] sm:$0xff]
    %v7766 = vld [vmem:[#allocation2 + $0x22b] sm:$0xff]
    %v7767 = vld [vmem:[#allocation2 + $0x224] sm:$0xff]
    %v7768 = vld [vmem:[#allocation2 + $0x22c] sm:$0xff]
    %v7769 = vld [vmem:[#allocation2 + $0x230] sm:$0xff]
    %v7770 = vld [vmem:[#allocation2 + $0x238] sm:$0xff]
    %v7771 = vld [vmem:[#allocation2 + $0x231] sm:$0xff]
    %v7772 = vld [vmem:[#allocation2 + $0x239] sm:$0xff]
    %v7773 = vld [vmem:[#allocation2 + $0x232] sm:$0xff]
    %v7774 = vld [vmem:[#allocation2 + $0x23a] sm:$0xff]
    %v7775 = vld [vmem:[#allocation2 + $0x233] sm:$0xff]
    %v7776 = vld [vmem:[#allocation2 + $0x23b] sm:$0xff]
    %v7777 = vld [vmem:[#allocation2 + $0x234] sm:$0xff]
    %v7778 = vld [vmem:[#allocation2 + $0x23c] sm:$0xff]
    %7795 = vrot.lane.b32.xlu0 %v7675, 16
    %v7796 = vpop.permute.xlu0 %7795
    %7797 = vrot.lane.b32.xlu0 %v7676, 16
    %v7798 = vpop.permute.xlu0 %7797
    %7799 = vrot.lane.b32.xlu0 %v7677, 16
    %v7800 = vpop.permute.xlu0 %7799
    %7801 = vrot.lane.b32.xlu0 %v7678, 16
    %v7802 = vpop.permute.xlu0 %7801
    %7803 = vrot.lane.b32.xlu0 %v7679, 16
    %v7804 = vpop.permute.xlu0 %7803
    %7805 = vrot.lane.b32.xlu0 %v7680, 16
    %v7806 = vpop.permute.xlu0 %7805
    %7807 = vrot.lane.b32.xlu0 %v7681, 16
    %v7808 = vpop.permute.xlu0 %7807
    %7809 = vrot.lane.b32.xlu0 %v7682, 16
    %v7810 = vpop.permute.xlu0 %7809
    %7811 = vrot.lane.b32.xlu0 %v7683, 16
    %v7812 = vpop.permute.xlu0 %7811
    %7813 = vrot.lane.b32.xlu0 %v7684, 16
    %v7814 = vpop.permute.xlu0 %7813
    %7815 = vrot.lane.b32.xlu0 %v7685, 16
    %v7816 = vpop.permute.xlu0 %7815
    %7817 = vrot.lane.b32.xlu0 %v7686, 16
    %v7818 = vpop.permute.xlu0 %7817
    %7819 = vrot.lane.b32.xlu0 %v7687, 16
    %v7820 = vpop.permute.xlu0 %7819
    %7821 = vrot.lane.b32.xlu0 %v7688, 16
    %v7822 = vpop.permute.xlu0 %7821
    %7823 = vrot.lane.b32.xlu0 %v7689, 16
    %v7824 = vpop.permute.xlu0 %7823
    %7825 = vrot.lane.b32.xlu0 %v7690, 16
    %v7826 = vpop.permute.xlu0 %7825
    %7859 = vrot.lane.b32.xlu0 %v7691, 32
    %v7860 = vpop.permute.xlu0 %7859
    %7861 = vrot.lane.b32.xlu0 %v7692, 32
    %v7862 = vpop.permute.xlu0 %7861
    %7863 = vrot.lane.b32.xlu0 %v7693, 32
    %v7864 = vpop.permute.xlu0 %7863
    %7865 = vrot.lane.b32.xlu0 %v7694, 32
    %v7866 = vpop.permute.xlu0 %7865
    %7867 = vrot.lane.b32.xlu0 %v7695, 32
    %v7868 = vpop.permute.xlu0 %7867
    %7869 = vrot.lane.b32.xlu0 %v7696, 32
    %v7870 = vpop.permute.xlu0 %7869
    %7871 = vrot.lane.b32.xlu0 %v7697, 32
    %v7872 = vpop.permute.xlu0 %7871
    %7873 = vrot.lane.b32.xlu0 %v7698, 32
    %v7874 = vpop.permute.xlu0 %7873
    %7875 = vrot.lane.b32.xlu0 %v7699, 32
    %v7876 = vpop.permute.xlu0 %7875
    %7877 = vrot.lane.b32.xlu0 %v7700, 32
    %v7878 = vpop.permute.xlu0 %7877
    %7879 = vrot.lane.b32.xlu0 %v7701, 32
    %v7880 = vpop.permute.xlu0 %7879
    %7881 = vrot.lane.b32.xlu0 %v7702, 32
    %v7882 = vpop.permute.xlu0 %7881
    %7883 = vrot.lane.b32.xlu0 %v7703, 32
    %v7884 = vpop.permute.xlu0 %7883
    %7885 = vrot.lane.b32.xlu0 %v7704, 32
    %v7886 = vpop.permute.xlu0 %7885
    %7887 = vrot.lane.b32.xlu0 %v7705, 32
    %v7888 = vpop.permute.xlu0 %7887
    %7889 = vrot.lane.b32.xlu0 %v7706, 32
    %v7890 = vpop.permute.xlu0 %7889
    %7923 = vrot.lane.b32.xlu0 %v7707, 48
    %v7924 = vpop.permute.xlu0 %7923
    %7925 = vrot.lane.b32.xlu0 %v7708, 48
    %v7926 = vpop.permute.xlu0 %7925
    %7927 = vrot.lane.b32.xlu0 %v7709, 48
    %v7928 = vpop.permute.xlu0 %7927
    %7929 = vrot.lane.b32.xlu0 %v7710, 48
    %v7930 = vpop.permute.xlu0 %7929
    %7931 = vrot.lane.b32.xlu0 %v7711, 48
    %v7932 = vpop.permute.xlu0 %7931
    %7933 = vrot.lane.b32.xlu0 %v7712, 48
    %v7934 = vpop.permute.xlu0 %7933
    %7935 = vrot.lane.b32.xlu0 %v7713, 48
    %v7936 = vpop.permute.xlu0 %7935
    %7937 = vrot.lane.b32.xlu0 %v7714, 48
    %v7938 = vpop.permute.xlu0 %7937
    %7939 = vrot.lane.b32.xlu0 %v7715, 48
    %v7940 = vpop.permute.xlu0 %7939
    %7941 = vrot.lane.b32.xlu0 %v7716, 48
    %v7942 = vpop.permute.xlu0 %7941
    %7943 = vrot.lane.b32.xlu0 %v7717, 48
    %v7944 = vpop.permute.xlu0 %7943
    %7945 = vrot.lane.b32.xlu0 %v7718, 48
    %v7946 = vpop.permute.xlu0 %7945
    %7947 = vrot.lane.b32.xlu0 %v7719, 48
    %v7948 = vpop.permute.xlu0 %7947
    %7949 = vrot.lane.b32.xlu0 %v7720, 48
    %v7950 = vpop.permute.xlu0 %7949
    %7951 = vrot.lane.b32.xlu0 %v7721, 48
    %v7952 = vpop.permute.xlu0 %7951
    %7953 = vrot.lane.b32.xlu0 %v7722, 48
    %v7954 = vpop.permute.xlu0 %7953
    %7987 = vrot.lane.b32.xlu0 %v7723, 64
    %v7988 = vpop.permute.xlu0 %7987
    %7989 = vrot.lane.b32.xlu0 %v7724, 64
    %v7990 = vpop.permute.xlu0 %7989
    %7991 = vrot.lane.b32.xlu0 %v7725, 64
    %v7992 = vpop.permute.xlu0 %7991
    %7993 = vrot.lane.b32.xlu0 %v7726, 64
    %v7994 = vpop.permute.xlu0 %7993
    %7995 = vrot.lane.b32.xlu0 %v7727, 64
    %v7996 = vpop.permute.xlu0 %7995
    %7997 = vrot.lane.b32.xlu0 %v7728, 64
    %v7998 = vpop.permute.xlu0 %7997
    %7999 = vrot.lane.b32.xlu0 %v7729, 64
    %v8000 = vpop.permute.xlu0 %7999
    %8001 = vrot.lane.b32.xlu0 %v7730, 64
    %v8002 = vpop.permute.xlu0 %8001
    %8003 = vrot.lane.b32.xlu0 %v7731, 64
    %v8004 = vpop.permute.xlu0 %8003
    %8005 = vrot.lane.b32.xlu0 %v7732, 64
    %v8006 = vpop.permute.xlu0 %8005
    %8007 = vrot.lane.b32.xlu0 %v7733, 64
    %v8008 = vpop.permute.xlu0 %8007
    %8009 = vrot.lane.b32.xlu0 %v7734, 64
    %v8010 = vpop.permute.xlu0 %8009
    %8011 = vrot.lane.b32.xlu0 %v7735, 64
    %v8012 = vpop.permute.xlu0 %8011
    %8013 = vrot.lane.b32.xlu0 %v7736, 64
    %v8014 = vpop.permute.xlu0 %8013
    %8015 = vrot.lane.b32.xlu0 %v7737, 64
    %v8016 = vpop.permute.xlu0 %8015
    %8017 = vrot.lane.b32.xlu0 %v7738, 64
    %v8018 = vpop.permute.xlu0 %8017
    %8051 = vrot.lane.b32.xlu0 %v7661, 80
    %v8052 = vpop.permute.xlu0 %8051
    %8053 = vrot.lane.b32.xlu0 %v7662, 80
    %v8054 = vpop.permute.xlu0 %8053
    %8055 = vrot.lane.b32.xlu0 %v7663, 80
    %v8056 = vpop.permute.xlu0 %8055
    %8057 = vrot.lane.b32.xlu0 %v7664, 80
    %v8058 = vpop.permute.xlu0 %8057
    %8059 = vrot.lane.b32.xlu0 %v7665, 80
    %v8060 = vpop.permute.xlu0 %8059
    %8061 = vrot.lane.b32.xlu0 %v7666, 80
    %v8062 = vpop.permute.xlu0 %8061
    %8063 = vrot.lane.b32.xlu0 %v7667, 80
    %v8064 = vpop.permute.xlu0 %8063
    %8065 = vrot.lane.b32.xlu0 %v7668, 80
    %v8066 = vpop.permute.xlu0 %8065
    %8067 = vrot.lane.b32.xlu0 %v7669, 80
    %v8068 = vpop.permute.xlu0 %8067
    %8069 = vrot.lane.b32.xlu0 %v7670, 80
    %v8070 = vpop.permute.xlu0 %8069
    %8071 = vrot.lane.b32.xlu0 %v7671, 80
    %v8072 = vpop.permute.xlu0 %8071
    %8073 = vrot.lane.b32.xlu0 %v7672, 80
    %v8074 = vpop.permute.xlu0 %8073
    %8075 = vrot.lane.b32.xlu0 %v7673, 80
    %v8076 = vpop.permute.xlu0 %8075
    %8077 = vrot.lane.b32.xlu0 %v7674, 80
    %v8078 = vpop.permute.xlu0 %8077
    %8079 = vrot.lane.b32.xlu0 %v7739, 80
    %v8080 = vpop.permute.xlu0 %8079
    %8081 = vrot.lane.b32.xlu0 %v7740, 80
    %v8082 = vpop.permute.xlu0 %8081
    %8101 = vrot.lane.b32.xlu0 %v7677, 96
    %v8102 = vpop.permute.xlu0 %8101
    %8103 = vrot.lane.b32.xlu0 %v7678, 96
    %v8104 = vpop.permute.xlu0 %8103
    %8105 = vrot.lane.b32.xlu0 %v7679, 96
    %v8106 = vpop.permute.xlu0 %8105
    %8107 = vrot.lane.b32.xlu0 %v7680, 96
    %v8108 = vpop.permute.xlu0 %8107
    %8109 = vrot.lane.b32.xlu0 %v7681, 96
    %v8110 = vpop.permute.xlu0 %8109
    %8111 = vrot.lane.b32.xlu0 %v7682, 96
    %v8112 = vpop.permute.xlu0 %8111
    %8113 = vrot.lane.b32.xlu0 %v7683, 96
    %v8114 = vpop.permute.xlu0 %8113
    %8115 = vrot.lane.b32.xlu0 %v7684, 96
    %v8116 = vpop.permute.xlu0 %8115
    %8117 = vrot.lane.b32.xlu0 %v7685, 96
    %v8118 = vpop.permute.xlu0 %8117
    %8119 = vrot.lane.b32.xlu0 %v7686, 96
    %v8120 = vpop.permute.xlu0 %8119
    %8121 = vrot.lane.b32.xlu0 %v7687, 96
    %v8122 = vpop.permute.xlu0 %8121
    %8123 = vrot.lane.b32.xlu0 %v7688, 96
    %v8124 = vpop.permute.xlu0 %8123
    %8125 = vrot.lane.b32.xlu0 %v7689, 96
    %v8126 = vpop.permute.xlu0 %8125
    %8127 = vrot.lane.b32.xlu0 %v7690, 96
    %v8128 = vpop.permute.xlu0 %8127
    %8129 = vrot.lane.b32.xlu0 %v7741, 96
    %v8130 = vpop.permute.xlu0 %8129
    %8131 = vrot.lane.b32.xlu0 %v7742, 96
    %v8132 = vpop.permute.xlu0 %8131
    %8151 = vrot.lane.b32.xlu0 %v7693, 112
    %v8152 = vpop.permute.xlu0 %8151
    %8153 = vrot.lane.b32.xlu0 %v7694, 112
    %v8154 = vpop.permute.xlu0 %8153
    %8155 = vrot.lane.b32.xlu0 %v7695, 112
    %v8156 = vpop.permute.xlu0 %8155
    %8157 = vrot.lane.b32.xlu0 %v7696, 112
    %v8158 = vpop.permute.xlu0 %8157
    %8159 = vrot.lane.b32.xlu0 %v7697, 112
    %v8160 = vpop.permute.xlu0 %8159
    %8161 = vrot.lane.b32.xlu0 %v7698, 112
    %v8162 = vpop.permute.xlu0 %8161
    %8163 = vrot.lane.b32.xlu0 %v7699, 112
    %v8164 = vpop.permute.xlu0 %8163
    %8165 = vrot.lane.b32.xlu0 %v7700, 112
    %v8166 = vpop.permute.xlu0 %8165
    %8167 = vrot.lane.b32.xlu0 %v7701, 112
    %v8168 = vpop.permute.xlu0 %8167
    %8169 = vrot.lane.b32.xlu0 %v7702, 112
    %v8170 = vpop.permute.xlu0 %8169
    %8171 = vrot.lane.b32.xlu0 %v7703, 112
    %v8172 = vpop.permute.xlu0 %8171
    %8173 = vrot.lane.b32.xlu0 %v7704, 112
    %v8174 = vpop.permute.xlu0 %8173
    %8175 = vrot.lane.b32.xlu0 %v7705, 112
    %v8176 = vpop.permute.xlu0 %8175
    %8177 = vrot.lane.b32.xlu0 %v7706, 112
    %v8178 = vpop.permute.xlu0 %8177
    %8179 = vrot.lane.b32.xlu0 %v7743, 112
    %v8180 = vpop.permute.xlu0 %8179
    %8181 = vrot.lane.b32.xlu0 %v7744, 112
    %v8182 = vpop.permute.xlu0 %8181
    %8201 = vrot.lane.b32.xlu0 %v7725, 16
    %v8202 = vpop.permute.xlu0 %8201
    %8203 = vrot.lane.b32.xlu0 %v7726, 16
    %v8204 = vpop.permute.xlu0 %8203
    %8205 = vrot.lane.b32.xlu0 %v7727, 16
    %v8206 = vpop.permute.xlu0 %8205
    %8207 = vrot.lane.b32.xlu0 %v7728, 16
    %v8208 = vpop.permute.xlu0 %8207
    %8209 = vrot.lane.b32.xlu0 %v7729, 16
    %v8210 = vpop.permute.xlu0 %8209
    %8211 = vrot.lane.b32.xlu0 %v7730, 16
    %v8212 = vpop.permute.xlu0 %8211
    %8213 = vrot.lane.b32.xlu0 %v7731, 16
    %v8214 = vpop.permute.xlu0 %8213
    %8215 = vrot.lane.b32.xlu0 %v7732, 16
    %v8216 = vpop.permute.xlu0 %8215
    %8217 = vrot.lane.b32.xlu0 %v7733, 16
    %v8218 = vpop.permute.xlu0 %8217
    %8219 = vrot.lane.b32.xlu0 %v7734, 16
    %v8220 = vpop.permute.xlu0 %8219
    %8221 = vrot.lane.b32.xlu0 %v7735, 16
    %v8222 = vpop.permute.xlu0 %8221
    %8223 = vrot.lane.b32.xlu0 %v7736, 16
    %v8224 = vpop.permute.xlu0 %8223
    %8225 = vrot.lane.b32.xlu0 %v7737, 16
    %v8226 = vpop.permute.xlu0 %8225
    %8227 = vrot.lane.b32.xlu0 %v7738, 16
    %v8228 = vpop.permute.xlu0 %8227
    %8229 = vrot.lane.b32.xlu0 %v7747, 16
    %v8230 = vpop.permute.xlu0 %8229
    %8231 = vrot.lane.b32.xlu0 %v7748, 16
    %v8232 = vpop.permute.xlu0 %8231
    %8251 = vrot.lane.b32.xlu0 %v7663, 32
    %v8252 = vpop.permute.xlu0 %8251
    %8253 = vrot.lane.b32.xlu0 %v7664, 32
    %v8254 = vpop.permute.xlu0 %8253
    %8255 = vrot.lane.b32.xlu0 %v7665, 32
    %v8256 = vpop.permute.xlu0 %8255
    %8257 = vrot.lane.b32.xlu0 %v7666, 32
    %v8258 = vpop.permute.xlu0 %8257
    %8259 = vrot.lane.b32.xlu0 %v7667, 32
    %v8260 = vpop.permute.xlu0 %8259
    %8261 = vrot.lane.b32.xlu0 %v7668, 32
    %v8262 = vpop.permute.xlu0 %8261
    %8263 = vrot.lane.b32.xlu0 %v7669, 32
    %v8264 = vpop.permute.xlu0 %8263
    %8265 = vrot.lane.b32.xlu0 %v7670, 32
    %v8266 = vpop.permute.xlu0 %8265
    %8267 = vrot.lane.b32.xlu0 %v7671, 32
    %v8268 = vpop.permute.xlu0 %8267
    %8269 = vrot.lane.b32.xlu0 %v7672, 32
    %v8270 = vpop.permute.xlu0 %8269
    %8271 = vrot.lane.b32.xlu0 %v7673, 32
    %v8272 = vpop.permute.xlu0 %8271
    %8273 = vrot.lane.b32.xlu0 %v7674, 32
    %v8274 = vpop.permute.xlu0 %8273
    %8275 = vrot.lane.b32.xlu0 %v7739, 32
    %v8276 = vpop.permute.xlu0 %8275
    %8277 = vrot.lane.b32.xlu0 %v7740, 32
    %v8278 = vpop.permute.xlu0 %8277
    %8279 = vrot.lane.b32.xlu0 %v7749, 32
    %v8280 = vpop.permute.xlu0 %8279
    %8281 = vrot.lane.b32.xlu0 %v7750, 32
    %v8282 = vpop.permute.xlu0 %8281
    %8301 = vrot.lane.b32.xlu0 %v7679, 48
    %v8302 = vpop.permute.xlu0 %8301
    %8303 = vrot.lane.b32.xlu0 %v7680, 48
    %v8304 = vpop.permute.xlu0 %8303
    %8305 = vrot.lane.b32.xlu0 %v7681, 48
    %v8306 = vpop.permute.xlu0 %8305
    %8307 = vrot.lane.b32.xlu0 %v7682, 48
    %v8308 = vpop.permute.xlu0 %8307
    %8309 = vrot.lane.b32.xlu0 %v7683, 48
    %v8310 = vpop.permute.xlu0 %8309
    %8311 = vrot.lane.b32.xlu0 %v7684, 48
    %v8312 = vpop.permute.xlu0 %8311
    %8313 = vrot.lane.b32.xlu0 %v7685, 48
    %v8314 = vpop.permute.xlu0 %8313
    %8315 = vrot.lane.b32.xlu0 %v7686, 48
    %v8316 = vpop.permute.xlu0 %8315
    %8317 = vrot.lane.b32.xlu0 %v7687, 48
    %v8318 = vpop.permute.xlu0 %8317
    %8319 = vrot.lane.b32.xlu0 %v7688, 48
    %v8320 = vpop.permute.xlu0 %8319
    %8321 = vrot.lane.b32.xlu0 %v7689, 48
    %v8322 = vpop.permute.xlu0 %8321
    %8323 = vrot.lane.b32.xlu0 %v7690, 48
    %v8324 = vpop.permute.xlu0 %8323
    %8325 = vrot.lane.b32.xlu0 %v7741, 48
    %v8326 = vpop.permute.xlu0 %8325
    %8327 = vrot.lane.b32.xlu0 %v7742, 48
    %v8328 = vpop.permute.xlu0 %8327
    %8329 = vrot.lane.b32.xlu0 %v7751, 48
    %v8330 = vpop.permute.xlu0 %8329
    %8331 = vrot.lane.b32.xlu0 %v7752, 48
    %v8332 = vpop.permute.xlu0 %8331
    %8351 = vrot.lane.b32.xlu0 %v7695, 64
    %v8352 = vpop.permute.xlu0 %8351
    %8353 = vrot.lane.b32.xlu0 %v7696, 64
    %v8354 = vpop.permute.xlu0 %8353
    %8355 = vrot.lane.b32.xlu0 %v7697, 64
    %v8356 = vpop.permute.xlu0 %8355
    %8357 = vrot.lane.b32.xlu0 %v7698, 64
    %v8358 = vpop.permute.xlu0 %8357
    %8359 = vrot.lane.b32.xlu0 %v7699, 64
    %v8360 = vpop.permute.xlu0 %8359
    %8361 = vrot.lane.b32.xlu0 %v7700, 64
    %v8362 = vpop.permute.xlu0 %8361
    %8363 = vrot.lane.b32.xlu0 %v7701, 64
    %v8364 = vpop.permute.xlu0 %8363
    %8365 = vrot.lane.b32.xlu0 %v7702, 64
    %v8366 = vpop.permute.xlu0 %8365
    %8367 = vrot.lane.b32.xlu0 %v7703, 64
    %v8368 = vpop.permute.xlu0 %8367
    %8369 = vrot.lane.b32.xlu0 %v7704, 64
    %v8370 = vpop.permute.xlu0 %8369
    %8371 = vrot.lane.b32.xlu0 %v7705, 64
    %v8372 = vpop.permute.xlu0 %8371
    %8373 = vrot.lane.b32.xlu0 %v7706, 64
    %v8374 = vpop.permute.xlu0 %8373
    %8375 = vrot.lane.b32.xlu0 %v7743, 64
    %v8376 = vpop.permute.xlu0 %8375
    %8377 = vrot.lane.b32.xlu0 %v7744, 64
    %v8378 = vpop.permute.xlu0 %8377
    %8379 = vrot.lane.b32.xlu0 %v7753, 64
    %v8380 = vpop.permute.xlu0 %8379
    %8381 = vrot.lane.b32.xlu0 %v7754, 64
    %v8382 = vpop.permute.xlu0 %8381
    %8403 = vrot.lane.b32.xlu0 %v7711, 80
    %v8404 = vpop.permute.xlu0 %8403
    %8405 = vrot.lane.b32.xlu0 %v7712, 80
    %v8406 = vpop.permute.xlu0 %8405
    %8407 = vrot.lane.b32.xlu0 %v7713, 80
    %v8408 = vpop.permute.xlu0 %8407
    %8409 = vrot.lane.b32.xlu0 %v7714, 80
    %v8410 = vpop.permute.xlu0 %8409
    %8411 = vrot.lane.b32.xlu0 %v7715, 80
    %v8412 = vpop.permute.xlu0 %8411
    %8413 = vrot.lane.b32.xlu0 %v7716, 80
    %v8414 = vpop.permute.xlu0 %8413
    %8415 = vrot.lane.b32.xlu0 %v7717, 80
    %v8416 = vpop.permute.xlu0 %8415
    %8417 = vrot.lane.b32.xlu0 %v7718, 80
    %v8418 = vpop.permute.xlu0 %8417
    %8419 = vrot.lane.b32.xlu0 %v7719, 80
    %v8420 = vpop.permute.xlu0 %8419
    %8421 = vrot.lane.b32.xlu0 %v7720, 80
    %v8422 = vpop.permute.xlu0 %8421
    %8423 = vrot.lane.b32.xlu0 %v7721, 80
    %v8424 = vpop.permute.xlu0 %8423
    %8425 = vrot.lane.b32.xlu0 %v7722, 80
    %v8426 = vpop.permute.xlu0 %8425
    %8427 = vrot.lane.b32.xlu0 %v7745, 80
    %v8428 = vpop.permute.xlu0 %8427
    %8429 = vrot.lane.b32.xlu0 %v7746, 80
    %v8430 = vpop.permute.xlu0 %8429
    %8431 = vrot.lane.b32.xlu0 %v7755, 80
    %v8432 = vpop.permute.xlu0 %8431
    %8433 = vrot.lane.b32.xlu0 %v7756, 80
    %v8434 = vpop.permute.xlu0 %8433
    %8453 = vrot.lane.b32.xlu0 %v7727, 96
    %v8454 = vpop.permute.xlu0 %8453
    %8455 = vrot.lane.b32.xlu0 %v7728, 96
    %v8456 = vpop.permute.xlu0 %8455
    %8457 = vrot.lane.b32.xlu0 %v7729, 96
    %v8458 = vpop.permute.xlu0 %8457
    %8459 = vrot.lane.b32.xlu0 %v7730, 96
    %v8460 = vpop.permute.xlu0 %8459
    %8461 = vrot.lane.b32.xlu0 %v7731, 96
    %v8462 = vpop.permute.xlu0 %8461
    %8463 = vrot.lane.b32.xlu0 %v7732, 96
    %v8464 = vpop.permute.xlu0 %8463
    %8465 = vrot.lane.b32.xlu0 %v7733, 96
    %v8466 = vpop.permute.xlu0 %8465
    %8467 = vrot.lane.b32.xlu0 %v7734, 96
    %v8468 = vpop.permute.xlu0 %8467
    %8469 = vrot.lane.b32.xlu0 %v7735, 96
    %v8470 = vpop.permute.xlu0 %8469
    %8471 = vrot.lane.b32.xlu0 %v7736, 96
    %v8472 = vpop.permute.xlu0 %8471
    %8473 = vrot.lane.b32.xlu0 %v7737, 96
    %v8474 = vpop.permute.xlu0 %8473
    %8475 = vrot.lane.b32.xlu0 %v7738, 96
    %v8476 = vpop.permute.xlu0 %8475
    %8477 = vrot.lane.b32.xlu0 %v7747, 96
    %v8478 = vpop.permute.xlu0 %8477
    %8479 = vrot.lane.b32.xlu0 %v7748, 96
    %v8480 = vpop.permute.xlu0 %8479
    %8481 = vrot.lane.b32.xlu0 %v7757, 96
    %v8482 = vpop.permute.xlu0 %8481
    %8483 = vrot.lane.b32.xlu0 %v7758, 96
    %v8484 = vpop.permute.xlu0 %8483
    %8503 = vrot.lane.b32.xlu0 %v7665, 112
    %v8504 = vpop.permute.xlu0 %8503
    %8505 = vrot.lane.b32.xlu0 %v7666, 112
    %v8506 = vpop.permute.xlu0 %8505
    %8507 = vrot.lane.b32.xlu0 %v7667, 112
    %v8508 = vpop.permute.xlu0 %8507
    %8509 = vrot.lane.b32.xlu0 %v7668, 112
    %v8510 = vpop.permute.xlu0 %8509
    %8511 = vrot.lane.b32.xlu0 %v7669, 112
    %v8512 = vpop.permute.xlu0 %8511
    %8513 = vrot.lane.b32.xlu0 %v7670, 112
    %v8514 = vpop.permute.xlu0 %8513
    %8515 = vrot.lane.b32.xlu0 %v7671, 112
    %v8516 = vpop.permute.xlu0 %8515
    %8517 = vrot.lane.b32.xlu0 %v7672, 112
    %v8518 = vpop.permute.xlu0 %8517
    %8519 = vrot.lane.b32.xlu0 %v7673, 112
    %v8520 = vpop.permute.xlu0 %8519
    %8521 = vrot.lane.b32.xlu0 %v7674, 112
    %v8522 = vpop.permute.xlu0 %8521
    %8523 = vrot.lane.b32.xlu0 %v7739, 112
    %v8524 = vpop.permute.xlu0 %8523
    %8525 = vrot.lane.b32.xlu0 %v7740, 112
    %v8526 = vpop.permute.xlu0 %8525
    %8527 = vrot.lane.b32.xlu0 %v7749, 112
    %v8528 = vpop.permute.xlu0 %8527
    %8529 = vrot.lane.b32.xlu0 %v7750, 112
    %v8530 = vpop.permute.xlu0 %8529
    %8531 = vrot.lane.b32.xlu0 %v7759, 112
    %v8532 = vpop.permute.xlu0 %8531
    %8533 = vrot.lane.b32.xlu0 %v7760, 112
    %v8534 = vpop.permute.xlu0 %8533
    %v8551 = vsel %vm706, %v7659, %v7796
    %v8552 = vsel %vm706, %v7660, %v7798
    %v8553 = vsel %vm706, %v7661, %v7800
    %v8554 = vsel %vm706, %v7662, %v7802
    %v8555 = vsel %vm706, %v7663, %v7804
    %v8556 = vsel %vm706, %v7664, %v7806
    %v8557 = vsel %vm706, %v7665, %v7808
    %v8558 = vsel %vm706, %v7666, %v7810
    %v8559 = vsel %vm706, %v7667, %v7812
    %v8560 = vsel %vm706, %v7668, %v7814
    %v8561 = vsel %vm706, %v7669, %v7816
    %v8562 = vsel %vm706, %v7670, %v7818
    %v8563 = vsel %vm706, %v7671, %v7820
    %v8564 = vsel %vm706, %v7672, %v7822
    %v8565 = vsel %vm706, %v7673, %v7824
    %v8566 = vsel %vm706, %v7674, %v7826
    %v8567 = vsel %vm2423, %v8551, %v7860
    %v8568 = vsel %vm2423, %v8552, %v7862
    %v8569 = vsel %vm2423, %v8553, %v7864
    %v8570 = vsel %vm2423, %v8554, %v7866
    %v8571 = vsel %vm2423, %v8555, %v7868
    %v8572 = vsel %vm2423, %v8556, %v7870
    %v8573 = vsel %vm2423, %v8557, %v7872
    %v8574 = vsel %vm2423, %v8558, %v7874
    %v8575 = vsel %vm2423, %v8559, %v7876
    %v8576 = vsel %vm2423, %v8560, %v7878
    %v8577 = vsel %vm2423, %v8561, %v7880
    %v8578 = vsel %vm2423, %v8562, %v7882
    %v8579 = vsel %vm2423, %v8563, %v7884
    %v8580 = vsel %vm2423, %v8564, %v7886
    %v8581 = vsel %vm2423, %v8565, %v7888
    %v8582 = vsel %vm2423, %v8566, %v7890
    %v8583 = vsel %vm2440, %v8567, %v7924
    %v8584 = vsel %vm2440, %v8568, %v7926
    %v8585 = vsel %vm2440, %v8569, %v7928
    %v8586 = vsel %vm2440, %v8570, %v7930
    %v8587 = vsel %vm2440, %v8571, %v7932
    %v8588 = vsel %vm2440, %v8572, %v7934
    %v8589 = vsel %vm2440, %v8573, %v7936
    %v8590 = vsel %vm2440, %v8574, %v7938
    %v8591 = vsel %vm2440, %v8575, %v7940
    %v8592 = vsel %vm2440, %v8576, %v7942
    %v8593 = vsel %vm2440, %v8577, %v7944
    %v8594 = vsel %vm2440, %v8578, %v7946
    %v8595 = vsel %vm2440, %v8579, %v7948
    %v8596 = vsel %vm2440, %v8580, %v7950
    %v8597 = vsel %vm2440, %v8581, %v7952
    %v8598 = vsel %vm2440, %v8582, %v7954
    %v8599 = vsel %vm2457, %v8583, %v7988
    %v8600 = vsel %vm2457, %v8584, %v7990
    %v8601 = vsel %vm2457, %v8585, %v7992
    %v8602 = vsel %vm2457, %v8586, %v7994
    %v8603 = vsel %vm2457, %v8587, %v7996
    %v8604 = vsel %vm2457, %v8588, %v7998
    %v8605 = vsel %vm2457, %v8589, %v8000
    %v8606 = vsel %vm2457, %v8590, %v8002
    %v8607 = vsel %vm2457, %v8591, %v8004
    %v8608 = vsel %vm2457, %v8592, %v8006
    %v8609 = vsel %vm2457, %v8593, %v8008
    %v8610 = vsel %vm2457, %v8594, %v8010
    %v8611 = vsel %vm2457, %v8595, %v8012
    %v8612 = vsel %vm2457, %v8596, %v8014
    %v8613 = vsel %vm2457, %v8597, %v8016
    %v8614 = vsel %vm2457, %v8598, %v8018
    %v8615 = vsel %vm2474, %v8599, %v8052
    %v8616 = vsel %vm2474, %v8600, %v8054
    %v8617 = vsel %vm2474, %v8601, %v8056
    %v8618 = vsel %vm2474, %v8602, %v8058
    %v8619 = vsel %vm2474, %v8603, %v8060
    %v8620 = vsel %vm2474, %v8604, %v8062
    %v8621 = vsel %vm2474, %v8605, %v8064
    %v8622 = vsel %vm2474, %v8606, %v8066
    %v8623 = vsel %vm2474, %v8607, %v8068
    %v8624 = vsel %vm2474, %v8608, %v8070
    %v8625 = vsel %vm2474, %v8609, %v8072
    %v8626 = vsel %vm2474, %v8610, %v8074
    %v8627 = vsel %vm2474, %v8611, %v8076
    %v8628 = vsel %vm2474, %v8612, %v8078
    %v8629 = vsel %vm2474, %v8613, %v8080
    %v8630 = vsel %vm2474, %v8614, %v8082
    %v8631 = vsel %vm2491, %v8615, %v8102
    %v8632 = vsel %vm2491, %v8616, %v8104
    %v8633 = vsel %vm2491, %v8617, %v8106
    %v8634 = vsel %vm2491, %v8618, %v8108
    %v8635 = vsel %vm2491, %v8619, %v8110
    %v8636 = vsel %vm2491, %v8620, %v8112
    %v8637 = vsel %vm2491, %v8621, %v8114
    %v8638 = vsel %vm2491, %v8622, %v8116
    %v8639 = vsel %vm2491, %v8623, %v8118
    %v8640 = vsel %vm2491, %v8624, %v8120
    %v8641 = vsel %vm2491, %v8625, %v8122
    %v8642 = vsel %vm2491, %v8626, %v8124
    %v8643 = vsel %vm2491, %v8627, %v8126
    %v8644 = vsel %vm2491, %v8628, %v8128
    %v8645 = vsel %vm2491, %v8629, %v8130
    %v8646 = vsel %vm2491, %v8630, %v8132
    %v8647 = vsel %vm2508, %v8631, %v8152
    %v8648 = vsel %vm2508, %v8632, %v8154
    %v8649 = vsel %vm2508, %v8633, %v8156
    %v8650 = vsel %vm2508, %v8634, %v8158
    %v8651 = vsel %vm2508, %v8635, %v8160
    %v8652 = vsel %vm2508, %v8636, %v8162
    %v8653 = vsel %vm2508, %v8637, %v8164
    %v8654 = vsel %vm2508, %v8638, %v8166
    %v8655 = vsel %vm2508, %v8639, %v8168
    %v8656 = vsel %vm2508, %v8640, %v8170
    %v8657 = vsel %vm2508, %v8641, %v8172
    %v8658 = vsel %vm2508, %v8642, %v8174
    %v8659 = vsel %vm2508, %v8643, %v8176
    %v8660 = vsel %vm2508, %v8644, %v8178
    %v8661 = vsel %vm2508, %v8645, %v8180
    %v8662 = vsel %vm2508, %v8646, %v8182
    %v8663 = vsel %vm706, %v7709, %v8202
    %v8664 = vsel %vm706, %v7710, %v8204
    %v8665 = vsel %vm706, %v7711, %v8206
    %v8666 = vsel %vm706, %v7712, %v8208
    %v8667 = vsel %vm706, %v7713, %v8210
    %v8668 = vsel %vm706, %v7714, %v8212
    %v8669 = vsel %vm706, %v7715, %v8214
    %v8670 = vsel %vm706, %v7716, %v8216
    %v8671 = vsel %vm706, %v7717, %v8218
    %v8672 = vsel %vm706, %v7718, %v8220
    %v8673 = vsel %vm706, %v7719, %v8222
    %v8674 = vsel %vm706, %v7720, %v8224
    %v8675 = vsel %vm706, %v7721, %v8226
    %v8676 = vsel %vm706, %v7722, %v8228
    %v8677 = vsel %vm706, %v7745, %v8230
    %v8678 = vsel %vm706, %v7746, %v8232
    %v8679 = vsel %vm2423, %v8663, %v8252
    %v8680 = vsel %vm2423, %v8664, %v8254
    %v8681 = vsel %vm2423, %v8665, %v8256
    %v8682 = vsel %vm2423, %v8666, %v8258
    %v8683 = vsel %vm2423, %v8667, %v8260
    %v8684 = vsel %vm2423, %v8668, %v8262
    %v8685 = vsel %vm2423, %v8669, %v8264
    %v8686 = vsel %vm2423, %v8670, %v8266
    %v8687 = vsel %vm2423, %v8671, %v8268
    %v8688 = vsel %vm2423, %v8672, %v8270
    %v8689 = vsel %vm2423, %v8673, %v8272
    %v8690 = vsel %vm2423, %v8674, %v8274
    %v8691 = vsel %vm2423, %v8675, %v8276
    %v8692 = vsel %vm2423, %v8676, %v8278
    %v8693 = vsel %vm2423, %v8677, %v8280
    %v8694 = vsel %vm2423, %v8678, %v8282
    %v8695 = vsel %vm2440, %v8679, %v8302
    %v8696 = vsel %vm2440, %v8680, %v8304
    %v8697 = vsel %vm2440, %v8681, %v8306
    %v8698 = vsel %vm2440, %v8682, %v8308
    %v8699 = vsel %vm2440, %v8683, %v8310
    %v8700 = vsel %vm2440, %v8684, %v8312
    %v8701 = vsel %vm2440, %v8685, %v8314
    %v8702 = vsel %vm2440, %v8686, %v8316
    %v8703 = vsel %vm2440, %v8687, %v8318
    %v8704 = vsel %vm2440, %v8688, %v8320
    %v8705 = vsel %vm2440, %v8689, %v8322
    %v8706 = vsel %vm2440, %v8690, %v8324
    %v8707 = vsel %vm2440, %v8691, %v8326
    %v8708 = vsel %vm2440, %v8692, %v8328
    %v8709 = vsel %vm2440, %v8693, %v8330
    %v8710 = vsel %vm2440, %v8694, %v8332
    %v8711 = vsel %vm2457, %v8695, %v8352
    %v8712 = vsel %vm2457, %v8696, %v8354
    %v8713 = vsel %vm2457, %v8697, %v8356
    %v8714 = vsel %vm2457, %v8698, %v8358
    %v8715 = vsel %vm2457, %v8699, %v8360
    %v8716 = vsel %vm2457, %v8700, %v8362
    %v8717 = vsel %vm2457, %v8701, %v8364
    %v8718 = vsel %vm2457, %v8702, %v8366
    %v8719 = vsel %vm2457, %v8703, %v8368
    %v8720 = vsel %vm2457, %v8704, %v8370
    %v8721 = vsel %vm2457, %v8705, %v8372
    %v8722 = vsel %vm2457, %v8706, %v8374
    %v8723 = vsel %vm2457, %v8707, %v8376
    %v8724 = vsel %vm2457, %v8708, %v8378
    %v8725 = vsel %vm2457, %v8709, %v8380
    %v8726 = vsel %vm2457, %v8710, %v8382
    %v8727 = vsel %vm2474, %v8711, %v8404
    %v8728 = vsel %vm2474, %v8712, %v8406
    %v8729 = vsel %vm2474, %v8713, %v8408
    %v8730 = vsel %vm2474, %v8714, %v8410
    %v8731 = vsel %vm2474, %v8715, %v8412
    %v8732 = vsel %vm2474, %v8716, %v8414
    %v8733 = vsel %vm2474, %v8717, %v8416
    %v8734 = vsel %vm2474, %v8718, %v8418
    %v8735 = vsel %vm2474, %v8719, %v8420
    %v8736 = vsel %vm2474, %v8720, %v8422
    %v8737 = vsel %vm2474, %v8721, %v8424
    %v8738 = vsel %vm2474, %v8722, %v8426
    %v8739 = vsel %vm2474, %v8723, %v8428
    %v8740 = vsel %vm2474, %v8724, %v8430
    %v8741 = vsel %vm2474, %v8725, %v8432
    %v8742 = vsel %vm2474, %v8726, %v8434
    %v8743 = vsel %vm2491, %v8727, %v8454
    %v8744 = vsel %vm2491, %v8728, %v8456
    %v8745 = vsel %vm2491, %v8729, %v8458
    %v8746 = vsel %vm2491, %v8730, %v8460
    %v8747 = vsel %vm2491, %v8731, %v8462
    %v8748 = vsel %vm2491, %v8732, %v8464
    %v8749 = vsel %vm2491, %v8733, %v8466
    %v8750 = vsel %vm2491, %v8734, %v8468
    %v8751 = vsel %vm2491, %v8735, %v8470
    %v8752 = vsel %vm2491, %v8736, %v8472
    %v8753 = vsel %vm2491, %v8737, %v8474
    %v8754 = vsel %vm2491, %v8738, %v8476
    %v8755 = vsel %vm2491, %v8739, %v8478
    %v8756 = vsel %vm2491, %v8740, %v8480
    %v8757 = vsel %vm2491, %v8741, %v8482
    %v8758 = vsel %vm2491, %v8742, %v8484
    %v8759 = vsel %vm2508, %v8743, %v8504
    %v8760 = vsel %vm2508, %v8744, %v8506
    %v8761 = vsel %vm2508, %v8745, %v8508
    %v8762 = vsel %vm2508, %v8746, %v8510
    %v8763 = vsel %vm2508, %v8747, %v8512
    %v8764 = vsel %vm2508, %v8748, %v8514
    %v8765 = vsel %vm2508, %v8749, %v8516
    %v8766 = vsel %vm2508, %v8750, %v8518
    %v8767 = vsel %vm2508, %v8751, %v8520
    %v8768 = vsel %vm2508, %v8752, %v8522
    %v8769 = vsel %vm2508, %v8753, %v8524
    %v8770 = vsel %vm2508, %v8754, %v8526
    %v8771 = vsel %vm2508, %v8755, %v8528
    %v8772 = vsel %vm2508, %v8756, %v8530
    %v8773 = vsel %vm2508, %v8757, %v8532
    %v8774 = vsel %vm2508, %v8758, %v8534
    %8777 = vrot.lane.b32.xlu0 %v7697, 16
    %v8778 = vpop.permute.xlu0 %8777
    %8779 = vrot.lane.b32.xlu0 %v7698, 16
    %v8780 = vpop.permute.xlu0 %8779
    %8781 = vrot.lane.b32.xlu0 %v7699, 16
    %v8782 = vpop.permute.xlu0 %8781
    %8783 = vrot.lane.b32.xlu0 %v7700, 16
    %v8784 = vpop.permute.xlu0 %8783
    %8785 = vrot.lane.b32.xlu0 %v7701, 16
    %v8786 = vpop.permute.xlu0 %8785
    %8787 = vrot.lane.b32.xlu0 %v7702, 16
    %v8788 = vpop.permute.xlu0 %8787
    %8789 = vrot.lane.b32.xlu0 %v7703, 16
    %v8790 = vpop.permute.xlu0 %8789
    %8791 = vrot.lane.b32.xlu0 %v7704, 16
    %v8792 = vpop.permute.xlu0 %8791
    %8793 = vrot.lane.b32.xlu0 %v7705, 16
    %v8794 = vpop.permute.xlu0 %8793
    %8795 = vrot.lane.b32.xlu0 %v7706, 16
    %v8796 = vpop.permute.xlu0 %8795
    %8797 = vrot.lane.b32.xlu0 %v7743, 16
    %v8798 = vpop.permute.xlu0 %8797
    %8799 = vrot.lane.b32.xlu0 %v7744, 16
    %v8800 = vpop.permute.xlu0 %8799
    %8801 = vrot.lane.b32.xlu0 %v7753, 16
    %v8802 = vpop.permute.xlu0 %8801
    %8803 = vrot.lane.b32.xlu0 %v7754, 16
    %v8804 = vpop.permute.xlu0 %8803
    %8805 = vrot.lane.b32.xlu0 %v7763, 16
    %v8806 = vpop.permute.xlu0 %8805
    %8807 = vrot.lane.b32.xlu0 %v7764, 16
    %v8808 = vpop.permute.xlu0 %8807
    %8827 = vrot.lane.b32.xlu0 %v7713, 32
    %v8828 = vpop.permute.xlu0 %8827
    %8829 = vrot.lane.b32.xlu0 %v7714, 32
    %v8830 = vpop.permute.xlu0 %8829
    %8831 = vrot.lane.b32.xlu0 %v7715, 32
    %v8832 = vpop.permute.xlu0 %8831
    %8833 = vrot.lane.b32.xlu0 %v7716, 32
    %v8834 = vpop.permute.xlu0 %8833
    %8835 = vrot.lane.b32.xlu0 %v7717, 32
    %v8836 = vpop.permute.xlu0 %8835
    %8837 = vrot.lane.b32.xlu0 %v7718, 32
    %v8838 = vpop.permute.xlu0 %8837
    %8839 = vrot.lane.b32.xlu0 %v7719, 32
    %v8840 = vpop.permute.xlu0 %8839
    %8841 = vrot.lane.b32.xlu0 %v7720, 32
    %v8842 = vpop.permute.xlu0 %8841
    %8843 = vrot.lane.b32.xlu0 %v7721, 32
    %v8844 = vpop.permute.xlu0 %8843
    %8845 = vrot.lane.b32.xlu0 %v7722, 32
    %v8846 = vpop.permute.xlu0 %8845
    %8847 = vrot.lane.b32.xlu0 %v7745, 32
    %v8848 = vpop.permute.xlu0 %8847
    %8849 = vrot.lane.b32.xlu0 %v7746, 32
    %v8850 = vpop.permute.xlu0 %8849
    %8851 = vrot.lane.b32.xlu0 %v7755, 32
    %v8852 = vpop.permute.xlu0 %8851
    %8853 = vrot.lane.b32.xlu0 %v7756, 32
    %v8854 = vpop.permute.xlu0 %8853
    %8855 = vrot.lane.b32.xlu0 %v7765, 32
    %v8856 = vpop.permute.xlu0 %8855
    %8857 = vrot.lane.b32.xlu0 %v7766, 32
    %v8858 = vpop.permute.xlu0 %8857
    %8877 = vrot.lane.b32.xlu0 %v7729, 48
    %v8878 = vpop.permute.xlu0 %8877
    %8879 = vrot.lane.b32.xlu0 %v7730, 48
    %v8880 = vpop.permute.xlu0 %8879
    %8881 = vrot.lane.b32.xlu0 %v7731, 48
    %v8882 = vpop.permute.xlu0 %8881
    %8883 = vrot.lane.b32.xlu0 %v7732, 48
    %v8884 = vpop.permute.xlu0 %8883
    %8885 = vrot.lane.b32.xlu0 %v7733, 48
    %v8886 = vpop.permute.xlu0 %8885
    %8887 = vrot.lane.b32.xlu0 %v7734, 48
    %v8888 = vpop.permute.xlu0 %8887
    %8889 = vrot.lane.b32.xlu0 %v7735, 48
    %v8890 = vpop.permute.xlu0 %8889
    %8891 = vrot.lane.b32.xlu0 %v7736, 48
    %v8892 = vpop.permute.xlu0 %8891
    %8893 = vrot.lane.b32.xlu0 %v7737, 48
    %v8894 = vpop.permute.xlu0 %8893
    %8895 = vrot.lane.b32.xlu0 %v7738, 48
    %v8896 = vpop.permute.xlu0 %8895
    %8897 = vrot.lane.b32.xlu0 %v7747, 48
    %v8898 = vpop.permute.xlu0 %8897
    %8899 = vrot.lane.b32.xlu0 %v7748, 48
    %v8900 = vpop.permute.xlu0 %8899
    %8901 = vrot.lane.b32.xlu0 %v7757, 48
    %v8902 = vpop.permute.xlu0 %8901
    %8903 = vrot.lane.b32.xlu0 %v7758, 48
    %v8904 = vpop.permute.xlu0 %8903
    %8905 = vrot.lane.b32.xlu0 %v7767, 48
    %v8906 = vpop.permute.xlu0 %8905
    %8907 = vrot.lane.b32.xlu0 %v7768, 48
    %v8908 = vpop.permute.xlu0 %8907
    %8927 = vrot.lane.b32.xlu0 %v7667, 64
    %v8928 = vpop.permute.xlu0 %8927
    %8929 = vrot.lane.b32.xlu0 %v7668, 64
    %v8930 = vpop.permute.xlu0 %8929
    %8931 = vrot.lane.b32.xlu0 %v7669, 64
    %v8932 = vpop.permute.xlu0 %8931
    %8933 = vrot.lane.b32.xlu0 %v7670, 64
    %v8934 = vpop.permute.xlu0 %8933
    %8935 = vrot.lane.b32.xlu0 %v7671, 64
    %v8936 = vpop.permute.xlu0 %8935
    %8937 = vrot.lane.b32.xlu0 %v7672, 64
    %v8938 = vpop.permute.xlu0 %8937
    %8939 = vrot.lane.b32.xlu0 %v7673, 64
    %v8940 = vpop.permute.xlu0 %8939
    %8941 = vrot.lane.b32.xlu0 %v7674, 64
    %v8942 = vpop.permute.xlu0 %8941
    %8943 = vrot.lane.b32.xlu0 %v7739, 64
    %v8944 = vpop.permute.xlu0 %8943
    %8945 = vrot.lane.b32.xlu0 %v7740, 64
    %v8946 = vpop.permute.xlu0 %8945
    %8947 = vrot.lane.b32.xlu0 %v7749, 64
    %v8948 = vpop.permute.xlu0 %8947
    %8949 = vrot.lane.b32.xlu0 %v7750, 64
    %v8950 = vpop.permute.xlu0 %8949
    %8951 = vrot.lane.b32.xlu0 %v7759, 64
    %v8952 = vpop.permute.xlu0 %8951
    %8953 = vrot.lane.b32.xlu0 %v7760, 64
    %v8954 = vpop.permute.xlu0 %8953
    %8955 = vrot.lane.b32.xlu0 %v7769, 64
    %v8956 = vpop.permute.xlu0 %8955
    %8957 = vrot.lane.b32.xlu0 %v7770, 64
    %v8958 = vpop.permute.xlu0 %8957
    %8979 = vrot.lane.b32.xlu0 %v7683, 80
    %v8980 = vpop.permute.xlu0 %8979
    %8981 = vrot.lane.b32.xlu0 %v7684, 80
    %v8982 = vpop.permute.xlu0 %8981
    %8983 = vrot.lane.b32.xlu0 %v7685, 80
    %v8984 = vpop.permute.xlu0 %8983
    %8985 = vrot.lane.b32.xlu0 %v7686, 80
    %v8986 = vpop.permute.xlu0 %8985
    %8987 = vrot.lane.b32.xlu0 %v7687, 80
    %v8988 = vpop.permute.xlu0 %8987
    %8989 = vrot.lane.b32.xlu0 %v7688, 80
    %v8990 = vpop.permute.xlu0 %8989
    %8991 = vrot.lane.b32.xlu0 %v7689, 80
    %v8992 = vpop.permute.xlu0 %8991
    %8993 = vrot.lane.b32.xlu0 %v7690, 80
    %v8994 = vpop.permute.xlu0 %8993
    %8995 = vrot.lane.b32.xlu0 %v7741, 80
    %v8996 = vpop.permute.xlu0 %8995
    %8997 = vrot.lane.b32.xlu0 %v7742, 80
    %v8998 = vpop.permute.xlu0 %8997
    %8999 = vrot.lane.b32.xlu0 %v7751, 80
    %v9000 = vpop.permute.xlu0 %8999
    %9001 = vrot.lane.b32.xlu0 %v7752, 80
    %v9002 = vpop.permute.xlu0 %9001
    %9003 = vrot.lane.b32.xlu0 %v7761, 80
    %v9004 = vpop.permute.xlu0 %9003
    %9005 = vrot.lane.b32.xlu0 %v7762, 80
    %v9006 = vpop.permute.xlu0 %9005
    %9007 = vrot.lane.b32.xlu0 %v7771, 80
    %v9008 = vpop.permute.xlu0 %9007
    %9009 = vrot.lane.b32.xlu0 %v7772, 80
    %v9010 = vpop.permute.xlu0 %9009
    %9029 = vrot.lane.b32.xlu0 %v7699, 96
    %v9030 = vpop.permute.xlu0 %9029
    %9031 = vrot.lane.b32.xlu0 %v7700, 96
    %v9032 = vpop.permute.xlu0 %9031
    %9033 = vrot.lane.b32.xlu0 %v7701, 96
    %v9034 = vpop.permute.xlu0 %9033
    %9035 = vrot.lane.b32.xlu0 %v7702, 96
    %v9036 = vpop.permute.xlu0 %9035
    %9037 = vrot.lane.b32.xlu0 %v7703, 96
    %v9038 = vpop.permute.xlu0 %9037
    %9039 = vrot.lane.b32.xlu0 %v7704, 96
    %v9040 = vpop.permute.xlu0 %9039
    %9041 = vrot.lane.b32.xlu0 %v7705, 96
    %v9042 = vpop.permute.xlu0 %9041
    %9043 = vrot.lane.b32.xlu0 %v7706, 96
    %v9044 = vpop.permute.xlu0 %9043
    %9045 = vrot.lane.b32.xlu0 %v7743, 96
    %v9046 = vpop.permute.xlu0 %9045
    %9047 = vrot.lane.b32.xlu0 %v7744, 96
    %v9048 = vpop.permute.xlu0 %9047
    %9049 = vrot.lane.b32.xlu0 %v7753, 96
    %v9050 = vpop.permute.xlu0 %9049
    %9051 = vrot.lane.b32.xlu0 %v7754, 96
    %v9052 = vpop.permute.xlu0 %9051
    %9053 = vrot.lane.b32.xlu0 %v7763, 96
    %v9054 = vpop.permute.xlu0 %9053
    %9055 = vrot.lane.b32.xlu0 %v7764, 96
    %v9056 = vpop.permute.xlu0 %9055
    %9057 = vrot.lane.b32.xlu0 %v7773, 96
    %v9058 = vpop.permute.xlu0 %9057
    %9059 = vrot.lane.b32.xlu0 %v7774, 96
    %v9060 = vpop.permute.xlu0 %9059
    %9079 = vrot.lane.b32.xlu0 %v7715, 112
    %v9080 = vpop.permute.xlu0 %9079
    %9081 = vrot.lane.b32.xlu0 %v7716, 112
    %v9082 = vpop.permute.xlu0 %9081
    %9083 = vrot.lane.b32.xlu0 %v7717, 112
    %v9084 = vpop.permute.xlu0 %9083
    %9085 = vrot.lane.b32.xlu0 %v7718, 112
    %v9086 = vpop.permute.xlu0 %9085
    %9087 = vrot.lane.b32.xlu0 %v7719, 112
    %v9088 = vpop.permute.xlu0 %9087
    %9089 = vrot.lane.b32.xlu0 %v7720, 112
    %v9090 = vpop.permute.xlu0 %9089
    %9091 = vrot.lane.b32.xlu0 %v7721, 112
    %v9092 = vpop.permute.xlu0 %9091
    %9093 = vrot.lane.b32.xlu0 %v7722, 112
    %v9094 = vpop.permute.xlu0 %9093
    %9095 = vrot.lane.b32.xlu0 %v7745, 112
    %v9096 = vpop.permute.xlu0 %9095
    %9097 = vrot.lane.b32.xlu0 %v7746, 112
    %v9098 = vpop.permute.xlu0 %9097
    %9099 = vrot.lane.b32.xlu0 %v7755, 112
    %v9100 = vpop.permute.xlu0 %9099
    %9101 = vrot.lane.b32.xlu0 %v7756, 112
    %v9102 = vpop.permute.xlu0 %9101
    %9103 = vrot.lane.b32.xlu0 %v7765, 112
    %v9104 = vpop.permute.xlu0 %9103
    %9105 = vrot.lane.b32.xlu0 %v7766, 112
    %v9106 = vpop.permute.xlu0 %9105
    %9107 = vrot.lane.b32.xlu0 %v7775, 112
    %v9108 = vpop.permute.xlu0 %9107
    %9109 = vrot.lane.b32.xlu0 %v7776, 112
    %v9110 = vpop.permute.xlu0 %9109
    %v9127 = vsel %vm706, %v7681, %v8778
    %v9128 = vsel %vm706, %v7682, %v8780
    %v9129 = vsel %vm706, %v7683, %v8782
    %v9130 = vsel %vm706, %v7684, %v8784
    %v9131 = vsel %vm706, %v7685, %v8786
    %v9132 = vsel %vm706, %v7686, %v8788
    %v9133 = vsel %vm706, %v7687, %v8790
    %v9134 = vsel %vm706, %v7688, %v8792
    %v9135 = vsel %vm706, %v7689, %v8794
    %v9136 = vsel %vm706, %v7690, %v8796
    %v9137 = vsel %vm706, %v7741, %v8798
    %v9138 = vsel %vm706, %v7742, %v8800
    %v9139 = vsel %vm706, %v7751, %v8802
    %v9140 = vsel %vm706, %v7752, %v8804
    %v9141 = vsel %vm706, %v7761, %v8806
    %v9142 = vsel %vm706, %v7762, %v8808
    %v9143 = vsel %vm2423, %v9127, %v8828
    %v9144 = vsel %vm2423, %v9128, %v8830
    %v9145 = vsel %vm2423, %v9129, %v8832
    %v9146 = vsel %vm2423, %v9130, %v8834
    %v9147 = vsel %vm2423, %v9131, %v8836
    %v9148 = vsel %vm2423, %v9132, %v8838
    %v9149 = vsel %vm2423, %v9133, %v8840
    %v9150 = vsel %vm2423, %v9134, %v8842
    %v9151 = vsel %vm2423, %v9135, %v8844
    %v9152 = vsel %vm2423, %v9136, %v8846
    %v9153 = vsel %vm2423, %v9137, %v8848
    %v9154 = vsel %vm2423, %v9138, %v8850
    %v9155 = vsel %vm2423, %v9139, %v8852
    %v9156 = vsel %vm2423, %v9140, %v8854
    %v9157 = vsel %vm2423, %v9141, %v8856
    %v9158 = vsel %vm2423, %v9142, %v8858
    %v9159 = vsel %vm2440, %v9143, %v8878
    %v9160 = vsel %vm2440, %v9144, %v8880
    %v9161 = vsel %vm2440, %v9145, %v8882
    %v9162 = vsel %vm2440, %v9146, %v8884
    %v9163 = vsel %vm2440, %v9147, %v8886
    %v9164 = vsel %vm2440, %v9148, %v8888
    %v9165 = vsel %vm2440, %v9149, %v8890
    %v9166 = vsel %vm2440, %v9150, %v8892
    %v9167 = vsel %vm2440, %v9151, %v8894
    %v9168 = vsel %vm2440, %v9152, %v8896
    %v9169 = vsel %vm2440, %v9153, %v8898
    %v9170 = vsel %vm2440, %v9154, %v8900
    %v9171 = vsel %vm2440, %v9155, %v8902
    %v9172 = vsel %vm2440, %v9156, %v8904
    %v9173 = vsel %vm2440, %v9157, %v8906
    %v9174 = vsel %vm2440, %v9158, %v8908
    %v9175 = vsel %vm2457, %v9159, %v8928
    %v9176 = vsel %vm2457, %v9160, %v8930
    %v9177 = vsel %vm2457, %v9161, %v8932
    %v9178 = vsel %vm2457, %v9162, %v8934
    %v9179 = vsel %vm2457, %v9163, %v8936
    %v9180 = vsel %vm2457, %v9164, %v8938
    %v9181 = vsel %vm2457, %v9165, %v8940
    %v9182 = vsel %vm2457, %v9166, %v8942
    %v9183 = vsel %vm2457, %v9167, %v8944
    %v9184 = vsel %vm2457, %v9168, %v8946
    %v9185 = vsel %vm2457, %v9169, %v8948
    %v9186 = vsel %vm2457, %v9170, %v8950
    %v9187 = vsel %vm2457, %v9171, %v8952
    %v9188 = vsel %vm2457, %v9172, %v8954
    %v9189 = vsel %vm2457, %v9173, %v8956
    %v9190 = vsel %vm2457, %v9174, %v8958
    %v9191 = vsel %vm2474, %v9175, %v8980
    %v9192 = vsel %vm2474, %v9176, %v8982
    %v9193 = vsel %vm2474, %v9177, %v8984
    %v9194 = vsel %vm2474, %v9178, %v8986
    %v9195 = vsel %vm2474, %v9179, %v8988
    %v9196 = vsel %vm2474, %v9180, %v8990
    %v9197 = vsel %vm2474, %v9181, %v8992
    %v9198 = vsel %vm2474, %v9182, %v8994
    %v9199 = vsel %vm2474, %v9183, %v8996
    %v9200 = vsel %vm2474, %v9184, %v8998
    %v9201 = vsel %vm2474, %v9185, %v9000
    %v9202 = vsel %vm2474, %v9186, %v9002
    %v9203 = vsel %vm2474, %v9187, %v9004
    %v9204 = vsel %vm2474, %v9188, %v9006
    %v9205 = vsel %vm2474, %v9189, %v9008
    %v9206 = vsel %vm2474, %v9190, %v9010
    %v9207 = vsel %vm2491, %v9191, %v9030
    %v9208 = vsel %vm2491, %v9192, %v9032
    %v9209 = vsel %vm2491, %v9193, %v9034
    %v9210 = vsel %vm2491, %v9194, %v9036
    %v9211 = vsel %vm2491, %v9195, %v9038
    %v9212 = vsel %vm2491, %v9196, %v9040
    %v9213 = vsel %vm2491, %v9197, %v9042
    %v9214 = vsel %vm2491, %v9198, %v9044
    %v9215 = vsel %vm2491, %v9199, %v9046
    %v9216 = vsel %vm2491, %v9200, %v9048
    %v9217 = vsel %vm2491, %v9201, %v9050
    %v9218 = vsel %vm2491, %v9202, %v9052
    %v9219 = vsel %vm2491, %v9203, %v9054
    %v9220 = vsel %vm2491, %v9204, %v9056
    %v9221 = vsel %vm2491, %v9205, %v9058
    %v9222 = vsel %vm2491, %v9206, %v9060
    %v9223 = vsel %vm2508, %v9207, %v9080
    %v9224 = vsel %vm2508, %v9208, %v9082
    %v9225 = vsel %vm2508, %v9209, %v9084
    %v9226 = vsel %vm2508, %v9210, %v9086
    %v9227 = vsel %vm2508, %v9211, %v9088
    %v9228 = vsel %vm2508, %v9212, %v9090
    %v9229 = vsel %vm2508, %v9213, %v9092
    %v9230 = vsel %vm2508, %v9214, %v9094
    %v9231 = vsel %vm2508, %v9215, %v9096
    %v9232 = vsel %vm2508, %v9216, %v9098
    %v9233 = vsel %vm2508, %v9217, %v9100
    %v9234 = vsel %vm2508, %v9218, %v9102
    %v9235 = vsel %vm2508, %v9219, %v9104
    %v9236 = vsel %vm2508, %v9220, %v9106
    %v9237 = vsel %vm2508, %v9221, %v9108
    %v9238 = vsel %vm2508, %v9222, %v9110
    %v9239 = vpack.c.bf16 %v8648, %v8647
    %v9240 = vpack.c.bf16 %v8760, %v8759
    %v9241 = vpack.c.bf16 %v9224, %v9223
    %v9242 = vpack.c.bf16 %v7732, %v7731
    %v9243 = vpack.c.bf16 %v8650, %v8649
    %v9244 = vpack.c.bf16 %v8762, %v8761
    %v9245 = vpack.c.bf16 %v9226, %v9225
    %v9246 = vpack.c.bf16 %v7734, %v7733
    %v9247 = vpack.c.bf16 %v8652, %v8651
    %v9248 = vpack.c.bf16 %v8764, %v8763
    %v9249 = vpack.c.bf16 %v9228, %v9227
    %v9250 = vpack.c.bf16 %v7736, %v7735
    %v9251 = vpack.c.bf16 %v8654, %v8653
    %v9252 = vpack.c.bf16 %v8766, %v8765
    %v9253 = vpack.c.bf16 %v9230, %v9229
    %v9254 = vpack.c.bf16 %v7738, %v7737
    %v9255 = vpack.c.bf16 %v8656, %v8655
    %v9256 = vpack.c.bf16 %v8768, %v8767
    %v9257 = vpack.c.bf16 %v9232, %v9231
    %v9258 = vpack.c.bf16 %v7748, %v7747
    %v9259 = vpack.c.bf16 %v8658, %v8657
    %v9260 = vpack.c.bf16 %v8770, %v8769
    %v9261 = vpack.c.bf16 %v9234, %v9233
    %v9262 = vpack.c.bf16 %v7758, %v7757
    %v9263 = vpack.c.bf16 %v8660, %v8659
    %v9264 = vpack.c.bf16 %v8772, %v8771
    %v9265 = vpack.c.bf16 %v9236, %v9235
    %v9266 = vpack.c.bf16 %v7768, %v7767
    %v9267 = vpack.c.bf16 %v8662, %v8661
    %v9268 = vpack.c.bf16 %v8774, %v8773
    %v9269 = vpack.c.bf16 %v9238, %v9237
    %v9270 = vpack.c.bf16 %v7778, %v7777
    %v9271 = vld [vmem:[%s4] sm:$0xf]
    %v9272 = vld [vmem:[%s4 + $0x4] sm:$0xf]
    %v9273 = vld [vmem:[%s4 + $0x8] sm:$0xf]
    %v9274 = vld [vmem:[%s4 + $0xc] sm:$0xf]
    %v9275 = vld [vmem:[%s4 + $0x10] sm:$0xf]
    %v9276 = vld [vmem:[%s4 + $0x14] sm:$0xf]
    %v9277 = vld [vmem:[%s4 + $0x18] sm:$0xf]
    %v9278 = vld [vmem:[%s4 + $0x1c] sm:$0xf]
    %v9279 = vld [vmem:[%s4 + $0x20] sm:$0xf]
    %v9280 = vld [vmem:[%s4 + $0x24] sm:$0xf]
    %v9281 = vld [vmem:[%s4 + $0x28] sm:$0xf]
    %v9282 = vld [vmem:[%s4 + $0x2c] sm:$0xf]
    %v9283 = vld [vmem:[%s4 + $0x30] sm:$0xf]
    %v9284 = vld [vmem:[%s4 + $0x34] sm:$0xf]
    %v9285 = vld [vmem:[%s4 + $0x38] sm:$0xf]
    %v9286 = vld [vmem:[%s4 + $0x3c] sm:$0xf]
    %v9287 = vld [vmem:[%s4 + $0x40] sm:$0xf]
    %v9288 = vld [vmem:[%s4 + $0x44] sm:$0xf]
    %v9289 = vld [vmem:[%s4 + $0x48] sm:$0xf]
    %v9290 = vld [vmem:[%s4 + $0x4c] sm:$0xf]
    %v9291 = vld [vmem:[%s4 + $0x50] sm:$0xf]
    %v9292 = vld [vmem:[%s4 + $0x54] sm:$0xf]
    %v9293 = vld [vmem:[%s4 + $0x58] sm:$0xf]
    %v9294 = vld [vmem:[%s4 + $0x5c] sm:$0xf]
    %v9295 = vld [vmem:[%s4 + $0x60] sm:$0xf]
    %v9296 = vld [vmem:[%s4 + $0x64] sm:$0xf]
    %v9297 = vld [vmem:[%s4 + $0x68] sm:$0xf]
    %v9298 = vld [vmem:[%s4 + $0x6c] sm:$0xf]
    %v9299 = vld [vmem:[%s4 + $0x70] sm:$0xf]
    %v9300 = vld [vmem:[%s4 + $0x74] sm:$0xf]
    %v9301 = vld [vmem:[%s4 + $0x78] sm:$0xf]
    %v9302 = vld [vmem:[%s4 + $0x7c] sm:$0xf]
    %v9303 = vld [vmem:[%s4 + $0x80] sm:$0xf]
    %v9304 = vld [vmem:[%s4 + $0x84] sm:$0xf]
    %v9305 = vld [vmem:[%s4 + $0x88] sm:$0xf]
    %v9306 = vld [vmem:[%s4 + $0x8c] sm:$0xf]
    %v9307 = vld [vmem:[%s4 + $0x90] sm:$0xf]
    %v9308 = vld [vmem:[%s4 + $0x94] sm:$0xf]
    %v9309 = vld [vmem:[%s4 + $0x98] sm:$0xf]
    %v9310 = vld [vmem:[%s4 + $0x9c] sm:$0xf]
    %v9311 = vld [vmem:[%s4 + $0xa0] sm:$0xf]
    %v9312 = vld [vmem:[%s4 + $0xa4] sm:$0xf]
    %v9313 = vld [vmem:[%s4 + $0xa8] sm:$0xf]
    %v9314 = vld [vmem:[%s4 + $0xac] sm:$0xf]
    %v9315 = vld [vmem:[%s4 + $0xb0] sm:$0xf]
    %v9316 = vld [vmem:[%s4 + $0xb4] sm:$0xf]
    %v9317 = vld [vmem:[%s4 + $0xb8] sm:$0xf]
    %v9318 = vld [vmem:[%s4 + $0xbc] sm:$0xf]
    %v9319 = vld [vmem:[%s4 + $0xc0] sm:$0xf]
    %v9320 = vld [vmem:[%s4 + $0xc4] sm:$0xf]
    %v9371 = vunpack.c.l.b16 %v9271
    %v9372 = vunpack.c.l.b16 %v9272
    %v9373 = vunpack.c.l.b16 %v9273
    %v9374 = vunpack.c.l.b16 %v9274
    %v9375 = vunpack.c.l.b16 %v9275
    %v9376 = vunpack.c.l.b16 %v9276
    %v9377 = vunpack.c.l.b16 %v9277
    %v9378 = vunpack.c.l.b16 %v9278
    %v9379 = vunpack.c.l.b16 %v9279
    %v9380 = vunpack.c.l.b16 %v9280
    %v9381 = vunpack.c.l.b16 %v9281
    %v9382 = vunpack.c.l.b16 %v9282
    %v9383 = vunpack.c.l.b16 %v9283
    %v9384 = vunpack.c.l.b16 %v9284
    %v9385 = vunpack.c.l.b16 %v9285
    %v9386 = vunpack.c.l.b16 %v9286
    %v9387 = vunpack.c.l.b16 %v9287
    %v9388 = vunpack.c.l.b16 %v9288
    %v9389 = vunpack.c.l.b16 %v9289
    %v9390 = vunpack.c.l.b16 %v9290
    %v9391 = vunpack.c.l.b16 %v9291
    %v9392 = vunpack.c.l.b16 %v9292
    %v9393 = vunpack.c.l.b16 %v9293
    %v9394 = vunpack.c.l.b16 %v9294
    %v9395 = vunpack.c.l.b16 %v9295
    %v9396 = vunpack.c.l.b16 %v9296
    %v9397 = vunpack.c.l.b16 %v9297
    %v9398 = vunpack.c.l.b16 %v9298
    %v9399 = vunpack.c.l.b16 %v9299
    %v9400 = vunpack.c.l.b16 %v9300
    %v9401 = vunpack.c.l.b16 %v9301
    %v9402 = vunpack.c.l.b16 %v9302
    %v9403 = vunpack.c.l.b16 %v9303
    %v9404 = vunpack.c.l.b16 %v9304
    %v9405 = vunpack.c.l.b16 %v9305
    %v9406 = vunpack.c.l.b16 %v9306
    %v9407 = vunpack.c.l.b16 %v9307
    %v9408 = vunpack.c.l.b16 %v9308
    %v9409 = vunpack.c.l.b16 %v9309
    %v9410 = vunpack.c.l.b16 %v9310
    %v9411 = vunpack.c.l.b16 %v9311
    %v9412 = vunpack.c.l.b16 %v9312
    %v9413 = vunpack.c.l.b16 %v9313
    %v9414 = vunpack.c.l.b16 %v9314
    %v9415 = vunpack.c.l.b16 %v9315
    %v9416 = vunpack.c.l.b16 %v9316
    %v9417 = vunpack.c.l.b16 %v9317
    %v9418 = vunpack.c.l.b16 %v9318
    %v9419 = vunpack.c.l.b16 %v9319
    %v9420 = vunpack.c.l.b16 %v9320
    %v9421 = vpack.c.b16 %v9372, %v9371
    %v9422 = vpack.c.b16 %v9374, %v9373
    %v9423 = vpack.c.b16 %v9376, %v9375
    %v9424 = vpack.c.b16 %v9378, %v9377
    %v9425 = vpack.c.b16 %v9380, %v9379
    %v9426 = vpack.c.b16 %v9382, %v9381
    %v9427 = vpack.c.b16 %v9384, %v9383
    %v9428 = vpack.c.b16 %v9386, %v9385
    %v9429 = vpack.c.b16 %v9388, %v9387
    %v9430 = vpack.c.b16 %v9390, %v9389
    %v9431 = vpack.c.b16 %v9392, %v9391
    %v9432 = vpack.c.b16 %v9394, %v9393
    %v9433 = vpack.c.b16 %v9396, %v9395
    %v9434 = vpack.c.b16 %v9398, %v9397
    %v9435 = vpack.c.b16 %v9400, %v9399
    %v9436 = vpack.c.b16 %v9402, %v9401
    %v9437 = vpack.c.b16 %v9404, %v9403
    %v9438 = vpack.c.b16 %v9406, %v9405
    %v9439 = vpack.c.b16 %v9408, %v9407
    %v9440 = vpack.c.b16 %v9410, %v9409
    %v9441 = vpack.c.b16 %v9412, %v9411
    %v9442 = vpack.c.b16 %v9414, %v9413
    %v9443 = vpack.c.b16 %v9416, %v9415
    %v9444 = vpack.c.b16 %v9418, %v9417
    %v9445 = vpack.c.b16 %v9420, %v9419
    %v9472 = vsel %vm706, %v9242, 0
    %v9475 = vsel %vm706, %v9246, 0
    %v9478 = vsel %vm706, %v9250, 0
    %v9481 = vsel %vm706, %v9254, 0
    %v9484 = vsel %vm706, %v9258, 0
    %v9487 = vsel %vm706, %v9262, 0
    %v9490 = vsel %vm706, %v9266, 0
    %v9493 = vsel %vm706, %v9270, 0
    %9495 = vmatprep.subr.bf16.mxu0 0
    %9496 = vmatpush1.bf16.msra.mxu0 %v9421
    %9497 = vmatprep.subr.bf16.mxu0 0
    %9498 = vmatpush1.bf16.msra.mxu0 %v9422
    %9499 = vmatprep.subr.bf16.mxu0 0
    %9500 = vmatpush1.bf16.msra.mxu0 %v9423
    %9501 = vmatprep.subr.bf16.mxu0 0
    %9502 = vmatpush1.bf16.msra.mxu0 %v9424
    %9503 = vmatprep.subr.bf16.mxu0 0
    %9504 = vmatpush1.bf16.msra.mxu0 %v9425
    %9505 = vmatprep.subr.bf16.mxu0 0
    %9506 = vmatpush1.bf16.msra.mxu0 %v9426
    %9507 = vmatprep.subr.bf16.mxu0 0
    %9508 = vmatpush1.bf16.msra.mxu0 %v9427
    %9509 = vmatprep.subr.bf16.mxu0 0
    %9510 = vmatpush1.bf16.msra.mxu0 %v9428
    %9511 = vmatprep.subr.bf16.mxu0 0
    %9512 = vmatpush1.bf16.msra.mxu0 %v9429
    %9513 = vmatprep.subr.bf16.mxu0 0
    %9514 = vmatpush1.bf16.msra.mxu0 %v9430
    %9515 = vmatprep.subr.bf16.mxu0 0
    %9516 = vmatpush1.bf16.msra.mxu0 %v9431
    %9517 = vmatprep.subr.bf16.mxu0 0
    %9518 = vmatpush1.bf16.msra.mxu0 %v9432
    %9519 = vmatprep.subr.bf16.mxu0 0
    %9520 = vmatpush1.bf16.msra.mxu0 %v9433
    %9521 = vmatprep.subr.bf16.mxu0 0
    %9522 = vmatpush1.bf16.msra.mxu0 %v9434
    %9523 = vmatprep.subr.bf16.mxu0 0
    %9524 = vmatpush1.bf16.msra.mxu0 %v9435
    %9525 = vmatprep.subr.bf16.mxu0 0
    %9526 = vmatpush1.bf16.msra.mxu0 %v9436
    %9527 = vmatprep.mubr.bf16.mxu0 %v9240
    %9528 = vmatmul.mubr.bf16.gmra.mrb[0].mxu0 %v9239
    %v9529 = vpop.f32.mrb[0].mxu0
    %v9530 = vadd.f32 0.0, %v9529
    %v9531 = vpop.f32.mrb[0].mxu0
    %v9532 = vpop.f32.mrb[0].mxu0
    %v9533 = vadd.f32 0.0, %v9532
    %v9534 = vpop.f32.mrb[0].mxu0
    %9535 = vmatprep.mubr.bf16.mxu0 %v9244
    %9536 = vmatmul.mubr.bf16.gmra.mrb[0].mxu0 %v9243
    %v9537 = vpop.f32.mrb[0].mxu0
    %v9538 = vadd.f32 0.0, %v9537
    %v9539 = vpop.f32.mrb[0].mxu0
    %v9540 = vpop.f32.mrb[0].mxu0
    %v9541 = vadd.f32 0.0, %v9540
    %v9542 = vpop.f32.mrb[0].mxu0
    %9543 = vmatprep.mubr.bf16.mxu0 %v9248
    %9544 = vmatmul.mubr.bf16.gmra.mrb[0].mxu0 %v9247
    %v9545 = vpop.f32.mrb[0].mxu0
    %v9546 = vadd.f32 0.0, %v9545
    %v9547 = vpop.f32.mrb[0].mxu0
    %v9548 = vpop.f32.mrb[0].mxu0
    %v9549 = vadd.f32 0.0, %v9548
    %v9550 = vpop.f32.mrb[0].mxu0
    %9551 = vmatprep.mubr.bf16.mxu0 %v9252
    %9552 = vmatmul.mubr.bf16.gmra.mrb[0].mxu0 %v9251
    %v9553 = vpop.f32.mrb[0].mxu0
    %v9554 = vadd.f32 0.0, %v9553
    %v9555 = vpop.f32.mrb[0].mxu0
    %v9556 = vpop.f32.mrb[0].mxu0
    %v9557 = vadd.f32 0.0, %v9556
    %v9558 = vpop.f32.mrb[0].mxu0
    %9559 = vmatprep.mubr.bf16.mxu0 %v9256
    %9560 = vmatmul.mubr.bf16.gmra.mrb[0].mxu0 %v9255
    %v9561 = vpop.f32.mrb[0].mxu0
    %v9562 = vadd.f32 0.0, %v9561
    %v9563 = vpop.f32.mrb[0].mxu0
    %v9564 = vpop.f32.mrb[0].mxu0
    %v9565 = vadd.f32 0.0, %v9564
    %v9566 = vpop.f32.mrb[0].mxu0
    %9567 = vmatprep.mubr.bf16.mxu0 %v9260
    %9568 = vmatmul.mubr.bf16.gmra.mrb[0].mxu0 %v9259
    %v9569 = vpop.f32.mrb[0].mxu0
    %v9570 = vadd.f32 0.0, %v9569
    %v9571 = vpop.f32.mrb[0].mxu0
    %v9572 = vpop.f32.mrb[0].mxu0
    %v9573 = vadd.f32 0.0, %v9572
    %v9574 = vpop.f32.mrb[0].mxu0
    %9575 = vmatprep.mubr.bf16.mxu0 %v9264
    %9576 = vmatmul.mubr.bf16.gmra.mrb[0].mxu0 %v9263
    %v9577 = vpop.f32.mrb[0].mxu0
    %v9578 = vadd.f32 0.0, %v9577
    %v9579 = vpop.f32.mrb[0].mxu0
    %v9580 = vpop.f32.mrb[0].mxu0
    %v9581 = vadd.f32 0.0, %v9580
    %v9582 = vpop.f32.mrb[0].mxu0
    %9583 = vmatprep.mubr.bf16.mxu0 %v9268
    %9584 = vmatmul.mubr.bf16.gmra.mrb[0].mxu0 %v9267
    %v9585 = vpop.f32.mrb[0].mxu0
    %v9586 = vadd.f32 0.0, %v9585
    %v9587 = vpop.f32.mrb[0].mxu0
    %v9588 = vpop.f32.mrb[0].mxu0
    %v9589 = vadd.f32 0.0, %v9588
    %v9590 = vpop.f32.mrb[0].mxu0
    %9591 = vdwg.mxu0
    %9592 = vmatprep.subr.bf16.mxu0 0
    %9593 = vmatpush1.bf16.msra.mxu0 %v9437
    %9594 = vmatprep.subr.bf16.mxu0 0
    %9595 = vmatpush1.bf16.msra.mxu0 %v9438
    %9596 = vmatprep.subr.bf16.mxu0 0
    %9597 = vmatpush1.bf16.msra.mxu0 %v9439
    %9598 = vmatprep.subr.bf16.mxu0 0
    %9599 = vmatpush1.bf16.msra.mxu0 %v9440
    %9600 = vmatprep.subr.bf16.mxu0 0
    %9601 = vmatpush1.bf16.msra.mxu0 %v9441
    %9602 = vmatprep.subr.bf16.mxu0 0
    %9603 = vmatpush1.bf16.msra.mxu0 %v9442
    %9604 = vmatprep.subr.bf16.mxu0 0
    %9605 = vmatpush1.bf16.msra.mxu0 %v9443
    %9606 = vmatprep.subr.bf16.mxu0 0
    %9607 = vmatpush1.bf16.msra.mxu0 %v9444
    %9608 = vmatprep.subr.bf16.mxu0 0
    %9609 = vmatpush1.bf16.msra.mxu0 %v9445
    %9610 = vmatprep.subr.bf16.mxu0 0
    %9611 = vmatpush1.bf16.msra.mxu0 0
    %9612 = vmatprep.subr.bf16.mxu0 0
    %9613 = vmatpush1.bf16.msra.mxu0 0
    %9614 = vmatprep.subr.bf16.mxu0 0
    %9615 = vmatpush1.bf16.msra.mxu0 0
    %9616 = vmatprep.subr.bf16.mxu0 0
    %9617 = vmatpush1.bf16.msra.mxu0 0
    %9618 = vmatprep.subr.bf16.mxu0 0
    %9619 = vmatpush1.bf16.msra.mxu0 0
    %9620 = vmatprep.subr.bf16.mxu0 0
    %9621 = vmatpush1.bf16.msra.mxu0 0
    %9622 = vmatprep.subr.bf16.mxu0 0
    %9623 = vmatpush1.bf16.msra.mxu0 0
    %9624 = vmatprep.mubr.bf16.mxu0 %v9472
    %9625 = vmatmul.mubr.bf16.gmra.mrb[0].mxu0 %v9241
    %v9626 = vpop.f32.mrb[0].mxu0
    %v9627 = vadd.f32 %v9530, %v9626
    %v9628 = vpop.f32.mrb[0].mxu0
    %v9629 = vpop.f32.mrb[0].mxu0
    %v9630 = vadd.f32 %v9533, %v9629
    %v9631 = vpop.f32.mrb[0].mxu0
    %9632 = vmatprep.mubr.bf16.mxu0 %v9475
    %9633 = vmatmul.mubr.bf16.gmra.mrb[0].mxu0 %v9245
    %v9634 = vpop.f32.mrb[0].mxu0
    %v9635 = vadd.f32 %v9538, %v9634
    %v9636 = vpop.f32.mrb[0].mxu0
    %v9637 = vpop.f32.mrb[0].mxu0
    %v9638 = vadd.f32 %v9541, %v9637
    %v9639 = vpop.f32.mrb[0].mxu0
    %9640 = vmatprep.mubr.bf16.mxu0 %v9478
    %9641 = vmatmul.mubr.bf16.gmra.mrb[0].mxu0 %v9249
    %v9642 = vpop.f32.mrb[0].mxu0
    %v9643 = vadd.f32 %v9546, %v9642
    %v9644 = vpop.f32.mrb[0].mxu0
    %v9645 = vpop.f32.mrb[0].mxu0
    %v9646 = vadd.f32 %v9549, %v9645
    %v9647 = vpop.f32.mrb[0].mxu0
    %9648 = vmatprep.mubr.bf16.mxu0 %v9481
    %9649 = vmatmul.mubr.bf16.gmra.mrb[0].mxu0 %v9253
    %v9650 = vpop.f32.mrb[0].mxu0
    %v9651 = vadd.f32 %v9554, %v9650
    %v9652 = vpop.f32.mrb[0].mxu0
    %v9653 = vpop.f32.mrb[0].mxu0
    %v9654 = vadd.f32 %v9557, %v9653
    %v9655 = vpop.f32.mrb[0].mxu0
    %9656 = vmatprep.mubr.bf16.mxu0 %v9484
    %9657 = vmatmul.mubr.bf16.gmra.mrb[0].mxu0 %v9257
    %v9658 = vpop.f32.mrb[0].mxu0
    %v9659 = vadd.f32 %v9562, %v9658
    %v9660 = vpop.f32.mrb[0].mxu0
    %v9661 = vpop.f32.mrb[0].mxu0
    %v9662 = vadd.f32 %v9565, %v9661
    %v9663 = vpop.f32.mrb[0].mxu0
    %9664 = vmatprep.mubr.bf16.mxu0 %v9487
    %9665 = vmatmul.mubr.bf16.gmra.mrb[0].mxu0 %v9261
    %v9666 = vpop.f32.mrb[0].mxu0
    %v9667 = vadd.f32 %v9570, %v9666
    %v9668 = vpop.f32.mrb[0].mxu0
    %v9669 = vpop.f32.mrb[0].mxu0
    %v9670 = vadd.f32 %v9573, %v9669
    %v9671 = vpop.f32.mrb[0].mxu0
    %9672 = vmatprep.mubr.bf16.mxu0 %v9490
    %9673 = vmatmul.mubr.bf16.gmra.mrb[0].mxu0 %v9265
    %v9674 = vpop.f32.mrb[0].mxu0
    %v9675 = vadd.f32 %v9578, %v9674
    %v9676 = vpop.f32.mrb[0].mxu0
    %v9677 = vpop.f32.mrb[0].mxu0
    %v9678 = vadd.f32 %v9581, %v9677
    %v9679 = vpop.f32.mrb[0].mxu0
    %9680 = vmatprep.mubr.bf16.mxu0 %v9493
    %9681 = vmatmul.mubr.bf16.gmra.mrb[0].mxu0 %v9269
    %v9682 = vpop.f32.mrb[0].mxu0
    %v9683 = vadd.f32 %v9586, %v9682
    %v9684 = vpop.f32.mrb[0].mxu0
    %v9685 = vpop.f32.mrb[0].mxu0
    %v9686 = vadd.f32 %v9589, %v9685
    %v9687 = vpop.f32.mrb[0].mxu0
    %9688 = vdwg.mxu0
    %9689 = vst.msk [vmem:[#allocation3 + $0x180] sm:$0xff] %vm2423, %v9627
    %9690 = vst.msk [vmem:[#allocation3 + $0x188] sm:$0xff] %vm2423, %v9630
    %9691 = vst.msk [vmem:[#allocation3 + $0x190] sm:$0xff] %vm2423, %v9635
    %9692 = vst.msk [vmem:[#allocation3 + $0x198] sm:$0xff] %vm2423, %v9638
    %9693 = vst.msk [vmem:[#allocation3 + $0x1a0] sm:$0xff] %vm2423, %v9643
    %9694 = vst.msk [vmem:[#allocation3 + $0x1a8] sm:$0xff] %vm2423, %v9646
    %9695 = vst.msk [vmem:[#allocation3 + $0x1b0] sm:$0xff] %vm2423, %v9651
    %9696 = vst.msk [vmem:[#allocation3 + $0x1b8] sm:$0xff] %vm2423, %v9654
    %9697 = vst.msk [vmem:[#allocation3 + $0x1c0] sm:$0xff] %vm2423, %v9659
    %9698 = vst.msk [vmem:[#allocation3 + $0x1c8] sm:$0xff] %vm2423, %v9662
    %9699 = vst.msk [vmem:[#allocation3 + $0x1d0] sm:$0xff] %vm2423, %v9667
    %9700 = vst.msk [vmem:[#allocation3 + $0x1d8] sm:$0xff] %vm2423, %v9670
    %9701 = vst.msk [vmem:[#allocation3 + $0x1e0] sm:$0xff] %vm2423, %v9675
    %9702 = vst.msk [vmem:[#allocation3 + $0x1e8] sm:$0xff] %vm2423, %v9678
    %9703 = vst.msk [vmem:[#allocation3 + $0x1f0] sm:$0xff] %vm2423, %v9683
    %9704 = vst.msk [vmem:[#allocation3 + $0x1f8] sm:$0xff] %vm2423, %v9686
    %v9705 = vld [vmem:[#allocation3] ss:$2 sm:$0x3f]
    %s9706 = scalar_lea.vmem [#allocation3], 32
    %v9707 = vld [vmem:[%s9706] ss:$2 sm:$0x3f]
    %s9708 = scalar_lea.vmem [#allocation3], 64
    %v9709 = vld [vmem:[%s9708] ss:$2 sm:$0x3f]
    %s9710 = scalar_lea.vmem [#allocation3], 96
    %v9711 = vld [vmem:[%s9710] ss:$2 sm:$0x3f]
    %s9712 = scalar_lea.vmem [#allocation3], 128
    %v9713 = vld [vmem:[%s9712] ss:$2 sm:$0x3f]
    %s9714 = scalar_lea.vmem [#allocation3], 160
    %v9715 = vld [vmem:[%s9714] ss:$2 sm:$0x3f]
    %s9716 = scalar_lea.vmem [#allocation3], 256
    %v9717 = vld [vmem:[%s9716] ss:$2 sm:$0x3f]
    %s9718 = scalar_lea.vmem [#allocation3], 288
    %v9719 = vld [vmem:[%s9718] ss:$2 sm:$0x3f]
    %s9720 = scalar_lea.vmem [#allocation3], 320
    %v9721 = vld [vmem:[%s9720] ss:$2 sm:$0x3f]
    %s9722 = scalar_lea.vmem [#allocation3], 352
    %v9723 = vld [vmem:[%s9722] ss:$2 sm:$0x3f]
    %s9724 = scalar_lea.vmem [#allocation3], 384
    %v9725 = vld [vmem:[%s9724] ss:$2 sm:$0x3f]
    %s9726 = scalar_lea.vmem [#allocation3], 416
    %v9727 = vld [vmem:[%s9726] ss:$2 sm:$0x3f]
    %v9729 = vrot.slane %v9707, 2
    %v9732 = vrot.slane %v9709, 4
    %v9735 = vrot.slane %v9711, 6
    %v9738 = vrot.slane %v9715, 2
    %v9741 = vrot.slane %v9717, 4
    %v9744 = vrot.slane %v9719, 6
    %v9747 = vrot.slane %v9723, 2
    %v9750 = vrot.slane %v9725, 4
    %v9753 = vrot.slane %v9727, 6
    %vm9755 = vcmask 1045504
    %v9756 = vsel %vm9755, %v9705, %v9729
    %vm9757 = vcmask 1043456
    %v9758 = vsel %vm9757, %v9729, %v9732
    %v9759 = vsel %vm413, %v9732, %v9735
    %v9760 = vsel %vm9755, %v9713, %v9738
    %v9761 = vsel %vm9757, %v9738, %v9741
    %v9762 = vsel %vm413, %v9741, %v9744
    %v9763 = vsel %vm9755, %v9721, %v9747
    %v9764 = vsel %vm9757, %v9747, %v9750
    %v9765 = vsel %vm413, %v9750, %v9753
    %v9766 = vsel %vm2423, %v9756, 0.0
    %v9767 = vsel %vm2423, %v9758, 0.0
    %v9768 = vadd.f32 %v9766, %v9767
    %v9769 = vsel %vm2423, %v9759, 0.0
    %v9770 = vadd.f32 %v9768, %v9769
    %v9771 = vsel %vm2423, %v9760, 0.0
    %v9772 = vadd.f32 %v9770, %v9771
    %v9773 = vsel %vm2423, %v9761, 0.0
    %v9774 = vadd.f32 %v9772, %v9773
    %v9775 = vsel %vm2423, %v9762, 0.0
    %v9776 = vadd.f32 %v9774, %v9775
    %v9777 = vsel %vm2423, %v9763, 0.0
    %v9778 = vadd.f32 %v9776, %v9777
    %v9779 = vsel %vm2423, %v9764, 0.0
    %v9780 = vadd.f32 %v9778, %v9779
    %v9781 = vsel %vm2423, %v9765, 0.0
    %v9782 = vadd.f32 %v9780, %v9781
    %v9783 = vrot.slane %v9782, 4
    %v9784 = vadd.f32 %v9782, %v9783
    %v9785 = vrot.slane %v9784, 2
    %v9786 = vadd.f32 %v9784, %v9785
    %v9787 = vrot.slane %v9786, 1
    %v9788 = vadd.f32 %v9786, %v9787
    %v9789 = vmul.f32 %v9788, 0.013888889
    %v9790 = vsub.f32 %v9756, %v9789
    %v9791 = vsub.f32 %v9758, %v9789
    %v9792 = vsub.f32 %v9759, %v9789
    %v9793 = vsub.f32 %v9760, %v9789
    %v9794 = vsub.f32 %v9761, %v9789
    %v9795 = vsub.f32 %v9762, %v9789
    %v9796 = vsub.f32 %v9763, %v9789
    %v9797 = vsub.f32 %v9764, %v9789
    %v9798 = vsub.f32 %v9765, %v9789
    %v9799 = vmul.f32 %v9790, %v9790
    %v9800 = vmul.f32 %v9791, %v9791
    %v9801 = vmul.f32 %v9792, %v9792
    %v9802 = vmul.f32 %v9793, %v9793
    %v9803 = vmul.f32 %v9794, %v9794
    %v9804 = vmul.f32 %v9795, %v9795
    %v9805 = vmul.f32 %v9796, %v9796
    %v9806 = vmul.f32 %v9797, %v9797
    %v9807 = vmul.f32 %v9798, %v9798
    %v9808 = vsel %vm2423, %v9799, 0.0
    %v9809 = vsel %vm2423, %v9800, 0.0
    %v9810 = vadd.f32 %v9808, %v9809
    %v9811 = vsel %vm2423, %v9801, 0.0
    %v9812 = vadd.f32 %v9810, %v9811
    %v9813 = vsel %vm2423, %v9802, 0.0
    %v9814 = vadd.f32 %v9812, %v9813
    %v9815 = vsel %vm2423, %v9803, 0.0
    %v9816 = vadd.f32 %v9814, %v9815
    %v9817 = vsel %vm2423, %v9804, 0.0
    %v9818 = vadd.f32 %v9816, %v9817
    %v9819 = vsel %vm2423, %v9805, 0.0
    %v9820 = vadd.f32 %v9818, %v9819
    %v9821 = vsel %vm2423, %v9806, 0.0
    %v9822 = vadd.f32 %v9820, %v9821
    %v9823 = vsel %vm2423, %v9807, 0.0
    %v9824 = vadd.f32 %v9822, %v9823
    %v9825 = vrot.slane %v9824, 4
    %v9826 = vadd.f32 %v9824, %v9825
    %v9827 = vrot.slane %v9826, 2
    %v9828 = vadd.f32 %v9826, %v9827
    %v9829 = vrot.slane %v9828, 1
    %v9830 = vadd.f32 %v9828, %v9829
    %v9831 = vmul.f32 %v9830, 0.013888889
    %v9832 = vld [vmem:[%s5] sm:$0x1]
    %v9833 = vadd.f32 %v9831, 1e-05
    %v9834 = vrsqrt.pop %v9833
    %v9835 = vmul.f32 %v9832, %v9834
    %v9836 = vld [vmem:[%s6] sm:$0x1]
    %v9837 = vmul.f32 %v9789, %v9835
    %v9838 = vsub.f32 %v9836, %v9837
    %v9840 = vlaneseq
    %v9841 = vshrl.u32 %v9840, 7
    %v9842 = vsub.s32 0, %v9841
    %v9843 = vrot.slane %v9835, %v9842
    %v9845 = vmul.f32 %v9756, %v9843
    %v9846 = vmul.f32 %v9758, %v9843
    %v9847 = vmul.f32 %v9759, %v9843
    %v9848 = vmul.f32 %v9760, %v9843
    %v9849 = vmul.f32 %v9761, %v9843
    %v9850 = vmul.f32 %v9762, %v9843
    %v9851 = vmul.f32 %v9763, %v9843
    %v9852 = vmul.f32 %v9764, %v9843
    %v9853 = vmul.f32 %v9765, %v9843
    %v9855 = vlaneseq
    %v9856 = vshrl.u32 %v9855, 7
    %v9857 = vsub.s32 0, %v9856
    %v9858 = vrot.slane %v9838, %v9857
    %v9860 = vadd.f32 %v9845, %v9858
    %v9861 = vadd.f32 %v9846, %v9858
    %v9862 = vadd.f32 %v9847, %v9858
    %v9863 = vadd.f32 %v9848, %v9858
    %v9864 = vadd.f32 %v9849, %v9858
    %v9865 = vadd.f32 %v9850, %v9858
    %v9866 = vadd.f32 %v9851, %v9858
    %v9867 = vadd.f32 %v9852, %v9858
    %v9868 = vadd.f32 %v9853, %v9858
    %vm9869 = vcmp.gt.f32.partialorder %v9860, 0.0
    %vm9870 = vcmp.gt.f32.partialorder %v9861, 0.0
    %vm9871 = vcmp.gt.f32.partialorder %v9862, 0.0
    %vm9872 = vcmp.gt.f32.partialorder %v9863, 0.0
    %vm9873 = vcmp.gt.f32.partialorder %v9864, 0.0
    %vm9874 = vcmp.gt.f32.partialorder %v9865, 0.0
    %vm9875 = vcmp.gt.f32.partialorder %v9866, 0.0
    %vm9876 = vcmp.gt.f32.partialorder %v9867, 0.0
    %vm9877 = vcmp.gt.f32.partialorder %v9868, 0.0
    %v9878 = vmul.f32 %v9860, 0.01
    %v9879 = vmul.f32 %v9861, 0.01
    %v9880 = vmul.f32 %v9862, 0.01
    %v9881 = vmul.f32 %v9863, 0.01
    %v9882 = vmul.f32 %v9864, 0.01
    %v9883 = vmul.f32 %v9865, 0.01
    %v9884 = vmul.f32 %v9866, 0.01
    %v9885 = vmul.f32 %v9867, 0.01
    %v9886 = vmul.f32 %v9868, 0.01
    %v9887 = vsel %vm9869, %v9860, %v9878
    %v9888 = vsel %vm9870, %v9861, %v9879
    %v9889 = vsel %vm9871, %v9862, %v9880
    %v9890 = vsel %vm9872, %v9863, %v9881
    %v9891 = vsel %vm9873, %v9864, %v9882
    %v9892 = vsel %vm9874, %v9865, %v9883
    %v9893 = vsel %vm9875, %v9866, %v9884
    %v9894 = vsel %vm9876, %v9867, %v9885
    %v9895 = vsel %vm9877, %v9868, %v9886
    %vm9896 = vcmask 256000
    %v9897 = vsel %vm9896, %v9887, -inf
    %v9898 = vrot.slane %v9897, 4
    %v9899 = vmax.f32 %v9897, %v9898
    %v9900 = vrot.slane %v9899, 2
    %v9901 = vmax.f32 %v9899, %v9900
    %v9902 = vrot.slane %v9901, 1
    %v9903 = vmax.f32 %v9901, %v9902
    %vm9904 = vcmask 261126
    %v9905 = vsel %vm9904, %v9887, -inf
    %vm9906 = vcmask 253952
    %v9907 = vsel %vm9906, %v9888, -inf
    %v9908 = vmax.f32 %v9905, %v9907
    %v9909 = vrot.slane %v9908, 4
    %v9910 = vmax.f32 %v9908, %v9909
    %v9911 = vrot.slane %v9910, 2
    %v9912 = vmax.f32 %v9910, %v9911
    %v9913 = vrot.slane %v9912, 1
    %v9914 = vmax.f32 %v9912, %v9913
    %v9915 = vmax.f32 %v9903, %v9914
    %vm9916 = vcmask 260100
    %v9917 = vsel %vm9916, %v9888, -inf
    %v9918 = vrot.slane %v9917, 4
    %v9919 = vmax.f32 %v9917, %v9918
    %v9920 = vrot.slane %v9919, 2
    %v9921 = vmax.f32 %v9919, %v9920
    %v9922 = vrot.slane %v9921, 1
    %v9923 = vmax.f32 %v9921, %v9922
    %v9924 = vmax.f32 %v9915, %v9923
    %vm9925 = vcmask 259075
    %v9926 = vsel %vm9925, %v9887, -inf
    %v9927 = vrot.slane %v9926, 4
    %v9928 = vmax.f32 %v9926, %v9927
    %v9929 = vrot.slane %v9928, 2
    %v9930 = vmax.f32 %v9928, %v9929
    %v9931 = vrot.slane %v9930, 1
    %v9932 = vmax.f32 %v9930, %v9931
    %vm9933 = vcmask 257025
    %v9934 = vsel %vm9933, %v9888, -inf
    %v9935 = vrot.slane %v9934, 4
    %v9936 = vmax.f32 %v9934, %v9935
    %v9937 = vrot.slane %v9936, 2
    %v9938 = vmax.f32 %v9936, %v9937
    %v9939 = vrot.slane %v9938, 1
    %v9940 = vmax.f32 %v9938, %v9939
    %v9941 = vmax.f32 %v9932, %v9940
    %vm9942 = vcmask 261127
    %v9943 = vsel %vm9942, %v9888, -inf
    %vm9944 = vcmask 254976
    %v9945 = vsel %vm9944, %v9889, -inf
    %v9946 = vmax.f32 %v9943, %v9945
    %v9947 = vrot.slane %v9946, 4
    %v9948 = vmax.f32 %v9946, %v9947
    %v9949 = vrot.slane %v9948, 2
    %v9950 = vmax.f32 %v9948, %v9949
    %v9951 = vrot.slane %v9950, 1
    %v9952 = vmax.f32 %v9950, %v9951
    %v9953 = vmax.f32 %v9941, %v9952
    %vm9954 = vcmask 258050
    %v9955 = vsel %vm9954, %v9889, -inf
    %v9956 = vrot.slane %v9955, 4
    %v9957 = vmax.f32 %v9955, %v9956
    %v9958 = vrot.slane %v9957, 2
    %v9959 = vmax.f32 %v9957, %v9958
    %v9960 = vrot.slane %v9959, 1
    %v9961 = vmax.f32 %v9959, %v9960
    %v9962 = vsel %vm9896, %v9890, -inf
    %v9963 = vrot.slane %v9962, 4
    %v9964 = vmax.f32 %v9962, %v9963
    %v9965 = vrot.slane %v9964, 2
    %v9966 = vmax.f32 %v9964, %v9965
    %v9967 = vrot.slane %v9966, 1
    %v9968 = vmax.f32 %v9966, %v9967
    %v9969 = vmax.f32 %v9961, %v9968
    %v9970 = vsel %vm9904, %v9890, -inf
    %v9971 = vsel %vm9906, %v9891, -inf
    %v9972 = vmax.f32 %v9970, %v9971
    %v9973 = vrot.slane %v9972, 4
    %v9974 = vmax.f32 %v9972, %v9973
    %v9975 = vrot.slane %v9974, 2
    %v9976 = vmax.f32 %v9974, %v9975
    %v9977 = vrot.slane %v9976, 1
    %v9978 = vmax.f32 %v9976, %v9977
    %v9979 = vmax.f32 %v9969, %v9978
    %vm9980 = vcmask 261125
    %v9981 = vsel %vm9980, %v9889, -inf
    %v9982 = vrot.slane %v9981, 4
    %v9983 = vmax.f32 %v9981, %v9982
    %v9984 = vrot.slane %v9983, 2
    %v9985 = vmax.f32 %v9983, %v9984
    %v9986 = vrot.slane %v9985, 1
    %v9987 = vmax.f32 %v9985, %v9986
    %v9988 = vsel %vm9925, %v9890, -inf
    %v9989 = vrot.slane %v9988, 4
    %v9990 = vmax.f32 %v9988, %v9989
    %v9991 = vrot.slane %v9990, 2
    %v9992 = vmax.f32 %v9990, %v9991
    %v9993 = vrot.slane %v9992, 1
    %v9994 = vmax.f32 %v9992, %v9993
    %v9995 = vmax.f32 %v9987, %v9994
    %v9996 = vsel %vm9933, %v9891, -inf
    %v9997 = vrot.slane %v9996, 4
    %v9998 = vmax.f32 %v9996, %v9997
    %v9999 = vrot.slane %v9998, 2
    %v10000 = vmax.f32 %v9998, %v9999
    %v10001 = vrot.slane %v10000, 1
    %v10002 = vmax.f32 %v10000, %v10001
    %v10003 = vmax.f32 %v9995, %v10002
    %10005 = vrot.lane.b32.xlu0 %v9953, 32
    %v10006 = vpop.permute.xlu0 %10005
    %10009 = vrot.lane.b32.xlu0 %v9979, 64
    %v10010 = vpop.permute.xlu0 %10009
    %10013 = vrot.lane.b32.xlu0 %v10003, 96
    %v10014 = vpop.permute.xlu0 %10013
    %v10016 = vsel %vm2423, %v9924, %v10006
    %v10017 = vsel %vm2457, %v10016, %v10010
    %v10018 = vsel %vm2491, %v10017, %v10014
    %v10019 = vsel %vm9916, %v9891, -inf
    %v10020 = vrot.slane %v10019, 4
    %v10021 = vmax.f32 %v10019, %v10020
    %v10022 = vrot.slane %v10021, 2
    %v10023 = vmax.f32 %v10021, %v10022
    %v10024 = vrot.slane %v10023, 1
    %v10025 = vmax.f32 %v10023, %v10024
    %v10026 = vsel %vm9954, %v9892, -inf
    %v10027 = vrot.slane %v10026, 4
    %v10028 = vmax.f32 %v10026, %v10027
    %v10029 = vrot.slane %v10028, 2
    %v10030 = vmax.f32 %v10028, %v10029
    %v10031 = vrot.slane %v10030, 1
    %v10032 = vmax.f32 %v10030, %v10031
    %v10033 = vmax.f32 %v10025, %v10032
    %v10034 = vsel %vm9896, %v9893, -inf
    %v10035 = vrot.slane %v10034, 4
    %v10036 = vmax.f32 %v10034, %v10035
    %v10037 = vrot.slane %v10036, 2
    %v10038 = vmax.f32 %v10036, %v10037
    %v10039 = vrot.slane %v10038, 1
    %v10040 = vmax.f32 %v10038, %v10039
    %v10041 = vmax.f32 %v10033, %v10040
    %v10042 = vsel %vm9942, %v9891, -inf
    %v10043 = vsel %vm9944, %v9892, -inf
    %v10044 = vmax.f32 %v10042, %v10043
    %v10045 = vrot.slane %v10044, 4
    %v10046 = vmax.f32 %v10044, %v10045
    %v10047 = vrot.slane %v10046, 2
    %v10048 = vmax.f32 %v10046, %v10047
    %v10049 = vrot.slane %v10048, 1
    %v10050 = vmax.f32 %v10048, %v10049
    %v10051 = vsel %vm9980, %v9892, -inf
    %v10052 = vrot.slane %v10051, 4
    %v10053 = vmax.f32 %v10051, %v10052
    %v10054 = vrot.slane %v10053, 2
    %v10055 = vmax.f32 %v10053, %v10054
    %v10056 = vrot.slane %v10055, 1
    %v10057 = vmax.f32 %v10055, %v10056
    %v10058 = vmax.f32 %v10050, %v10057
    %v10059 = vsel %vm9925, %v9893, -inf
    %v10060 = vrot.slane %v10059, 4
    %v10061 = vmax.f32 %v10059, %v10060
    %v10062 = vrot.slane %v10061, 2
    %v10063 = vmax.f32 %v10061, %v10062
    %v10064 = vrot.slane %v10063, 1
    %v10065 = vmax.f32 %v10063, %v10064
    %v10066 = vmax.f32 %v10058, %v10065
    %v10067 = vsel %vm9904, %v9893, -inf
    %v10068 = vsel %vm9906, %v9894, -inf
    %v10069 = vmax.f32 %v10067, %v10068
    %v10070 = vrot.slane %v10069, 4
    %v10071 = vmax.f32 %v10069, %v10070
    %v10072 = vrot.slane %v10071, 2
    %v10073 = vmax.f32 %v10071, %v10072
    %v10074 = vrot.slane %v10073, 1
    %v10075 = vmax.f32 %v10073, %v10074
    %v10076 = vsel %vm9916, %v9894, -inf
    %v10077 = vrot.slane %v10076, 4
    %v10078 = vmax.f32 %v10076, %v10077
    %v10079 = vrot.slane %v10078, 2
    %v10080 = vmax.f32 %v10078, %v10079
    %v10081 = vrot.slane %v10080, 1
    %v10082 = vmax.f32 %v10080, %v10081
    %v10083 = vmax.f32 %v10075, %v10082
    %v10084 = vsel %vm9954, %v9895, -inf
    %v10085 = vrot.slane %v10084, 4
    %v10086 = vmax.f32 %v10084, %v10085
    %v10087 = vrot.slane %v10086, 2
    %v10088 = vmax.f32 %v10086, %v10087
    %v10089 = vrot.slane %v10088, 1
    %v10090 = vmax.f32 %v10088, %v10089
    %v10091 = vmax.f32 %v10083, %v10090
    %v10092 = vsel %vm9933, %v9894, -inf
    %v10093 = vrot.slane %v10092, 4
    %v10094 = vmax.f32 %v10092, %v10093
    %v10095 = vrot.slane %v10094, 2
    %v10096 = vmax.f32 %v10094, %v10095
    %v10097 = vrot.slane %v10096, 1
    %v10098 = vmax.f32 %v10096, %v10097
    %v10099 = vsel %vm9942, %v9894, -inf
    %v10100 = vsel %vm9944, %v9895, -inf
    %v10101 = vmax.f32 %v10099, %v10100
    %v10102 = vrot.slane %v10101, 4
    %v10103 = vmax.f32 %v10101, %v10102
    %v10104 = vrot.slane %v10103, 2
    %v10105 = vmax.f32 %v10103, %v10104
    %v10106 = vrot.slane %v10105, 1
    %v10107 = vmax.f32 %v10105, %v10106
    %v10108 = vmax.f32 %v10098, %v10107
    %v10109 = vsel %vm9980, %v9895, -inf
    %v10110 = vrot.slane %v10109, 4
    %v10111 = vmax.f32 %v10109, %v10110
    %v10112 = vrot.slane %v10111, 2
    %v10113 = vmax.f32 %v10111, %v10112
    %v10114 = vrot.slane %v10113, 1
    %v10115 = vmax.f32 %v10113, %v10114
    %v10116 = vmax.f32 %v10108, %v10115
    %10118 = vrot.lane.b32.xlu0 %v10066, 32
    %v10119 = vpop.permute.xlu0 %10118
    %10122 = vrot.lane.b32.xlu0 %v10091, 64
    %v10123 = vpop.permute.xlu0 %10122
    %10126 = vrot.lane.b32.xlu0 %v10116, 96
    %v10127 = vpop.permute.xlu0 %10126
    %v10129 = vsel %vm2423, %v10041, %v10119
    %v10130 = vsel %vm2457, %v10129, %v10123
    %v10131 = vsel %vm2491, %v10130, %v10127
    %v10133 = vrot.slane %v10131, 7
    %vm10135 = vcmask 1040384
    %v10136 = vsel %vm10135, %v10018, %v10133
    %v10137 = vld [vmem:[%s7] sm:$0xff]
    %v10138 = vld [vmem:[%s7 + $0x8] sm:$0xff]
    %v10139 = vld [vmem:[%s7 + $0x10] sm:$0xff]
    %v10140 = vld [vmem:[%s7 + $0x18] sm:$0xff]
    %v10141 = vld [vmem:[%s7 + $0x20] sm:$0xff]
    %v10142 = vld [vmem:[%s7 + $0x28] sm:$0xff]
    %v10143 = vld [vmem:[%s7 + $0x30] sm:$0xff]
    %v10144 = vld [vmem:[%s7 + $0x38] sm:$0xff]
    %v10145 = vld [vmem:[%s7 + $0x40] sm:$0xff]
    %v10146 = vld [vmem:[%s7 + $0x48] sm:$0xff]
    %v10147 = vld [vmem:[%s7 + $0x50] sm:$0xff]
    %v10148 = vld [vmem:[%s7 + $0x58] sm:$0xff]
    %v10149 = vld [vmem:[%s7 + $0x60] sm:$0xff]
    %v10150 = vld [vmem:[%s7 + $0x68] sm:$0xff]
    %v10151 = vld [vmem:[%s7 + $0x70] sm:$0xff]
    %v10152 = vld [vmem:[%s7 + $0x78] sm:$0xff]
    %v10153 = vld [vmem:[%s8] sm:$0x1]
    %v10155 = vlaneseq
    %v10156 = vshrl.u32 %v10155, 7
    %v10157 = vsub.s32 0, %v10156
    %v10158 = vrot.slane %v10153, %v10157
    %10160 = vmatprep.subr.mxu0 0.0
    %10161 = vmatpush1.msra.mxu0 %v10137
    %10162 = vmatprep.subr.mxu0 0.0
    %10163 = vmatpush1.msra.mxu0 %v10138
    %10164 = vmatprep.subr.mxu0 0.0
    %10165 = vmatpush1.msra.mxu0 %v10139
    %10166 = vmatprep.subr.mxu0 0.0
    %10167 = vmatpush1.msra.mxu0 %v10140
    %10168 = vmatprep.subr.mxu0 0.0
    %10169 = vmatpush1.msra.mxu0 %v10141
    %10170 = vmatprep.subr.mxu0 0.0
    %10171 = vmatpush1.msra.mxu0 %v10142
    %10172 = vmatprep.subr.mxu0 0.0
    %10173 = vmatpush1.msra.mxu0 %v10143
    %10174 = vmatprep.subr.mxu0 0.0
    %10175 = vmatpush1.msra.mxu0 %v10144
    %10176 = vmatprep.subr.mxu0 0.0
    %10177 = vmatpush1.msra.mxu0 %v10145
    %10178 = vmatprep.subr.mxu0 0.0
    %10179 = vmatpush1.msra.mxu0 %v10146
    %10180 = vmatprep.subr.mxu0 0.0
    %10181 = vmatpush1.msra.mxu0 %v10147
    %10182 = vmatprep.subr.mxu0 0.0
    %10183 = vmatpush1.msra.mxu0 %v10148
    %10184 = vmatprep.subr.mxu0 0.0
    %10185 = vmatpush1.msra.mxu0 %v10149
    %10186 = vmatprep.subr.mxu0 0.0
    %10187 = vmatpush1.msra.mxu0 %v10150
    %10188 = vmatprep.subr.mxu0 0.0
    %10189 = vmatpush1.msra.mxu0 %v10151
    %10190 = vmatprep.subr.mxu0 0.0
    %10191 = vmatpush1.msra.mxu0 %v10152
    %10192 = vmatprep.subr.mxu0 0.0
    %10193 = vmatpush1.msra.mxu0 0.0
    %10194 = vmatprep.subr.mxu0 0.0
    %10195 = vmatpush1.msra.mxu0 0.0
    %10196 = vmatprep.subr.mxu0 0.0
    %10197 = vmatpush1.msra.mxu0 0.0
    %10198 = vmatprep.subr.mxu0 0.0
    %10199 = vmatpush1.msra.mxu0 0.0
    %10200 = vmatprep.subr.mxu0 0.0
    %10201 = vmatpush1.msra.mxu0 0.0
    %10202 = vmatprep.subr.mxu0 0.0
    %10203 = vmatpush1.msra.mxu0 0.0
    %10204 = vmatprep.subr.mxu0 0.0
    %10205 = vmatpush1.msra.mxu0 0.0
    %10206 = vmatprep.subr.mxu0 0.0
    %10207 = vmatpush1.msra.mxu0 0.0
    %10208 = vmatprep.subr.mxu0 0.0
    %10209 = vmatpush1.msra.mxu0 0.0
    %10210 = vmatprep.subr.mxu0 0.0
    %10211 = vmatpush1.msra.mxu0 0.0
    %10212 = vmatprep.subr.mxu0 0.0
    %10213 = vmatpush1.msra.mxu0 0.0
    %10214 = vmatprep.subr.mxu0 0.0
    %10215 = vmatpush1.msra.mxu0 0.0
    %10216 = vmatprep.subr.mxu0 0.0
    %10217 = vmatpush1.msra.mxu0 0.0
    %10218 = vmatprep.subr.mxu0 0.0
    %10219 = vmatpush1.msra.mxu0 0.0
    %10220 = vmatprep.subr.mxu0 0.0
    %10221 = vmatpush1.msra.mxu0 0.0
    %10222 = vmatprep.subr.mxu0 0.0
    %10223 = vmatpush1.msra.mxu0 0.0
    %10224 = vmatprep.mubr.f32.mxu0 0.0
    %10225 = vmatmul.mubr.f32.gmra.mrb[0].mxu0 %v10136
    %v10226 = vpop.f32.mrb[0].mxu0
    %v10227 = vadd.f32 %v10158, %v10226
    %v10228 = vpop.f32.mrb[0].mxu0
    %10229 = vdwg.mxu0
    %vm10230 = vcmp.gt.f32.partialorder %v10227, 0.0
    %v10231 = vmul.f32 %v10227, 0.01
    %v10232 = vsel %vm10230, %v10227, %v10231
    %v10233 = vld [vmem:[%s9] sm:$0xff]
    %v10234 = vld [vmem:[%s9 + $0x8] sm:$0xff]
    %v10235 = vld [vmem:[%s9 + $0x10] sm:$0xff]
    %v10236 = vld [vmem:[%s9 + $0x18] sm:$0xff]
    %v10237 = vld [vmem:[%s10] sm:$0x1]
    %v10239 = vlaneseq
    %v10240 = vshrl.u32 %v10239, 7
    %v10241 = vsub.s32 0, %v10240
    %v10242 = vrot.slane %v10237, %v10241
    %v10245 = vsel %vm2423, %v10232, 0
    %10247 = vmatprep.subr.mxu0 0.0
    %10248 = vmatpush1.msra.mxu0 %v10233
    %10249 = vmatprep.subr.mxu0 0.0
    %10250 = vmatpush1.msra.mxu0 %v10234
    %10251 = vmatprep.subr.mxu0 0.0
    %10252 = vmatpush1.msra.mxu0 %v10235
    %10253 = vmatprep.subr.mxu0 0.0
    %10254 = vmatpush1.msra.mxu0 %v10236
    %10255 = vmatprep.subr.mxu0 0.0
    %10256 = vmatpush1.msra.mxu0 0.0
    %10257 = vmatprep.subr.mxu0 0.0
    %10258 = vmatpush1.msra.mxu0 0.0
    %10259 = vmatprep.subr.mxu0 0.0
    %10260 = vmatpush1.msra.mxu0 0.0
    %10261 = vmatprep.subr.mxu0 0.0
    %10262 = vmatpush1.msra.mxu0 0.0
    %10263 = vmatprep.subr.mxu0 0.0
    %10264 = vmatpush1.msra.mxu0 0.0
    %10265 = vmatprep.subr.mxu0 0.0
    %10266 = vmatpush1.msra.mxu0 0.0
    %10267 = vmatprep.subr.mxu0 0.0
    %10268 = vmatpush1.msra.mxu0 0.0
    %10269 = vmatprep.subr.mxu0 0.0
    %10270 = vmatpush1.msra.mxu0 0.0
    %10271 = vmatprep.subr.mxu0 0.0
    %10272 = vmatpush1.msra.mxu0 0.0
    %10273 = vmatprep.subr.mxu0 0.0
    %10274 = vmatpush1.msra.mxu0 0.0
    %10275 = vmatprep.subr.mxu0 0.0
    %10276 = vmatpush1.msra.mxu0 0.0
    %10277 = vmatprep.subr.mxu0 0.0
    %10278 = vmatpush1.msra.mxu0 0.0
    %10279 = vmatprep.subr.mxu0 0.0
    %10280 = vmatpush1.msra.mxu0 0.0
    %10281 = vmatprep.subr.mxu0 0.0
    %10282 = vmatpush1.msra.mxu0 0.0
    %10283 = vmatprep.subr.mxu0 0.0
    %10284 = vmatpush1.msra.mxu0 0.0
    %10285 = vmatprep.subr.mxu0 0.0
    %10286 = vmatpush1.msra.mxu0 0.0
    %10287 = vmatprep.subr.mxu0 0.0
    %10288 = vmatpush1.msra.mxu0 0.0
    %10289 = vmatprep.subr.mxu0 0.0
    %10290 = vmatpush1.msra.mxu0 0.0
    %10291 = vmatprep.subr.mxu0 0.0
    %10292 = vmatpush1.msra.mxu0 0.0
    %10293 = vmatprep.subr.mxu0 0.0
    %10294 = vmatpush1.msra.mxu0 0.0
    %10295 = vmatprep.subr.mxu0 0.0
    %10296 = vmatpush1.msra.mxu0 0.0
    %10297 = vmatprep.subr.mxu0 0.0
    %10298 = vmatpush1.msra.mxu0 0.0
    %10299 = vmatprep.subr.mxu0 0.0
    %10300 = vmatpush1.msra.mxu0 0.0
    %10301 = vmatprep.subr.mxu0 0.0
    %10302 = vmatpush1.msra.mxu0 0.0
    %10303 = vmatprep.subr.mxu0 0.0
    %10304 = vmatpush1.msra.mxu0 0.0
    %10305 = vmatprep.subr.mxu0 0.0
    %10306 = vmatpush1.msra.mxu0 0.0
    %10307 = vmatprep.subr.mxu0 0.0
    %10308 = vmatpush1.msra.mxu0 0.0
    %10309 = vmatprep.subr.mxu0 0.0
    %10310 = vmatpush1.msra.mxu0 0.0
    %10311 = vmatprep.mubr.f32.mxu0 0.0
    %10312 = vmatmul.mubr.f32.gmra.mrb[0].mxu0 %v10245
    %v10313 = vpop.f32.mrb[0].mxu0
    %v10314 = vadd.f32 %v10242, %v10313
    %v10315 = vpop.f32.mrb[0].mxu0
    %10316 = vdwg.mxu0
    %vm10317 = vcmask 41984
    %10318 = vst.msk [vmem:[#allocation4] sm:$0x3] %vm10317, %v10314
    // Predicated region
    $region46: #{dqn_forward.1} parent=1 // pred_check
      _
    $region47: #{dqn_forward.1} parent=1 // pred_check_branch
      %10320 = sbr.rel (0) target = $region49
    $region48: #{dqn_forward.1} parent=1 // pred_region
      %s10322 = ssub.s32 32, 32
      %10323 = vsyncadd [#allocation5], %s10322
      %s10325 = sshll.u32 [#allocation4], 4
      %s10326 = int_to_ptr.vmem [resolvable:$true] %s10325
      %10328 = dma.vmem_to_hbm [thread:$0]  %s10326, 32, %s11, [#allocation5]
    $region49: #{dqn_forward.1} parent=1 // pred_fallthru
      _
    // Predicated region
    $region50: #{dqn_forward.1} parent=1 // pred_check
      _
    $region51: #{dqn_forward.1} parent=1 // pred_check_branch
      %10330 = sbr.rel (0) target = $region53
    $region52: #{dqn_forward.1} parent=1 // pred_region
      %10331 = dma.done [#allocation5], 32
    $region53: #{dqn_forward.1} parent=1 // pred_fallthru
      _
    %10332 = vsyncpa [#allocation5], 1

</llo_original>
